<compile_context>
chip_gen: v7x
topology: tpu7x:2x2x1
jax: 0.10.0
libtpu: 0.0.40
codegen_flags: <defaults>
</compile_context>

<pallas_src>
import functools

import jax
import jax.numpy as jnp
from jax import lax
from jax.experimental import pallas as pl
from jax.experimental.pallas import tpu as pltpu

LANE_TILE = 1024          # flattened-position tile (lane axis); sweep 1024-2048 per chip
RBF_LANE_CHUNK = 256      # in-kernel lane chunk for the RBF mixture (bounds live vregs)


def _round_up(a, b):
    return -(-a // b) * b


def _vmem_limit_bytes():
    # Generation-aware scoped-VMEM budget: ~75% of physical (v5e/v6e ~96 MiB of 128, v7x 48 of 64).
    try:
        cap = int(pltpu.get_tpu_info().vmem_capacity_bytes)
    except Exception:
        cap = 64 * 1024 * 1024
    return min(cap * 3 // 4, 100 * 1024 * 1024)


_VMEM_LIMIT = _vmem_limit_bytes()


# ----------------------------- Pallas kernels ------------------------------ #
def _stitch(x_ref, xh_ref, xbuf_ref, tl):
    # Current tile + narrow halo -> one contiguous (Cin, tl + halo_pad) window in VMEM.
    # TODO(synk): the "better" variant (memory_space=pl.ANY + one manual DMA of the whole window)
    #             would also delete this VMEM->VMEM stitch copy.
    xbuf_ref[:, :tl] = x_ref[0]
    xbuf_ref[:, tl:] = xh_ref[0]


def _conv_fold_kernel(w_ref, x_ref, xh_ref, o_ref, xbuf_ref, slab_ref, *, kh, kw, wrow, cin):
    """Single wide-K MXU dot: kh*kw taps folded into the contraction dim via an in-VMEM im2col
    slab (requires cin % 8 == 0 so every slab store is sublane-aligned)."""
    tl = o_ref.shape[2]
    _stitch(x_ref, xh_ref, xbuf_ref, tl)
    for t in range(kh * kw):                          # static unroll: fill the slab
        i, j = divmod(t, kw)
        s = i * wrow + j                              # static shift, s <= halo_pad
        slab_ref[t * cin:(t + 1) * cin, :] = xbuf_ref[:, s:s + tl]
    o_ref[0] = jnp.dot(w_ref[...], slab_ref[...], preferred_element_type=jnp.float32)


def _conv_taps_kernel(w_ref, x_ref, xh_ref, o_ref, xbuf_ref, *, kh, kw, wrow):
    """Fallback for cin % 8 != 0: unrolled shifted-tap matmuls accumulated in vregs.
    TODO(synk): dense fold with sublane-offset slab stores would also cover this case."""
    tl = o_ref.shape[2]
    _stitch(x_ref, xh_ref, xbuf_ref, tl)
    acc = jnp.zeros((o_ref.shape[1], tl), jnp.float32)
    for t in range(kh * kw):
        i, j = divmod(t, kw)
        s = i * wrow + j
        acc = acc + jnp.dot(w_ref[t], xbuf_ref[:, s:s + tl],
                            preferred_element_type=jnp.float32)
    o_ref[0] = acc


def _conv_rbf_kernel(scal_ref, cent_ref, w_ref, rbfw_ref, x_ref, xh_ref, o_ref, xbuf_ref,
                     *, kh, kw, wrow, chunk):
    """Conv fused with the Gaussian-RBF mixture, lane-chunked to bound vreg pressure."""
    tl = o_ref.shape[2]
    n_out = o_ref.shape[1]
    _stitch(x_ref, xh_ref, xbuf_ref, tl)
    sp = scal_ref[0]                                  # sqrt(rbf_precision)      (SMEM scalar)
    lb_s = scal_ref[1]                                # lb * sqrt(precision)
    ub_s = scal_ref[2]                                # ub * sqrt(precision)
    n_taps = kh * kw
    n_cent = cent_ref.shape[0]
    for c0 in range(0, tl, chunk):                    # static lane-chunk loop
        cw = min(chunk, tl - c0)                      # 128-multiple (tl, c0, chunk all are)
        acc = jnp.zeros((n_out, cw), jnp.float32)
        for t in range(n_taps):
            i, j = divmod(t, kw)
            s = i * wrow + j + c0
            acc = acc + jnp.dot(w_ref[t], xbuf_ref[:, s:s + cw],
                                preferred_element_type=jnp.float32)
        u = jnp.clip(acc * sp, lb_s, ub_s)            # pre-scaled: no per-center prec multiply
        res = jnp.zeros_like(u)
        for m in range(n_cent):                       # centers are pre-scaled by sqrt(prec)
            d = u - cent_ref[m]
            res = res + rbfw_ref[:, m:m + 1] * jnp.exp(-(d * d))
        o_ref[0, :, c0:c0 + cw] = res


def _residual_kernel(stdn_ref, alpha_ref, x_ref, y_ref, z_ref, o_ref):
    n = pl.program_id(0)
    s2 = stdn_ref[n] * stdn_ref[n]                    # per-image noise level from SMEM
    a = alpha_ref[0]                                  # learnable alpha_prox from SMEM
    x = x_ref[...]
    o_ref[...] = x - s2 * (z_ref[...] + a * (x - y_ref[...]))


# ----------------------------- Pallas wrappers ----------------------------- #
def shifted_conv_pallas(img, w, kh, kw, rbf=None, tile=LANE_TILE):
    """Valid 2-D correlation with in-kernel windowing on the row-flattened image (no HBM im2col).

    img: (N, Cin, Hi, Wi) f32;  w: (Cout, Cin, kh, kw) f32
    rbf: optional (rbf_weights (Cout, M), rbf_centers (M,), precision, lb, ub) fused elementwise.
    Returns (N, Cout, Hi-kh+1, Wi-kw+1) f32.
    """
    N, Cin, Hi, Wi = img.shape
    Cout = w.shape[0]
    KK = kh * kw
    Ho, Wo = Hi - kh + 1, Wi - kw + 1

    halo = (kh - 1) * Wi + (kw - 1)                   # max flattened tap shift
    halo_pad = _round_up(halo, 128)                   # narrow halo block; divides tl
    lout = Ho * Wi                                    # flattened output positions
    tl = max(halo_pad, min(_round_up(tile, halo_pad), _round_up(lout, halo_pad)))
    nt = pl.cdiv(lout, tl)
    lf = nt * tl + halo_pad                           # tail so the halo block never reads OOB

    # TODO(synk): stream xflat / v / weights in bf16 (f32 MXU accumulation) on v6e/v7x for ~2x
    #             less DMA; kept f32 here to preserve the tight reference check.
    xflat = jnp.pad(img.reshape(N, Cin, Hi * Wi).astype(jnp.float32),
                    ((0, 0), (0, 0), (0, lf - Hi * Wi)))

    x_spec = pl.BlockSpec((1, Cin, tl), lambda n, t: (n, 0, t))
    halo_ratio = tl // halo_pad
    halo_spec = pl.BlockSpec((1, Cin, halo_pad), lambda n, t: (n, 0, (t + 1) * halo_ratio))
    out_spec = pl.BlockSpec((1, Cout, tl), lambda n, t: (n, 0, t))
    scratch = [pltpu.VMEM((Cin, tl + halo_pad), jnp.float32)]

    if rbf is not None:
        rbf_w, centers, prec, lb, ub = rbf
        M = centers.shape[0]
        sp = jnp.sqrt(jnp.asarray(prec, jnp.float32))
        scal = jnp.stack([sp, sp * jnp.asarray(lb, jnp.float32),
                          sp * jnp.asarray(ub, jnp.float32)])
        w_taps = w.transpose(2, 3, 0, 1).reshape(KK, Cout, Cin).astype(jnp.float32)
        kernel = functools.partial(_conv_rbf_kernel, kh=kh, kw=kw, wrow=Wi,
                                   chunk=min(RBF_LANE_CHUNK, tl))
        smem = pl.BlockSpec(memory_space=pltpu.MemorySpace.SMEM)
        in_specs = [smem, smem,
                    pl.BlockSpec((KK, Cout, Cin), lambda n, t: (0, 0, 0)),
                    pl.BlockSpec((Cout, M), lambda n, t: (0, 0)),
                    x_spec, halo_spec]
        args = (scal, sp * centers.astype(jnp.float32),
                w_taps, rbf_w.astype(jnp.float32), xflat, xflat)
    elif Cin % 8 == 0:
        # Fold the kh*kw taps into one wide-K contraction (im2col slab never leaves VMEM).
        w_stack = w.transpose(0, 2, 3, 1).reshape(Cout, KK * Cin).astype(jnp.float32)
        kernel = functools.partial(_conv_fold_kernel, kh=kh, kw=kw, wrow=Wi, cin=Cin)
        in_specs = [pl.BlockSpec((Cout, KK * Cin), lambda n, t: (0, 0)), x_spec, halo_spec]
        args = (w_stack, xflat, xflat)
        scratch = scratch + [pltpu.VMEM((KK * Cin, tl), jnp.float32)]
    else:
        w_taps = w.transpose(2, 3, 0, 1).reshape(KK, Cout, Cin).astype(jnp.float32)
        kernel = functools.partial(_conv_taps_kernel, kh=kh, kw=kw, wrow=Wi)
        in_specs = [pl.BlockSpec((KK, Cout, Cin), lambda n, t: (0, 0, 0)), x_spec, halo_spec]
        args = (w_taps, xflat, xflat)

    out_flat = pl.pallas_call(
        kernel,
        out_shape=jax.ShapeDtypeStruct((N, Cout, nt * tl), jnp.float32),
        grid=(N, nt),
        in_specs=in_specs,
        out_specs=out_spec,
        scratch_shapes=scratch,
        compiler_params=pltpu.CompilerParams(
            dimension_semantics=("parallel", "parallel"),
            vmem_limit_bytes=_VMEM_LIMIT),
    )(*args)

    # Drop the flattened-layout tail and the wrap-around/garbage columns.
    return out_flat[:, :, :lout].reshape(N, Cout, Ho, Wi)[:, :, :, :Wo]


def residual_pallas(x, net_input, z, stdn, alpha, lanes=512, row_block=8):
    """out = x - stdn^2 * (z + alpha * (x - net_input)) on lane-dense (row_block, lanes) blocks."""
    N, C, H, W = x.shape
    chw = C * H * W
    rows = pl.cdiv(chw, lanes)
    rb = min(row_block, rows)
    rows_p = _round_up(rows, rb)
    chw_p = rows_p * lanes

    def prep(t):
        t = t.reshape(N, chw).astype(jnp.float32)
        if chw_p != chw:                               # skip pad when already lane-aligned
            t = jnp.pad(t, ((0, 0), (0, chw_p - chw)))
        return t.reshape(N, rows_p, lanes)

    x3, y3, z3 = prep(x), prep(net_input), prep(z)
    blk = pl.BlockSpec((1, rb, lanes), lambda n, r: (n, r, 0))
    smem = pl.BlockSpec(memory_space=pltpu.MemorySpace.SMEM)
    out = pl.pallas_call(
        _residual_kernel,
        out_shape=jax.ShapeDtypeStruct((N, rows_p, lanes), jnp.float32),
        grid=(N, rows_p // rb),
        in_specs=[smem, smem, blk, blk, blk],
        out_specs=blk,
        compiler_params=pltpu.CompilerParams(
            dimension_semantics=("parallel", "parallel"),
            vmem_limit_bytes=_VMEM_LIMIT),
    )(stdn.astype(jnp.float32), alpha.astype(jnp.float32), x3, y3, z3)
    if chw_p != chw:
        out = out.reshape(N, chw_p)[:, :chw]
    return out.reshape(N, C, H, W)


# --------------------------------- Glue ------------------------------------ #
def _dct1d(n):
    k = jnp.arange(n, dtype=jnp.float32)[:, None]
    i = jnp.arange(n, dtype=jnp.float32)[None, :]
    m = jnp.sqrt(2.0 / n) * jnp.cos(jnp.pi * (2.0 * i + 1.0) * k / (2.0 * n))
    return m.at[0].set(m[0] / jnp.sqrt(2.0))


def dct_conv_init(F, C, kh, kw):
    # Deterministic 2-D DCT filter bank (mimics pydl init.dct); skips the DC atom.
    basis = jnp.kron(_dct1d(kh), _dct1d(kw))          # (kh*kw, kh*kw)
    n = kh * kw
    idx = (jnp.arange(F * C) % (n - 1)) + 1
    return basis[idx].reshape(F, C, kh, kw).astype(jnp.float32)


def normalize_weights(w, scale_f, normalized, zero_mean):
    if zero_mean:
        w = w - w.mean(axis=(1, 2, 3), keepdims=True)
    if normalized:
        nrm = jnp.sqrt(jnp.sum(w * w, axis=(1, 2, 3), keepdims=True)) + 1e-12
        w = w / nrm
        if scale_f is not None:
            w = w * scale_f[:, None, None, None]
    return w


def sym_pad_adjoint(z, pad):
    # Adjoint of 'symmetric' padding. z: (N, C, H+pt+pb, W+pl+pr); pad = (pt, pb, pl, pr)
    # TODO(synk): scatter-add style pad transpose kept as host-side XLA ops (tiny, image-sized).
    pt, pb, pL, pr = pad
    H2, W2 = z.shape[2], z.shape[3]
    core = z[:, :, pt:H2 - pb, :]
    if pt:
        core = core.at[:, :, :pt, :].add(z[:, :, :pt, :][:, :, ::-1, :])
    if pb:
        core = core.at[:, :, -pb:, :].add(z[:, :, H2 - pb:, :][:, :, ::-1, :])
    z = core
    core = z[:, :, :, pL:W2 - pr]
    if pL:
        core = core.at[:, :, :, :pL].add(z[:, :, :, :pL][:, :, :, ::-1])
    if pr:
        core = core.at[:, :, :, -pr:].add(z[:, :, :, W2 - pr:][:, :, :, ::-1])
    return core


def residual_rbf_layer_forward(x, stdn, rbf_data, net_input, params, cfg):
    del rbf_data  # exact RBF evaluated in-kernel (see TODO at top of file)
    if net_input is None:
        net_input = x
    kh, kw = cfg["kernel_size"]
    pt, pb, pL, pr = cfg["pad"]

    w = normalize_weights(params["conv_weights"], params["scale_f"],
                          cfg["normalizedWeights"], cfg["zeroMeanWeights"])

    # ---- u = K x fused with the Gaussian-RBF mixture (symmetric pad + valid correlation)
    xpad = jnp.pad(x, ((0, 0), (0, 0), (pt, pb), (pL, pr)), mode="symmetric")
    v = shifted_conv_pallas(
        xpad, w, kh, kw,
        rbf=(params["rbf_weights"], params["rbf_centers"],
             cfg["rbf_precision"], cfg["lb"], cfg["ub"]))

    # ---- z = K^T v : zero pad, valid correlation with flipped/transposed weights, pad adjoint
    # TODO(synk): fuse conv1+RBF+conv2 into one kernel (second halo) so v never round-trips HBM.
    vzp = jnp.pad(v, ((0, 0), (0, 0), (kh - 1, kh - 1), (kw - 1, kw - 1)))
    wt = jnp.flip(w, (-2, -1)).transpose(1, 0, 2, 3)                 # (C, F, kh, kw)
    zfull = shifted_conv_pallas(vzp, wt, kh, kw)
    z = sym_pad_adjoint(zfull, (pt, pb, pL, pr))                     # (N, C, H, W)

    # ---- proximal residual combine (alpha/stdn stay device scalars -> jit/grad friendly)
    alpha = params["alpha_prox"]
    if alpha is None:
        alpha = jnp.zeros((1,), jnp.float32)
    return residual_pallas(x, net_input, z, stdn, alpha)


# ------------------------- Pure-XLA reference check ------------------------ #
def reference_forward(x, stdn, net_input, params, cfg):
    if net_input is None:
        net_input = x
    kh, kw = cfg["kernel_size"]
    pt, pb, pL, pr = cfg["pad"]
    w = normalize_weights(params["conv_weights"], params["scale_f"],
                          cfg["normalizedWeights"], cfg["zeroMeanWeights"])
    dn = ("NCHW", "OIHW", "NCHW")
    xpad = jnp.pad(x, ((0, 0), (0, 0), (pt, pb), (pL, pr)), mode="symmetric")
    u = lax.conv_general_dilated(xpad, w, (1, 1), "VALID", dimension_numbers=dn)
    u = jnp.clip(u, cfg["lb"], cfg["ub"])
    c = params["rbf_centers"]
    g = jnp.exp(-cfg["rbf_precision"] * (u[..., None] - c) ** 2)
    v = jnp.sum(g * params["rbf_weights"][None, :, None, None, :], axis=-1)
    vzp = jnp.pad(v, ((0, 0), (0, 0), (kh - 1, kh - 1), (kw - 1, kw - 1)))
    wt = jnp.flip(w, (-2, -1)).transpose(1, 0, 2, 3)
    zfull = lax.conv_general_dilated(vzp, wt, (1, 1), "VALID", dimension_numbers=dn)
    z = sym_pad_adjoint(zfull, (pt, pb, pL, pr))
    alpha = params["alpha_prox"][0] if params["alpha_prox"] is not None else 0.0
    s2 = (stdn.astype(jnp.float32) ** 2)[:, None, None, None]
    return x - s2 * (z + alpha * (x - net_input))


# --------------------------------- Main ------------------------------------ #
if __name__ == "__main__":
    key = jax.random.PRNGKey(0)
    N, C, H, W = 2, 4, 16, 16           # batch, input_channels, spatial
    F, M = 8, 16                        # output_features, rbf_mixtures
    kh = kw = 5                         # kernel_size -> pad 'same' = (2, 2, 2, 2)
    lb, ub = -100.0, 100.0
    delta = (ub - lb) / (M - 1)

    cfg = dict(kernel_size=(kh, kw), pad=(2, 2, 2, 2), padType="symmetric",
               rbf_precision=float(1.0 / (2.0 * delta * delta)),
               lb=lb, ub=ub, normalizedWeights=True, zeroMeanWeights=True)

    params = dict(
        conv_weights=dct_conv_init(F, C, kh, kw),                       # (F, C, kh, kw), init.dct
        scale_f=jnp.full((F,), 0.1, jnp.float32),                       # scale_f.fill_(0.1)
        alpha_prox=jnp.full((1,), 0.1, jnp.float32),                    # alpha_prox.fill_(0.1)
        rbf_weights=jnp.full((F, M), 1e-4, jnp.float32),                # rbf_weights.fill_(1e-4)
        rbf_centers=jnp.linspace(lb, ub, M, dtype=jnp.float32),         # linspace(lb, ub, M)
    )

    x = jax.random.normal(key, (N, C, H, W), jnp.float32)
    stdn = jnp.full((N,), 25.0 / 255.0, jnp.float32)
    # rbf_data: precomputed Gaussian-RBF LUT, as pydl passes at call time (unused here).
    grid_pts = jnp.linspace(lb, ub, 64, dtype=jnp.float32)
    rbf_data = jnp.exp(-cfg["rbf_precision"] *
                       (grid_pts[:, None] - params["rbf_centers"][None, :]) ** 2)

    out = residual_rbf_layer_forward(x, stdn, rbf_data, None, params, cfg)
    jax.block_until_ready(out)
    assert out.shape == (N, C, H, W) and out.dtype == jnp.float32

    ref = reference_forward(x, stdn, None, params, cfg)
    assert bool(jnp.allclose(out, ref, rtol=1e-4, atol=1e-5)), "Pallas result differs from reference"
    print("KERNEL_OK")
</pallas_src>

<mosaic_0001>
module attributes {stable_mosaic.version = 11 : i64} {
  func.func @_conv_rbf_kernel(%arg0: i32, %arg1: i32, %arg2: memref<3xf32, #tpu.memory_space<smem>>, %arg3: memref<16xf32, #tpu.memory_space<smem>>, %arg4: memref<25x8x4xf32, #tpu.memory_space<vmem>>, %arg5: memref<8x16xf32, #tpu.memory_space<vmem>>, %arg6: memref<1x4x384xf32, #tpu.memory_space<vmem>>, %arg7: memref<1x4x128xf32, #tpu.memory_space<vmem>>, %arg8: memref<1x8x384xf32, #tpu.memory_space<vmem>>, %arg9: memref<4x512xf32, #tpu.memory_space<vmem>>) attributes {dimension_semantics = [#tpu.dimension_semantics<parallel>, #tpu.dimension_semantics<parallel>], iteration_bounds = array<i64: 2, 1>, scalar_prefetch = 0 : i64, scratch_operands = 1 : i64, tpu.core_type = #tpu.core_type<tc>, window_params = [{transform_indices = @transform_0, window_bounds = array<i64: 3>}, {transform_indices = @transform_1, window_bounds = array<i64: 16>}, {pipeline_mode = #tpu.pipeline_mode<synchronous>, transform_indices = @transform_2, window_bounds = array<i64: 25, 8, 4>}, {pipeline_mode = #tpu.pipeline_mode<synchronous>, transform_indices = @transform_3, window_bounds = array<i64: 8, 16>}, {transform_indices = @transform_4, window_bounds = array<i64: 1, 4, 384>}, {transform_indices = @transform_5, window_bounds = array<i64: 1, 4, 128>}, {transform_indices = @transform_6, window_bounds = array<i64: 1, 8, 384>}]} {
    %c0 = arith.constant 0 : index
    %c0_0 = arith.constant 0 : index
    %c0_1 = arith.constant 0 : index
    %0 = vector.load %arg6[%c0, %c0_0, %c0_1] : memref<1x4x384xf32, #tpu.memory_space<vmem>>, vector<1x4x384xf32>
    %1 = vector.shape_cast %0 : vector<1x4x384xf32> to vector<4x384xf32>
    %c0_2 = arith.constant 0 : index
    %c0_3 = arith.constant 0 : index
    %2 = vector.load %arg9[%c0_2, %c0_3] : memref<4x512xf32, #tpu.memory_space<vmem>>, vector<4x384xf32>
    tpu.vector_store %arg9[%c0_2, %c0_3], %1 {strides = array<i32>} : memref<4x512xf32, #tpu.memory_space<vmem>>, vector<4x384xf32>,
    %c0_4 = arith.constant 0 : index
    %c0_5 = arith.constant 0 : index
    %c0_6 = arith.constant 0 : index
    %3 = vector.load %arg7[%c0_4, %c0_5, %c0_6] : memref<1x4x128xf32, #tpu.memory_space<vmem>>, vector<1x4x128xf32>
    %4 = vector.shape_cast %3 : vector<1x4x128xf32> to vector<4x128xf32>
    %c0_7 = arith.constant 0 : index
    %c384 = arith.constant 384 : index
    %5 = vector.load %arg9[%c0_7, %c384] : memref<4x512xf32, #tpu.memory_space<vmem>>, vector<4x128xf32>
    tpu.vector_store %arg9[%c0_7, %c384], %4 {strides = array<i32>} : memref<4x512xf32, #tpu.memory_space<vmem>>, vector<4x128xf32>,
    %c0_8 = arith.constant 0 : index
    %6 = memref.load %arg2[%c0_8] : memref<3xf32, #tpu.memory_space<smem>>
    %c1 = arith.constant 1 : index
    %7 = memref.load %arg2[%c1] : memref<3xf32, #tpu.memory_space<smem>>
    %c2 = arith.constant 2 : index
    %8 = memref.load %arg2[%c2] : memref<3xf32, #tpu.memory_space<smem>>
    %cst = arith.constant 0.000000e+00 : f32
    %9 = vector.broadcast %cst : f32 to vector<8x256xf32>
    %c0_9 = arith.constant 0 : index
    %c0_10 = arith.constant 0 : index
    %c0_11 = arith.constant 0 : index
    %10 = vector.load %arg4[%c0_9, %c0_10, %c0_11] : memref<25x8x4xf32, #tpu.memory_space<vmem>>, vector<1x8x4xf32>
    %11 = vector.shape_cast %10 : vector<1x8x4xf32> to vector<8x4xf32>
    %c0_12 = arith.constant 0 : index
    %c0_13 = arith.constant 0 : index
    %12 = vector.load %arg9[%c0_12, %c0_13] : memref<4x512xf32, #tpu.memory_space<vmem>>, vector<4x256xf32>
    %cst_14 = arith.constant dense<0.000000e+00> : vector<8x256xf32>
    %13 = tpu.matmul %11, %12, %cst_14 {dimension_numbers = #tpu.dot_dimension_numbers<[1], [0], [0], [1], [0, 0, 1, 1], [], []>} : vector<8x4xf32>, vector<4x256xf32>, vector<8x256xf32> -> vector<8x256xf32>
    %14 = arith.addf %9, %13 : vector<8x256xf32>
    %c1_15 = arith.constant 1 : index
    %c0_16 = arith.constant 0 : index
    %c0_17 = arith.constant 0 : index
    %15 = vector.load %arg4[%c1_15, %c0_16, %c0_17] : memref<25x8x4xf32, #tpu.memory_space<vmem>>, vector<1x8x4xf32>
    %16 = vector.shape_cast %15 : vector<1x8x4xf32> to vector<8x4xf32>
    %c0_18 = arith.constant 0 : index
    %c1_19 = arith.constant 1 : index
    %17 = vector.load %arg9[%c0_18, %c1_19] : memref<4x512xf32, #tpu.memory_space<vmem>>, vector<4x256xf32>
    %cst_20 = arith.constant dense<0.000000e+00> : vector<8x256xf32>
    %18 = tpu.matmul %16, %17, %cst_20 {dimension_numbers = #tpu.dot_dimension_numbers<[1], [0], [0], [1], [0, 0, 1, 1], [], []>} : vector<8x4xf32>, vector<4x256xf32>, vector<8x256xf32> -> vector<8x256xf32>
    %19 = arith.addf %14, %18 : vector<8x256xf32>
    %c2_21 = arith.constant 2 : index
    %c0_22 = arith.constant 0 : index
    %c0_23 = arith.constant 0 : index
    %20 = vector.load %arg4[%c2_21, %c0_22, %c0_23] : memref<25x8x4xf32, #tpu.memory_space<vmem>>, vector<1x8x4xf32>
    %21 = vector.shape_cast %20 : vector<1x8x4xf32> to vector<8x4xf32>
    %c0_24 = arith.constant 0 : index
    %c2_25 = arith.constant 2 : index
    %22 = vector.load %arg9[%c0_24, %c2_25] : memref<4x512xf32, #tpu.memory_space<vmem>>, vector<4x256xf32>
    %cst_26 = arith.constant dense<0.000000e+00> : vector<8x256xf32>
    %23 = tpu.matmul %21, %22, %cst_26 {dimension_numbers = #tpu.dot_dimension_numbers<[1], [0], [0], [1], [0, 0, 1, 1], [], []>} : vector<8x4xf32>, vector<4x256xf32>, vector<8x256xf32> -> vector<8x256xf32>
    %24 = arith.addf %19, %23 : vector<8x256xf32>
    %c3 = arith.constant 3 : index
    %c0_27 = arith.constant 0 : index
    %c0_28 = arith.constant 0 : index
    %25 = vector.load %arg4[%c3, %c0_27, %c0_28] : memref<25x8x4xf32, #tpu.memory_space<vmem>>, vector<1x8x4xf32>
    %26 = vector.shape_cast %25 : vector<1x8x4xf32> to vector<8x4xf32>
    %c0_29 = arith.constant 0 : index
    %c3_30 = arith.constant 3 : index
    %27 = vector.load %arg9[%c0_29, %c3_30] : memref<4x512xf32, #tpu.memory_space<vmem>>, vector<4x256xf32>
    %cst_31 = arith.constant dense<0.000000e+00> : vector<8x256xf32>
    %28 = tpu.matmul %26, %27, %cst_31 {dimension_numbers = #tpu.dot_dimension_numbers<[1], [0], [0], [1], [0, 0, 1, 1], [], []>} : vector<8x4xf32>, vector<4x256xf32>, vector<8x256xf32> -> vector<8x256xf32>
    %29 = arith.addf %24, %28 : vector<8x256xf32>
    %c4 = arith.constant 4 : index
    %c0_32 = arith.constant 0 : index
    %c0_33 = arith.constant 0 : index
    %30 = vector.load %arg4[%c4, %c0_32, %c0_33] : memref<25x8x4xf32, #tpu.memory_space<vmem>>, vector<1x8x4xf32>
    %31 = vector.shape_cast %30 : vector<1x8x4xf32> to vector<8x4xf32>
    %c0_34 = arith.constant 0 : index
    %c4_35 = arith.constant 4 : index
    %32 = vector.load %arg9[%c0_34, %c4_35] : memref<4x512xf32, #tpu.memory_space<vmem>>, vector<4x256xf32>
    %cst_36 = arith.constant dense<0.000000e+00> : vector<8x256xf32>
    %33 = tpu.matmul %31, %32, %cst_36 {dimension_numbers = #tpu.dot_dimension_numbers<[1], [0], [0], [1], [0, 0, 1, 1], [], []>} : vector<8x4xf32>, vector<4x256xf32>, vector<8x256xf32> -> vector<8x256xf32>
    %34 = arith.addf %29, %33 : vector<8x256xf32>
    %c5 = arith.constant 5 : index
    %c0_37 = arith.constant 0 : index
    %c0_38 = arith.constant 0 : index
    %35 = vector.load %arg4[%c5, %c0_37, %c0_38] : memref<25x8x4xf32, #tpu.memory_space<vmem>>, vector<1x8x4xf32>
    %36 = vector.shape_cast %35 : vector<1x8x4xf32> to vector<8x4xf32>
    %c0_39 = arith.constant 0 : index
    %c20 = arith.constant 20 : index
    %37 = vector.load %arg9[%c0_39, %c20] : memref<4x512xf32, #tpu.memory_space<vmem>>, vector<4x256xf32>
    %cst_40 = arith.constant dense<0.000000e+00> : vector<8x256xf32>
    %38 = tpu.matmul %36, %37, %cst_40 {dimension_numbers = #tpu.dot_dimension_numbers<[1], [0], [0], [1], [0, 0, 1, 1], [], []>} : vector<8x4xf32>, vector<4x256xf32>, vector<8x256xf32> -> vector<8x256xf32>
    %39 = arith.addf %34, %38 : vector<8x256xf32>
    %c6 = arith.constant 6 : index
    %c0_41 = arith.constant 0 : index
    %c0_42 = arith.constant 0 : index
    %40 = vector.load %arg4[%c6, %c0_41, %c0_42] : memref<25x8x4xf32, #tpu.memory_space<vmem>>, vector<1x8x4xf32>
    %41 = vector.shape_cast %40 : vector<1x8x4xf32> to vector<8x4xf32>
    %c0_43 = arith.constant 0 : index
    %c21 = arith.constant 21 : index
    %42 = vector.load %arg9[%c0_43, %c21] : memref<4x512xf32, #tpu.memory_space<vmem>>, vector<4x256xf32>
    %cst_44 = arith.constant dense<0.000000e+00> : vector<8x256xf32>
    %43 = tpu.matmul %41, %42, %cst_44 {dimension_numbers = #tpu.dot_dimension_numbers<[1], [0], [0], [1], [0, 0, 1, 1], [], []>} : vector<8x4xf32>, vector<4x256xf32>, vector<8x256xf32> -> vector<8x256xf32>
    %44 = arith.addf %39, %43 : vector<8x256xf32>
    %c7 = arith.constant 7 : index
    %c0_45 = arith.constant 0 : index
    %c0_46 = arith.constant 0 : index
    %45 = vector.load %arg4[%c7, %c0_45, %c0_46] : memref<25x8x4xf32, #tpu.memory_space<vmem>>, vector<1x8x4xf32>
    %46 = vector.shape_cast %45 : vector<1x8x4xf32> to vector<8x4xf32>
    %c0_47 = arith.constant 0 : index
    %c22 = arith.constant 22 : index
    %47 = vector.load %arg9[%c0_47, %c22] : memref<4x512xf32, #tpu.memory_space<vmem>>, vector<4x256xf32>
    %cst_48 = arith.constant dense<0.000000e+00> : vector<8x256xf32>
    %48 = tpu.matmul %46, %47, %cst_48 {dimension_numbers = #tpu.dot_dimension_numbers<[1], [0], [0], [1], [0, 0, 1, 1], [], []>} : vector<8x4xf32>, vector<4x256xf32>, vector<8x256xf32> -> vector<8x256xf32>
    %49 = arith.addf %44, %48 : vector<8x256xf32>
    %c8 = arith.constant 8 : index
    %c0_49 = arith.constant 0 : index
    %c0_50 = arith.constant 0 : index
    %50 = vector.load %arg4[%c8, %c0_49, %c0_50] : memref<25x8x4xf32, #tpu.memory_space<vmem>>, vector<1x8x4xf32>
    %51 = vector.shape_cast %50 : vector<1x8x4xf32> to vector<8x4xf32>
    %c0_51 = arith.constant 0 : index
    %c23 = arith.constant 23 : index
    %52 = vector.load %arg9[%c0_51, %c23] : memref<4x512xf32, #tpu.memory_space<vmem>>, vector<4x256xf32>
    %cst_52 = arith.constant dense<0.000000e+00> : vector<8x256xf32>
    %53 = tpu.matmul %51, %52, %cst_52 {dimension_numbers = #tpu.dot_dimension_numbers<[1], [0], [0], [1], [0, 0, 1, 1], [], []>} : vector<8x4xf32>, vector<4x256xf32>, vector<8x256xf32> -> vector<8x256xf32>
    %54 = arith.addf %49, %53 : vector<8x256xf32>
    %c9 = arith.constant 9 : index
    %c0_53 = arith.constant 0 : index
    %c0_54 = arith.constant 0 : index
    %55 = vector.load %arg4[%c9, %c0_53, %c0_54] : memref<25x8x4xf32, #tpu.memory_space<vmem>>, vector<1x8x4xf32>
    %56 = vector.shape_cast %55 : vector<1x8x4xf32> to vector<8x4xf32>
    %c0_55 = arith.constant 0 : index
    %c24 = arith.constant 24 : index
    %57 = vector.load %arg9[%c0_55, %c24] : memref<4x512xf32, #tpu.memory_space<vmem>>, vector<4x256xf32>
    %cst_56 = arith.constant dense<0.000000e+00> : vector<8x256xf32>
    %58 = tpu.matmul %56, %57, %cst_56 {dimension_numbers = #tpu.dot_dimension_numbers<[1], [0], [0], [1], [0, 0, 1, 1], [], []>} : vector<8x4xf32>, vector<4x256xf32>, vector<8x256xf32> -> vector<8x256xf32>
    %59 = arith.addf %54, %58 : vector<8x256xf32>
    %c10 = arith.constant 10 : index
    %c0_57 = arith.constant 0 : index
    %c0_58 = arith.constant 0 : index
    %60 = vector.load %arg4[%c10, %c0_57, %c0_58] : memref<25x8x4xf32, #tpu.memory_space<vmem>>, vector<1x8x4xf32>
    %61 = vector.shape_cast %60 : vector<1x8x4xf32> to vector<8x4xf32>
    %c0_59 = arith.constant 0 : index
    %c40 = arith.constant 40 : index
    %62 = vector.load %arg9[%c0_59, %c40] : memref<4x512xf32, #tpu.memory_space<vmem>>, vector<4x256xf32>
    %cst_60 = arith.constant dense<0.000000e+00> : vector<8x256xf32>
    %63 = tpu.matmul %61, %62, %cst_60 {dimension_numbers = #tpu.dot_dimension_numbers<[1], [0], [0], [1], [0, 0, 1, 1], [], []>} : vector<8x4xf32>, vector<4x256xf32>, vector<8x256xf32> -> vector<8x256xf32>
    %64 = arith.addf %59, %63 : vector<8x256xf32>
    %c11 = arith.constant 11 : index
    %c0_61 = arith.constant 0 : index
    %c0_62 = arith.constant 0 : index
    %65 = vector.load %arg4[%c11, %c0_61, %c0_62] : memref<25x8x4xf32, #tpu.memory_space<vmem>>, vector<1x8x4xf32>
    %66 = vector.shape_cast %65 : vector<1x8x4xf32> to vector<8x4xf32>
    %c0_63 = arith.constant 0 : index
    %c41 = arith.constant 41 : index
    %67 = vector.load %arg9[%c0_63, %c41] : memref<4x512xf32, #tpu.memory_space<vmem>>, vector<4x256xf32>
    %cst_64 = arith.constant dense<0.000000e+00> : vector<8x256xf32>
    %68 = tpu.matmul %66, %67, %cst_64 {dimension_numbers = #tpu.dot_dimension_numbers<[1], [0], [0], [1], [0, 0, 1, 1], [], []>} : vector<8x4xf32>, vector<4x256xf32>, vector<8x256xf32> -> vector<8x256xf32>
    %69 = arith.addf %64, %68 : vector<8x256xf32>
    %c12 = arith.constant 12 : index
    %c0_65 = arith.constant 0 : index
    %c0_66 = arith.constant 0 : index
    %70 = vector.load %arg4[%c12, %c0_65, %c0_66] : memref<25x8x4xf32, #tpu.memory_space<vmem>>, vector<1x8x4xf32>
    %71 = vector.shape_cast %70 : vector<1x8x4xf32> to vector<8x4xf32>
    %c0_67 = arith.constant 0 : index
    %c42 = arith.constant 42 : index
    %72 = vector.load %arg9[%c0_67, %c42] : memref<4x512xf32, #tpu.memory_space<vmem>>, vector<4x256xf32>
    %cst_68 = arith.constant dense<0.000000e+00> : vector<8x256xf32>
    %73 = tpu.matmul %71, %72, %cst_68 {dimension_numbers = #tpu.dot_dimension_numbers<[1], [0], [0], [1], [0, 0, 1, 1], [], []>} : vector<8x4xf32>, vector<4x256xf32>, vector<8x256xf32> -> vector<8x256xf32>
    %74 = arith.addf %69, %73 : vector<8x256xf32>
    %c13 = arith.constant 13 : index
    %c0_69 = arith.constant 0 : index
    %c0_70 = arith.constant 0 : index
    %75 = vector.load %arg4[%c13, %c0_69, %c0_70] : memref<25x8x4xf32, #tpu.memory_space<vmem>>, vector<1x8x4xf32>
    %76 = vector.shape_cast %75 : vector<1x8x4xf32> to vector<8x4xf32>
    %c0_71 = arith.constant 0 : index
    %c43 = arith.constant 43 : index
    %77 = vector.load %arg9[%c0_71, %c43] : memref<4x512xf32, #tpu.memory_space<vmem>>, vector<4x256xf32>
    %cst_72 = arith.constant dense<0.000000e+00> : vector<8x256xf32>
    %78 = tpu.matmul %76, %77, %cst_72 {dimension_numbers = #tpu.dot_dimension_numbers<[1], [0], [0], [1], [0, 0, 1, 1], [], []>} : vector<8x4xf32>, vector<4x256xf32>, vector<8x256xf32> -> vector<8x256xf32>
    %79 = arith.addf %74, %78 : vector<8x256xf32>
    %c14 = arith.constant 14 : index
    %c0_73 = arith.constant 0 : index
    %c0_74 = arith.constant 0 : index
    %80 = vector.load %arg4[%c14, %c0_73, %c0_74] : memref<25x8x4xf32, #tpu.memory_space<vmem>>, vector<1x8x4xf32>
    %81 = vector.shape_cast %80 : vector<1x8x4xf32> to vector<8x4xf32>
    %c0_75 = arith.constant 0 : index
    %c44 = arith.constant 44 : index
    %82 = vector.load %arg9[%c0_75, %c44] : memref<4x512xf32, #tpu.memory_space<vmem>>, vector<4x256xf32>
    %cst_76 = arith.constant dense<0.000000e+00> : vector<8x256xf32>
    %83 = tpu.matmul %81, %82, %cst_76 {dimension_numbers = #tpu.dot_dimension_numbers<[1], [0], [0], [1], [0, 0, 1, 1], [], []>} : vector<8x4xf32>, vector<4x256xf32>, vector<8x256xf32> -> vector<8x256xf32>
    %84 = arith.addf %79, %83 : vector<8x256xf32>
    %c15 = arith.constant 15 : index
    %c0_77 = arith.constant 0 : index
    %c0_78 = arith.constant 0 : index
    %85 = vector.load %arg4[%c15, %c0_77, %c0_78] : memref<25x8x4xf32, #tpu.memory_space<vmem>>, vector<1x8x4xf32>
    %86 = vector.shape_cast %85 : vector<1x8x4xf32> to vector<8x4xf32>
    %c0_79 = arith.constant 0 : index
    %c60 = arith.constant 60 : index
    %87 = vector.load %arg9[%c0_79, %c60] : memref<4x512xf32, #tpu.memory_space<vmem>>, vector<4x256xf32>
    %cst_80 = arith.constant dense<0.000000e+00> : vector<8x256xf32>
    %88 = tpu.matmul %86, %87, %cst_80 {dimension_numbers = #tpu.dot_dimension_numbers<[1], [0], [0], [1], [0, 0, 1, 1], [], []>} : vector<8x4xf32>, vector<4x256xf32>, vector<8x256xf32> -> vector<8x256xf32>
    %89 = arith.addf %84, %88 : vector<8x256xf32>
    %c16 = arith.constant 16 : index
    %c0_81 = arith.constant 0 : index
    %c0_82 = arith.constant 0 : index
    %90 = vector.load %arg4[%c16, %c0_81, %c0_82] : memref<25x8x4xf32, #tpu.memory_space<vmem>>, vector<1x8x4xf32>
    %91 = vector.shape_cast %90 : vector<1x8x4xf32> to vector<8x4xf32>
    %c0_83 = arith.constant 0 : index
    %c61 = arith.constant 61 : index
    %92 = vector.load %arg9[%c0_83, %c61] : memref<4x512xf32, #tpu.memory_space<vmem>>, vector<4x256xf32>
    %cst_84 = arith.constant dense<0.000000e+00> : vector<8x256xf32>
    %93 = tpu.matmul %91, %92, %cst_84 {dimension_numbers = #tpu.dot_dimension_numbers<[1], [0], [0], [1], [0, 0, 1, 1], [], []>} : vector<8x4xf32>, vector<4x256xf32>, vector<8x256xf32> -> vector<8x256xf32>
    %94 = arith.addf %89, %93 : vector<8x256xf32>
    %c17 = arith.constant 17 : index
    %c0_85 = arith.constant 0 : index
    %c0_86 = arith.constant 0 : index
    %95 = vector.load %arg4[%c17, %c0_85, %c0_86] : memref<25x8x4xf32, #tpu.memory_space<vmem>>, vector<1x8x4xf32>
    %96 = vector.shape_cast %95 : vector<1x8x4xf32> to vector<8x4xf32>
    %c0_87 = arith.constant 0 : index
    %c62 = arith.constant 62 : index
    %97 = vector.load %arg9[%c0_87, %c62] : memref<4x512xf32, #tpu.memory_space<vmem>>, vector<4x256xf32>
    %cst_88 = arith.constant dense<0.000000e+00> : vector<8x256xf32>
    %98 = tpu.matmul %96, %97, %cst_88 {dimension_numbers = #tpu.dot_dimension_numbers<[1], [0], [0], [1], [0, 0, 1, 1], [], []>} : vector<8x4xf32>, vector<4x256xf32>, vector<8x256xf32> -> vector<8x256xf32>
    %99 = arith.addf %94, %98 : vector<8x256xf32>
    %c18 = arith.constant 18 : index
    %c0_89 = arith.constant 0 : index
    %c0_90 = arith.constant 0 : index
    %100 = vector.load %arg4[%c18, %c0_89, %c0_90] : memref<25x8x4xf32, #tpu.memory_space<vmem>>, vector<1x8x4xf32>
    %101 = vector.shape_cast %100 : vector<1x8x4xf32> to vector<8x4xf32>
    %c0_91 = arith.constant 0 : index
    %c63 = arith.constant 63 : index
    %102 = vector.load %arg9[%c0_91, %c63] : memref<4x512xf32, #tpu.memory_space<vmem>>, vector<4x256xf32>
    %cst_92 = arith.constant dense<0.000000e+00> : vector<8x256xf32>
    %103 = tpu.matmul %101, %102, %cst_92 {dimension_numbers = #tpu.dot_dimension_numbers<[1], [0], [0], [1], [0, 0, 1, 1], [], []>} : vector<8x4xf32>, vector<4x256xf32>, vector<8x256xf32> -> vector<8x256xf32>
    %104 = arith.addf %99, %103 : vector<8x256xf32>
    %c19 = arith.constant 19 : index
    %c0_93 = arith.constant 0 : index
    %c0_94 = arith.constant 0 : index
    %105 = vector.load %arg4[%c19, %c0_93, %c0_94] : memref<25x8x4xf32, #tpu.memory_space<vmem>>, vector<1x8x4xf32>
    %106 = vector.shape_cast %105 : vector<1x8x4xf32> to vector<8x4xf32>
    %c0_95 = arith.constant 0 : index
    %c64 = arith.constant 64 : index
    %107 = vector.load %arg9[%c0_95, %c64] : memref<4x512xf32, #tpu.memory_space<vmem>>, vector<4x256xf32>
    %cst_96 = arith.constant dense<0.000000e+00> : vector<8x256xf32>
    %108 = tpu.matmul %106, %107, %cst_96 {dimension_numbers = #tpu.dot_dimension_numbers<[1], [0], [0], [1], [0, 0, 1, 1], [], []>} : vector<8x4xf32>, vector<4x256xf32>, vector<8x256xf32> -> vector<8x256xf32>
    %109 = arith.addf %104, %108 : vector<8x256xf32>
    %c20_97 = arith.constant 20 : index
    %c0_98 = arith.constant 0 : index
    %c0_99 = arith.constant 0 : index
    %110 = vector.load %arg4[%c20_97, %c0_98, %c0_99] : memref<25x8x4xf32, #tpu.memory_space<vmem>>, vector<1x8x4xf32>
    %111 = vector.shape_cast %110 : vector<1x8x4xf32> to vector<8x4xf32>
    %c0_100 = arith.constant 0 : index
    %c80 = arith.constant 80 : index
    %112 = vector.load %arg9[%c0_100, %c80] : memref<4x512xf32, #tpu.memory_space<vmem>>, vector<4x256xf32>
    %cst_101 = arith.constant dense<0.000000e+00> : vector<8x256xf32>
    %113 = tpu.matmul %111, %112, %cst_101 {dimension_numbers = #tpu.dot_dimension_numbers<[1], [0], [0], [1], [0, 0, 1, 1], [], []>} : vector<8x4xf32>, vector<4x256xf32>, vector<8x256xf32> -> vector<8x256xf32>
    %114 = arith.addf %109, %113 : vector<8x256xf32>
    %c21_102 = arith.constant 21 : index
    %c0_103 = arith.constant 0 : index
    %c0_104 = arith.constant 0 : index
    %115 = vector.load %arg4[%c21_102, %c0_103, %c0_104] : memref<25x8x4xf32, #tpu.memory_space<vmem>>, vector<1x8x4xf32>
    %116 = vector.shape_cast %115 : vector<1x8x4xf32> to vector<8x4xf32>
    %c0_105 = arith.constant 0 : index
    %c81 = arith.constant 81 : index
    %117 = vector.load %arg9[%c0_105, %c81] : memref<4x512xf32, #tpu.memory_space<vmem>>, vector<4x256xf32>
    %cst_106 = arith.constant dense<0.000000e+00> : vector<8x256xf32>
    %118 = tpu.matmul %116, %117, %cst_106 {dimension_numbers = #tpu.dot_dimension_numbers<[1], [0], [0], [1], [0, 0, 1, 1], [], []>} : vector<8x4xf32>, vector<4x256xf32>, vector<8x256xf32> -> vector<8x256xf32>
    %119 = arith.addf %114, %118 : vector<8x256xf32>
    %c22_107 = arith.constant 22 : index
    %c0_108 = arith.constant 0 : index
    %c0_109 = arith.constant 0 : index
    %120 = vector.load %arg4[%c22_107, %c0_108, %c0_109] : memref<25x8x4xf32, #tpu.memory_space<vmem>>, vector<1x8x4xf32>
    %121 = vector.shape_cast %120 : vector<1x8x4xf32> to vector<8x4xf32>
    %c0_110 = arith.constant 0 : index
    %c82 = arith.constant 82 : index
    %122 = vector.load %arg9[%c0_110, %c82] : memref<4x512xf32, #tpu.memory_space<vmem>>, vector<4x256xf32>
    %cst_111 = arith.constant dense<0.000000e+00> : vector<8x256xf32>
    %123 = tpu.matmul %121, %122, %cst_111 {dimension_numbers = #tpu.dot_dimension_numbers<[1], [0], [0], [1], [0, 0, 1, 1], [], []>} : vector<8x4xf32>, vector<4x256xf32>, vector<8x256xf32> -> vector<8x256xf32>
    %124 = arith.addf %119, %123 : vector<8x256xf32>
    %c23_112 = arith.constant 23 : index
    %c0_113 = arith.constant 0 : index
    %c0_114 = arith.constant 0 : index
    %125 = vector.load %arg4[%c23_112, %c0_113, %c0_114] : memref<25x8x4xf32, #tpu.memory_space<vmem>>, vector<1x8x4xf32>
    %126 = vector.shape_cast %125 : vector<1x8x4xf32> to vector<8x4xf32>
    %c0_115 = arith.constant 0 : index
    %c83 = arith.constant 83 : index
    %127 = vector.load %arg9[%c0_115, %c83] : memref<4x512xf32, #tpu.memory_space<vmem>>, vector<4x256xf32>
    %cst_116 = arith.constant dense<0.000000e+00> : vector<8x256xf32>
    %128 = tpu.matmul %126, %127, %cst_116 {dimension_numbers = #tpu.dot_dimension_numbers<[1], [0], [0], [1], [0, 0, 1, 1], [], []>} : vector<8x4xf32>, vector<4x256xf32>, vector<8x256xf32> -> vector<8x256xf32>
    %129 = arith.addf %124, %128 : vector<8x256xf32>
    %c24_117 = arith.constant 24 : index
    %c0_118 = arith.constant 0 : index
    %c0_119 = arith.constant 0 : index
    %130 = vector.load %arg4[%c24_117, %c0_118, %c0_119] : memref<25x8x4xf32, #tpu.memory_space<vmem>>, vector<1x8x4xf32>
    %131 = vector.shape_cast %130 : vector<1x8x4xf32> to vector<8x4xf32>
    %c0_120 = arith.constant 0 : index
    %c84 = arith.constant 84 : index
    %132 = vector.load %arg9[%c0_120, %c84] : memref<4x512xf32, #tpu.memory_space<vmem>>, vector<4x256xf32>
    %cst_121 = arith.constant dense<0.000000e+00> : vector<8x256xf32>
    %133 = tpu.matmul %131, %132, %cst_121 {dimension_numbers = #tpu.dot_dimension_numbers<[1], [0], [0], [1], [0, 0, 1, 1], [], []>} : vector<8x4xf32>, vector<4x256xf32>, vector<8x256xf32> -> vector<8x256xf32>
    %134 = arith.addf %129, %133 : vector<8x256xf32>
    %135 = vector.broadcast %6 : f32 to vector<8x256xf32>
    %136 = arith.mulf %134, %135 : vector<8x256xf32>
    %137 = vector.broadcast %7 : f32 to vector<8x256xf32>
    %138 = arith.maximumf %137, %136 : vector<8x256xf32>
    %139 = vector.broadcast %8 : f32 to vector<8x256xf32>
    %140 = arith.minimumf %139, %138 : vector<8x256xf32>
    %cst_122 = arith.constant 0.000000e+00 : f32
    %141 = vector.broadcast %cst_122 : f32 to vector<8x256xf32>
    %c0_123 = arith.constant 0 : index
    %142 = memref.load %arg3[%c0_123] : memref<16xf32, #tpu.memory_space<smem>>
    %143 = vector.broadcast %142 : f32 to vector<8x256xf32>
    %144 = arith.subf %140, %143 : vector<8x256xf32>
    %c0_124 = arith.constant 0 : index
    %c0_125 = arith.constant 0 : index
    %145 = vector.load %arg5[%c0_124, %c0_125] : memref<8x16xf32, #tpu.memory_space<vmem>>, vector<8x1xf32>
    %146 = arith.mulf %144, %144 : vector<8x256xf32>
    %cst_126 = arith.constant 0.000000e+00 : f32
    %147 = vector.broadcast %cst_126 : f32 to vector<8x256xf32>
    %148 = arith.subf %147, %146 : vector<8x256xf32>
    %149 = math.exp %148 : vector<8x256xf32>
    %150 = vector.broadcast %145 : vector<8x1xf32> to vector<8x256xf32>
    %151 = arith.mulf %150, %149 : vector<8x256xf32>
    %152 = arith.addf %141, %151 : vector<8x256xf32>
    %c1_127 = arith.constant 1 : index
    %153 = memref.load %arg3[%c1_127] : memref<16xf32, #tpu.memory_space<smem>>
    %154 = vector.broadcast %153 : f32 to vector<8x256xf32>
    %155 = arith.subf %140, %154 : vector<8x256xf32>
    %c0_128 = arith.constant 0 : index
    %c1_129 = arith.constant 1 : index
    %156 = vector.load %arg5[%c0_128, %c1_129] : memref<8x16xf32, #tpu.memory_space<vmem>>, vector<8x1xf32>
    %157 = arith.mulf %155, %155 : vector<8x256xf32>
    %cst_130 = arith.constant 0.000000e+00 : f32
    %158 = vector.broadcast %cst_130 : f32 to vector<8x256xf32>
    %159 = arith.subf %158, %157 : vector<8x256xf32>
    %160 = math.exp %159 : vector<8x256xf32>
    %161 = vector.broadcast %156 : vector<8x1xf32> to vector<8x256xf32>
    %162 = arith.mulf %161, %160 : vector<8x256xf32>
    %163 = arith.addf %152, %162 : vector<8x256xf32>
    %c2_131 = arith.constant 2 : index
    %164 = memref.load %arg3[%c2_131] : memref<16xf32, #tpu.memory_space<smem>>
    %165 = vector.broadcast %164 : f32 to vector<8x256xf32>
    %166 = arith.subf %140, %165 : vector<8x256xf32>
    %c0_132 = arith.constant 0 : index
    %c2_133 = arith.constant 2 : index
    %167 = vector.load %arg5[%c0_132, %c2_133] : memref<8x16xf32, #tpu.memory_space<vmem>>, vector<8x1xf32>
    %168 = arith.mulf %166, %166 : vector<8x256xf32>
    %cst_134 = arith.constant 0.000000e+00 : f32
    %169 = vector.broadcast %cst_134 : f32 to vector<8x256xf32>
    %170 = arith.subf %169, %168 : vector<8x256xf32>
    %171 = math.exp %170 : vector<8x256xf32>
    %172 = vector.broadcast %167 : vector<8x1xf32> to vector<8x256xf32>
    %173 = arith.mulf %172, %171 : vector<8x256xf32>
    %174 = arith.addf %163, %173 : vector<8x256xf32>
    %c3_135 = arith.constant 3 : index
    %175 = memref.load %arg3[%c3_135] : memref<16xf32, #tpu.memory_space<smem>>
    %176 = vector.broadcast %175 : f32 to vector<8x256xf32>
    %177 = arith.subf %140, %176 : vector<8x256xf32>
    %c0_136 = arith.constant 0 : index
    %c3_137 = arith.constant 3 : index
    %178 = vector.load %arg5[%c0_136, %c3_137] : memref<8x16xf32, #tpu.memory_space<vmem>>, vector<8x1xf32>
    %179 = arith.mulf %177, %177 : vector<8x256xf32>
    %cst_138 = arith.constant 0.000000e+00 : f32
    %180 = vector.broadcast %cst_138 : f32 to vector<8x256xf32>
    %181 = arith.subf %180, %179 : vector<8x256xf32>
    %182 = math.exp %181 : vector<8x256xf32>
    %183 = vector.broadcast %178 : vector<8x1xf32> to vector<8x256xf32>
    %184 = arith.mulf %183, %182 : vector<8x256xf32>
    %185 = arith.addf %174, %184 : vector<8x256xf32>
    %c4_139 = arith.constant 4 : index
    %186 = memref.load %arg3[%c4_139] : memref<16xf32, #tpu.memory_space<smem>>
    %187 = vector.broadcast %186 : f32 to vector<8x256xf32>
    %188 = arith.subf %140, %187 : vector<8x256xf32>
    %c0_140 = arith.constant 0 : index
    %c4_141 = arith.constant 4 : index
    %189 = vector.load %arg5[%c0_140, %c4_141] : memref<8x16xf32, #tpu.memory_space<vmem>>, vector<8x1xf32>
    %190 = arith.mulf %188, %188 : vector<8x256xf32>
    %cst_142 = arith.constant 0.000000e+00 : f32
    %191 = vector.broadcast %cst_142 : f32 to vector<8x256xf32>
    %192 = arith.subf %191, %190 : vector<8x256xf32>
    %193 = math.exp %192 : vector<8x256xf32>
    %194 = vector.broadcast %189 : vector<8x1xf32> to vector<8x256xf32>
    %195 = arith.mulf %194, %193 : vector<8x256xf32>
    %196 = arith.addf %185, %195 : vector<8x256xf32>
    %c5_143 = arith.constant 5 : index
    %197 = memref.load %arg3[%c5_143] : memref<16xf32, #tpu.memory_space<smem>>
    %198 = vector.broadcast %197 : f32 to vector<8x256xf32>
    %199 = arith.subf %140, %198 : vector<8x256xf32>
    %c0_144 = arith.constant 0 : index
    %c5_145 = arith.constant 5 : index
    %200 = vector.load %arg5[%c0_144, %c5_145] : memref<8x16xf32, #tpu.memory_space<vmem>>, vector<8x1xf32>
    %201 = arith.mulf %199, %199 : vector<8x256xf32>
    %cst_146 = arith.constant 0.000000e+00 : f32
    %202 = vector.broadcast %cst_146 : f32 to vector<8x256xf32>
    %203 = arith.subf %202, %201 : vector<8x256xf32>
    %204 = math.exp %203 : vector<8x256xf32>
    %205 = vector.broadcast %200 : vector<8x1xf32> to vector<8x256xf32>
    %206 = arith.mulf %205, %204 : vector<8x256xf32>
    %207 = arith.addf %196, %206 : vector<8x256xf32>
    %c6_147 = arith.constant 6 : index
    %208 = memref.load %arg3[%c6_147] : memref<16xf32, #tpu.memory_space<smem>>
    %209 = vector.broadcast %208 : f32 to vector<8x256xf32>
    %210 = arith.subf %140, %209 : vector<8x256xf32>
    %c0_148 = arith.constant 0 : index
    %c6_149 = arith.constant 6 : index
    %211 = vector.load %arg5[%c0_148, %c6_149] : memref<8x16xf32, #tpu.memory_space<vmem>>, vector<8x1xf32>
    %212 = arith.mulf %210, %210 : vector<8x256xf32>
    %cst_150 = arith.constant 0.000000e+00 : f32
    %213 = vector.broadcast %cst_150 : f32 to vector<8x256xf32>
    %214 = arith.subf %213, %212 : vector<8x256xf32>
    %215 = math.exp %214 : vector<8x256xf32>
    %216 = vector.broadcast %211 : vector<8x1xf32> to vector<8x256xf32>
    %217 = arith.mulf %216, %215 : vector<8x256xf32>
    %218 = arith.addf %207, %217 : vector<8x256xf32>
    %c7_151 = arith.constant 7 : index
    %219 = memref.load %arg3[%c7_151] : memref<16xf32, #tpu.memory_space<smem>>
    %220 = vector.broadcast %219 : f32 to vector<8x256xf32>
    %221 = arith.subf %140, %220 : vector<8x256xf32>
    %c0_152 = arith.constant 0 : index
    %c7_153 = arith.constant 7 : index
    %222 = vector.load %arg5[%c0_152, %c7_153] : memref<8x16xf32, #tpu.memory_space<vmem>>, vector<8x1xf32>
    %223 = arith.mulf %221, %221 : vector<8x256xf32>
    %cst_154 = arith.constant 0.000000e+00 : f32
    %224 = vector.broadcast %cst_154 : f32 to vector<8x256xf32>
    %225 = arith.subf %224, %223 : vector<8x256xf32>
    %226 = math.exp %225 : vector<8x256xf32>
    %227 = vector.broadcast %222 : vector<8x1xf32> to vector<8x256xf32>
    %228 = arith.mulf %227, %226 : vector<8x256xf32>
    %229 = arith.addf %218, %228 : vector<8x256xf32>
    %c8_155 = arith.constant 8 : index
    %230 = memref.load %arg3[%c8_155] : memref<16xf32, #tpu.memory_space<smem>>
    %231 = vector.broadcast %230 : f32 to vector<8x256xf32>
    %232 = arith.subf %140, %231 : vector<8x256xf32>
    %c0_156 = arith.constant 0 : index
    %c8_157 = arith.constant 8 : index
    %233 = vector.load %arg5[%c0_156, %c8_157] : memref<8x16xf32, #tpu.memory_space<vmem>>, vector<8x1xf32>
    %234 = arith.mulf %232, %232 : vector<8x256xf32>
    %cst_158 = arith.constant 0.000000e+00 : f32
    %235 = vector.broadcast %cst_158 : f32 to vector<8x256xf32>
    %236 = arith.subf %235, %234 : vector<8x256xf32>
    %237 = math.exp %236 : vector<8x256xf32>
    %238 = vector.broadcast %233 : vector<8x1xf32> to vector<8x256xf32>
    %239 = arith.mulf %238, %237 : vector<8x256xf32>
    %240 = arith.addf %229, %239 : vector<8x256xf32>
    %c9_159 = arith.constant 9 : index
    %241 = memref.load %arg3[%c9_159] : memref<16xf32, #tpu.memory_space<smem>>
    %242 = vector.broadcast %241 : f32 to vector<8x256xf32>
    %243 = arith.subf %140, %242 : vector<8x256xf32>
    %c0_160 = arith.constant 0 : index
    %c9_161 = arith.constant 9 : index
    %244 = vector.load %arg5[%c0_160, %c9_161] : memref<8x16xf32, #tpu.memory_space<vmem>>, vector<8x1xf32>
    %245 = arith.mulf %243, %243 : vector<8x256xf32>
    %cst_162 = arith.constant 0.000000e+00 : f32
    %246 = vector.broadcast %cst_162 : f32 to vector<8x256xf32>
    %247 = arith.subf %246, %245 : vector<8x256xf32>
    %248 = math.exp %247 : vector<8x256xf32>
    %249 = vector.broadcast %244 : vector<8x1xf32> to vector<8x256xf32>
    %250 = arith.mulf %249, %248 : vector<8x256xf32>
    %251 = arith.addf %240, %250 : vector<8x256xf32>
    %c10_163 = arith.constant 10 : index
    %252 = memref.load %arg3[%c10_163] : memref<16xf32, #tpu.memory_space<smem>>
    %253 = vector.broadcast %252 : f32 to vector<8x256xf32>
    %254 = arith.subf %140, %253 : vector<8x256xf32>
    %c0_164 = arith.constant 0 : index
    %c10_165 = arith.constant 10 : index
    %255 = vector.load %arg5[%c0_164, %c10_165] : memref<8x16xf32, #tpu.memory_space<vmem>>, vector<8x1xf32>
    %256 = arith.mulf %254, %254 : vector<8x256xf32>
    %cst_166 = arith.constant 0.000000e+00 : f32
    %257 = vector.broadcast %cst_166 : f32 to vector<8x256xf32>
    %258 = arith.subf %257, %256 : vector<8x256xf32>
    %259 = math.exp %258 : vector<8x256xf32>
    %260 = vector.broadcast %255 : vector<8x1xf32> to vector<8x256xf32>
    %261 = arith.mulf %260, %259 : vector<8x256xf32>
    %262 = arith.addf %251, %261 : vector<8x256xf32>
    %c11_167 = arith.constant 11 : index
    %263 = memref.load %arg3[%c11_167] : memref<16xf32, #tpu.memory_space<smem>>
    %264 = vector.broadcast %263 : f32 to vector<8x256xf32>
    %265 = arith.subf %140, %264 : vector<8x256xf32>
    %c0_168 = arith.constant 0 : index
    %c11_169 = arith.constant 11 : index
    %266 = vector.load %arg5[%c0_168, %c11_169] : memref<8x16xf32, #tpu.memory_space<vmem>>, vector<8x1xf32>
    %267 = arith.mulf %265, %265 : vector<8x256xf32>
    %cst_170 = arith.constant 0.000000e+00 : f32
    %268 = vector.broadcast %cst_170 : f32 to vector<8x256xf32>
    %269 = arith.subf %268, %267 : vector<8x256xf32>
    %270 = math.exp %269 : vector<8x256xf32>
    %271 = vector.broadcast %266 : vector<8x1xf32> to vector<8x256xf32>
    %272 = arith.mulf %271, %270 : vector<8x256xf32>
    %273 = arith.addf %262, %272 : vector<8x256xf32>
    %c12_171 = arith.constant 12 : index
    %274 = memref.load %arg3[%c12_171] : memref<16xf32, #tpu.memory_space<smem>>
    %275 = vector.broadcast %274 : f32 to vector<8x256xf32>
    %276 = arith.subf %140, %275 : vector<8x256xf32>
    %c0_172 = arith.constant 0 : index
    %c12_173 = arith.constant 12 : index
    %277 = vector.load %arg5[%c0_172, %c12_173] : memref<8x16xf32, #tpu.memory_space<vmem>>, vector<8x1xf32>
    %278 = arith.mulf %276, %276 : vector<8x256xf32>
    %cst_174 = arith.constant 0.000000e+00 : f32
    %279 = vector.broadcast %cst_174 : f32 to vector<8x256xf32>
    %280 = arith.subf %279, %278 : vector<8x256xf32>
    %281 = math.exp %280 : vector<8x256xf32>
    %282 = vector.broadcast %277 : vector<8x1xf32> to vector<8x256xf32>
    %283 = arith.mulf %282, %281 : vector<8x256xf32>
    %284 = arith.addf %273, %283 : vector<8x256xf32>
    %c13_175 = arith.constant 13 : index
    %285 = memref.load %arg3[%c13_175] : memref<16xf32, #tpu.memory_space<smem>>
    %286 = vector.broadcast %285 : f32 to vector<8x256xf32>
    %287 = arith.subf %140, %286 : vector<8x256xf32>
    %c0_176 = arith.constant 0 : index
    %c13_177 = arith.constant 13 : index
    %288 = vector.load %arg5[%c0_176, %c13_177] : memref<8x16xf32, #tpu.memory_space<vmem>>, vector<8x1xf32>
    %289 = arith.mulf %287, %287 : vector<8x256xf32>
    %cst_178 = arith.constant 0.000000e+00 : f32
    %290 = vector.broadcast %cst_178 : f32 to vector<8x256xf32>
    %291 = arith.subf %290, %289 : vector<8x256xf32>
    %292 = math.exp %291 : vector<8x256xf32>
    %293 = vector.broadcast %288 : vector<8x1xf32> to vector<8x256xf32>
    %294 = arith.mulf %293, %292 : vector<8x256xf32>
    %295 = arith.addf %284, %294 : vector<8x256xf32>
    %c14_179 = arith.constant 14 : index
    %296 = memref.load %arg3[%c14_179] : memref<16xf32, #tpu.memory_space<smem>>
    %297 = vector.broadcast %296 : f32 to vector<8x256xf32>
    %298 = arith.subf %140, %297 : vector<8x256xf32>
    %c0_180 = arith.constant 0 : index
    %c14_181 = arith.constant 14 : index
    %299 = vector.load %arg5[%c0_180, %c14_181] : memref<8x16xf32, #tpu.memory_space<vmem>>, vector<8x1xf32>
    %300 = arith.mulf %298, %298 : vector<8x256xf32>
    %cst_182 = arith.constant 0.000000e+00 : f32
    %301 = vector.broadcast %cst_182 : f32 to vector<8x256xf32>
    %302 = arith.subf %301, %300 : vector<8x256xf32>
    %303 = math.exp %302 : vector<8x256xf32>
    %304 = vector.broadcast %299 : vector<8x1xf32> to vector<8x256xf32>
    %305 = arith.mulf %304, %303 : vector<8x256xf32>
    %306 = arith.addf %295, %305 : vector<8x256xf32>
    %c15_183 = arith.constant 15 : index
    %307 = memref.load %arg3[%c15_183] : memref<16xf32, #tpu.memory_space<smem>>
    %308 = vector.broadcast %307 : f32 to vector<8x256xf32>
    %309 = arith.subf %140, %308 : vector<8x256xf32>
    %c0_184 = arith.constant 0 : index
    %c15_185 = arith.constant 15 : index
    %310 = vector.load %arg5[%c0_184, %c15_185] : memref<8x16xf32, #tpu.memory_space<vmem>>, vector<8x1xf32>
    %311 = arith.mulf %309, %309 : vector<8x256xf32>
    %cst_186 = arith.constant 0.000000e+00 : f32
    %312 = vector.broadcast %cst_186 : f32 to vector<8x256xf32>
    %313 = arith.subf %312, %311 : vector<8x256xf32>
    %314 = math.exp %313 : vector<8x256xf32>
    %315 = vector.broadcast %310 : vector<8x1xf32> to vector<8x256xf32>
    %316 = arith.mulf %315, %314 : vector<8x256xf32>
    %317 = arith.addf %306, %316 : vector<8x256xf32>
    %c0_187 = arith.constant 0 : index
    %c0_188 = arith.constant 0 : index
    %c0_189 = arith.constant 0 : index
    %318 = vector.load %arg8[%c0_187, %c0_188, %c0_189] : memref<1x8x384xf32, #tpu.memory_space<vmem>>, vector<1x8x256xf32>
    %319 = vector.shape_cast %318 : vector<1x8x256xf32> to vector<8x256xf32>
    %320 = vector.shape_cast %317 : vector<8x256xf32> to vector<1x8x256xf32>
    tpu.vector_store %arg8[%c0_187, %c0_188, %c0_189], %320 {strides = array<i32>} : memref<1x8x384xf32, #tpu.memory_space<vmem>>, vector<1x8x256xf32>,
    %cst_190 = arith.constant 0.000000e+00 : f32
    %321 = vector.broadcast %cst_190 : f32 to vector<8x128xf32>
    %c0_191 = arith.constant 0 : index
    %c0_192 = arith.constant 0 : index
    %c0_193 = arith.constant 0 : index
    %322 = vector.load %arg4[%c0_191, %c0_192, %c0_193] : memref<25x8x4xf32, #tpu.memory_space<vmem>>, vector<1x8x4xf32>
    %323 = vector.shape_cast %322 : vector<1x8x4xf32> to vector<8x4xf32>
    %c0_194 = arith.constant 0 : index
    %c256 = arith.constant 256 : index
    %324 = vector.load %arg9[%c0_194, %c256] : memref<4x512xf32, #tpu.memory_space<vmem>>, vector<4x128xf32>
    %cst_195 = arith.constant dense<0.000000e+00> : vector<8x128xf32>
    %325 = tpu.matmul %323, %324, %cst_195 {dimension_numbers = #tpu.dot_dimension_numbers<[1], [0], [0], [1], [0, 0, 1, 1], [], []>} : vector<8x4xf32>, vector<4x128xf32>, vector<8x128xf32> -> vector<8x128xf32>
    %326 = arith.addf %321, %325 : vector<8x128xf32>
    %c1_196 = arith.constant 1 : index
    %c0_197 = arith.constant 0 : index
    %c0_198 = arith.constant 0 : index
    %327 = vector.load %arg4[%c1_196, %c0_197, %c0_198] : memref<25x8x4xf32, #tpu.memory_space<vmem>>, vector<1x8x4xf32>
    %328 = vector.shape_cast %327 : vector<1x8x4xf32> to vector<8x4xf32>
    %c0_199 = arith.constant 0 : index
    %c257 = arith.constant 257 : index
    %329 = vector.load %arg9[%c0_199, %c257] : memref<4x512xf32, #tpu.memory_space<vmem>>, vector<4x128xf32>
    %cst_200 = arith.constant dense<0.000000e+00> : vector<8x128xf32>
    %330 = tpu.matmul %328, %329, %cst_200 {dimension_numbers = #tpu.dot_dimension_numbers<[1], [0], [0], [1], [0, 0, 1, 1], [], []>} : vector<8x4xf32>, vector<4x128xf32>, vector<8x128xf32> -> vector<8x128xf32>
    %331 = arith.addf %326, %330 : vector<8x128xf32>
    %c2_201 = arith.constant 2 : index
    %c0_202 = arith.constant 0 : index
    %c0_203 = arith.constant 0 : index
    %332 = vector.load %arg4[%c2_201, %c0_202, %c0_203] : memref<25x8x4xf32, #tpu.memory_space<vmem>>, vector<1x8x4xf32>
    %333 = vector.shape_cast %332 : vector<1x8x4xf32> to vector<8x4xf32>
    %c0_204 = arith.constant 0 : index
    %c258 = arith.constant 258 : index
    %334 = vector.load %arg9[%c0_204, %c258] : memref<4x512xf32, #tpu.memory_space<vmem>>, vector<4x128xf32>
    %cst_205 = arith.constant dense<0.000000e+00> : vector<8x128xf32>
    %335 = tpu.matmul %333, %334, %cst_205 {dimension_numbers = #tpu.dot_dimension_numbers<[1], [0], [0], [1], [0, 0, 1, 1], [], []>} : vector<8x4xf32>, vector<4x128xf32>, vector<8x128xf32> -> vector<8x128xf32>
    %336 = arith.addf %331, %335 : vector<8x128xf32>
    %c3_206 = arith.constant 3 : index
    %c0_207 = arith.constant 0 : index
    %c0_208 = arith.constant 0 : index
    %337 = vector.load %arg4[%c3_206, %c0_207, %c0_208] : memref<25x8x4xf32, #tpu.memory_space<vmem>>, vector<1x8x4xf32>
    %338 = vector.shape_cast %337 : vector<1x8x4xf32> to vector<8x4xf32>
    %c0_209 = arith.constant 0 : index
    %c259 = arith.constant 259 : index
    %339 = vector.load %arg9[%c0_209, %c259] : memref<4x512xf32, #tpu.memory_space<vmem>>, vector<4x128xf32>
    %cst_210 = arith.constant dense<0.000000e+00> : vector<8x128xf32>
    %340 = tpu.matmul %338, %339, %cst_210 {dimension_numbers = #tpu.dot_dimension_numbers<[1], [0], [0], [1], [0, 0, 1, 1], [], []>} : vector<8x4xf32>, vector<4x128xf32>, vector<8x128xf32> -> vector<8x128xf32>
    %341 = arith.addf %336, %340 : vector<8x128xf32>
    %c4_211 = arith.constant 4 : index
    %c0_212 = arith.constant 0 : index
    %c0_213 = arith.constant 0 : index
    %342 = vector.load %arg4[%c4_211, %c0_212, %c0_213] : memref<25x8x4xf32, #tpu.memory_space<vmem>>, vector<1x8x4xf32>
    %343 = vector.shape_cast %342 : vector<1x8x4xf32> to vector<8x4xf32>
    %c0_214 = arith.constant 0 : index
    %c260 = arith.constant 260 : index
    %344 = vector.load %arg9[%c0_214, %c260] : memref<4x512xf32, #tpu.memory_space<vmem>>, vector<4x128xf32>
    %cst_215 = arith.constant dense<0.000000e+00> : vector<8x128xf32>
    %345 = tpu.matmul %343, %344, %cst_215 {dimension_numbers = #tpu.dot_dimension_numbers<[1], [0], [0], [1], [0, 0, 1, 1], [], []>} : vector<8x4xf32>, vector<4x128xf32>, vector<8x128xf32> -> vector<8x128xf32>
    %346 = arith.addf %341, %345 : vector<8x128xf32>
    %c5_216 = arith.constant 5 : index
    %c0_217 = arith.constant 0 : index
    %c0_218 = arith.constant 0 : index
    %347 = vector.load %arg4[%c5_216, %c0_217, %c0_218] : memref<25x8x4xf32, #tpu.memory_space<vmem>>, vector<1x8x4xf32>
    %348 = vector.shape_cast %347 : vector<1x8x4xf32> to vector<8x4xf32>
    %c0_219 = arith.constant 0 : index
    %c276 = arith.constant 276 : index
    %349 = vector.load %arg9[%c0_219, %c276] : memref<4x512xf32, #tpu.memory_space<vmem>>, vector<4x128xf32>
    %cst_220 = arith.constant dense<0.000000e+00> : vector<8x128xf32>
    %350 = tpu.matmul %348, %349, %cst_220 {dimension_numbers = #tpu.dot_dimension_numbers<[1], [0], [0], [1], [0, 0, 1, 1], [], []>} : vector<8x4xf32>, vector<4x128xf32>, vector<8x128xf32> -> vector<8x128xf32>
    %351 = arith.addf %346, %350 : vector<8x128xf32>
    %c6_221 = arith.constant 6 : index
    %c0_222 = arith.constant 0 : index
    %c0_223 = arith.constant 0 : index
    %352 = vector.load %arg4[%c6_221, %c0_222, %c0_223] : memref<25x8x4xf32, #tpu.memory_space<vmem>>, vector<1x8x4xf32>
    %353 = vector.shape_cast %352 : vector<1x8x4xf32> to vector<8x4xf32>
    %c0_224 = arith.constant 0 : index
    %c277 = arith.constant 277 : index
    %354 = vector.load %arg9[%c0_224, %c277] : memref<4x512xf32, #tpu.memory_space<vmem>>, vector<4x128xf32>
    %cst_225 = arith.constant dense<0.000000e+00> : vector<8x128xf32>
    %355 = tpu.matmul %353, %354, %cst_225 {dimension_numbers = #tpu.dot_dimension_numbers<[1], [0], [0], [1], [0, 0, 1, 1], [], []>} : vector<8x4xf32>, vector<4x128xf32>, vector<8x128xf32> -> vector<8x128xf32>
    %356 = arith.addf %351, %355 : vector<8x128xf32>
    %c7_226 = arith.constant 7 : index
    %c0_227 = arith.constant 0 : index
    %c0_228 = arith.constant 0 : index
    %357 = vector.load %arg4[%c7_226, %c0_227, %c0_228] : memref<25x8x4xf32, #tpu.memory_space<vmem>>, vector<1x8x4xf32>
    %358 = vector.shape_cast %357 : vector<1x8x4xf32> to vector<8x4xf32>
    %c0_229 = arith.constant 0 : index
    %c278 = arith.constant 278 : index
    %359 = vector.load %arg9[%c0_229, %c278] : memref<4x512xf32, #tpu.memory_space<vmem>>, vector<4x128xf32>
    %cst_230 = arith.constant dense<0.000000e+00> : vector<8x128xf32>
    %360 = tpu.matmul %358, %359, %cst_230 {dimension_numbers = #tpu.dot_dimension_numbers<[1], [0], [0], [1], [0, 0, 1, 1], [], []>} : vector<8x4xf32>, vector<4x128xf32>, vector<8x128xf32> -> vector<8x128xf32>
    %361 = arith.addf %356, %360 : vector<8x128xf32>
    %c8_231 = arith.constant 8 : index
    %c0_232 = arith.constant 0 : index
    %c0_233 = arith.constant 0 : index
    %362 = vector.load %arg4[%c8_231, %c0_232, %c0_233] : memref<25x8x4xf32, #tpu.memory_space<vmem>>, vector<1x8x4xf32>
    %363 = vector.shape_cast %362 : vector<1x8x4xf32> to vector<8x4xf32>
    %c0_234 = arith.constant 0 : index
    %c279 = arith.constant 279 : index
    %364 = vector.load %arg9[%c0_234, %c279] : memref<4x512xf32, #tpu.memory_space<vmem>>, vector<4x128xf32>
    %cst_235 = arith.constant dense<0.000000e+00> : vector<8x128xf32>
    %365 = tpu.matmul %363, %364, %cst_235 {dimension_numbers = #tpu.dot_dimension_numbers<[1], [0], [0], [1], [0, 0, 1, 1], [], []>} : vector<8x4xf32>, vector<4x128xf32>, vector<8x128xf32> -> vector<8x128xf32>
    %366 = arith.addf %361, %365 : vector<8x128xf32>
    %c9_236 = arith.constant 9 : index
    %c0_237 = arith.constant 0 : index
    %c0_238 = arith.constant 0 : index
    %367 = vector.load %arg4[%c9_236, %c0_237, %c0_238] : memref<25x8x4xf32, #tpu.memory_space<vmem>>, vector<1x8x4xf32>
    %368 = vector.shape_cast %367 : vector<1x8x4xf32> to vector<8x4xf32>
    %c0_239 = arith.constant 0 : index
    %c280 = arith.constant 280 : index
    %369 = vector.load %arg9[%c0_239, %c280] : memref<4x512xf32, #tpu.memory_space<vmem>>, vector<4x128xf32>
    %cst_240 = arith.constant dense<0.000000e+00> : vector<8x128xf32>
    %370 = tpu.matmul %368, %369, %cst_240 {dimension_numbers = #tpu.dot_dimension_numbers<[1], [0], [0], [1], [0, 0, 1, 1], [], []>} : vector<8x4xf32>, vector<4x128xf32>, vector<8x128xf32> -> vector<8x128xf32>
    %371 = arith.addf %366, %370 : vector<8x128xf32>
    %c10_241 = arith.constant 10 : index
    %c0_242 = arith.constant 0 : index
    %c0_243 = arith.constant 0 : index
    %372 = vector.load %arg4[%c10_241, %c0_242, %c0_243] : memref<25x8x4xf32, #tpu.memory_space<vmem>>, vector<1x8x4xf32>
    %373 = vector.shape_cast %372 : vector<1x8x4xf32> to vector<8x4xf32>
    %c0_244 = arith.constant 0 : index
    %c296 = arith.constant 296 : index
    %374 = vector.load %arg9[%c0_244, %c296] : memref<4x512xf32, #tpu.memory_space<vmem>>, vector<4x128xf32>
    %cst_245 = arith.constant dense<0.000000e+00> : vector<8x128xf32>
    %375 = tpu.matmul %373, %374, %cst_245 {dimension_numbers = #tpu.dot_dimension_numbers<[1], [0], [0], [1], [0, 0, 1, 1], [], []>} : vector<8x4xf32>, vector<4x128xf32>, vector<8x128xf32> -> vector<8x128xf32>
    %376 = arith.addf %371, %375 : vector<8x128xf32>
    %c11_246 = arith.constant 11 : index
    %c0_247 = arith.constant 0 : index
    %c0_248 = arith.constant 0 : index
    %377 = vector.load %arg4[%c11_246, %c0_247, %c0_248] : memref<25x8x4xf32, #tpu.memory_space<vmem>>, vector<1x8x4xf32>
    %378 = vector.shape_cast %377 : vector<1x8x4xf32> to vector<8x4xf32>
    %c0_249 = arith.constant 0 : index
    %c297 = arith.constant 297 : index
    %379 = vector.load %arg9[%c0_249, %c297] : memref<4x512xf32, #tpu.memory_space<vmem>>, vector<4x128xf32>
    %cst_250 = arith.constant dense<0.000000e+00> : vector<8x128xf32>
    %380 = tpu.matmul %378, %379, %cst_250 {dimension_numbers = #tpu.dot_dimension_numbers<[1], [0], [0], [1], [0, 0, 1, 1], [], []>} : vector<8x4xf32>, vector<4x128xf32>, vector<8x128xf32> -> vector<8x128xf32>
    %381 = arith.addf %376, %380 : vector<8x128xf32>
    %c12_251 = arith.constant 12 : index
    %c0_252 = arith.constant 0 : index
    %c0_253 = arith.constant 0 : index
    %382 = vector.load %arg4[%c12_251, %c0_252, %c0_253] : memref<25x8x4xf32, #tpu.memory_space<vmem>>, vector<1x8x4xf32>
    %383 = vector.shape_cast %382 : vector<1x8x4xf32> to vector<8x4xf32>
    %c0_254 = arith.constant 0 : index
    %c298 = arith.constant 298 : index
    %384 = vector.load %arg9[%c0_254, %c298] : memref<4x512xf32, #tpu.memory_space<vmem>>, vector<4x128xf32>
    %cst_255 = arith.constant dense<0.000000e+00> : vector<8x128xf32>
    %385 = tpu.matmul %383, %384, %cst_255 {dimension_numbers = #tpu.dot_dimension_numbers<[1], [0], [0], [1], [0, 0, 1, 1], [], []>} : vector<8x4xf32>, vector<4x128xf32>, vector<8x128xf32> -> vector<8x128xf32>
    %386 = arith.addf %381, %385 : vector<8x128xf32>
    %c13_256 = arith.constant 13 : index
    %c0_257 = arith.constant 0 : index
    %c0_258 = arith.constant 0 : index
    %387 = vector.load %arg4[%c13_256, %c0_257, %c0_258] : memref<25x8x4xf32, #tpu.memory_space<vmem>>, vector<1x8x4xf32>
    %388 = vector.shape_cast %387 : vector<1x8x4xf32> to vector<8x4xf32>
    %c0_259 = arith.constant 0 : index
    %c299 = arith.constant 299 : index
    %389 = vector.load %arg9[%c0_259, %c299] : memref<4x512xf32, #tpu.memory_space<vmem>>, vector<4x128xf32>
    %cst_260 = arith.constant dense<0.000000e+00> : vector<8x128xf32>
    %390 = tpu.matmul %388, %389, %cst_260 {dimension_numbers = #tpu.dot_dimension_numbers<[1], [0], [0], [1], [0, 0, 1, 1], [], []>} : vector<8x4xf32>, vector<4x128xf32>, vector<8x128xf32> -> vector<8x128xf32>
    %391 = arith.addf %386, %390 : vector<8x128xf32>
    %c14_261 = arith.constant 14 : index
    %c0_262 = arith.constant 0 : index
    %c0_263 = arith.constant 0 : index
    %392 = vector.load %arg4[%c14_261, %c0_262, %c0_263] : memref<25x8x4xf32, #tpu.memory_space<vmem>>, vector<1x8x4xf32>
    %393 = vector.shape_cast %392 : vector<1x8x4xf32> to vector<8x4xf32>
    %c0_264 = arith.constant 0 : index
    %c300 = arith.constant 300 : index
    %394 = vector.load %arg9[%c0_264, %c300] : memref<4x512xf32, #tpu.memory_space<vmem>>, vector<4x128xf32>
    %cst_265 = arith.constant dense<0.000000e+00> : vector<8x128xf32>
    %395 = tpu.matmul %393, %394, %cst_265 {dimension_numbers = #tpu.dot_dimension_numbers<[1], [0], [0], [1], [0, 0, 1, 1], [], []>} : vector<8x4xf32>, vector<4x128xf32>, vector<8x128xf32> -> vector<8x128xf32>
    %396 = arith.addf %391, %395 : vector<8x128xf32>
    %c15_266 = arith.constant 15 : index
    %c0_267 = arith.constant 0 : index
    %c0_268 = arith.constant 0 : index
    %397 = vector.load %arg4[%c15_266, %c0_267, %c0_268] : memref<25x8x4xf32, #tpu.memory_space<vmem>>, vector<1x8x4xf32>
    %398 = vector.shape_cast %397 : vector<1x8x4xf32> to vector<8x4xf32>
    %c0_269 = arith.constant 0 : index
    %c316 = arith.constant 316 : index
    %399 = vector.load %arg9[%c0_269, %c316] : memref<4x512xf32, #tpu.memory_space<vmem>>, vector<4x128xf32>
    %cst_270 = arith.constant dense<0.000000e+00> : vector<8x128xf32>
    %400 = tpu.matmul %398, %399, %cst_270 {dimension_numbers = #tpu.dot_dimension_numbers<[1], [0], [0], [1], [0, 0, 1, 1], [], []>} : vector<8x4xf32>, vector<4x128xf32>, vector<8x128xf32> -> vector<8x128xf32>
    %401 = arith.addf %396, %400 : vector<8x128xf32>
    %c16_271 = arith.constant 16 : index
    %c0_272 = arith.constant 0 : index
    %c0_273 = arith.constant 0 : index
    %402 = vector.load %arg4[%c16_271, %c0_272, %c0_273] : memref<25x8x4xf32, #tpu.memory_space<vmem>>, vector<1x8x4xf32>
    %403 = vector.shape_cast %402 : vector<1x8x4xf32> to vector<8x4xf32>
    %c0_274 = arith.constant 0 : index
    %c317 = arith.constant 317 : index
    %404 = vector.load %arg9[%c0_274, %c317] : memref<4x512xf32, #tpu.memory_space<vmem>>, vector<4x128xf32>
    %cst_275 = arith.constant dense<0.000000e+00> : vector<8x128xf32>
    %405 = tpu.matmul %403, %404, %cst_275 {dimension_numbers = #tpu.dot_dimension_numbers<[1], [0], [0], [1], [0, 0, 1, 1], [], []>} : vector<8x4xf32>, vector<4x128xf32>, vector<8x128xf32> -> vector<8x128xf32>
    %406 = arith.addf %401, %405 : vector<8x128xf32>
    %c17_276 = arith.constant 17 : index
    %c0_277 = arith.constant 0 : index
    %c0_278 = arith.constant 0 : index
    %407 = vector.load %arg4[%c17_276, %c0_277, %c0_278] : memref<25x8x4xf32, #tpu.memory_space<vmem>>, vector<1x8x4xf32>
    %408 = vector.shape_cast %407 : vector<1x8x4xf32> to vector<8x4xf32>
    %c0_279 = arith.constant 0 : index
    %c318 = arith.constant 318 : index
    %409 = vector.load %arg9[%c0_279, %c318] : memref<4x512xf32, #tpu.memory_space<vmem>>, vector<4x128xf32>
    %cst_280 = arith.constant dense<0.000000e+00> : vector<8x128xf32>
    %410 = tpu.matmul %408, %409, %cst_280 {dimension_numbers = #tpu.dot_dimension_numbers<[1], [0], [0], [1], [0, 0, 1, 1], [], []>} : vector<8x4xf32>, vector<4x128xf32>, vector<8x128xf32> -> vector<8x128xf32>
    %411 = arith.addf %406, %410 : vector<8x128xf32>
    %c18_281 = arith.constant 18 : index
    %c0_282 = arith.constant 0 : index
    %c0_283 = arith.constant 0 : index
    %412 = vector.load %arg4[%c18_281, %c0_282, %c0_283] : memref<25x8x4xf32, #tpu.memory_space<vmem>>, vector<1x8x4xf32>
    %413 = vector.shape_cast %412 : vector<1x8x4xf32> to vector<8x4xf32>
    %c0_284 = arith.constant 0 : index
    %c319 = arith.constant 319 : index
    %414 = vector.load %arg9[%c0_284, %c319] : memref<4x512xf32, #tpu.memory_space<vmem>>, vector<4x128xf32>
    %cst_285 = arith.constant dense<0.000000e+00> : vector<8x128xf32>
    %415 = tpu.matmul %413, %414, %cst_285 {dimension_numbers = #tpu.dot_dimension_numbers<[1], [0], [0], [1], [0, 0, 1, 1], [], []>} : vector<8x4xf32>, vector<4x128xf32>, vector<8x128xf32> -> vector<8x128xf32>
    %416 = arith.addf %411, %415 : vector<8x128xf32>
    %c19_286 = arith.constant 19 : index
    %c0_287 = arith.constant 0 : index
    %c0_288 = arith.constant 0 : index
    %417 = vector.load %arg4[%c19_286, %c0_287, %c0_288] : memref<25x8x4xf32, #tpu.memory_space<vmem>>, vector<1x8x4xf32>
    %418 = vector.shape_cast %417 : vector<1x8x4xf32> to vector<8x4xf32>
    %c0_289 = arith.constant 0 : index
    %c320 = arith.constant 320 : index
    %419 = vector.load %arg9[%c0_289, %c320] : memref<4x512xf32, #tpu.memory_space<vmem>>, vector<4x128xf32>
    %cst_290 = arith.constant dense<0.000000e+00> : vector<8x128xf32>
    %420 = tpu.matmul %418, %419, %cst_290 {dimension_numbers = #tpu.dot_dimension_numbers<[1], [0], [0], [1], [0, 0, 1, 1], [], []>} : vector<8x4xf32>, vector<4x128xf32>, vector<8x128xf32> -> vector<8x128xf32>
    %421 = arith.addf %416, %420 : vector<8x128xf32>
    %c20_291 = arith.constant 20 : index
    %c0_292 = arith.constant 0 : index
    %c0_293 = arith.constant 0 : index
    %422 = vector.load %arg4[%c20_291, %c0_292, %c0_293] : memref<25x8x4xf32, #tpu.memory_space<vmem>>, vector<1x8x4xf32>
    %423 = vector.shape_cast %422 : vector<1x8x4xf32> to vector<8x4xf32>
    %c0_294 = arith.constant 0 : index
    %c336 = arith.constant 336 : index
    %424 = vector.load %arg9[%c0_294, %c336] : memref<4x512xf32, #tpu.memory_space<vmem>>, vector<4x128xf32>
    %cst_295 = arith.constant dense<0.000000e+00> : vector<8x128xf32>
    %425 = tpu.matmul %423, %424, %cst_295 {dimension_numbers = #tpu.dot_dimension_numbers<[1], [0], [0], [1], [0, 0, 1, 1], [], []>} : vector<8x4xf32>, vector<4x128xf32>, vector<8x128xf32> -> vector<8x128xf32>
    %426 = arith.addf %421, %425 : vector<8x128xf32>
    %c21_296 = arith.constant 21 : index
    %c0_297 = arith.constant 0 : index
    %c0_298 = arith.constant 0 : index
    %427 = vector.load %arg4[%c21_296, %c0_297, %c0_298] : memref<25x8x4xf32, #tpu.memory_space<vmem>>, vector<1x8x4xf32>
    %428 = vector.shape_cast %427 : vector<1x8x4xf32> to vector<8x4xf32>
    %c0_299 = arith.constant 0 : index
    %c337 = arith.constant 337 : index
    %429 = vector.load %arg9[%c0_299, %c337] : memref<4x512xf32, #tpu.memory_space<vmem>>, vector<4x128xf32>
    %cst_300 = arith.constant dense<0.000000e+00> : vector<8x128xf32>
    %430 = tpu.matmul %428, %429, %cst_300 {dimension_numbers = #tpu.dot_dimension_numbers<[1], [0], [0], [1], [0, 0, 1, 1], [], []>} : vector<8x4xf32>, vector<4x128xf32>, vector<8x128xf32> -> vector<8x128xf32>
    %431 = arith.addf %426, %430 : vector<8x128xf32>
    %c22_301 = arith.constant 22 : index
    %c0_302 = arith.constant 0 : index
    %c0_303 = arith.constant 0 : index
    %432 = vector.load %arg4[%c22_301, %c0_302, %c0_303] : memref<25x8x4xf32, #tpu.memory_space<vmem>>, vector<1x8x4xf32>
    %433 = vector.shape_cast %432 : vector<1x8x4xf32> to vector<8x4xf32>
    %c0_304 = arith.constant 0 : index
    %c338 = arith.constant 338 : index
    %434 = vector.load %arg9[%c0_304, %c338] : memref<4x512xf32, #tpu.memory_space<vmem>>, vector<4x128xf32>
    %cst_305 = arith.constant dense<0.000000e+00> : vector<8x128xf32>
    %435 = tpu.matmul %433, %434, %cst_305 {dimension_numbers = #tpu.dot_dimension_numbers<[1], [0], [0], [1], [0, 0, 1, 1], [], []>} : vector<8x4xf32>, vector<4x128xf32>, vector<8x128xf32> -> vector<8x128xf32>
    %436 = arith.addf %431, %435 : vector<8x128xf32>
    %c23_306 = arith.constant 23 : index
    %c0_307 = arith.constant 0 : index
    %c0_308 = arith.constant 0 : index
    %437 = vector.load %arg4[%c23_306, %c0_307, %c0_308] : memref<25x8x4xf32, #tpu.memory_space<vmem>>, vector<1x8x4xf32>
    %438 = vector.shape_cast %437 : vector<1x8x4xf32> to vector<8x4xf32>
    %c0_309 = arith.constant 0 : index
    %c339 = arith.constant 339 : index
    %439 = vector.load %arg9[%c0_309, %c339] : memref<4x512xf32, #tpu.memory_space<vmem>>, vector<4x128xf32>
    %cst_310 = arith.constant dense<0.000000e+00> : vector<8x128xf32>
    %440 = tpu.matmul %438, %439, %cst_310 {dimension_numbers = #tpu.dot_dimension_numbers<[1], [0], [0], [1], [0, 0, 1, 1], [], []>} : vector<8x4xf32>, vector<4x128xf32>, vector<8x128xf32> -> vector<8x128xf32>
    %441 = arith.addf %436, %440 : vector<8x128xf32>
    %c24_311 = arith.constant 24 : index
    %c0_312 = arith.constant 0 : index
    %c0_313 = arith.constant 0 : index
    %442 = vector.load %arg4[%c24_311, %c0_312, %c0_313] : memref<25x8x4xf32, #tpu.memory_space<vmem>>, vector<1x8x4xf32>
    %443 = vector.shape_cast %442 : vector<1x8x4xf32> to vector<8x4xf32>
    %c0_314 = arith.constant 0 : index
    %c340 = arith.constant 340 : index
    %444 = vector.load %arg9[%c0_314, %c340] : memref<4x512xf32, #tpu.memory_space<vmem>>, vector<4x128xf32>
    %cst_315 = arith.constant dense<0.000000e+00> : vector<8x128xf32>
    %445 = tpu.matmul %443, %444, %cst_315 {dimension_numbers = #tpu.dot_dimension_numbers<[1], [0], [0], [1], [0, 0, 1, 1], [], []>} : vector<8x4xf32>, vector<4x128xf32>, vector<8x128xf32> -> vector<8x128xf32>
    %446 = arith.addf %441, %445 : vector<8x128xf32>
    %447 = vector.broadcast %6 : f32 to vector<8x128xf32>
    %448 = arith.mulf %446, %447 : vector<8x128xf32>
    %449 = vector.broadcast %7 : f32 to vector<8x128xf32>
    %450 = arith.maximumf %449, %448 : vector<8x128xf32>
    %451 = vector.broadcast %8 : f32 to vector<8x128xf32>
    %452 = arith.minimumf %451, %450 : vector<8x128xf32>
    %cst_316 = arith.constant 0.000000e+00 : f32
    %453 = vector.broadcast %cst_316 : f32 to vector<8x128xf32>
    %c0_317 = arith.constant 0 : index
    %454 = memref.load %arg3[%c0_317] : memref<16xf32, #tpu.memory_space<smem>>
    %455 = vector.broadcast %454 : f32 to vector<8x128xf32>
    %456 = arith.subf %452, %455 : vector<8x128xf32>
    %c0_318 = arith.constant 0 : index
    %c0_319 = arith.constant 0 : index
    %457 = vector.load %arg5[%c0_318, %c0_319] : memref<8x16xf32, #tpu.memory_space<vmem>>, vector<8x1xf32>
    %458 = arith.mulf %456, %456 : vector<8x128xf32>
    %cst_320 = arith.constant 0.000000e+00 : f32
    %459 = vector.broadcast %cst_320 : f32 to vector<8x128xf32>
    %460 = arith.subf %459, %458 : vector<8x128xf32>
    %461 = math.exp %460 : vector<8x128xf32>
    %462 = vector.broadcast %457 : vector<8x1xf32> to vector<8x128xf32>
    %463 = arith.mulf %462, %461 : vector<8x128xf32>
    %464 = arith.addf %453, %463 : vector<8x128xf32>
    %c1_321 = arith.constant 1 : index
    %465 = memref.load %arg3[%c1_321] : memref<16xf32, #tpu.memory_space<smem>>
    %466 = vector.broadcast %465 : f32 to vector<8x128xf32>
    %467 = arith.subf %452, %466 : vector<8x128xf32>
    %c0_322 = arith.constant 0 : index
    %c1_323 = arith.constant 1 : index
    %468 = vector.load %arg5[%c0_322, %c1_323] : memref<8x16xf32, #tpu.memory_space<vmem>>, vector<8x1xf32>
    %469 = arith.mulf %467, %467 : vector<8x128xf32>
    %cst_324 = arith.constant 0.000000e+00 : f32
    %470 = vector.broadcast %cst_324 : f32 to vector<8x128xf32>
    %471 = arith.subf %470, %469 : vector<8x128xf32>
    %472 = math.exp %471 : vector<8x128xf32>
    %473 = vector.broadcast %468 : vector<8x1xf32> to vector<8x128xf32>
    %474 = arith.mulf %473, %472 : vector<8x128xf32>
    %475 = arith.addf %464, %474 : vector<8x128xf32>
    %c2_325 = arith.constant 2 : index
    %476 = memref.load %arg3[%c2_325] : memref<16xf32, #tpu.memory_space<smem>>
    %477 = vector.broadcast %476 : f32 to vector<8x128xf32>
    %478 = arith.subf %452, %477 : vector<8x128xf32>
    %c0_326 = arith.constant 0 : index
    %c2_327 = arith.constant 2 : index
    %479 = vector.load %arg5[%c0_326, %c2_327] : memref<8x16xf32, #tpu.memory_space<vmem>>, vector<8x1xf32>
    %480 = arith.mulf %478, %478 : vector<8x128xf32>
    %cst_328 = arith.constant 0.000000e+00 : f32
    %481 = vector.broadcast %cst_328 : f32 to vector<8x128xf32>
    %482 = arith.subf %481, %480 : vector<8x128xf32>
    %483 = math.exp %482 : vector<8x128xf32>
    %484 = vector.broadcast %479 : vector<8x1xf32> to vector<8x128xf32>
    %485 = arith.mulf %484, %483 : vector<8x128xf32>
    %486 = arith.addf %475, %485 : vector<8x128xf32>
    %c3_329 = arith.constant 3 : index
    %487 = memref.load %arg3[%c3_329] : memref<16xf32, #tpu.memory_space<smem>>
    %488 = vector.broadcast %487 : f32 to vector<8x128xf32>
    %489 = arith.subf %452, %488 : vector<8x128xf32>
    %c0_330 = arith.constant 0 : index
    %c3_331 = arith.constant 3 : index
    %490 = vector.load %arg5[%c0_330, %c3_331] : memref<8x16xf32, #tpu.memory_space<vmem>>, vector<8x1xf32>
    %491 = arith.mulf %489, %489 : vector<8x128xf32>
    %cst_332 = arith.constant 0.000000e+00 : f32
    %492 = vector.broadcast %cst_332 : f32 to vector<8x128xf32>
    %493 = arith.subf %492, %491 : vector<8x128xf32>
    %494 = math.exp %493 : vector<8x128xf32>
    %495 = vector.broadcast %490 : vector<8x1xf32> to vector<8x128xf32>
    %496 = arith.mulf %495, %494 : vector<8x128xf32>
    %497 = arith.addf %486, %496 : vector<8x128xf32>
    %c4_333 = arith.constant 4 : index
    %498 = memref.load %arg3[%c4_333] : memref<16xf32, #tpu.memory_space<smem>>
    %499 = vector.broadcast %498 : f32 to vector<8x128xf32>
    %500 = arith.subf %452, %499 : vector<8x128xf32>
    %c0_334 = arith.constant 0 : index
    %c4_335 = arith.constant 4 : index
    %501 = vector.load %arg5[%c0_334, %c4_335] : memref<8x16xf32, #tpu.memory_space<vmem>>, vector<8x1xf32>
    %502 = arith.mulf %500, %500 : vector<8x128xf32>
    %cst_336 = arith.constant 0.000000e+00 : f32
    %503 = vector.broadcast %cst_336 : f32 to vector<8x128xf32>
    %504 = arith.subf %503, %502 : vector<8x128xf32>
    %505 = math.exp %504 : vector<8x128xf32>
    %506 = vector.broadcast %501 : vector<8x1xf32> to vector<8x128xf32>
    %507 = arith.mulf %506, %505 : vector<8x128xf32>
    %508 = arith.addf %497, %507 : vector<8x128xf32>
    %c5_337 = arith.constant 5 : index
    %509 = memref.load %arg3[%c5_337] : memref<16xf32, #tpu.memory_space<smem>>
    %510 = vector.broadcast %509 : f32 to vector<8x128xf32>
    %511 = arith.subf %452, %510 : vector<8x128xf32>
    %c0_338 = arith.constant 0 : index
    %c5_339 = arith.constant 5 : index
    %512 = vector.load %arg5[%c0_338, %c5_339] : memref<8x16xf32, #tpu.memory_space<vmem>>, vector<8x1xf32>
    %513 = arith.mulf %511, %511 : vector<8x128xf32>
    %cst_340 = arith.constant 0.000000e+00 : f32
    %514 = vector.broadcast %cst_340 : f32 to vector<8x128xf32>
    %515 = arith.subf %514, %513 : vector<8x128xf32>
    %516 = math.exp %515 : vector<8x128xf32>
    %517 = vector.broadcast %512 : vector<8x1xf32> to vector<8x128xf32>
    %518 = arith.mulf %517, %516 : vector<8x128xf32>
    %519 = arith.addf %508, %518 : vector<8x128xf32>
    %c6_341 = arith.constant 6 : index
    %520 = memref.load %arg3[%c6_341] : memref<16xf32, #tpu.memory_space<smem>>
    %521 = vector.broadcast %520 : f32 to vector<8x128xf32>
    %522 = arith.subf %452, %521 : vector<8x128xf32>
    %c0_342 = arith.constant 0 : index
    %c6_343 = arith.constant 6 : index
    %523 = vector.load %arg5[%c0_342, %c6_343] : memref<8x16xf32, #tpu.memory_space<vmem>>, vector<8x1xf32>
    %524 = arith.mulf %522, %522 : vector<8x128xf32>
    %cst_344 = arith.constant 0.000000e+00 : f32
    %525 = vector.broadcast %cst_344 : f32 to vector<8x128xf32>
    %526 = arith.subf %525, %524 : vector<8x128xf32>
    %527 = math.exp %526 : vector<8x128xf32>
    %528 = vector.broadcast %523 : vector<8x1xf32> to vector<8x128xf32>
    %529 = arith.mulf %528, %527 : vector<8x128xf32>
    %530 = arith.addf %519, %529 : vector<8x128xf32>
    %c7_345 = arith.constant 7 : index
    %531 = memref.load %arg3[%c7_345] : memref<16xf32, #tpu.memory_space<smem>>
    %532 = vector.broadcast %531 : f32 to vector<8x128xf32>
    %533 = arith.subf %452, %532 : vector<8x128xf32>
    %c0_346 = arith.constant 0 : index
    %c7_347 = arith.constant 7 : index
    %534 = vector.load %arg5[%c0_346, %c7_347] : memref<8x16xf32, #tpu.memory_space<vmem>>, vector<8x1xf32>
    %535 = arith.mulf %533, %533 : vector<8x128xf32>
    %cst_348 = arith.constant 0.000000e+00 : f32
    %536 = vector.broadcast %cst_348 : f32 to vector<8x128xf32>
    %537 = arith.subf %536, %535 : vector<8x128xf32>
    %538 = math.exp %537 : vector<8x128xf32>
    %539 = vector.broadcast %534 : vector<8x1xf32> to vector<8x128xf32>
    %540 = arith.mulf %539, %538 : vector<8x128xf32>
    %541 = arith.addf %530, %540 : vector<8x128xf32>
    %c8_349 = arith.constant 8 : index
    %542 = memref.load %arg3[%c8_349] : memref<16xf32, #tpu.memory_space<smem>>
    %543 = vector.broadcast %542 : f32 to vector<8x128xf32>
    %544 = arith.subf %452, %543 : vector<8x128xf32>
    %c0_350 = arith.constant 0 : index
    %c8_351 = arith.constant 8 : index
    %545 = vector.load %arg5[%c0_350, %c8_351] : memref<8x16xf32, #tpu.memory_space<vmem>>, vector<8x1xf32>
    %546 = arith.mulf %544, %544 : vector<8x128xf32>
    %cst_352 = arith.constant 0.000000e+00 : f32
    %547 = vector.broadcast %cst_352 : f32 to vector<8x128xf32>
    %548 = arith.subf %547, %546 : vector<8x128xf32>
    %549 = math.exp %548 : vector<8x128xf32>
    %550 = vector.broadcast %545 : vector<8x1xf32> to vector<8x128xf32>
    %551 = arith.mulf %550, %549 : vector<8x128xf32>
    %552 = arith.addf %541, %551 : vector<8x128xf32>
    %c9_353 = arith.constant 9 : index
    %553 = memref.load %arg3[%c9_353] : memref<16xf32, #tpu.memory_space<smem>>
    %554 = vector.broadcast %553 : f32 to vector<8x128xf32>
    %555 = arith.subf %452, %554 : vector<8x128xf32>
    %c0_354 = arith.constant 0 : index
    %c9_355 = arith.constant 9 : index
    %556 = vector.load %arg5[%c0_354, %c9_355] : memref<8x16xf32, #tpu.memory_space<vmem>>, vector<8x1xf32>
    %557 = arith.mulf %555, %555 : vector<8x128xf32>
    %cst_356 = arith.constant 0.000000e+00 : f32
    %558 = vector.broadcast %cst_356 : f32 to vector<8x128xf32>
    %559 = arith.subf %558, %557 : vector<8x128xf32>
    %560 = math.exp %559 : vector<8x128xf32>
    %561 = vector.broadcast %556 : vector<8x1xf32> to vector<8x128xf32>
    %562 = arith.mulf %561, %560 : vector<8x128xf32>
    %563 = arith.addf %552, %562 : vector<8x128xf32>
    %c10_357 = arith.constant 10 : index
    %564 = memref.load %arg3[%c10_357] : memref<16xf32, #tpu.memory_space<smem>>
    %565 = vector.broadcast %564 : f32 to vector<8x128xf32>
    %566 = arith.subf %452, %565 : vector<8x128xf32>
    %c0_358 = arith.constant 0 : index
    %c10_359 = arith.constant 10 : index
    %567 = vector.load %arg5[%c0_358, %c10_359] : memref<8x16xf32, #tpu.memory_space<vmem>>, vector<8x1xf32>
    %568 = arith.mulf %566, %566 : vector<8x128xf32>
    %cst_360 = arith.constant 0.000000e+00 : f32
    %569 = vector.broadcast %cst_360 : f32 to vector<8x128xf32>
    %570 = arith.subf %569, %568 : vector<8x128xf32>
    %571 = math.exp %570 : vector<8x128xf32>
    %572 = vector.broadcast %567 : vector<8x1xf32> to vector<8x128xf32>
    %573 = arith.mulf %572, %571 : vector<8x128xf32>
    %574 = arith.addf %563, %573 : vector<8x128xf32>
    %c11_361 = arith.constant 11 : index
    %575 = memref.load %arg3[%c11_361] : memref<16xf32, #tpu.memory_space<smem>>
    %576 = vector.broadcast %575 : f32 to vector<8x128xf32>
    %577 = arith.subf %452, %576 : vector<8x128xf32>
    %c0_362 = arith.constant 0 : index
    %c11_363 = arith.constant 11 : index
    %578 = vector.load %arg5[%c0_362, %c11_363] : memref<8x16xf32, #tpu.memory_space<vmem>>, vector<8x1xf32>
    %579 = arith.mulf %577, %577 : vector<8x128xf32>
    %cst_364 = arith.constant 0.000000e+00 : f32
    %580 = vector.broadcast %cst_364 : f32 to vector<8x128xf32>
    %581 = arith.subf %580, %579 : vector<8x128xf32>
    %582 = math.exp %581 : vector<8x128xf32>
    %583 = vector.broadcast %578 : vector<8x1xf32> to vector<8x128xf32>
    %584 = arith.mulf %583, %582 : vector<8x128xf32>
    %585 = arith.addf %574, %584 : vector<8x128xf32>
    %c12_365 = arith.constant 12 : index
    %586 = memref.load %arg3[%c12_365] : memref<16xf32, #tpu.memory_space<smem>>
    %587 = vector.broadcast %586 : f32 to vector<8x128xf32>
    %588 = arith.subf %452, %587 : vector<8x128xf32>
    %c0_366 = arith.constant 0 : index
    %c12_367 = arith.constant 12 : index
    %589 = vector.load %arg5[%c0_366, %c12_367] : memref<8x16xf32, #tpu.memory_space<vmem>>, vector<8x1xf32>
    %590 = arith.mulf %588, %588 : vector<8x128xf32>
    %cst_368 = arith.constant 0.000000e+00 : f32
    %591 = vector.broadcast %cst_368 : f32 to vector<8x128xf32>
    %592 = arith.subf %591, %590 : vector<8x128xf32>
    %593 = math.exp %592 : vector<8x128xf32>
    %594 = vector.broadcast %589 : vector<8x1xf32> to vector<8x128xf32>
    %595 = arith.mulf %594, %593 : vector<8x128xf32>
    %596 = arith.addf %585, %595 : vector<8x128xf32>
    %c13_369 = arith.constant 13 : index
    %597 = memref.load %arg3[%c13_369] : memref<16xf32, #tpu.memory_space<smem>>
    %598 = vector.broadcast %597 : f32 to vector<8x128xf32>
    %599 = arith.subf %452, %598 : vector<8x128xf32>
    %c0_370 = arith.constant 0 : index
    %c13_371 = arith.constant 13 : index
    %600 = vector.load %arg5[%c0_370, %c13_371] : memref<8x16xf32, #tpu.memory_space<vmem>>, vector<8x1xf32>
    %601 = arith.mulf %599, %599 : vector<8x128xf32>
    %cst_372 = arith.constant 0.000000e+00 : f32
    %602 = vector.broadcast %cst_372 : f32 to vector<8x128xf32>
    %603 = arith.subf %602, %601 : vector<8x128xf32>
    %604 = math.exp %603 : vector<8x128xf32>
    %605 = vector.broadcast %600 : vector<8x1xf32> to vector<8x128xf32>
    %606 = arith.mulf %605, %604 : vector<8x128xf32>
    %607 = arith.addf %596, %606 : vector<8x128xf32>
    %c14_373 = arith.constant 14 : index
    %608 = memref.load %arg3[%c14_373] : memref<16xf32, #tpu.memory_space<smem>>
    %609 = vector.broadcast %608 : f32 to vector<8x128xf32>
    %610 = arith.subf %452, %609 : vector<8x128xf32>
    %c0_374 = arith.constant 0 : index
    %c14_375 = arith.constant 14 : index
    %611 = vector.load %arg5[%c0_374, %c14_375] : memref<8x16xf32, #tpu.memory_space<vmem>>, vector<8x1xf32>
    %612 = arith.mulf %610, %610 : vector<8x128xf32>
    %cst_376 = arith.constant 0.000000e+00 : f32
    %613 = vector.broadcast %cst_376 : f32 to vector<8x128xf32>
    %614 = arith.subf %613, %612 : vector<8x128xf32>
    %615 = math.exp %614 : vector<8x128xf32>
    %616 = vector.broadcast %611 : vector<8x1xf32> to vector<8x128xf32>
    %617 = arith.mulf %616, %615 : vector<8x128xf32>
    %618 = arith.addf %607, %617 : vector<8x128xf32>
    %c15_377 = arith.constant 15 : index
    %619 = memref.load %arg3[%c15_377] : memref<16xf32, #tpu.memory_space<smem>>
    %620 = vector.broadcast %619 : f32 to vector<8x128xf32>
    %621 = arith.subf %452, %620 : vector<8x128xf32>
    %c0_378 = arith.constant 0 : index
    %c15_379 = arith.constant 15 : index
    %622 = vector.load %arg5[%c0_378, %c15_379] : memref<8x16xf32, #tpu.memory_space<vmem>>, vector<8x1xf32>
    %623 = arith.mulf %621, %621 : vector<8x128xf32>
    %cst_380 = arith.constant 0.000000e+00 : f32
    %624 = vector.broadcast %cst_380 : f32 to vector<8x128xf32>
    %625 = arith.subf %624, %623 : vector<8x128xf32>
    %626 = math.exp %625 : vector<8x128xf32>
    %627 = vector.broadcast %622 : vector<8x1xf32> to vector<8x128xf32>
    %628 = arith.mulf %627, %626 : vector<8x128xf32>
    %629 = arith.addf %618, %628 : vector<8x128xf32>
    %c0_381 = arith.constant 0 : index
    %c0_382 = arith.constant 0 : index
    %c256_383 = arith.constant 256 : index
    %630 = vector.load %arg8[%c0_381, %c0_382, %c256_383] : memref<1x8x384xf32, #tpu.memory_space<vmem>>, vector<1x8x128xf32>
    %631 = vector.shape_cast %630 : vector<1x8x128xf32> to vector<8x128xf32>
    %632 = vector.shape_cast %629 : vector<8x128xf32> to vector<1x8x128xf32>
    tpu.vector_store %arg8[%c0_381, %c0_382, %c256_383], %632 {strides = array<i32>} : memref<1x8x384xf32, #tpu.memory_space<vmem>>, vector<1x8x128xf32>,
    return
  }
  func.func @transform_0(%arg0: i32, %arg1: i32) -> i32 {
    %c0_i32 = arith.constant 0 : i32
    %c0_i32_0 = arith.constant 0 : i32
    return %c0_i32 : i32
  }
  func.func @transform_1(%arg0: i32, %arg1: i32) -> i32 {
    %c0_i32 = arith.constant 0 : i32
    %c0_i32_0 = arith.constant 0 : i32
    return %c0_i32 : i32
  }
  func.func @transform_2(%arg0: i32, %arg1: i32) -> (i32, i32, i32) {
    %c0_i32 = arith.constant 0 : i32
    %c0_i32_0 = arith.constant 0 : i32
    %c0_i32_1 = arith.constant 0 : i32
    %c0_i32_2 = arith.constant 0 : i32
    return %c0_i32, %c0_i32_0, %c0_i32_1 : i32, i32, i32
  }
  func.func @transform_3(%arg0: i32, %arg1: i32) -> (i32, i32) {
    %c0_i32 = arith.constant 0 : i32
    %c0_i32_0 = arith.constant 0 : i32
    %c0_i32_1 = arith.constant 0 : i32
    return %c0_i32, %c0_i32_0 : i32, i32
  }
  func.func @transform_4(%arg0: i32, %arg1: i32) -> (i32, i32, i32) {
    %c0_i32 = arith.constant 0 : i32
    %c0_i32_0 = arith.constant 0 : i32
    return %arg0, %c0_i32, %arg1 : i32, i32, i32
  }
  func.func @transform_5(%arg0: i32, %arg1: i32) -> (i32, i32, i32) {
    %c1_i32 = arith.constant 1 : i32
    %0 = arith.addi %arg1, %c1_i32 : i32
    %c3_i32 = arith.constant 3 : i32
    %1 = arith.muli %0, %c3_i32 : i32
    %c0_i32 = arith.constant 0 : i32
    %c0_i32_0 = arith.constant 0 : i32
    return %arg0, %c0_i32, %1 : i32, i32, i32
  }
  func.func @transform_6(%arg0: i32, %arg1: i32) -> (i32, i32, i32) {
    %c0_i32 = arith.constant 0 : i32
    %c0_i32_0 = arith.constant 0 : i32
    return %arg0, %c0_i32, %arg1 : i32, i32, i32
  }
}

</mosaic_0001>

<llo_original>
// kernel: tpu_custom_call.1
$region0: #{tpu_custom_call.1}
  #allocation0 [shape = 'u32[]', space=smem, size = 0x4, offset = 0x4, fixed_abs, tag = 'smem constant byte address 0x4 - core index']
  #allocation1 [shape = 'u32[144,128]{1,0:T(1,128)}', space=vmem, size = 0x12000, scoped, tag = 'internal scratch']
  #allocation2 [shape = 'f32[4,512]{1,0:T(4,128)}', space=vmem, size = 0x2000, scoped, tag = 'scratch operand']
  %s0 = inlined_call_operand.vmem [shape: f32[3], index: 0, kind: input, shape index: {}]
  %s1 = inlined_call_operand.vmem [shape: f32[16], index: 1, kind: input, shape index: {}]
  %s2 = inlined_call_operand.vmem [shape: f32[25,8,4], index: 2, kind: input, shape index: {}]
  %s3 = inlined_call_operand.vmem [shape: f32[8,16], index: 3, kind: input, shape index: {}]
  %s4 = inlined_call_operand.vmem [shape: f32[2,4,512], index: 4, kind: input, shape index: {}]
  %s5 = inlined_call_operand.vmem [shape: f32[2,4,512], index: 5, kind: input, shape index: {}]
  %s6 = inlined_call_operand.hbm [shape: f32[2,8,384], index: 6, kind: output, shape index: {}]
  %s7 = sld [smem:[#allocation0]]
  $region65: #{tpu_custom_call.1} parent=0
    _
  %s9 = ssub.s32 1, %s7
  %s10 = scalar_select 0, %s9, %s7
  $region1: #{tpu_custom_call.1} parent=0
    #allocation3 [shape = 'u8[512]{0}', space=smem, size = 0x200, scoped, tag = 'input window, operand 0, single buffered']
    #allocation4 [shape = 's32[2]{0}', space=sflag, size = 0x8, scoped, tag = 'scoped memory for tpu_custom_call.1']
    #allocation5 [shape = 's32[2]{0}', space=sflag, size = 0x8, scoped, tag = 'scoped memory for tpu_custom_call.1']
    #allocation6 [shape = 'u8[512]{0}', space=smem, size = 0x200, scoped, tag = 'input window, operand 1, single buffered']
    #allocation7 [shape = 's32[1]{0}', space=sflag, size = 0x4, scoped, tag = 'scoped memory for tpu_custom_call.1']
    #allocation8 [shape = 'u8[24576]{0}', space=vmem, size = 0x6000, scoped, tag = 'output window, operand 0']
    %11 = vsyncpa [#allocation5], 0
    %12 = vsyncpa [#allocation7], 0
    %13 = vsyncpa [#allocation4], 0
    %s14 = scalar_lea.sflag [#allocation4], 1
    %15 = vsyncpa %s14, 0
    loop: start=0, step=1, limit=4
    $region2: #{tpu_custom_call.1} parent=1 // loop_pre_header
      _
    $region3: #{tpu_custom_call.1} parent=1 // loop_header
      %s17 = sphi 0, %s21
      %p18 = scmp.ge.s32.totalorder %s17, 4
      %s24 = sphi 0, %s36
      %s25 = sphi 0, %s32
      %s26 = sphi 0, %s24
      %s27 = sphi 0, %s25
      %s28 = sphi 0, %s26
      %s29 = sphi 0, %s27
      %s37 = sphi 0, %s37
      %s39 = sphi 0, %s37
      %s40 = sphi 0, %s39
      %s54 = sphi 0, %s40
      %s58 = sphi 0, %s58
      %s60 = sphi 0, %s58
      %s61 = sphi 0, %s60
      %s75 = sphi 0, %s61
      %s79 = sphi 0, %s79
      %s81 = sphi 0, %s79
      %s82 = sphi 0, %s81
      %s96 = sphi 0, %s82
      %s100 = sphi 0, %s100
      %s102 = sphi 0, %s100
      %s103 = sphi 0, %s102
      %s117 = sphi 0, %s103
      %s125 = sphi 0, %s127
      %s128 = sphi 0, %s125
      %s129 = sphi 0, %s128
      %s145 = sphi 0, %s129
      %s157 = sphi 0, %s159
      %s160 = sphi 0, %s157
      %s161 = sphi 0, %s160
      %s177 = sphi 0, %s161
      %s185 = sphi 0, %s187
      %s188 = sphi 0, %s185
      %s189 = sphi 0, %s188
      %s205 = sphi 0, %s189
    $region4: #{tpu_custom_call.1} parent=1 // loop_header_branch
      %20 = sbr.rel (%p18) target = $region8
    $region5: #{tpu_custom_call.1} parent=1 // loop_body
      %s22 = ssub.s32 %s17, 1
      %s23 = ssub.s32 %s17, 2
      %s30 = sadd.s32 1, %s25
      %p31 = scmp.ge.s32.totalorder %s30, 1
      %s32 = scalar_select %p31, 0, %s30
      %s33 = sadd.s32 1, %s24
      %s34 = scalar_select %p31, %s33, %s24
      %p35 = scmp.ge.s32.totalorder %s34, 2
      %s36 = scalar_select %p35, 0, %s34
      %s38 = sadd.s32 %s37, 1
      %p41 = scmp.eq.s32.totalorder %s17, 1
      %p42 = scmp.ne.s32.totalorder %s37, %s39
      %p43 = scmp.eq.s32.totalorder %s17, 0
      %p44 = por %p42, %p43
      %p45 = scmp.ne.s32.totalorder %s37, %s39
      %p46 = scmp.eq.s32.totalorder %s22, 1
      %p47 = por %p45, %p46
      %p48 = scmp.ne.s32.totalorder %s39, %s40
      %p49 = scmp.eq.s32.totalorder %s22, 0
      %p50 = por %p48, %p49
      %p51 = scmp.ne.s32.totalorder %s39, %s40
      %p52 = scmp.eq.s32.totalorder %s23, 1
      %p53 = por %p51, %p52
      %p55 = scmp.ne.s32.totalorder %s40, %s54
      %p56 = scmp.eq.s32.totalorder %s23, 0
      %p57 = por %p55, %p56
      %s59 = sadd.s32 %s58, 1
      %p62 = scmp.eq.s32.totalorder %s17, 1
      %p63 = scmp.ne.s32.totalorder %s58, %s60
      %p64 = scmp.eq.s32.totalorder %s17, 0
      %p65 = por %p63, %p64
      %p66 = scmp.ne.s32.totalorder %s58, %s60
      %p67 = scmp.eq.s32.totalorder %s22, 1
      %p68 = por %p66, %p67
      %p69 = scmp.ne.s32.totalorder %s60, %s61
      %p70 = scmp.eq.s32.totalorder %s22, 0
      %p71 = por %p69, %p70
      %p72 = scmp.ne.s32.totalorder %s60, %s61
      %p73 = scmp.eq.s32.totalorder %s23, 1
      %p74 = por %p72, %p73
      %p76 = scmp.ne.s32.totalorder %s61, %s75
      %p77 = scmp.eq.s32.totalorder %s23, 0
      %p78 = por %p76, %p77
      %s80 = sadd.s32 %s79, 1
      %p83 = scmp.eq.s32.totalorder %s17, 1
      %p84 = scmp.ne.s32.totalorder %s79, %s81
      %p85 = scmp.eq.s32.totalorder %s17, 0
      %p86 = por %p84, %p85
      %p87 = scmp.ne.s32.totalorder %s79, %s81
      %p88 = scmp.eq.s32.totalorder %s22, 1
      %p89 = por %p87, %p88
      %p90 = scmp.ne.s32.totalorder %s81, %s82
      %p91 = scmp.eq.s32.totalorder %s22, 0
      %p92 = por %p90, %p91
      %p93 = scmp.ne.s32.totalorder %s81, %s82
      %p94 = scmp.eq.s32.totalorder %s23, 1
      %p95 = por %p93, %p94
      %p97 = scmp.ne.s32.totalorder %s82, %s96
      %p98 = scmp.eq.s32.totalorder %s23, 0
      %p99 = por %p97, %p98
      %s101 = sadd.s32 %s100, 1
      %p104 = scmp.eq.s32.totalorder %s17, 1
      %p105 = scmp.ne.s32.totalorder %s100, %s102
      %p106 = scmp.eq.s32.totalorder %s17, 0
      %p107 = por %p105, %p106
      %p108 = scmp.ne.s32.totalorder %s100, %s102
      %p109 = scmp.eq.s32.totalorder %s22, 1
      %p110 = por %p108, %p109
      %p111 = scmp.ne.s32.totalorder %s102, %s103
      %p112 = scmp.eq.s32.totalorder %s22, 0
      %p113 = por %p111, %p112
      %p114 = scmp.ne.s32.totalorder %s102, %s103
      %p115 = scmp.eq.s32.totalorder %s23, 1
      %p116 = por %p114, %p115
      %p118 = scmp.ne.s32.totalorder %s103, %s117
      %p119 = scmp.eq.s32.totalorder %s23, 0
      %p120 = por %p118, %p119
      %s121 = ssub.s32 %s24, %s36
      %s122 = ssub.s32 %s25, %s32
      %s123 = sor.u32 %s121, %s122
      %p124 = scmp.eq.s32.totalorder %s123, 0
      %s126 = sadd.s32 %s125, 1
      %s127 = scalar_select %p124, %s125, %s126
      %p130 = pneg %p124
      %p131 = scmp.eq.s32.totalorder %s17, 1
      %p132 = por %p130, %p131
      %p133 = scmp.ne.s32.totalorder %s125, %s128
      %p134 = scmp.eq.s32.totalorder %s17, 0
      %p135 = por %p133, %p134
      %p136 = scmp.ne.s32.totalorder %s125, %s128
      %p137 = scmp.eq.s32.totalorder %s22, 1
      %p138 = por %p136, %p137
      %p139 = scmp.ne.s32.totalorder %s128, %s129
      %p140 = scmp.eq.s32.totalorder %s22, 0
      %p141 = por %p139, %p140
      %p142 = scmp.ne.s32.totalorder %s128, %s129
      %p143 = scmp.eq.s32.totalorder %s23, 1
      %p144 = por %p142, %p143
      %p146 = scmp.ne.s32.totalorder %s129, %s145
      %p147 = scmp.eq.s32.totalorder %s23, 0
      %p148 = por %p146, %p147
      %s149 = sadd.s32 %s25, 1
      %s150 = smul.u32 %s149, 3
      %s151 = sadd.s32 %s32, 1
      %s152 = smul.u32 %s151, 3
      %s153 = ssub.s32 %s24, %s36
      %s154 = ssub.s32 %s150, %s152
      %s155 = sor.u32 %s153, %s154
      %p156 = scmp.eq.s32.totalorder %s155, 0
      %s158 = sadd.s32 %s157, 1
      %s159 = scalar_select %p156, %s157, %s158
      %p162 = pneg %p156
      %p163 = scmp.eq.s32.totalorder %s17, 1
      %p164 = por %p162, %p163
      %p165 = scmp.ne.s32.totalorder %s157, %s160
      %p166 = scmp.eq.s32.totalorder %s17, 0
      %p167 = por %p165, %p166
      %p168 = scmp.ne.s32.totalorder %s157, %s160
      %p169 = scmp.eq.s32.totalorder %s22, 1
      %p170 = por %p168, %p169
      %p171 = scmp.ne.s32.totalorder %s160, %s161
      %p172 = scmp.eq.s32.totalorder %s22, 0
      %p173 = por %p171, %p172
      %p174 = scmp.ne.s32.totalorder %s160, %s161
      %p175 = scmp.eq.s32.totalorder %s23, 1
      %p176 = por %p174, %p175
      %p178 = scmp.ne.s32.totalorder %s161, %s177
      %p179 = scmp.eq.s32.totalorder %s23, 0
      %p180 = por %p178, %p179
      %s181 = ssub.s32 %s24, %s36
      %s182 = ssub.s32 %s25, %s32
      %s183 = sor.u32 %s181, %s182
      %p184 = scmp.eq.s32.totalorder %s183, 0
      %s186 = sadd.s32 %s185, 1
      %s187 = scalar_select %p184, %s185, %s186
      %p190 = pneg %p184
      %p191 = scmp.eq.s32.totalorder %s17, 1
      %p192 = por %p190, %p191
      %p193 = scmp.ne.s32.totalorder %s185, %s188
      %p194 = scmp.eq.s32.totalorder %s17, 0
      %p195 = por %p193, %p194
      %p196 = scmp.ne.s32.totalorder %s185, %s188
      %p197 = scmp.eq.s32.totalorder %s22, 1
      %p198 = por %p196, %p197
      %p199 = scmp.ne.s32.totalorder %s188, %s189
      %p200 = scmp.eq.s32.totalorder %s22, 0
      %p201 = por %p199, %p200
      %p202 = scmp.ne.s32.totalorder %s188, %s189
      %p203 = scmp.eq.s32.totalorder %s23, 1
      %p204 = por %p202, %p203
      %p206 = scmp.ne.s32.totalorder %s189, %s205
      %p207 = scmp.eq.s32.totalorder %s23, 0
      %p208 = por %p206, %p207
      %p209 = scmp.le.s32.totalorder 1, %s17
      %p210 = scmp.lt.s32.totalorder %s17, 3
      %p211 = pnand %p209, %p210
      %p212 = pneg %p211
      // Predicated region
      $region9: #{tpu_custom_call.1} parent=5 // pred_check
        _
      $region10: #{tpu_custom_call.1} parent=5 // pred_check_branch
        %214 = sbr.rel (%p211) target = $region12
      $region11: #{tpu_custom_call.1} parent=5 // pred_region
        %s215 = ssub.s32 %s17, 1
        // Predicated region
        $region13: #{tpu_custom_call.1} parent=11 // pred_check
          %p216 = pneg %p50
        $region14: #{tpu_custom_call.1} parent=11 // pred_check_branch
          %218 = sbr.rel (%p216) target = $region16
        $region15: #{tpu_custom_call.1} parent=11 // pred_region
          %s220 = ssub.s32 16, 16
          %221 = vsyncadd [#allocation5], %s220
          %s223 = sshll.u32 %s0, 4
          %s224 = int_to_ptr.vmem [resolvable:$true] %s223
          %226 = dma.vmem_to_smem %s224, 16, [#allocation3], [#allocation5]
        $region16: #{tpu_custom_call.1} parent=11 // pred_fallthru
          _
        // Predicated region
        $region17: #{tpu_custom_call.1} parent=11 // pred_check
          %p227 = pneg %p71
        $region18: #{tpu_custom_call.1} parent=11 // pred_check_branch
          %229 = sbr.rel (%p227) target = $region20
        $region19: #{tpu_custom_call.1} parent=11 // pred_region
          %s231 = ssub.s32 16, 16
          %232 = vsyncadd [#allocation7], %s231
          %s234 = sshll.u32 %s1, 4
          %s235 = int_to_ptr.vmem [resolvable:$true] %s234
          %237 = dma.vmem_to_smem %s235, 16, [#allocation6], [#allocation7]
        $region20: #{tpu_custom_call.1} parent=11 // pred_fallthru
          _
        // Predicated region
        $region21: #{tpu_custom_call.1} parent=11 // pred_check
          %p238 = pneg %p92
        $region22: #{tpu_custom_call.1} parent=11 // pred_check_branch
          %240 = sbr.rel (%p238) target = $region24
        $region23: #{tpu_custom_call.1} parent=11 // pred_region
          _
        $region24: #{tpu_custom_call.1} parent=11 // pred_fallthru
          _
        // Predicated region
        $region25: #{tpu_custom_call.1} parent=11 // pred_check
          %p241 = pneg %p113
        $region26: #{tpu_custom_call.1} parent=11 // pred_check_branch
          %243 = sbr.rel (%p241) target = $region28
        $region27: #{tpu_custom_call.1} parent=11 // pred_region
          _
        $region28: #{tpu_custom_call.1} parent=11 // pred_fallthru
          _
      $region12: #{tpu_custom_call.1} parent=5 // pred_fallthru
        _
      %p244 = scmp.lt.s32.totalorder %s17, 2
      // Predicated region
      $region29: #{tpu_custom_call.1} parent=5 // pred_check
        %p245 = pneg %p244
      $region30: #{tpu_custom_call.1} parent=5 // pred_check_branch
        %247 = sbr.rel (%p245) target = $region32
      $region31: #{tpu_custom_call.1} parent=5 // pred_region
        // Predicated region
        $region33: #{tpu_custom_call.1} parent=31 // pred_check
          %p248 = pneg %p135
        $region34: #{tpu_custom_call.1} parent=31 // pred_check_branch
          %250 = sbr.rel (%p248) target = $region36
        $region35: #{tpu_custom_call.1} parent=31 // pred_region
          %s251 = smul.u32 3, %s25
          %s252 = ssub.s32 4, %s251
          %p253 = scmp.lt.s32.totalorder %s252, 3
          %s254 = scalar_select %p253, %s252, 3
          %s255 = smul.u32 64, %s254
          %p256 = scmp.lt.s32.totalorder %s24, 1
          %s257 = scalar_select %p256, %s24, 1
          %p258 = scmp.lt.s32.totalorder %s251, 3
          %s259 = scalar_select %p258, %s251, 3
          %s260 = smul.addr %s257, 4
          %s261 = sadd.s32 %s259, %s260
          %s262 = smul.addr %s261, 4
          %s263 = scalar_lea.vmem %s4, %s262
          %s264 = smul.u32 3, %s25
          %s265 = ssub.s32 4, %s264
          %p266 = scmp.lt.s32.totalorder %s265, 3
          %s267 = scalar_select %p266, %s265, 3
          %s268 = smul.u32 64, %s267
        $region36: #{tpu_custom_call.1} parent=31 // pred_fallthru
          _
        // Predicated region
        $region37: #{tpu_custom_call.1} parent=31 // pred_check
          %p269 = pneg %p167
        $region38: #{tpu_custom_call.1} parent=31 // pred_check_branch
          %271 = sbr.rel (%p269) target = $region40
        $region39: #{tpu_custom_call.1} parent=31 // pred_region
          %s272 = sadd.s32 %s25, 1
          %s273 = smul.u32 %s272, 3
          %p274 = scmp.lt.s32.totalorder %s24, 1
          %s275 = scalar_select %p274, %s24, 1
          %p276 = scmp.lt.s32.totalorder %s273, 3
          %s277 = scalar_select %p276, %s273, 3
          %s278 = smul.addr %s275, 4
          %s279 = sadd.s32 %s277, %s278
          %s280 = smul.addr %s279, 4
          %s281 = scalar_lea.vmem %s5, %s280
          %s282 = sadd.s32 %s25, 1
          %s283 = smul.u32 %s282, 3
        $region40: #{tpu_custom_call.1} parent=31 // pred_fallthru
          _
      $region32: #{tpu_custom_call.1} parent=5 // pred_fallthru
        _
      %p284 = scmp.le.s32.totalorder 1, %s17
      %p285 = scmp.lt.s32.totalorder %s17, 3
      %p286 = pnand %p284, %p285
      %p287 = pneg %p286
      // Predicated region
      $region41: #{tpu_custom_call.1} parent=5 // pred_check
        _
      $region42: #{tpu_custom_call.1} parent=5 // pred_check_branch
        %289 = sbr.rel (%p286) target = $region44
      $region43: #{tpu_custom_call.1} parent=5 // pred_region
        %s290 = ssub.s32 %s17, 1
        // Predicated region
        $region45: #{tpu_custom_call.1} parent=43 // pred_check
          %p291 = pneg %p50
        $region46: #{tpu_custom_call.1} parent=43 // pred_check_branch
          %293 = sbr.rel (%p291) target = $region48
        $region47: #{tpu_custom_call.1} parent=43 // pred_region
          %294 = dma.done [#allocation5], 16
        $region48: #{tpu_custom_call.1} parent=43 // pred_fallthru
          _
        // Predicated region
        $region49: #{tpu_custom_call.1} parent=43 // pred_check
          %p295 = pneg %p71
        $region50: #{tpu_custom_call.1} parent=43 // pred_check_branch
          %297 = sbr.rel (%p295) target = $region52
        $region51: #{tpu_custom_call.1} parent=43 // pred_region
          %298 = dma.done [#allocation7], 16
        $region52: #{tpu_custom_call.1} parent=43 // pred_fallthru
          _
        %299 = sfence
        %p300 = pneg %p50
        %p301 = pneg %p47
        %p302 = pneg %p71
        %p303 = pneg %p68
        %p304 = pneg %p92
        %p305 = pneg %p89
        %p306 = pneg %p113
        %p307 = pneg %p110
        %s308 = smul.u32 3, %s27
        %s309 = ssub.s32 4, %s308
        %p310 = scmp.lt.s32.totalorder %s309, 3
        %s311 = scalar_select %p310, %s309, 3
        %s312 = smul.u32 64, %s311
        %p313 = scmp.lt.s32.totalorder %s26, 1
        %s314 = scalar_select %p313, %s26, 1
        %p315 = scmp.lt.s32.totalorder %s308, 3
        %s316 = scalar_select %p315, %s308, 3
        %s317 = smul.addr %s314, 4
        %s318 = sadd.s32 %s316, %s317
        %s319 = smul.addr %s318, 4
        %s320 = scalar_lea.vmem %s4, %s319
        %p321 = pneg %p141
        %p322 = pneg %p138
        %s323 = sadd.s32 %s27, 1
        %s324 = smul.u32 %s323, 3
        %p325 = scmp.lt.s32.totalorder %s26, 1
        %s326 = scalar_select %p325, %s26, 1
        %p327 = scmp.lt.s32.totalorder %s324, 3
        %s328 = scalar_select %p327, %s324, 3
        %s329 = smul.addr %s326, 4
        %s330 = sadd.s32 %s328, %s329
        %s331 = smul.addr %s330, 4
        %s332 = scalar_lea.vmem %s5, %s331
        %p333 = pneg %p173
        %p334 = pneg %p170
        %p335 = pneg %p201
        %p336 = pneg %p198
        %s337 = sand.u32 %s188, 1
        %s338 = scalar_lea.sflag [#allocation4], %s337
        %s339 = sand.u32 %s188, 1
        %s340 = smul.addr %s339, 24
        %s341 = scalar_lea.vmem [#allocation8], %s340
        %s342 = smul.u32 3, %s27
        %s343 = ssub.s32 4, %s342
        %p344 = scmp.lt.s32.totalorder %s343, 3
        %s345 = scalar_select %p344, %s343, 3
        %s346 = smul.u32 64, %s345
        %p347 = scmp.lt.s32.totalorder %s26, 1
        %s348 = scalar_select %p347, %s26, 1
        %p349 = scmp.lt.s32.totalorder %s342, 3
        %s350 = scalar_select %p349, %s342, 3
        %s351 = smul.addr %s348, 4
        %s352 = sadd.s32 %s350, %s351
        %s353 = smul.addr %s352, 4
        %s354 = scalar_lea.vmem %s4, %s353
        %s355 = smul.u32 3, %s27
        %s356 = ssub.s32 4, %s355
        %p357 = scmp.lt.s32.totalorder %s356, 3
        %s358 = scalar_select %p357, %s356, 3
        %s359 = smul.u32 64, %s358
        %s360 = sadd.s32 %s27, 1
        %s361 = smul.u32 %s360, 3
        %p362 = scmp.lt.s32.totalorder %s26, 1
        %s363 = scalar_select %p362, %s26, 1
        %p364 = scmp.lt.s32.totalorder %s361, 3
        %s365 = scalar_select %p364, %s361, 3
        %s366 = smul.addr %s363, 4
        %s367 = sadd.s32 %s365, %s366
        %s368 = smul.addr %s367, 4
        %s369 = scalar_lea.vmem %s5, %s368
        %s370 = sadd.s32 %s27, 1
        %s371 = smul.u32 %s370, 3
        %s372 = smul.u32 3, %s27
        %v373 = vld [vmem:[%s354] sm:$0xff]
        %v374 = vld [vmem:[%s354 + $0x8] sm:$0xf]
        %375 = vst [vmem:[#allocation2] sm:$0xff] %v373
        %376 = vst [vmem:[#allocation2 + $0x8] sm:$0xf] %v374
        %v377 = vld [vmem:[%s369] sm:$0xf]
        %378 = vst [vmem:[#allocation2 + $0xc] sm:$0xf] %v377
        %s379 = sld [smem:[#allocation3]]
        %s380 = sld [smem:[#allocation3 + $0x1]]
        %s381 = sld [smem:[#allocation3 + $0x2]]
        %v382 = vld [vmem:[%s2] sm:$0xff]
        %v383 = vld [vmem:[#allocation2] sm:$0xff]
        %s384 = scalar_lea.vmem %s2, 8
        %v385 = vld [vmem:[%s384] sm:$0xff]
        %v386 = vld [vmem:[#allocation2 + $0x8] sm:$0xf]
        %v389 = vcombine.high %v383, %v383
        %390 = vrot.lane.b32.xlu0 %v383, 127
        %v391 = vpop.permute.xlu0 %390
        %392 = vrot.lane.b32.xlu0 %v389, 127
        %v393 = vpop.permute.xlu0 %392
        %394 = vrot.lane.b32.xlu0 %v386, 127
        %v395 = vpop.permute.xlu0 %394
        %vm396 = vcmask 1039360
        %v397 = vsel %vm396, %v391, %v393
        %v398 = vsel %vm396, %v393, %v395
        %vm399 = vcmask 31744
        %v401 = vsel %vm399, %v385, 0
        %vm403 = vcmask 1043456
        %v404 = vsel %vm403, %v397, 0
        %v406 = vsel %vm403, %v398, 0
        %408 = vmatprep.subr.mxu0 %v406
        %409 = vmatpush1.msra.mxu0 %v404
        %410 = vmatprep.subr.mxu0 0.0
        %411 = vmatpush1.msra.mxu0 0.0
        %412 = vmatprep.subr.mxu0 0.0
        %413 = vmatpush1.msra.mxu0 0.0
        %414 = vmatprep.subr.mxu0 0.0
        %415 = vmatpush1.msra.mxu0 0.0
        %416 = vmatprep.subr.mxu0 0.0
        %417 = vmatpush1.msra.mxu0 0.0
        %418 = vmatprep.subr.mxu0 0.0
        %419 = vmatpush1.msra.mxu0 0.0
        %420 = vmatprep.subr.mxu0 0.0
        %421 = vmatpush1.msra.mxu0 0.0
        %422 = vmatprep.subr.mxu0 0.0
        %423 = vmatpush1.msra.mxu0 0.0
        %424 = vmatprep.subr.mxu0 0.0
        %425 = vmatpush1.msra.mxu0 0.0
        %426 = vmatprep.subr.mxu0 0.0
        %427 = vmatpush1.msra.mxu0 0.0
        %428 = vmatprep.subr.mxu0 0.0
        %429 = vmatpush1.msra.mxu0 0.0
        %430 = vmatprep.subr.mxu0 0.0
        %431 = vmatpush1.msra.mxu0 0.0
        %432 = vmatprep.subr.mxu0 0.0
        %433 = vmatpush1.msra.mxu0 0.0
        %434 = vmatprep.subr.mxu0 0.0
        %435 = vmatpush1.msra.mxu0 0.0
        %436 = vmatprep.subr.mxu0 0.0
        %437 = vmatpush1.msra.mxu0 0.0
        %438 = vmatprep.subr.mxu0 0.0
        %439 = vmatpush1.msra.mxu0 0.0
        %440 = vmatprep.subr.mxu0 0.0
        %441 = vmatpush1.msra.mxu0 0.0
        %442 = vmatprep.subr.mxu0 0.0
        %443 = vmatpush1.msra.mxu0 0.0
        %444 = vmatprep.subr.mxu0 0.0
        %445 = vmatpush1.msra.mxu0 0.0
        %446 = vmatprep.subr.mxu0 0.0
        %447 = vmatpush1.msra.mxu0 0.0
        %448 = vmatprep.subr.mxu0 0.0
        %449 = vmatpush1.msra.mxu0 0.0
        %450 = vmatprep.subr.mxu0 0.0
        %451 = vmatpush1.msra.mxu0 0.0
        %452 = vmatprep.subr.mxu0 0.0
        %453 = vmatpush1.msra.mxu0 0.0
        %454 = vmatprep.subr.mxu0 0.0
        %455 = vmatpush1.msra.mxu0 0.0
        %456 = vmatprep.subr.mxu0 0.0
        %457 = vmatpush1.msra.mxu0 0.0
        %458 = vmatprep.subr.mxu0 0.0
        %459 = vmatpush1.msra.mxu0 0.0
        %460 = vmatprep.subr.mxu0 0.0
        %461 = vmatpush1.msra.mxu0 0.0
        %462 = vmatprep.subr.mxu0 0.0
        %463 = vmatpush1.msra.mxu0 0.0
        %464 = vmatprep.subr.mxu0 0.0
        %465 = vmatpush1.msra.mxu0 0.0
        %466 = vmatprep.subr.mxu0 0.0
        %467 = vmatpush1.msra.mxu0 0.0
        %468 = vmatprep.subr.mxu0 0.0
        %469 = vmatpush1.msra.mxu0 0.0
        %470 = vmatprep.subr.mxu0 0.0
        %471 = vmatpush1.msra.mxu0 0.0
        %472 = vmatprep.mubr.f32.mxu0 0.0
        %473 = vmatmul.mubr.f32.gmra.mrb[0].mxu0 %v401
        %v474 = vpop.f32.mrb[0].mxu0
        %v475 = vadd.f32 0.0, %v474
        %v476 = vpop.f32.mrb[0].mxu0
        %v477 = vadd.f32 0.0, %v476
        %478 = vdwg.mxu0
        %v480 = vsel %vm399, %v382, 0
        %v482 = vsel %vm403, %v383, 0
        %v484 = vsel %vm403, %v389, 0
        %486 = vmatprep.subr.mxu0 %v484
        %487 = vmatpush1.msra.mxu0 %v482
        %488 = vmatprep.subr.mxu0 0.0
        %489 = vmatpush1.msra.mxu0 0.0
        %490 = vmatprep.subr.mxu0 0.0
        %491 = vmatpush1.msra.mxu0 0.0
        %492 = vmatprep.subr.mxu0 0.0
        %493 = vmatpush1.msra.mxu0 0.0
        %494 = vmatprep.subr.mxu0 0.0
        %495 = vmatpush1.msra.mxu0 0.0
        %496 = vmatprep.subr.mxu0 0.0
        %497 = vmatpush1.msra.mxu0 0.0
        %498 = vmatprep.subr.mxu0 0.0
        %499 = vmatpush1.msra.mxu0 0.0
        %500 = vmatprep.subr.mxu0 0.0
        %501 = vmatpush1.msra.mxu0 0.0
        %502 = vmatprep.subr.mxu0 0.0
        %503 = vmatpush1.msra.mxu0 0.0
        %504 = vmatprep.subr.mxu0 0.0
        %505 = vmatpush1.msra.mxu0 0.0
        %506 = vmatprep.subr.mxu0 0.0
        %507 = vmatpush1.msra.mxu0 0.0
        %508 = vmatprep.subr.mxu0 0.0
        %509 = vmatpush1.msra.mxu0 0.0
        %510 = vmatprep.subr.mxu0 0.0
        %511 = vmatpush1.msra.mxu0 0.0
        %512 = vmatprep.subr.mxu0 0.0
        %513 = vmatpush1.msra.mxu0 0.0
        %514 = vmatprep.subr.mxu0 0.0
        %515 = vmatpush1.msra.mxu0 0.0
        %516 = vmatprep.subr.mxu0 0.0
        %517 = vmatpush1.msra.mxu0 0.0
        %518 = vmatprep.subr.mxu0 0.0
        %519 = vmatpush1.msra.mxu0 0.0
        %520 = vmatprep.subr.mxu0 0.0
        %521 = vmatpush1.msra.mxu0 0.0
        %522 = vmatprep.subr.mxu0 0.0
        %523 = vmatpush1.msra.mxu0 0.0
        %524 = vmatprep.subr.mxu0 0.0
        %525 = vmatpush1.msra.mxu0 0.0
        %526 = vmatprep.subr.mxu0 0.0
        %527 = vmatpush1.msra.mxu0 0.0
        %528 = vmatprep.subr.mxu0 0.0
        %529 = vmatpush1.msra.mxu0 0.0
        %530 = vmatprep.subr.mxu0 0.0
        %531 = vmatpush1.msra.mxu0 0.0
        %532 = vmatprep.subr.mxu0 0.0
        %533 = vmatpush1.msra.mxu0 0.0
        %534 = vmatprep.subr.mxu0 0.0
        %535 = vmatpush1.msra.mxu0 0.0
        %536 = vmatprep.subr.mxu0 0.0
        %537 = vmatpush1.msra.mxu0 0.0
        %538 = vmatprep.subr.mxu0 0.0
        %539 = vmatpush1.msra.mxu0 0.0
        %540 = vmatprep.subr.mxu0 0.0
        %541 = vmatpush1.msra.mxu0 0.0
        %542 = vmatprep.subr.mxu0 0.0
        %543 = vmatpush1.msra.mxu0 0.0
        %544 = vmatprep.subr.mxu0 0.0
        %545 = vmatpush1.msra.mxu0 0.0
        %546 = vmatprep.subr.mxu0 0.0
        %547 = vmatpush1.msra.mxu0 0.0
        %548 = vmatprep.subr.mxu0 0.0
        %549 = vmatpush1.msra.mxu0 0.0
        %550 = vmatprep.mubr.f32.mxu0 0.0
        %551 = vmatmul.mubr.f32.gmra.mrb[0].mxu0 %v480
        %v552 = vpop.f32.mrb[0].mxu0
        %v553 = vadd.f32 %v475, %v552
        %v554 = vpop.f32.mrb[0].mxu0
        %v555 = vadd.f32 %v477, %v554
        %556 = vdwg.mxu0
        %s557 = scalar_lea.vmem %s2, 16
        %v558 = vld [vmem:[%s557] sm:$0xff]
        %v559 = vld [vmem:[#allocation2] sm:$0xff]
        %v560 = vld [vmem:[#allocation2 + $0x8] sm:$0xf]
        %v563 = vcombine.high %v559, %v559
        %564 = vrot.lane.b32.xlu0 %v559, 126
        %v565 = vpop.permute.xlu0 %564
        %566 = vrot.lane.b32.xlu0 %v563, 126
        %v567 = vpop.permute.xlu0 %566
        %568 = vrot.lane.b32.xlu0 %v560, 126
        %v569 = vpop.permute.xlu0 %568
        %vm570 = vcmask 1031168
        %v571 = vsel %vm570, %v565, %v567
        %v572 = vsel %vm570, %v567, %v569
        %v574 = vsel %vm399, %v558, 0
        %v576 = vsel %vm403, %v571, 0
        %v578 = vsel %vm403, %v572, 0
        %580 = vmatprep.subr.mxu0 %v578
        %581 = vmatpush1.msra.mxu0 %v576
        %582 = vmatprep.subr.mxu0 0.0
        %583 = vmatpush1.msra.mxu0 0.0
        %584 = vmatprep.subr.mxu0 0.0
        %585 = vmatpush1.msra.mxu0 0.0
        %586 = vmatprep.subr.mxu0 0.0
        %587 = vmatpush1.msra.mxu0 0.0
        %588 = vmatprep.subr.mxu0 0.0
        %589 = vmatpush1.msra.mxu0 0.0
        %590 = vmatprep.subr.mxu0 0.0
        %591 = vmatpush1.msra.mxu0 0.0
        %592 = vmatprep.subr.mxu0 0.0
        %593 = vmatpush1.msra.mxu0 0.0
        %594 = vmatprep.subr.mxu0 0.0
        %595 = vmatpush1.msra.mxu0 0.0
        %596 = vmatprep.subr.mxu0 0.0
        %597 = vmatpush1.msra.mxu0 0.0
        %598 = vmatprep.subr.mxu0 0.0
        %599 = vmatpush1.msra.mxu0 0.0
        %600 = vmatprep.subr.mxu0 0.0
        %601 = vmatpush1.msra.mxu0 0.0
        %602 = vmatprep.subr.mxu0 0.0
        %603 = vmatpush1.msra.mxu0 0.0
        %604 = vmatprep.subr.mxu0 0.0
        %605 = vmatpush1.msra.mxu0 0.0
        %606 = vmatprep.subr.mxu0 0.0
        %607 = vmatpush1.msra.mxu0 0.0
        %608 = vmatprep.subr.mxu0 0.0
        %609 = vmatpush1.msra.mxu0 0.0
        %610 = vmatprep.subr.mxu0 0.0
        %611 = vmatpush1.msra.mxu0 0.0
        %612 = vmatprep.subr.mxu0 0.0
        %613 = vmatpush1.msra.mxu0 0.0
        %614 = vmatprep.subr.mxu0 0.0
        %615 = vmatpush1.msra.mxu0 0.0
        %616 = vmatprep.subr.mxu0 0.0
        %617 = vmatpush1.msra.mxu0 0.0
        %618 = vmatprep.subr.mxu0 0.0
        %619 = vmatpush1.msra.mxu0 0.0
        %620 = vmatprep.subr.mxu0 0.0
        %621 = vmatpush1.msra.mxu0 0.0
        %622 = vmatprep.subr.mxu0 0.0
        %623 = vmatpush1.msra.mxu0 0.0
        %624 = vmatprep.subr.mxu0 0.0
        %625 = vmatpush1.msra.mxu0 0.0
        %626 = vmatprep.subr.mxu0 0.0
        %627 = vmatpush1.msra.mxu0 0.0
        %628 = vmatprep.subr.mxu0 0.0
        %629 = vmatpush1.msra.mxu0 0.0
        %630 = vmatprep.subr.mxu0 0.0
        %631 = vmatpush1.msra.mxu0 0.0
        %632 = vmatprep.subr.mxu0 0.0
        %633 = vmatpush1.msra.mxu0 0.0
        %634 = vmatprep.subr.mxu0 0.0
        %635 = vmatpush1.msra.mxu0 0.0
        %636 = vmatprep.subr.mxu0 0.0
        %637 = vmatpush1.msra.mxu0 0.0
        %638 = vmatprep.subr.mxu0 0.0
        %639 = vmatpush1.msra.mxu0 0.0
        %640 = vmatprep.subr.mxu0 0.0
        %641 = vmatpush1.msra.mxu0 0.0
        %642 = vmatprep.subr.mxu0 0.0
        %643 = vmatpush1.msra.mxu0 0.0
        %644 = vmatprep.mubr.f32.mxu0 0.0
        %645 = vmatmul.mubr.f32.gmra.mrb[0].mxu0 %v574
        %v646 = vpop.f32.mrb[0].mxu0
        %v647 = vadd.f32 0.0, %v646
        %v648 = vpop.f32.mrb[0].mxu0
        %v649 = vadd.f32 0.0, %v648
        %650 = vdwg.mxu0
        %v651 = vadd.f32 %v553, %v647
        %v652 = vadd.f32 %v555, %v649
        %s653 = scalar_lea.vmem %s2, 24
        %v654 = vld [vmem:[%s653] sm:$0xff]
        %v655 = vld [vmem:[#allocation2] sm:$0xff]
        %v656 = vld [vmem:[#allocation2 + $0x8] sm:$0xf]
        %v659 = vcombine.high %v655, %v655
        %660 = vrot.lane.b32.xlu0 %v655, 125
        %v661 = vpop.permute.xlu0 %660
        %662 = vrot.lane.b32.xlu0 %v659, 125
        %v663 = vpop.permute.xlu0 %662
        %664 = vrot.lane.b32.xlu0 %v656, 125
        %v665 = vpop.permute.xlu0 %664
        %vm666 = vcmask 1022976
        %v667 = vsel %vm666, %v661, %v663
        %v668 = vsel %vm666, %v663, %v665
        %v670 = vsel %vm399, %v654, 0
        %v672 = vsel %vm403, %v667, 0
        %v674 = vsel %vm403, %v668, 0
        %676 = vmatprep.subr.mxu0 %v674
        %677 = vmatpush1.msra.mxu0 %v672
        %678 = vmatprep.subr.mxu0 0.0
        %679 = vmatpush1.msra.mxu0 0.0
        %680 = vmatprep.subr.mxu0 0.0
        %681 = vmatpush1.msra.mxu0 0.0
        %682 = vmatprep.subr.mxu0 0.0
        %683 = vmatpush1.msra.mxu0 0.0
        %684 = vmatprep.subr.mxu0 0.0
        %685 = vmatpush1.msra.mxu0 0.0
        %686 = vmatprep.subr.mxu0 0.0
        %687 = vmatpush1.msra.mxu0 0.0
        %688 = vmatprep.subr.mxu0 0.0
        %689 = vmatpush1.msra.mxu0 0.0
        %690 = vmatprep.subr.mxu0 0.0
        %691 = vmatpush1.msra.mxu0 0.0
        %692 = vmatprep.subr.mxu0 0.0
        %693 = vmatpush1.msra.mxu0 0.0
        %694 = vmatprep.subr.mxu0 0.0
        %695 = vmatpush1.msra.mxu0 0.0
        %696 = vmatprep.subr.mxu0 0.0
        %697 = vmatpush1.msra.mxu0 0.0
        %698 = vmatprep.subr.mxu0 0.0
        %699 = vmatpush1.msra.mxu0 0.0
        %700 = vmatprep.subr.mxu0 0.0
        %701 = vmatpush1.msra.mxu0 0.0
        %702 = vmatprep.subr.mxu0 0.0
        %703 = vmatpush1.msra.mxu0 0.0
        %704 = vmatprep.subr.mxu0 0.0
        %705 = vmatpush1.msra.mxu0 0.0
        %706 = vmatprep.subr.mxu0 0.0
        %707 = vmatpush1.msra.mxu0 0.0
        %708 = vmatprep.subr.mxu0 0.0
        %709 = vmatpush1.msra.mxu0 0.0
        %710 = vmatprep.subr.mxu0 0.0
        %711 = vmatpush1.msra.mxu0 0.0
        %712 = vmatprep.subr.mxu0 0.0
        %713 = vmatpush1.msra.mxu0 0.0
        %714 = vmatprep.subr.mxu0 0.0
        %715 = vmatpush1.msra.mxu0 0.0
        %716 = vmatprep.subr.mxu0 0.0
        %717 = vmatpush1.msra.mxu0 0.0
        %718 = vmatprep.subr.mxu0 0.0
        %719 = vmatpush1.msra.mxu0 0.0
        %720 = vmatprep.subr.mxu0 0.0
        %721 = vmatpush1.msra.mxu0 0.0
        %722 = vmatprep.subr.mxu0 0.0
        %723 = vmatpush1.msra.mxu0 0.0
        %724 = vmatprep.subr.mxu0 0.0
        %725 = vmatpush1.msra.mxu0 0.0
        %726 = vmatprep.subr.mxu0 0.0
        %727 = vmatpush1.msra.mxu0 0.0
        %728 = vmatprep.subr.mxu0 0.0
        %729 = vmatpush1.msra.mxu0 0.0
        %730 = vmatprep.subr.mxu0 0.0
        %731 = vmatpush1.msra.mxu0 0.0
        %732 = vmatprep.subr.mxu0 0.0
        %733 = vmatpush1.msra.mxu0 0.0
        %734 = vmatprep.subr.mxu0 0.0
        %735 = vmatpush1.msra.mxu0 0.0
        %736 = vmatprep.subr.mxu0 0.0
        %737 = vmatpush1.msra.mxu0 0.0
        %738 = vmatprep.subr.mxu0 0.0
        %739 = vmatpush1.msra.mxu0 0.0
        %740 = vmatprep.mubr.f32.mxu0 0.0
        %741 = vmatmul.mubr.f32.gmra.mrb[0].mxu0 %v670
        %v742 = vpop.f32.mrb[0].mxu0
        %v743 = vadd.f32 0.0, %v742
        %v744 = vpop.f32.mrb[0].mxu0
        %v745 = vadd.f32 0.0, %v744
        %746 = vdwg.mxu0
        %v747 = vadd.f32 %v651, %v743
        %v748 = vadd.f32 %v652, %v745
        %s749 = scalar_lea.vmem %s2, 32
        %v750 = vld [vmem:[%s749] sm:$0xff]
        %v751 = vld [vmem:[#allocation2] sm:$0xff]
        %v752 = vld [vmem:[#allocation2 + $0x8] sm:$0xf]
        %v755 = vcombine.high %v751, %v751
        %756 = vrot.lane.b32.xlu0 %v751, 124
        %v757 = vpop.permute.xlu0 %756
        %758 = vrot.lane.b32.xlu0 %v755, 124
        %v759 = vpop.permute.xlu0 %758
        %760 = vrot.lane.b32.xlu0 %v752, 124
        %v761 = vpop.permute.xlu0 %760
        %vm762 = vcmask 1014784
        %v763 = vsel %vm762, %v757, %v759
        %v764 = vsel %vm762, %v759, %v761
        %v766 = vsel %vm399, %v750, 0
        %v768 = vsel %vm403, %v763, 0
        %v770 = vsel %vm403, %v764, 0
        %772 = vmatprep.subr.mxu0 %v770
        %773 = vmatpush1.msra.mxu0 %v768
        %774 = vmatprep.subr.mxu0 0.0
        %775 = vmatpush1.msra.mxu0 0.0
        %776 = vmatprep.subr.mxu0 0.0
        %777 = vmatpush1.msra.mxu0 0.0
        %778 = vmatprep.subr.mxu0 0.0
        %779 = vmatpush1.msra.mxu0 0.0
        %780 = vmatprep.subr.mxu0 0.0
        %781 = vmatpush1.msra.mxu0 0.0
        %782 = vmatprep.subr.mxu0 0.0
        %783 = vmatpush1.msra.mxu0 0.0
        %784 = vmatprep.subr.mxu0 0.0
        %785 = vmatpush1.msra.mxu0 0.0
        %786 = vmatprep.subr.mxu0 0.0
        %787 = vmatpush1.msra.mxu0 0.0
        %788 = vmatprep.subr.mxu0 0.0
        %789 = vmatpush1.msra.mxu0 0.0
        %790 = vmatprep.subr.mxu0 0.0
        %791 = vmatpush1.msra.mxu0 0.0
        %792 = vmatprep.subr.mxu0 0.0
        %793 = vmatpush1.msra.mxu0 0.0
        %794 = vmatprep.subr.mxu0 0.0
        %795 = vmatpush1.msra.mxu0 0.0
        %796 = vmatprep.subr.mxu0 0.0
        %797 = vmatpush1.msra.mxu0 0.0
        %798 = vmatprep.subr.mxu0 0.0
        %799 = vmatpush1.msra.mxu0 0.0
        %800 = vmatprep.subr.mxu0 0.0
        %801 = vmatpush1.msra.mxu0 0.0
        %802 = vmatprep.subr.mxu0 0.0
        %803 = vmatpush1.msra.mxu0 0.0
        %804 = vmatprep.subr.mxu0 0.0
        %805 = vmatpush1.msra.mxu0 0.0
        %806 = vmatprep.subr.mxu0 0.0
        %807 = vmatpush1.msra.mxu0 0.0
        %808 = vmatprep.subr.mxu0 0.0
        %809 = vmatpush1.msra.mxu0 0.0
        %810 = vmatprep.subr.mxu0 0.0
        %811 = vmatpush1.msra.mxu0 0.0
        %812 = vmatprep.subr.mxu0 0.0
        %813 = vmatpush1.msra.mxu0 0.0
        %814 = vmatprep.subr.mxu0 0.0
        %815 = vmatpush1.msra.mxu0 0.0
        %816 = vmatprep.subr.mxu0 0.0
        %817 = vmatpush1.msra.mxu0 0.0
        %818 = vmatprep.subr.mxu0 0.0
        %819 = vmatpush1.msra.mxu0 0.0
        %820 = vmatprep.subr.mxu0 0.0
        %821 = vmatpush1.msra.mxu0 0.0
        %822 = vmatprep.subr.mxu0 0.0
        %823 = vmatpush1.msra.mxu0 0.0
        %824 = vmatprep.subr.mxu0 0.0
        %825 = vmatpush1.msra.mxu0 0.0
        %826 = vmatprep.subr.mxu0 0.0
        %827 = vmatpush1.msra.mxu0 0.0
        %828 = vmatprep.subr.mxu0 0.0
        %829 = vmatpush1.msra.mxu0 0.0
        %830 = vmatprep.subr.mxu0 0.0
        %831 = vmatpush1.msra.mxu0 0.0
        %832 = vmatprep.subr.mxu0 0.0
        %833 = vmatpush1.msra.mxu0 0.0
        %834 = vmatprep.subr.mxu0 0.0
        %835 = vmatpush1.msra.mxu0 0.0
        %836 = vmatprep.mubr.f32.mxu0 0.0
        %837 = vmatmul.mubr.f32.gmra.mrb[0].mxu0 %v766
        %v838 = vpop.f32.mrb[0].mxu0
        %v839 = vadd.f32 0.0, %v838
        %v840 = vpop.f32.mrb[0].mxu0
        %v841 = vadd.f32 0.0, %v840
        %842 = vdwg.mxu0
        %v843 = vadd.f32 %v747, %v839
        %v844 = vadd.f32 %v748, %v841
        %s845 = scalar_lea.vmem %s2, 40
        %v846 = vld [vmem:[%s845] sm:$0xff]
        %v847 = vld [vmem:[#allocation2] sm:$0xff]
        %v848 = vld [vmem:[#allocation2 + $0x8] sm:$0xf]
        %v851 = vcombine.high %v847, %v847
        %852 = vrot.lane.b32.xlu0 %v847, 108
        %v853 = vpop.permute.xlu0 %852
        %854 = vrot.lane.b32.xlu0 %v851, 108
        %v855 = vpop.permute.xlu0 %854
        %856 = vrot.lane.b32.xlu0 %v848, 108
        %v857 = vpop.permute.xlu0 %856
        %vm858 = vcmask 883712
        %v859 = vsel %vm858, %v853, %v855
        %v860 = vsel %vm858, %v855, %v857
        %v862 = vsel %vm399, %v846, 0
        %v864 = vsel %vm403, %v859, 0
        %v866 = vsel %vm403, %v860, 0
        %868 = vmatprep.subr.mxu0 %v866
        %869 = vmatpush1.msra.mxu0 %v864
        %870 = vmatprep.subr.mxu0 0.0
        %871 = vmatpush1.msra.mxu0 0.0
        %872 = vmatprep.subr.mxu0 0.0
        %873 = vmatpush1.msra.mxu0 0.0
        %874 = vmatprep.subr.mxu0 0.0
        %875 = vmatpush1.msra.mxu0 0.0
        %876 = vmatprep.subr.mxu0 0.0
        %877 = vmatpush1.msra.mxu0 0.0
        %878 = vmatprep.subr.mxu0 0.0
        %879 = vmatpush1.msra.mxu0 0.0
        %880 = vmatprep.subr.mxu0 0.0
        %881 = vmatpush1.msra.mxu0 0.0
        %882 = vmatprep.subr.mxu0 0.0
        %883 = vmatpush1.msra.mxu0 0.0
        %884 = vmatprep.subr.mxu0 0.0
        %885 = vmatpush1.msra.mxu0 0.0
        %886 = vmatprep.subr.mxu0 0.0
        %887 = vmatpush1.msra.mxu0 0.0
        %888 = vmatprep.subr.mxu0 0.0
        %889 = vmatpush1.msra.mxu0 0.0
        %890 = vmatprep.subr.mxu0 0.0
        %891 = vmatpush1.msra.mxu0 0.0
        %892 = vmatprep.subr.mxu0 0.0
        %893 = vmatpush1.msra.mxu0 0.0
        %894 = vmatprep.subr.mxu0 0.0
        %895 = vmatpush1.msra.mxu0 0.0
        %896 = vmatprep.subr.mxu0 0.0
        %897 = vmatpush1.msra.mxu0 0.0
        %898 = vmatprep.subr.mxu0 0.0
        %899 = vmatpush1.msra.mxu0 0.0
        %900 = vmatprep.subr.mxu0 0.0
        %901 = vmatpush1.msra.mxu0 0.0
        %902 = vmatprep.subr.mxu0 0.0
        %903 = vmatpush1.msra.mxu0 0.0
        %904 = vmatprep.subr.mxu0 0.0
        %905 = vmatpush1.msra.mxu0 0.0
        %906 = vmatprep.subr.mxu0 0.0
        %907 = vmatpush1.msra.mxu0 0.0
        %908 = vmatprep.subr.mxu0 0.0
        %909 = vmatpush1.msra.mxu0 0.0
        %910 = vmatprep.subr.mxu0 0.0
        %911 = vmatpush1.msra.mxu0 0.0
        %912 = vmatprep.subr.mxu0 0.0
        %913 = vmatpush1.msra.mxu0 0.0
        %914 = vmatprep.subr.mxu0 0.0
        %915 = vmatpush1.msra.mxu0 0.0
        %916 = vmatprep.subr.mxu0 0.0
        %917 = vmatpush1.msra.mxu0 0.0
        %918 = vmatprep.subr.mxu0 0.0
        %919 = vmatpush1.msra.mxu0 0.0
        %920 = vmatprep.subr.mxu0 0.0
        %921 = vmatpush1.msra.mxu0 0.0
        %922 = vmatprep.subr.mxu0 0.0
        %923 = vmatpush1.msra.mxu0 0.0
        %924 = vmatprep.subr.mxu0 0.0
        %925 = vmatpush1.msra.mxu0 0.0
        %926 = vmatprep.subr.mxu0 0.0
        %927 = vmatpush1.msra.mxu0 0.0
        %928 = vmatprep.subr.mxu0 0.0
        %929 = vmatpush1.msra.mxu0 0.0
        %930 = vmatprep.subr.mxu0 0.0
        %931 = vmatpush1.msra.mxu0 0.0
        %932 = vmatprep.mubr.f32.mxu0 0.0
        %933 = vmatmul.mubr.f32.gmra.mrb[0].mxu0 %v862
        %v934 = vpop.f32.mrb[0].mxu0
        %v935 = vadd.f32 0.0, %v934
        %v936 = vpop.f32.mrb[0].mxu0
        %v937 = vadd.f32 0.0, %v936
        %938 = vdwg.mxu0
        %v939 = vadd.f32 %v843, %v935
        %v940 = vadd.f32 %v844, %v937
        %s941 = scalar_lea.vmem %s2, 48
        %v942 = vld [vmem:[%s941] sm:$0xff]
        %v943 = vld [vmem:[#allocation2] sm:$0xff]
        %v944 = vld [vmem:[#allocation2 + $0x8] sm:$0xf]
        %v947 = vcombine.high %v943, %v943
        %948 = vrot.lane.b32.xlu0 %v943, 107
        %v949 = vpop.permute.xlu0 %948
        %950 = vrot.lane.b32.xlu0 %v947, 107
        %v951 = vpop.permute.xlu0 %950
        %952 = vrot.lane.b32.xlu0 %v944, 107
        %v953 = vpop.permute.xlu0 %952
        %vm954 = vcmask 875520
        %v955 = vsel %vm954, %v949, %v951
        %v956 = vsel %vm954, %v951, %v953
        %v958 = vsel %vm399, %v942, 0
        %v960 = vsel %vm403, %v955, 0
        %v962 = vsel %vm403, %v956, 0
        %964 = vmatprep.subr.mxu0 %v962
        %965 = vmatpush1.msra.mxu0 %v960
        %966 = vmatprep.subr.mxu0 0.0
        %967 = vmatpush1.msra.mxu0 0.0
        %968 = vmatprep.subr.mxu0 0.0
        %969 = vmatpush1.msra.mxu0 0.0
        %970 = vmatprep.subr.mxu0 0.0
        %971 = vmatpush1.msra.mxu0 0.0
        %972 = vmatprep.subr.mxu0 0.0
        %973 = vmatpush1.msra.mxu0 0.0
        %974 = vmatprep.subr.mxu0 0.0
        %975 = vmatpush1.msra.mxu0 0.0
        %976 = vmatprep.subr.mxu0 0.0
        %977 = vmatpush1.msra.mxu0 0.0
        %978 = vmatprep.subr.mxu0 0.0
        %979 = vmatpush1.msra.mxu0 0.0
        %980 = vmatprep.subr.mxu0 0.0
        %981 = vmatpush1.msra.mxu0 0.0
        %982 = vmatprep.subr.mxu0 0.0
        %983 = vmatpush1.msra.mxu0 0.0
        %984 = vmatprep.subr.mxu0 0.0
        %985 = vmatpush1.msra.mxu0 0.0
        %986 = vmatprep.subr.mxu0 0.0
        %987 = vmatpush1.msra.mxu0 0.0
        %988 = vmatprep.subr.mxu0 0.0
        %989 = vmatpush1.msra.mxu0 0.0
        %990 = vmatprep.subr.mxu0 0.0
        %991 = vmatpush1.msra.mxu0 0.0
        %992 = vmatprep.subr.mxu0 0.0
        %993 = vmatpush1.msra.mxu0 0.0
        %994 = vmatprep.subr.mxu0 0.0
        %995 = vmatpush1.msra.mxu0 0.0
        %996 = vmatprep.subr.mxu0 0.0
        %997 = vmatpush1.msra.mxu0 0.0
        %998 = vmatprep.subr.mxu0 0.0
        %999 = vmatpush1.msra.mxu0 0.0
        %1000 = vmatprep.subr.mxu0 0.0
        %1001 = vmatpush1.msra.mxu0 0.0
        %1002 = vmatprep.subr.mxu0 0.0
        %1003 = vmatpush1.msra.mxu0 0.0
        %1004 = vmatprep.subr.mxu0 0.0
        %1005 = vmatpush1.msra.mxu0 0.0
        %1006 = vmatprep.subr.mxu0 0.0
        %1007 = vmatpush1.msra.mxu0 0.0
        %1008 = vmatprep.subr.mxu0 0.0
        %1009 = vmatpush1.msra.mxu0 0.0
        %1010 = vmatprep.subr.mxu0 0.0
        %1011 = vmatpush1.msra.mxu0 0.0
        %1012 = vmatprep.subr.mxu0 0.0
        %1013 = vmatpush1.msra.mxu0 0.0
        %1014 = vmatprep.subr.mxu0 0.0
        %1015 = vmatpush1.msra.mxu0 0.0
        %1016 = vmatprep.subr.mxu0 0.0
        %1017 = vmatpush1.msra.mxu0 0.0
        %1018 = vmatprep.subr.mxu0 0.0
        %1019 = vmatpush1.msra.mxu0 0.0
        %1020 = vmatprep.subr.mxu0 0.0
        %1021 = vmatpush1.msra.mxu0 0.0
        %1022 = vmatprep.subr.mxu0 0.0
        %1023 = vmatpush1.msra.mxu0 0.0
        %1024 = vmatprep.subr.mxu0 0.0
        %1025 = vmatpush1.msra.mxu0 0.0
        %1026 = vmatprep.subr.mxu0 0.0
        %1027 = vmatpush1.msra.mxu0 0.0
        %1028 = vmatprep.mubr.f32.mxu0 0.0
        %1029 = vmatmul.mubr.f32.gmra.mrb[0].mxu0 %v958
        %v1030 = vpop.f32.mrb[0].mxu0
        %v1031 = vadd.f32 0.0, %v1030
        %v1032 = vpop.f32.mrb[0].mxu0
        %v1033 = vadd.f32 0.0, %v1032
        %1034 = vdwg.mxu0
        %v1035 = vadd.f32 %v939, %v1031
        %v1036 = vadd.f32 %v940, %v1033
        %s1037 = scalar_lea.vmem %s2, 56
        %v1038 = vld [vmem:[%s1037] sm:$0xff]
        %v1039 = vld [vmem:[#allocation2] sm:$0xff]
        %v1040 = vld [vmem:[#allocation2 + $0x8] sm:$0xf]
        %v1043 = vcombine.high %v1039, %v1039
        %1044 = vrot.lane.b32.xlu0 %v1039, 106
        %v1045 = vpop.permute.xlu0 %1044
        %1046 = vrot.lane.b32.xlu0 %v1043, 106
        %v1047 = vpop.permute.xlu0 %1046
        %1048 = vrot.lane.b32.xlu0 %v1040, 106
        %v1049 = vpop.permute.xlu0 %1048
        %vm1050 = vcmask 867328
        %v1051 = vsel %vm1050, %v1045, %v1047
        %v1052 = vsel %vm1050, %v1047, %v1049
        %v1054 = vsel %vm399, %v1038, 0
        %v1056 = vsel %vm403, %v1051, 0
        %v1058 = vsel %vm403, %v1052, 0
        %1060 = vmatprep.subr.mxu0 %v1058
        %1061 = vmatpush1.msra.mxu0 %v1056
        %1062 = vmatprep.subr.mxu0 0.0
        %1063 = vmatpush1.msra.mxu0 0.0
        %1064 = vmatprep.subr.mxu0 0.0
        %1065 = vmatpush1.msra.mxu0 0.0
        %1066 = vmatprep.subr.mxu0 0.0
        %1067 = vmatpush1.msra.mxu0 0.0
        %1068 = vmatprep.subr.mxu0 0.0
        %1069 = vmatpush1.msra.mxu0 0.0
        %1070 = vmatprep.subr.mxu0 0.0
        %1071 = vmatpush1.msra.mxu0 0.0
        %1072 = vmatprep.subr.mxu0 0.0
        %1073 = vmatpush1.msra.mxu0 0.0
        %1074 = vmatprep.subr.mxu0 0.0
        %1075 = vmatpush1.msra.mxu0 0.0
        %1076 = vmatprep.subr.mxu0 0.0
        %1077 = vmatpush1.msra.mxu0 0.0
        %1078 = vmatprep.subr.mxu0 0.0
        %1079 = vmatpush1.msra.mxu0 0.0
        %1080 = vmatprep.subr.mxu0 0.0
        %1081 = vmatpush1.msra.mxu0 0.0
        %1082 = vmatprep.subr.mxu0 0.0
        %1083 = vmatpush1.msra.mxu0 0.0
        %1084 = vmatprep.subr.mxu0 0.0
        %1085 = vmatpush1.msra.mxu0 0.0
        %1086 = vmatprep.subr.mxu0 0.0
        %1087 = vmatpush1.msra.mxu0 0.0
        %1088 = vmatprep.subr.mxu0 0.0
        %1089 = vmatpush1.msra.mxu0 0.0
        %1090 = vmatprep.subr.mxu0 0.0
        %1091 = vmatpush1.msra.mxu0 0.0
        %1092 = vmatprep.subr.mxu0 0.0
        %1093 = vmatpush1.msra.mxu0 0.0
        %1094 = vmatprep.subr.mxu0 0.0
        %1095 = vmatpush1.msra.mxu0 0.0
        %1096 = vmatprep.subr.mxu0 0.0
        %1097 = vmatpush1.msra.mxu0 0.0
        %1098 = vmatprep.subr.mxu0 0.0
        %1099 = vmatpush1.msra.mxu0 0.0
        %1100 = vmatprep.subr.mxu0 0.0
        %1101 = vmatpush1.msra.mxu0 0.0
        %1102 = vmatprep.subr.mxu0 0.0
        %1103 = vmatpush1.msra.mxu0 0.0
        %1104 = vmatprep.subr.mxu0 0.0
        %1105 = vmatpush1.msra.mxu0 0.0
        %1106 = vmatprep.subr.mxu0 0.0
        %1107 = vmatpush1.msra.mxu0 0.0
        %1108 = vmatprep.subr.mxu0 0.0
        %1109 = vmatpush1.msra.mxu0 0.0
        %1110 = vmatprep.subr.mxu0 0.0
        %1111 = vmatpush1.msra.mxu0 0.0
        %1112 = vmatprep.subr.mxu0 0.0
        %1113 = vmatpush1.msra.mxu0 0.0
        %1114 = vmatprep.subr.mxu0 0.0
        %1115 = vmatpush1.msra.mxu0 0.0
        %1116 = vmatprep.subr.mxu0 0.0
        %1117 = vmatpush1.msra.mxu0 0.0
        %1118 = vmatprep.subr.mxu0 0.0
        %1119 = vmatpush1.msra.mxu0 0.0
        %1120 = vmatprep.subr.mxu0 0.0
        %1121 = vmatpush1.msra.mxu0 0.0
        %1122 = vmatprep.subr.mxu0 0.0
        %1123 = vmatpush1.msra.mxu0 0.0
        %1124 = vmatprep.mubr.f32.mxu0 0.0
        %1125 = vmatmul.mubr.f32.gmra.mrb[0].mxu0 %v1054
        %v1126 = vpop.f32.mrb[0].mxu0
        %v1127 = vadd.f32 0.0, %v1126
        %v1128 = vpop.f32.mrb[0].mxu0
        %v1129 = vadd.f32 0.0, %v1128
        %1130 = vdwg.mxu0
        %v1131 = vadd.f32 %v1035, %v1127
        %v1132 = vadd.f32 %v1036, %v1129
        %s1133 = scalar_lea.vmem %s2, 64
        %v1134 = vld [vmem:[%s1133] sm:$0xff]
        %v1135 = vld [vmem:[#allocation2] sm:$0xff]
        %v1136 = vld [vmem:[#allocation2 + $0x8] sm:$0xf]
        %v1139 = vcombine.high %v1135, %v1135
        %1140 = vrot.lane.b32.xlu0 %v1135, 105
        %v1141 = vpop.permute.xlu0 %1140
        %1142 = vrot.lane.b32.xlu0 %v1139, 105
        %v1143 = vpop.permute.xlu0 %1142
        %1144 = vrot.lane.b32.xlu0 %v1136, 105
        %v1145 = vpop.permute.xlu0 %1144
        %vm1146 = vcmask 859136
        %v1147 = vsel %vm1146, %v1141, %v1143
        %v1148 = vsel %vm1146, %v1143, %v1145
        %v1150 = vsel %vm399, %v1134, 0
        %v1152 = vsel %vm403, %v1147, 0
        %v1154 = vsel %vm403, %v1148, 0
        %1156 = vmatprep.subr.mxu0 %v1154
        %1157 = vmatpush1.msra.mxu0 %v1152
        %1158 = vmatprep.subr.mxu0 0.0
        %1159 = vmatpush1.msra.mxu0 0.0
        %1160 = vmatprep.subr.mxu0 0.0
        %1161 = vmatpush1.msra.mxu0 0.0
        %1162 = vmatprep.subr.mxu0 0.0
        %1163 = vmatpush1.msra.mxu0 0.0
        %1164 = vmatprep.subr.mxu0 0.0
        %1165 = vmatpush1.msra.mxu0 0.0
        %1166 = vmatprep.subr.mxu0 0.0
        %1167 = vmatpush1.msra.mxu0 0.0
        %1168 = vmatprep.subr.mxu0 0.0
        %1169 = vmatpush1.msra.mxu0 0.0
        %1170 = vmatprep.subr.mxu0 0.0
        %1171 = vmatpush1.msra.mxu0 0.0
        %1172 = vmatprep.subr.mxu0 0.0
        %1173 = vmatpush1.msra.mxu0 0.0
        %1174 = vmatprep.subr.mxu0 0.0
        %1175 = vmatpush1.msra.mxu0 0.0
        %1176 = vmatprep.subr.mxu0 0.0
        %1177 = vmatpush1.msra.mxu0 0.0
        %1178 = vmatprep.subr.mxu0 0.0
        %1179 = vmatpush1.msra.mxu0 0.0
        %1180 = vmatprep.subr.mxu0 0.0
        %1181 = vmatpush1.msra.mxu0 0.0
        %1182 = vmatprep.subr.mxu0 0.0
        %1183 = vmatpush1.msra.mxu0 0.0
        %1184 = vmatprep.subr.mxu0 0.0
        %1185 = vmatpush1.msra.mxu0 0.0
        %1186 = vmatprep.subr.mxu0 0.0
        %1187 = vmatpush1.msra.mxu0 0.0
        %1188 = vmatprep.subr.mxu0 0.0
        %1189 = vmatpush1.msra.mxu0 0.0
        %1190 = vmatprep.subr.mxu0 0.0
        %1191 = vmatpush1.msra.mxu0 0.0
        %1192 = vmatprep.subr.mxu0 0.0
        %1193 = vmatpush1.msra.mxu0 0.0
        %1194 = vmatprep.subr.mxu0 0.0
        %1195 = vmatpush1.msra.mxu0 0.0
        %1196 = vmatprep.subr.mxu0 0.0
        %1197 = vmatpush1.msra.mxu0 0.0
        %1198 = vmatprep.subr.mxu0 0.0
        %1199 = vmatpush1.msra.mxu0 0.0
        %1200 = vmatprep.subr.mxu0 0.0
        %1201 = vmatpush1.msra.mxu0 0.0
        %1202 = vmatprep.subr.mxu0 0.0
        %1203 = vmatpush1.msra.mxu0 0.0
        %1204 = vmatprep.subr.mxu0 0.0
        %1205 = vmatpush1.msra.mxu0 0.0
        %1206 = vmatprep.subr.mxu0 0.0
        %1207 = vmatpush1.msra.mxu0 0.0
        %1208 = vmatprep.subr.mxu0 0.0
        %1209 = vmatpush1.msra.mxu0 0.0
        %1210 = vmatprep.subr.mxu0 0.0
        %1211 = vmatpush1.msra.mxu0 0.0
        %1212 = vmatprep.subr.mxu0 0.0
        %1213 = vmatpush1.msra.mxu0 0.0
        %1214 = vmatprep.subr.mxu0 0.0
        %1215 = vmatpush1.msra.mxu0 0.0
        %1216 = vmatprep.subr.mxu0 0.0
        %1217 = vmatpush1.msra.mxu0 0.0
        %1218 = vmatprep.subr.mxu0 0.0
        %1219 = vmatpush1.msra.mxu0 0.0
        %1220 = vmatprep.mubr.f32.mxu0 0.0
        %1221 = vmatmul.mubr.f32.gmra.mrb[0].mxu0 %v1150
        %v1222 = vpop.f32.mrb[0].mxu0
        %v1223 = vadd.f32 0.0, %v1222
        %v1224 = vpop.f32.mrb[0].mxu0
        %v1225 = vadd.f32 0.0, %v1224
        %1226 = vdwg.mxu0
        %v1227 = vadd.f32 %v1131, %v1223
        %v1228 = vadd.f32 %v1132, %v1225
        %s1229 = scalar_lea.vmem %s2, 72
        %v1230 = vld [vmem:[%s1229] sm:$0xff]
        %v1231 = vld [vmem:[#allocation2] sm:$0xff]
        %v1232 = vld [vmem:[#allocation2 + $0x8] sm:$0xf]
        %v1235 = vcombine.high %v1231, %v1231
        %1236 = vrot.lane.b32.xlu0 %v1231, 104
        %v1237 = vpop.permute.xlu0 %1236
        %1238 = vrot.lane.b32.xlu0 %v1235, 104
        %v1239 = vpop.permute.xlu0 %1238
        %1240 = vrot.lane.b32.xlu0 %v1232, 104
        %v1241 = vpop.permute.xlu0 %1240
        %vm1242 = vcmask 850944
        %v1243 = vsel %vm1242, %v1237, %v1239
        %v1244 = vsel %vm1242, %v1239, %v1241
        %v1246 = vsel %vm399, %v1230, 0
        %v1248 = vsel %vm403, %v1243, 0
        %v1250 = vsel %vm403, %v1244, 0
        %1252 = vmatprep.subr.mxu0 %v1250
        %1253 = vmatpush1.msra.mxu0 %v1248
        %1254 = vmatprep.subr.mxu0 0.0
        %1255 = vmatpush1.msra.mxu0 0.0
        %1256 = vmatprep.subr.mxu0 0.0
        %1257 = vmatpush1.msra.mxu0 0.0
        %1258 = vmatprep.subr.mxu0 0.0
        %1259 = vmatpush1.msra.mxu0 0.0
        %1260 = vmatprep.subr.mxu0 0.0
        %1261 = vmatpush1.msra.mxu0 0.0
        %1262 = vmatprep.subr.mxu0 0.0
        %1263 = vmatpush1.msra.mxu0 0.0
        %1264 = vmatprep.subr.mxu0 0.0
        %1265 = vmatpush1.msra.mxu0 0.0
        %1266 = vmatprep.subr.mxu0 0.0
        %1267 = vmatpush1.msra.mxu0 0.0
        %1268 = vmatprep.subr.mxu0 0.0
        %1269 = vmatpush1.msra.mxu0 0.0
        %1270 = vmatprep.subr.mxu0 0.0
        %1271 = vmatpush1.msra.mxu0 0.0
        %1272 = vmatprep.subr.mxu0 0.0
        %1273 = vmatpush1.msra.mxu0 0.0
        %1274 = vmatprep.subr.mxu0 0.0
        %1275 = vmatpush1.msra.mxu0 0.0
        %1276 = vmatprep.subr.mxu0 0.0
        %1277 = vmatpush1.msra.mxu0 0.0
        %1278 = vmatprep.subr.mxu0 0.0
        %1279 = vmatpush1.msra.mxu0 0.0
        %1280 = vmatprep.subr.mxu0 0.0
        %1281 = vmatpush1.msra.mxu0 0.0
        %1282 = vmatprep.subr.mxu0 0.0
        %1283 = vmatpush1.msra.mxu0 0.0
        %1284 = vmatprep.subr.mxu0 0.0
        %1285 = vmatpush1.msra.mxu0 0.0
        %1286 = vmatprep.subr.mxu0 0.0
        %1287 = vmatpush1.msra.mxu0 0.0
        %1288 = vmatprep.subr.mxu0 0.0
        %1289 = vmatpush1.msra.mxu0 0.0
        %1290 = vmatprep.subr.mxu0 0.0
        %1291 = vmatpush1.msra.mxu0 0.0
        %1292 = vmatprep.subr.mxu0 0.0
        %1293 = vmatpush1.msra.mxu0 0.0
        %1294 = vmatprep.subr.mxu0 0.0
        %1295 = vmatpush1.msra.mxu0 0.0
        %1296 = vmatprep.subr.mxu0 0.0
        %1297 = vmatpush1.msra.mxu0 0.0
        %1298 = vmatprep.subr.mxu0 0.0
        %1299 = vmatpush1.msra.mxu0 0.0
        %1300 = vmatprep.subr.mxu0 0.0
        %1301 = vmatpush1.msra.mxu0 0.0
        %1302 = vmatprep.subr.mxu0 0.0
        %1303 = vmatpush1.msra.mxu0 0.0
        %1304 = vmatprep.subr.mxu0 0.0
        %1305 = vmatpush1.msra.mxu0 0.0
        %1306 = vmatprep.subr.mxu0 0.0
        %1307 = vmatpush1.msra.mxu0 0.0
        %1308 = vmatprep.subr.mxu0 0.0
        %1309 = vmatpush1.msra.mxu0 0.0
        %1310 = vmatprep.subr.mxu0 0.0
        %1311 = vmatpush1.msra.mxu0 0.0
        %1312 = vmatprep.subr.mxu0 0.0
        %1313 = vmatpush1.msra.mxu0 0.0
        %1314 = vmatprep.subr.mxu0 0.0
        %1315 = vmatpush1.msra.mxu0 0.0
        %1316 = vmatprep.mubr.f32.mxu0 0.0
        %1317 = vmatmul.mubr.f32.gmra.mrb[0].mxu0 %v1246
        %v1318 = vpop.f32.mrb[0].mxu0
        %v1319 = vadd.f32 0.0, %v1318
        %v1320 = vpop.f32.mrb[0].mxu0
        %v1321 = vadd.f32 0.0, %v1320
        %1322 = vdwg.mxu0
        %v1323 = vadd.f32 %v1227, %v1319
        %v1324 = vadd.f32 %v1228, %v1321
        %s1325 = scalar_lea.vmem %s2, 80
        %v1326 = vld [vmem:[%s1325] sm:$0xff]
        %v1327 = vld [vmem:[#allocation2] sm:$0xff]
        %v1328 = vld [vmem:[#allocation2 + $0x8] sm:$0xf]
        %v1331 = vcombine.high %v1327, %v1327
        %1332 = vrot.lane.b32.xlu0 %v1327, 88
        %v1333 = vpop.permute.xlu0 %1332
        %1334 = vrot.lane.b32.xlu0 %v1331, 88
        %v1335 = vpop.permute.xlu0 %1334
        %1336 = vrot.lane.b32.xlu0 %v1328, 88
        %v1337 = vpop.permute.xlu0 %1336
        %vm1338 = vcmask 719872
        %v1339 = vsel %vm1338, %v1333, %v1335
        %v1340 = vsel %vm1338, %v1335, %v1337
        %v1342 = vsel %vm399, %v1326, 0
        %v1344 = vsel %vm403, %v1339, 0
        %v1346 = vsel %vm403, %v1340, 0
        %1348 = vmatprep.subr.mxu0 %v1346
        %1349 = vmatpush1.msra.mxu0 %v1344
        %1350 = vmatprep.subr.mxu0 0.0
        %1351 = vmatpush1.msra.mxu0 0.0
        %1352 = vmatprep.subr.mxu0 0.0
        %1353 = vmatpush1.msra.mxu0 0.0
        %1354 = vmatprep.subr.mxu0 0.0
        %1355 = vmatpush1.msra.mxu0 0.0
        %1356 = vmatprep.subr.mxu0 0.0
        %1357 = vmatpush1.msra.mxu0 0.0
        %1358 = vmatprep.subr.mxu0 0.0
        %1359 = vmatpush1.msra.mxu0 0.0
        %1360 = vmatprep.subr.mxu0 0.0
        %1361 = vmatpush1.msra.mxu0 0.0
        %1362 = vmatprep.subr.mxu0 0.0
        %1363 = vmatpush1.msra.mxu0 0.0
        %1364 = vmatprep.subr.mxu0 0.0
        %1365 = vmatpush1.msra.mxu0 0.0
        %1366 = vmatprep.subr.mxu0 0.0
        %1367 = vmatpush1.msra.mxu0 0.0
        %1368 = vmatprep.subr.mxu0 0.0
        %1369 = vmatpush1.msra.mxu0 0.0
        %1370 = vmatprep.subr.mxu0 0.0
        %1371 = vmatpush1.msra.mxu0 0.0
        %1372 = vmatprep.subr.mxu0 0.0
        %1373 = vmatpush1.msra.mxu0 0.0
        %1374 = vmatprep.subr.mxu0 0.0
        %1375 = vmatpush1.msra.mxu0 0.0
        %1376 = vmatprep.subr.mxu0 0.0
        %1377 = vmatpush1.msra.mxu0 0.0
        %1378 = vmatprep.subr.mxu0 0.0
        %1379 = vmatpush1.msra.mxu0 0.0
        %1380 = vmatprep.subr.mxu0 0.0
        %1381 = vmatpush1.msra.mxu0 0.0
        %1382 = vmatprep.subr.mxu0 0.0
        %1383 = vmatpush1.msra.mxu0 0.0
        %1384 = vmatprep.subr.mxu0 0.0
        %1385 = vmatpush1.msra.mxu0 0.0
        %1386 = vmatprep.subr.mxu0 0.0
        %1387 = vmatpush1.msra.mxu0 0.0
        %1388 = vmatprep.subr.mxu0 0.0
        %1389 = vmatpush1.msra.mxu0 0.0
        %1390 = vmatprep.subr.mxu0 0.0
        %1391 = vmatpush1.msra.mxu0 0.0
        %1392 = vmatprep.subr.mxu0 0.0
        %1393 = vmatpush1.msra.mxu0 0.0
        %1394 = vmatprep.subr.mxu0 0.0
        %1395 = vmatpush1.msra.mxu0 0.0
        %1396 = vmatprep.subr.mxu0 0.0
        %1397 = vmatpush1.msra.mxu0 0.0
        %1398 = vmatprep.subr.mxu0 0.0
        %1399 = vmatpush1.msra.mxu0 0.0
        %1400 = vmatprep.subr.mxu0 0.0
        %1401 = vmatpush1.msra.mxu0 0.0
        %1402 = vmatprep.subr.mxu0 0.0
        %1403 = vmatpush1.msra.mxu0 0.0
        %1404 = vmatprep.subr.mxu0 0.0
        %1405 = vmatpush1.msra.mxu0 0.0
        %1406 = vmatprep.subr.mxu0 0.0
        %1407 = vmatpush1.msra.mxu0 0.0
        %1408 = vmatprep.subr.mxu0 0.0
        %1409 = vmatpush1.msra.mxu0 0.0
        %1410 = vmatprep.subr.mxu0 0.0
        %1411 = vmatpush1.msra.mxu0 0.0
        %1412 = vmatprep.mubr.f32.mxu0 0.0
        %1413 = vmatmul.mubr.f32.gmra.mrb[0].mxu0 %v1342
        %v1414 = vpop.f32.mrb[0].mxu0
        %v1415 = vadd.f32 0.0, %v1414
        %v1416 = vpop.f32.mrb[0].mxu0
        %v1417 = vadd.f32 0.0, %v1416
        %1418 = vdwg.mxu0
        %v1419 = vadd.f32 %v1323, %v1415
        %v1420 = vadd.f32 %v1324, %v1417
        %s1421 = scalar_lea.vmem %s2, 88
        %v1422 = vld [vmem:[%s1421] sm:$0xff]
        %v1423 = vld [vmem:[#allocation2] sm:$0xff]
        %v1424 = vld [vmem:[#allocation2 + $0x8] sm:$0xf]
        %v1427 = vcombine.high %v1423, %v1423
        %1428 = vrot.lane.b32.xlu0 %v1423, 87
        %v1429 = vpop.permute.xlu0 %1428
        %1430 = vrot.lane.b32.xlu0 %v1427, 87
        %v1431 = vpop.permute.xlu0 %1430
        %1432 = vrot.lane.b32.xlu0 %v1424, 87
        %v1433 = vpop.permute.xlu0 %1432
        %vm1434 = vcmask 711680
        %v1435 = vsel %vm1434, %v1429, %v1431
        %v1436 = vsel %vm1434, %v1431, %v1433
        %v1438 = vsel %vm399, %v1422, 0
        %v1440 = vsel %vm403, %v1435, 0
        %v1442 = vsel %vm403, %v1436, 0
        %1444 = vmatprep.subr.mxu0 %v1442
        %1445 = vmatpush1.msra.mxu0 %v1440
        %1446 = vmatprep.subr.mxu0 0.0
        %1447 = vmatpush1.msra.mxu0 0.0
        %1448 = vmatprep.subr.mxu0 0.0
        %1449 = vmatpush1.msra.mxu0 0.0
        %1450 = vmatprep.subr.mxu0 0.0
        %1451 = vmatpush1.msra.mxu0 0.0
        %1452 = vmatprep.subr.mxu0 0.0
        %1453 = vmatpush1.msra.mxu0 0.0
        %1454 = vmatprep.subr.mxu0 0.0
        %1455 = vmatpush1.msra.mxu0 0.0
        %1456 = vmatprep.subr.mxu0 0.0
        %1457 = vmatpush1.msra.mxu0 0.0
        %1458 = vmatprep.subr.mxu0 0.0
        %1459 = vmatpush1.msra.mxu0 0.0
        %1460 = vmatprep.subr.mxu0 0.0
        %1461 = vmatpush1.msra.mxu0 0.0
        %1462 = vmatprep.subr.mxu0 0.0
        %1463 = vmatpush1.msra.mxu0 0.0
        %1464 = vmatprep.subr.mxu0 0.0
        %1465 = vmatpush1.msra.mxu0 0.0
        %1466 = vmatprep.subr.mxu0 0.0
        %1467 = vmatpush1.msra.mxu0 0.0
        %1468 = vmatprep.subr.mxu0 0.0
        %1469 = vmatpush1.msra.mxu0 0.0
        %1470 = vmatprep.subr.mxu0 0.0
        %1471 = vmatpush1.msra.mxu0 0.0
        %1472 = vmatprep.subr.mxu0 0.0
        %1473 = vmatpush1.msra.mxu0 0.0
        %1474 = vmatprep.subr.mxu0 0.0
        %1475 = vmatpush1.msra.mxu0 0.0
        %1476 = vmatprep.subr.mxu0 0.0
        %1477 = vmatpush1.msra.mxu0 0.0
        %1478 = vmatprep.subr.mxu0 0.0
        %1479 = vmatpush1.msra.mxu0 0.0
        %1480 = vmatprep.subr.mxu0 0.0
        %1481 = vmatpush1.msra.mxu0 0.0
        %1482 = vmatprep.subr.mxu0 0.0
        %1483 = vmatpush1.msra.mxu0 0.0
        %1484 = vmatprep.subr.mxu0 0.0
        %1485 = vmatpush1.msra.mxu0 0.0
        %1486 = vmatprep.subr.mxu0 0.0
        %1487 = vmatpush1.msra.mxu0 0.0
        %1488 = vmatprep.subr.mxu0 0.0
        %1489 = vmatpush1.msra.mxu0 0.0
        %1490 = vmatprep.subr.mxu0 0.0
        %1491 = vmatpush1.msra.mxu0 0.0
        %1492 = vmatprep.subr.mxu0 0.0
        %1493 = vmatpush1.msra.mxu0 0.0
        %1494 = vmatprep.subr.mxu0 0.0
        %1495 = vmatpush1.msra.mxu0 0.0
        %1496 = vmatprep.subr.mxu0 0.0
        %1497 = vmatpush1.msra.mxu0 0.0
        %1498 = vmatprep.subr.mxu0 0.0
        %1499 = vmatpush1.msra.mxu0 0.0
        %1500 = vmatprep.subr.mxu0 0.0
        %1501 = vmatpush1.msra.mxu0 0.0
        %1502 = vmatprep.subr.mxu0 0.0
        %1503 = vmatpush1.msra.mxu0 0.0
        %1504 = vmatprep.subr.mxu0 0.0
        %1505 = vmatpush1.msra.mxu0 0.0
        %1506 = vmatprep.subr.mxu0 0.0
        %1507 = vmatpush1.msra.mxu0 0.0
        %1508 = vmatprep.mubr.f32.mxu0 0.0
        %1509 = vmatmul.mubr.f32.gmra.mrb[0].mxu0 %v1438
        %v1510 = vpop.f32.mrb[0].mxu0
        %v1511 = vadd.f32 0.0, %v1510
        %v1512 = vpop.f32.mrb[0].mxu0
        %v1513 = vadd.f32 0.0, %v1512
        %1514 = vdwg.mxu0
        %v1515 = vadd.f32 %v1419, %v1511
        %v1516 = vadd.f32 %v1420, %v1513
        %s1517 = scalar_lea.vmem %s2, 96
        %v1518 = vld [vmem:[%s1517] sm:$0xff]
        %v1519 = vld [vmem:[#allocation2] sm:$0xff]
        %v1520 = vld [vmem:[#allocation2 + $0x8] sm:$0xf]
        %v1523 = vcombine.high %v1519, %v1519
        %1524 = vrot.lane.b32.xlu0 %v1519, 86
        %v1525 = vpop.permute.xlu0 %1524
        %1526 = vrot.lane.b32.xlu0 %v1523, 86
        %v1527 = vpop.permute.xlu0 %1526
        %1528 = vrot.lane.b32.xlu0 %v1520, 86
        %v1529 = vpop.permute.xlu0 %1528
        %vm1530 = vcmask 703488
        %v1531 = vsel %vm1530, %v1525, %v1527
        %v1532 = vsel %vm1530, %v1527, %v1529
        %v1534 = vsel %vm399, %v1518, 0
        %v1536 = vsel %vm403, %v1531, 0
        %v1538 = vsel %vm403, %v1532, 0
        %1540 = vmatprep.subr.mxu0 %v1538
        %1541 = vmatpush1.msra.mxu0 %v1536
        %1542 = vmatprep.subr.mxu0 0.0
        %1543 = vmatpush1.msra.mxu0 0.0
        %1544 = vmatprep.subr.mxu0 0.0
        %1545 = vmatpush1.msra.mxu0 0.0
        %1546 = vmatprep.subr.mxu0 0.0
        %1547 = vmatpush1.msra.mxu0 0.0
        %1548 = vmatprep.subr.mxu0 0.0
        %1549 = vmatpush1.msra.mxu0 0.0
        %1550 = vmatprep.subr.mxu0 0.0
        %1551 = vmatpush1.msra.mxu0 0.0
        %1552 = vmatprep.subr.mxu0 0.0
        %1553 = vmatpush1.msra.mxu0 0.0
        %1554 = vmatprep.subr.mxu0 0.0
        %1555 = vmatpush1.msra.mxu0 0.0
        %1556 = vmatprep.subr.mxu0 0.0
        %1557 = vmatpush1.msra.mxu0 0.0
        %1558 = vmatprep.subr.mxu0 0.0
        %1559 = vmatpush1.msra.mxu0 0.0
        %1560 = vmatprep.subr.mxu0 0.0
        %1561 = vmatpush1.msra.mxu0 0.0
        %1562 = vmatprep.subr.mxu0 0.0
        %1563 = vmatpush1.msra.mxu0 0.0
        %1564 = vmatprep.subr.mxu0 0.0
        %1565 = vmatpush1.msra.mxu0 0.0
        %1566 = vmatprep.subr.mxu0 0.0
        %1567 = vmatpush1.msra.mxu0 0.0
        %1568 = vmatprep.subr.mxu0 0.0
        %1569 = vmatpush1.msra.mxu0 0.0
        %1570 = vmatprep.subr.mxu0 0.0
        %1571 = vmatpush1.msra.mxu0 0.0
        %1572 = vmatprep.subr.mxu0 0.0
        %1573 = vmatpush1.msra.mxu0 0.0
        %1574 = vmatprep.subr.mxu0 0.0
        %1575 = vmatpush1.msra.mxu0 0.0
        %1576 = vmatprep.subr.mxu0 0.0
        %1577 = vmatpush1.msra.mxu0 0.0
        %1578 = vmatprep.subr.mxu0 0.0
        %1579 = vmatpush1.msra.mxu0 0.0
        %1580 = vmatprep.subr.mxu0 0.0
        %1581 = vmatpush1.msra.mxu0 0.0
        %1582 = vmatprep.subr.mxu0 0.0
        %1583 = vmatpush1.msra.mxu0 0.0
        %1584 = vmatprep.subr.mxu0 0.0
        %1585 = vmatpush1.msra.mxu0 0.0
        %1586 = vmatprep.subr.mxu0 0.0
        %1587 = vmatpush1.msra.mxu0 0.0
        %1588 = vmatprep.subr.mxu0 0.0
        %1589 = vmatpush1.msra.mxu0 0.0
        %1590 = vmatprep.subr.mxu0 0.0
        %1591 = vmatpush1.msra.mxu0 0.0
        %1592 = vmatprep.subr.mxu0 0.0
        %1593 = vmatpush1.msra.mxu0 0.0
        %1594 = vmatprep.subr.mxu0 0.0
        %1595 = vmatpush1.msra.mxu0 0.0
        %1596 = vmatprep.subr.mxu0 0.0
        %1597 = vmatpush1.msra.mxu0 0.0
        %1598 = vmatprep.subr.mxu0 0.0
        %1599 = vmatpush1.msra.mxu0 0.0
        %1600 = vmatprep.subr.mxu0 0.0
        %1601 = vmatpush1.msra.mxu0 0.0
        %1602 = vmatprep.subr.mxu0 0.0
        %1603 = vmatpush1.msra.mxu0 0.0
        %1604 = vmatprep.mubr.f32.mxu0 0.0
        %1605 = vmatmul.mubr.f32.gmra.mrb[0].mxu0 %v1534
        %v1606 = vpop.f32.mrb[0].mxu0
        %v1607 = vadd.f32 0.0, %v1606
        %v1608 = vpop.f32.mrb[0].mxu0
        %v1609 = vadd.f32 0.0, %v1608
        %1610 = vdwg.mxu0
        %v1611 = vadd.f32 %v1515, %v1607
        %v1612 = vadd.f32 %v1516, %v1609
        %s1613 = scalar_lea.vmem %s2, 104
        %v1614 = vld [vmem:[%s1613] sm:$0xff]
        %v1615 = vld [vmem:[#allocation2] sm:$0xff]
        %v1616 = vld [vmem:[#allocation2 + $0x8] sm:$0xf]
        %v1619 = vcombine.high %v1615, %v1615
        %1620 = vrot.lane.b32.xlu0 %v1615, 85
        %v1621 = vpop.permute.xlu0 %1620
        %1622 = vrot.lane.b32.xlu0 %v1619, 85
        %v1623 = vpop.permute.xlu0 %1622
        %1624 = vrot.lane.b32.xlu0 %v1616, 85
        %v1625 = vpop.permute.xlu0 %1624
        %vm1626 = vcmask 695296
        %v1627 = vsel %vm1626, %v1621, %v1623
        %v1628 = vsel %vm1626, %v1623, %v1625
        %v1630 = vsel %vm399, %v1614, 0
        %v1632 = vsel %vm403, %v1627, 0
        %v1634 = vsel %vm403, %v1628, 0
        %1636 = vmatprep.subr.mxu0 %v1634
        %1637 = vmatpush1.msra.mxu0 %v1632
        %1638 = vmatprep.subr.mxu0 0.0
        %1639 = vmatpush1.msra.mxu0 0.0
        %1640 = vmatprep.subr.mxu0 0.0
        %1641 = vmatpush1.msra.mxu0 0.0
        %1642 = vmatprep.subr.mxu0 0.0
        %1643 = vmatpush1.msra.mxu0 0.0
        %1644 = vmatprep.subr.mxu0 0.0
        %1645 = vmatpush1.msra.mxu0 0.0
        %1646 = vmatprep.subr.mxu0 0.0
        %1647 = vmatpush1.msra.mxu0 0.0
        %1648 = vmatprep.subr.mxu0 0.0
        %1649 = vmatpush1.msra.mxu0 0.0
        %1650 = vmatprep.subr.mxu0 0.0
        %1651 = vmatpush1.msra.mxu0 0.0
        %1652 = vmatprep.subr.mxu0 0.0
        %1653 = vmatpush1.msra.mxu0 0.0
        %1654 = vmatprep.subr.mxu0 0.0
        %1655 = vmatpush1.msra.mxu0 0.0
        %1656 = vmatprep.subr.mxu0 0.0
        %1657 = vmatpush1.msra.mxu0 0.0
        %1658 = vmatprep.subr.mxu0 0.0
        %1659 = vmatpush1.msra.mxu0 0.0
        %1660 = vmatprep.subr.mxu0 0.0
        %1661 = vmatpush1.msra.mxu0 0.0
        %1662 = vmatprep.subr.mxu0 0.0
        %1663 = vmatpush1.msra.mxu0 0.0
        %1664 = vmatprep.subr.mxu0 0.0
        %1665 = vmatpush1.msra.mxu0 0.0
        %1666 = vmatprep.subr.mxu0 0.0
        %1667 = vmatpush1.msra.mxu0 0.0
        %1668 = vmatprep.subr.mxu0 0.0
        %1669 = vmatpush1.msra.mxu0 0.0
        %1670 = vmatprep.subr.mxu0 0.0
        %1671 = vmatpush1.msra.mxu0 0.0
        %1672 = vmatprep.subr.mxu0 0.0
        %1673 = vmatpush1.msra.mxu0 0.0
        %1674 = vmatprep.subr.mxu0 0.0
        %1675 = vmatpush1.msra.mxu0 0.0
        %1676 = vmatprep.subr.mxu0 0.0
        %1677 = vmatpush1.msra.mxu0 0.0
        %1678 = vmatprep.subr.mxu0 0.0
        %1679 = vmatpush1.msra.mxu0 0.0
        %1680 = vmatprep.subr.mxu0 0.0
        %1681 = vmatpush1.msra.mxu0 0.0
        %1682 = vmatprep.subr.mxu0 0.0
        %1683 = vmatpush1.msra.mxu0 0.0
        %1684 = vmatprep.subr.mxu0 0.0
        %1685 = vmatpush1.msra.mxu0 0.0
        %1686 = vmatprep.subr.mxu0 0.0
        %1687 = vmatpush1.msra.mxu0 0.0
        %1688 = vmatprep.subr.mxu0 0.0
        %1689 = vmatpush1.msra.mxu0 0.0
        %1690 = vmatprep.subr.mxu0 0.0
        %1691 = vmatpush1.msra.mxu0 0.0
        %1692 = vmatprep.subr.mxu0 0.0
        %1693 = vmatpush1.msra.mxu0 0.0
        %1694 = vmatprep.subr.mxu0 0.0
        %1695 = vmatpush1.msra.mxu0 0.0
        %1696 = vmatprep.subr.mxu0 0.0
        %1697 = vmatpush1.msra.mxu0 0.0
        %1698 = vmatprep.subr.mxu0 0.0
        %1699 = vmatpush1.msra.mxu0 0.0
        %1700 = vmatprep.mubr.f32.mxu0 0.0
        %1701 = vmatmul.mubr.f32.gmra.mrb[0].mxu0 %v1630
        %v1702 = vpop.f32.mrb[0].mxu0
        %v1703 = vadd.f32 0.0, %v1702
        %v1704 = vpop.f32.mrb[0].mxu0
        %v1705 = vadd.f32 0.0, %v1704
        %1706 = vdwg.mxu0
        %v1707 = vadd.f32 %v1611, %v1703
        %v1708 = vadd.f32 %v1612, %v1705
        %s1709 = scalar_lea.vmem %s2, 112
        %v1710 = vld [vmem:[%s1709] sm:$0xff]
        %v1711 = vld [vmem:[#allocation2] sm:$0xff]
        %v1712 = vld [vmem:[#allocation2 + $0x8] sm:$0xf]
        %v1715 = vcombine.high %v1711, %v1711
        %1716 = vrot.lane.b32.xlu0 %v1711, 84
        %v1717 = vpop.permute.xlu0 %1716
        %1718 = vrot.lane.b32.xlu0 %v1715, 84
        %v1719 = vpop.permute.xlu0 %1718
        %1720 = vrot.lane.b32.xlu0 %v1712, 84
        %v1721 = vpop.permute.xlu0 %1720
        %vm1722 = vcmask 687104
        %v1723 = vsel %vm1722, %v1717, %v1719
        %v1724 = vsel %vm1722, %v1719, %v1721
        %v1726 = vsel %vm399, %v1710, 0
        %v1728 = vsel %vm403, %v1723, 0
        %v1730 = vsel %vm403, %v1724, 0
        %1732 = vmatprep.subr.mxu0 %v1730
        %1733 = vmatpush1.msra.mxu0 %v1728
        %1734 = vmatprep.subr.mxu0 0.0
        %1735 = vmatpush1.msra.mxu0 0.0
        %1736 = vmatprep.subr.mxu0 0.0
        %1737 = vmatpush1.msra.mxu0 0.0
        %1738 = vmatprep.subr.mxu0 0.0
        %1739 = vmatpush1.msra.mxu0 0.0
        %1740 = vmatprep.subr.mxu0 0.0
        %1741 = vmatpush1.msra.mxu0 0.0
        %1742 = vmatprep.subr.mxu0 0.0
        %1743 = vmatpush1.msra.mxu0 0.0
        %1744 = vmatprep.subr.mxu0 0.0
        %1745 = vmatpush1.msra.mxu0 0.0
        %1746 = vmatprep.subr.mxu0 0.0
        %1747 = vmatpush1.msra.mxu0 0.0
        %1748 = vmatprep.subr.mxu0 0.0
        %1749 = vmatpush1.msra.mxu0 0.0
        %1750 = vmatprep.subr.mxu0 0.0
        %1751 = vmatpush1.msra.mxu0 0.0
        %1752 = vmatprep.subr.mxu0 0.0
        %1753 = vmatpush1.msra.mxu0 0.0
        %1754 = vmatprep.subr.mxu0 0.0
        %1755 = vmatpush1.msra.mxu0 0.0
        %1756 = vmatprep.subr.mxu0 0.0
        %1757 = vmatpush1.msra.mxu0 0.0
        %1758 = vmatprep.subr.mxu0 0.0
        %1759 = vmatpush1.msra.mxu0 0.0
        %1760 = vmatprep.subr.mxu0 0.0
        %1761 = vmatpush1.msra.mxu0 0.0
        %1762 = vmatprep.subr.mxu0 0.0
        %1763 = vmatpush1.msra.mxu0 0.0
        %1764 = vmatprep.subr.mxu0 0.0
        %1765 = vmatpush1.msra.mxu0 0.0
        %1766 = vmatprep.subr.mxu0 0.0
        %1767 = vmatpush1.msra.mxu0 0.0
        %1768 = vmatprep.subr.mxu0 0.0
        %1769 = vmatpush1.msra.mxu0 0.0
        %1770 = vmatprep.subr.mxu0 0.0
        %1771 = vmatpush1.msra.mxu0 0.0
        %1772 = vmatprep.subr.mxu0 0.0
        %1773 = vmatpush1.msra.mxu0 0.0
        %1774 = vmatprep.subr.mxu0 0.0
        %1775 = vmatpush1.msra.mxu0 0.0
        %1776 = vmatprep.subr.mxu0 0.0
        %1777 = vmatpush1.msra.mxu0 0.0
        %1778 = vmatprep.subr.mxu0 0.0
        %1779 = vmatpush1.msra.mxu0 0.0
        %1780 = vmatprep.subr.mxu0 0.0
        %1781 = vmatpush1.msra.mxu0 0.0
        %1782 = vmatprep.subr.mxu0 0.0
        %1783 = vmatpush1.msra.mxu0 0.0
        %1784 = vmatprep.subr.mxu0 0.0
        %1785 = vmatpush1.msra.mxu0 0.0
        %1786 = vmatprep.subr.mxu0 0.0
        %1787 = vmatpush1.msra.mxu0 0.0
        %1788 = vmatprep.subr.mxu0 0.0
        %1789 = vmatpush1.msra.mxu0 0.0
        %1790 = vmatprep.subr.mxu0 0.0
        %1791 = vmatpush1.msra.mxu0 0.0
        %1792 = vmatprep.subr.mxu0 0.0
        %1793 = vmatpush1.msra.mxu0 0.0
        %1794 = vmatprep.subr.mxu0 0.0
        %1795 = vmatpush1.msra.mxu0 0.0
        %1796 = vmatprep.mubr.f32.mxu0 0.0
        %1797 = vmatmul.mubr.f32.gmra.mrb[0].mxu0 %v1726
        %v1798 = vpop.f32.mrb[0].mxu0
        %v1799 = vadd.f32 0.0, %v1798
        %v1800 = vpop.f32.mrb[0].mxu0
        %v1801 = vadd.f32 0.0, %v1800
        %1802 = vdwg.mxu0
        %v1803 = vadd.f32 %v1707, %v1799
        %v1804 = vadd.f32 %v1708, %v1801
        %s1805 = scalar_lea.vmem %s2, 120
        %v1806 = vld [vmem:[%s1805] sm:$0xff]
        %v1807 = vld [vmem:[#allocation2] sm:$0xff]
        %v1808 = vld [vmem:[#allocation2 + $0x8] sm:$0xf]
        %v1811 = vcombine.high %v1807, %v1807
        %1812 = vrot.lane.b32.xlu0 %v1807, 68
        %v1813 = vpop.permute.xlu0 %1812
        %1814 = vrot.lane.b32.xlu0 %v1811, 68
        %v1815 = vpop.permute.xlu0 %1814
        %1816 = vrot.lane.b32.xlu0 %v1808, 68
        %v1817 = vpop.permute.xlu0 %1816
        %vm1818 = vcmask 556032
        %v1819 = vsel %vm1818, %v1813, %v1815
        %v1820 = vsel %vm1818, %v1815, %v1817
        %v1822 = vsel %vm399, %v1806, 0
        %v1824 = vsel %vm403, %v1819, 0
        %v1826 = vsel %vm403, %v1820, 0
        %1828 = vmatprep.subr.mxu0 %v1826
        %1829 = vmatpush1.msra.mxu0 %v1824
        %1830 = vmatprep.subr.mxu0 0.0
        %1831 = vmatpush1.msra.mxu0 0.0
        %1832 = vmatprep.subr.mxu0 0.0
        %1833 = vmatpush1.msra.mxu0 0.0
        %1834 = vmatprep.subr.mxu0 0.0
        %1835 = vmatpush1.msra.mxu0 0.0
        %1836 = vmatprep.subr.mxu0 0.0
        %1837 = vmatpush1.msra.mxu0 0.0
        %1838 = vmatprep.subr.mxu0 0.0
        %1839 = vmatpush1.msra.mxu0 0.0
        %1840 = vmatprep.subr.mxu0 0.0
        %1841 = vmatpush1.msra.mxu0 0.0
        %1842 = vmatprep.subr.mxu0 0.0
        %1843 = vmatpush1.msra.mxu0 0.0
        %1844 = vmatprep.subr.mxu0 0.0
        %1845 = vmatpush1.msra.mxu0 0.0
        %1846 = vmatprep.subr.mxu0 0.0
        %1847 = vmatpush1.msra.mxu0 0.0
        %1848 = vmatprep.subr.mxu0 0.0
        %1849 = vmatpush1.msra.mxu0 0.0
        %1850 = vmatprep.subr.mxu0 0.0
        %1851 = vmatpush1.msra.mxu0 0.0
        %1852 = vmatprep.subr.mxu0 0.0
        %1853 = vmatpush1.msra.mxu0 0.0
        %1854 = vmatprep.subr.mxu0 0.0
        %1855 = vmatpush1.msra.mxu0 0.0
        %1856 = vmatprep.subr.mxu0 0.0
        %1857 = vmatpush1.msra.mxu0 0.0
        %1858 = vmatprep.subr.mxu0 0.0
        %1859 = vmatpush1.msra.mxu0 0.0
        %1860 = vmatprep.subr.mxu0 0.0
        %1861 = vmatpush1.msra.mxu0 0.0
        %1862 = vmatprep.subr.mxu0 0.0
        %1863 = vmatpush1.msra.mxu0 0.0
        %1864 = vmatprep.subr.mxu0 0.0
        %1865 = vmatpush1.msra.mxu0 0.0
        %1866 = vmatprep.subr.mxu0 0.0
        %1867 = vmatpush1.msra.mxu0 0.0
        %1868 = vmatprep.subr.mxu0 0.0
        %1869 = vmatpush1.msra.mxu0 0.0
        %1870 = vmatprep.subr.mxu0 0.0
        %1871 = vmatpush1.msra.mxu0 0.0
        %1872 = vmatprep.subr.mxu0 0.0
        %1873 = vmatpush1.msra.mxu0 0.0
        %1874 = vmatprep.subr.mxu0 0.0
        %1875 = vmatpush1.msra.mxu0 0.0
        %1876 = vmatprep.subr.mxu0 0.0
        %1877 = vmatpush1.msra.mxu0 0.0
        %1878 = vmatprep.subr.mxu0 0.0
        %1879 = vmatpush1.msra.mxu0 0.0
        %1880 = vmatprep.subr.mxu0 0.0
        %1881 = vmatpush1.msra.mxu0 0.0
        %1882 = vmatprep.subr.mxu0 0.0
        %1883 = vmatpush1.msra.mxu0 0.0
        %1884 = vmatprep.subr.mxu0 0.0
        %1885 = vmatpush1.msra.mxu0 0.0
        %1886 = vmatprep.subr.mxu0 0.0
        %1887 = vmatpush1.msra.mxu0 0.0
        %1888 = vmatprep.subr.mxu0 0.0
        %1889 = vmatpush1.msra.mxu0 0.0
        %1890 = vmatprep.subr.mxu0 0.0
        %1891 = vmatpush1.msra.mxu0 0.0
        %1892 = vmatprep.mubr.f32.mxu0 0.0
        %1893 = vmatmul.mubr.f32.gmra.mrb[0].mxu0 %v1822
        %v1894 = vpop.f32.mrb[0].mxu0
        %v1895 = vadd.f32 0.0, %v1894
        %v1896 = vpop.f32.mrb[0].mxu0
        %v1897 = vadd.f32 0.0, %v1896
        %1898 = vdwg.mxu0
        %v1899 = vadd.f32 %v1803, %v1895
        %v1900 = vadd.f32 %v1804, %v1897
        %s1901 = scalar_lea.vmem %s2, 128
        %v1902 = vld [vmem:[%s1901] sm:$0xff]
        %v1903 = vld [vmem:[#allocation2] sm:$0xff]
        %v1904 = vld [vmem:[#allocation2 + $0x8] sm:$0xf]
        %v1907 = vcombine.high %v1903, %v1903
        %1908 = vrot.lane.b32.xlu0 %v1903, 67
        %v1909 = vpop.permute.xlu0 %1908
        %1910 = vrot.lane.b32.xlu0 %v1907, 67
        %v1911 = vpop.permute.xlu0 %1910
        %1912 = vrot.lane.b32.xlu0 %v1904, 67
        %v1913 = vpop.permute.xlu0 %1912
        %vm1914 = vcmask 547840
        %v1915 = vsel %vm1914, %v1909, %v1911
        %v1916 = vsel %vm1914, %v1911, %v1913
        %v1918 = vsel %vm399, %v1902, 0
        %v1920 = vsel %vm403, %v1915, 0
        %v1922 = vsel %vm403, %v1916, 0
        %1924 = vmatprep.subr.mxu0 %v1922
        %1925 = vmatpush1.msra.mxu0 %v1920
        %1926 = vmatprep.subr.mxu0 0.0
        %1927 = vmatpush1.msra.mxu0 0.0
        %1928 = vmatprep.subr.mxu0 0.0
        %1929 = vmatpush1.msra.mxu0 0.0
        %1930 = vmatprep.subr.mxu0 0.0
        %1931 = vmatpush1.msra.mxu0 0.0
        %1932 = vmatprep.subr.mxu0 0.0
        %1933 = vmatpush1.msra.mxu0 0.0
        %1934 = vmatprep.subr.mxu0 0.0
        %1935 = vmatpush1.msra.mxu0 0.0
        %1936 = vmatprep.subr.mxu0 0.0
        %1937 = vmatpush1.msra.mxu0 0.0
        %1938 = vmatprep.subr.mxu0 0.0
        %1939 = vmatpush1.msra.mxu0 0.0
        %1940 = vmatprep.subr.mxu0 0.0
        %1941 = vmatpush1.msra.mxu0 0.0
        %1942 = vmatprep.subr.mxu0 0.0
        %1943 = vmatpush1.msra.mxu0 0.0
        %1944 = vmatprep.subr.mxu0 0.0
        %1945 = vmatpush1.msra.mxu0 0.0
        %1946 = vmatprep.subr.mxu0 0.0
        %1947 = vmatpush1.msra.mxu0 0.0
        %1948 = vmatprep.subr.mxu0 0.0
        %1949 = vmatpush1.msra.mxu0 0.0
        %1950 = vmatprep.subr.mxu0 0.0
        %1951 = vmatpush1.msra.mxu0 0.0
        %1952 = vmatprep.subr.mxu0 0.0
        %1953 = vmatpush1.msra.mxu0 0.0
        %1954 = vmatprep.subr.mxu0 0.0
        %1955 = vmatpush1.msra.mxu0 0.0
        %1956 = vmatprep.subr.mxu0 0.0
        %1957 = vmatpush1.msra.mxu0 0.0
        %1958 = vmatprep.subr.mxu0 0.0
        %1959 = vmatpush1.msra.mxu0 0.0
        %1960 = vmatprep.subr.mxu0 0.0
        %1961 = vmatpush1.msra.mxu0 0.0
        %1962 = vmatprep.subr.mxu0 0.0
        %1963 = vmatpush1.msra.mxu0 0.0
        %1964 = vmatprep.subr.mxu0 0.0
        %1965 = vmatpush1.msra.mxu0 0.0
        %1966 = vmatprep.subr.mxu0 0.0
        %1967 = vmatpush1.msra.mxu0 0.0
        %1968 = vmatprep.subr.mxu0 0.0
        %1969 = vmatpush1.msra.mxu0 0.0
        %1970 = vmatprep.subr.mxu0 0.0
        %1971 = vmatpush1.msra.mxu0 0.0
        %1972 = vmatprep.subr.mxu0 0.0
        %1973 = vmatpush1.msra.mxu0 0.0
        %1974 = vmatprep.subr.mxu0 0.0
        %1975 = vmatpush1.msra.mxu0 0.0
        %1976 = vmatprep.subr.mxu0 0.0
        %1977 = vmatpush1.msra.mxu0 0.0
        %1978 = vmatprep.subr.mxu0 0.0
        %1979 = vmatpush1.msra.mxu0 0.0
        %1980 = vmatprep.subr.mxu0 0.0
        %1981 = vmatpush1.msra.mxu0 0.0
        %1982 = vmatprep.subr.mxu0 0.0
        %1983 = vmatpush1.msra.mxu0 0.0
        %1984 = vmatprep.subr.mxu0 0.0
        %1985 = vmatpush1.msra.mxu0 0.0
        %1986 = vmatprep.subr.mxu0 0.0
        %1987 = vmatpush1.msra.mxu0 0.0
        %1988 = vmatprep.mubr.f32.mxu0 0.0
        %1989 = vmatmul.mubr.f32.gmra.mrb[0].mxu0 %v1918
        %v1990 = vpop.f32.mrb[0].mxu0
        %v1991 = vadd.f32 0.0, %v1990
        %v1992 = vpop.f32.mrb[0].mxu0
        %v1993 = vadd.f32 0.0, %v1992
        %1994 = vdwg.mxu0
        %v1995 = vadd.f32 %v1899, %v1991
        %v1996 = vadd.f32 %v1900, %v1993
        %s1997 = scalar_lea.vmem %s2, 136
        %v1998 = vld [vmem:[%s1997] sm:$0xff]
        %v1999 = vld [vmem:[#allocation2] sm:$0xff]
        %v2000 = vld [vmem:[#allocation2 + $0x8] sm:$0xf]
        %v2003 = vcombine.high %v1999, %v1999
        %2004 = vrot.lane.b32.xlu0 %v1999, 66
        %v2005 = vpop.permute.xlu0 %2004
        %2006 = vrot.lane.b32.xlu0 %v2003, 66
        %v2007 = vpop.permute.xlu0 %2006
        %2008 = vrot.lane.b32.xlu0 %v2000, 66
        %v2009 = vpop.permute.xlu0 %2008
        %vm2010 = vcmask 539648
        %v2011 = vsel %vm2010, %v2005, %v2007
        %v2012 = vsel %vm2010, %v2007, %v2009
        %v2014 = vsel %vm399, %v1998, 0
        %v2016 = vsel %vm403, %v2011, 0
        %v2018 = vsel %vm403, %v2012, 0
        %2020 = vmatprep.subr.mxu0 %v2018
        %2021 = vmatpush1.msra.mxu0 %v2016
        %2022 = vmatprep.subr.mxu0 0.0
        %2023 = vmatpush1.msra.mxu0 0.0
        %2024 = vmatprep.subr.mxu0 0.0
        %2025 = vmatpush1.msra.mxu0 0.0
        %2026 = vmatprep.subr.mxu0 0.0
        %2027 = vmatpush1.msra.mxu0 0.0
        %2028 = vmatprep.subr.mxu0 0.0
        %2029 = vmatpush1.msra.mxu0 0.0
        %2030 = vmatprep.subr.mxu0 0.0
        %2031 = vmatpush1.msra.mxu0 0.0
        %2032 = vmatprep.subr.mxu0 0.0
        %2033 = vmatpush1.msra.mxu0 0.0
        %2034 = vmatprep.subr.mxu0 0.0
        %2035 = vmatpush1.msra.mxu0 0.0
        %2036 = vmatprep.subr.mxu0 0.0
        %2037 = vmatpush1.msra.mxu0 0.0
        %2038 = vmatprep.subr.mxu0 0.0
        %2039 = vmatpush1.msra.mxu0 0.0
        %2040 = vmatprep.subr.mxu0 0.0
        %2041 = vmatpush1.msra.mxu0 0.0
        %2042 = vmatprep.subr.mxu0 0.0
        %2043 = vmatpush1.msra.mxu0 0.0
        %2044 = vmatprep.subr.mxu0 0.0
        %2045 = vmatpush1.msra.mxu0 0.0
        %2046 = vmatprep.subr.mxu0 0.0
        %2047 = vmatpush1.msra.mxu0 0.0
        %2048 = vmatprep.subr.mxu0 0.0
        %2049 = vmatpush1.msra.mxu0 0.0
        %2050 = vmatprep.subr.mxu0 0.0
        %2051 = vmatpush1.msra.mxu0 0.0
        %2052 = vmatprep.subr.mxu0 0.0
        %2053 = vmatpush1.msra.mxu0 0.0
        %2054 = vmatprep.subr.mxu0 0.0
        %2055 = vmatpush1.msra.mxu0 0.0
        %2056 = vmatprep.subr.mxu0 0.0
        %2057 = vmatpush1.msra.mxu0 0.0
        %2058 = vmatprep.subr.mxu0 0.0
        %2059 = vmatpush1.msra.mxu0 0.0
        %2060 = vmatprep.subr.mxu0 0.0
        %2061 = vmatpush1.msra.mxu0 0.0
        %2062 = vmatprep.subr.mxu0 0.0
        %2063 = vmatpush1.msra.mxu0 0.0
        %2064 = vmatprep.subr.mxu0 0.0
        %2065 = vmatpush1.msra.mxu0 0.0
        %2066 = vmatprep.subr.mxu0 0.0
        %2067 = vmatpush1.msra.mxu0 0.0
        %2068 = vmatprep.subr.mxu0 0.0
        %2069 = vmatpush1.msra.mxu0 0.0
        %2070 = vmatprep.subr.mxu0 0.0
        %2071 = vmatpush1.msra.mxu0 0.0
        %2072 = vmatprep.subr.mxu0 0.0
        %2073 = vmatpush1.msra.mxu0 0.0
        %2074 = vmatprep.subr.mxu0 0.0
        %2075 = vmatpush1.msra.mxu0 0.0
        %2076 = vmatprep.subr.mxu0 0.0
        %2077 = vmatpush1.msra.mxu0 0.0
        %2078 = vmatprep.subr.mxu0 0.0
        %2079 = vmatpush1.msra.mxu0 0.0
        %2080 = vmatprep.subr.mxu0 0.0
        %2081 = vmatpush1.msra.mxu0 0.0
        %2082 = vmatprep.subr.mxu0 0.0
        %2083 = vmatpush1.msra.mxu0 0.0
        %2084 = vmatprep.mubr.f32.mxu0 0.0
        %2085 = vmatmul.mubr.f32.gmra.mrb[0].mxu0 %v2014
        %v2086 = vpop.f32.mrb[0].mxu0
        %v2087 = vadd.f32 0.0, %v2086
        %v2088 = vpop.f32.mrb[0].mxu0
        %v2089 = vadd.f32 0.0, %v2088
        %2090 = vdwg.mxu0
        %v2091 = vadd.f32 %v1995, %v2087
        %v2092 = vadd.f32 %v1996, %v2089
        %s2093 = scalar_lea.vmem %s2, 144
        %v2094 = vld [vmem:[%s2093] sm:$0xff]
        %v2095 = vld [vmem:[#allocation2] sm:$0xff]
        %v2096 = vld [vmem:[#allocation2 + $0x8] sm:$0xf]
        %v2099 = vcombine.high %v2095, %v2095
        %2100 = vrot.lane.b32.xlu0 %v2095, 65
        %v2101 = vpop.permute.xlu0 %2100
        %2102 = vrot.lane.b32.xlu0 %v2099, 65
        %v2103 = vpop.permute.xlu0 %2102
        %2104 = vrot.lane.b32.xlu0 %v2096, 65
        %v2105 = vpop.permute.xlu0 %2104
        %vm2106 = vcmask 531456
        %v2107 = vsel %vm2106, %v2101, %v2103
        %v2108 = vsel %vm2106, %v2103, %v2105
        %v2110 = vsel %vm399, %v2094, 0
        %v2112 = vsel %vm403, %v2107, 0
        %v2114 = vsel %vm403, %v2108, 0
        %2116 = vmatprep.subr.mxu0 %v2114
        %2117 = vmatpush1.msra.mxu0 %v2112
        %2118 = vmatprep.subr.mxu0 0.0
        %2119 = vmatpush1.msra.mxu0 0.0
        %2120 = vmatprep.subr.mxu0 0.0
        %2121 = vmatpush1.msra.mxu0 0.0
        %2122 = vmatprep.subr.mxu0 0.0
        %2123 = vmatpush1.msra.mxu0 0.0
        %2124 = vmatprep.subr.mxu0 0.0
        %2125 = vmatpush1.msra.mxu0 0.0
        %2126 = vmatprep.subr.mxu0 0.0
        %2127 = vmatpush1.msra.mxu0 0.0
        %2128 = vmatprep.subr.mxu0 0.0
        %2129 = vmatpush1.msra.mxu0 0.0
        %2130 = vmatprep.subr.mxu0 0.0
        %2131 = vmatpush1.msra.mxu0 0.0
        %2132 = vmatprep.subr.mxu0 0.0
        %2133 = vmatpush1.msra.mxu0 0.0
        %2134 = vmatprep.subr.mxu0 0.0
        %2135 = vmatpush1.msra.mxu0 0.0
        %2136 = vmatprep.subr.mxu0 0.0
        %2137 = vmatpush1.msra.mxu0 0.0
        %2138 = vmatprep.subr.mxu0 0.0
        %2139 = vmatpush1.msra.mxu0 0.0
        %2140 = vmatprep.subr.mxu0 0.0
        %2141 = vmatpush1.msra.mxu0 0.0
        %2142 = vmatprep.subr.mxu0 0.0
        %2143 = vmatpush1.msra.mxu0 0.0
        %2144 = vmatprep.subr.mxu0 0.0
        %2145 = vmatpush1.msra.mxu0 0.0
        %2146 = vmatprep.subr.mxu0 0.0
        %2147 = vmatpush1.msra.mxu0 0.0
        %2148 = vmatprep.subr.mxu0 0.0
        %2149 = vmatpush1.msra.mxu0 0.0
        %2150 = vmatprep.subr.mxu0 0.0
        %2151 = vmatpush1.msra.mxu0 0.0
        %2152 = vmatprep.subr.mxu0 0.0
        %2153 = vmatpush1.msra.mxu0 0.0
        %2154 = vmatprep.subr.mxu0 0.0
        %2155 = vmatpush1.msra.mxu0 0.0
        %2156 = vmatprep.subr.mxu0 0.0
        %2157 = vmatpush1.msra.mxu0 0.0
        %2158 = vmatprep.subr.mxu0 0.0
        %2159 = vmatpush1.msra.mxu0 0.0
        %2160 = vmatprep.subr.mxu0 0.0
        %2161 = vmatpush1.msra.mxu0 0.0
        %2162 = vmatprep.subr.mxu0 0.0
        %2163 = vmatpush1.msra.mxu0 0.0
        %2164 = vmatprep.subr.mxu0 0.0
        %2165 = vmatpush1.msra.mxu0 0.0
        %2166 = vmatprep.subr.mxu0 0.0
        %2167 = vmatpush1.msra.mxu0 0.0
        %2168 = vmatprep.subr.mxu0 0.0
        %2169 = vmatpush1.msra.mxu0 0.0
        %2170 = vmatprep.subr.mxu0 0.0
        %2171 = vmatpush1.msra.mxu0 0.0
        %2172 = vmatprep.subr.mxu0 0.0
        %2173 = vmatpush1.msra.mxu0 0.0
        %2174 = vmatprep.subr.mxu0 0.0
        %2175 = vmatpush1.msra.mxu0 0.0
        %2176 = vmatprep.subr.mxu0 0.0
        %2177 = vmatpush1.msra.mxu0 0.0
        %2178 = vmatprep.subr.mxu0 0.0
        %2179 = vmatpush1.msra.mxu0 0.0
        %2180 = vmatprep.mubr.f32.mxu0 0.0
        %2181 = vmatmul.mubr.f32.gmra.mrb[0].mxu0 %v2110
        %v2182 = vpop.f32.mrb[0].mxu0
        %v2183 = vadd.f32 0.0, %v2182
        %v2184 = vpop.f32.mrb[0].mxu0
        %v2185 = vadd.f32 0.0, %v2184
        %2186 = vdwg.mxu0
        %v2187 = vadd.f32 %v2091, %v2183
        %v2188 = vadd.f32 %v2092, %v2185
        %s2189 = scalar_lea.vmem %s2, 152
        %v2190 = vld [vmem:[%s2189] sm:$0xff]
        %v2191 = vld [vmem:[#allocation2] sm:$0xff]
        %v2192 = vld [vmem:[#allocation2 + $0x8] sm:$0xf]
        %v2195 = vcombine.high %v2191, %v2191
        %2196 = vrot.lane.b32.xlu0 %v2191, 64
        %v2197 = vpop.permute.xlu0 %2196
        %2198 = vrot.lane.b32.xlu0 %v2195, 64
        %v2199 = vpop.permute.xlu0 %2198
        %2200 = vrot.lane.b32.xlu0 %v2192, 64
        %v2201 = vpop.permute.xlu0 %2200
        %vm2202 = vcmask 523264
        %v2203 = vsel %vm2202, %v2197, %v2199
        %v2204 = vsel %vm2202, %v2199, %v2201
        %v2206 = vsel %vm399, %v2190, 0
        %v2208 = vsel %vm403, %v2203, 0
        %v2210 = vsel %vm403, %v2204, 0
        %2212 = vmatprep.subr.mxu0 %v2210
        %2213 = vmatpush1.msra.mxu0 %v2208
        %2214 = vmatprep.subr.mxu0 0.0
        %2215 = vmatpush1.msra.mxu0 0.0
        %2216 = vmatprep.subr.mxu0 0.0
        %2217 = vmatpush1.msra.mxu0 0.0
        %2218 = vmatprep.subr.mxu0 0.0
        %2219 = vmatpush1.msra.mxu0 0.0
        %2220 = vmatprep.subr.mxu0 0.0
        %2221 = vmatpush1.msra.mxu0 0.0
        %2222 = vmatprep.subr.mxu0 0.0
        %2223 = vmatpush1.msra.mxu0 0.0
        %2224 = vmatprep.subr.mxu0 0.0
        %2225 = vmatpush1.msra.mxu0 0.0
        %2226 = vmatprep.subr.mxu0 0.0
        %2227 = vmatpush1.msra.mxu0 0.0
        %2228 = vmatprep.subr.mxu0 0.0
        %2229 = vmatpush1.msra.mxu0 0.0
        %2230 = vmatprep.subr.mxu0 0.0
        %2231 = vmatpush1.msra.mxu0 0.0
        %2232 = vmatprep.subr.mxu0 0.0
        %2233 = vmatpush1.msra.mxu0 0.0
        %2234 = vmatprep.subr.mxu0 0.0
        %2235 = vmatpush1.msra.mxu0 0.0
        %2236 = vmatprep.subr.mxu0 0.0
        %2237 = vmatpush1.msra.mxu0 0.0
        %2238 = vmatprep.subr.mxu0 0.0
        %2239 = vmatpush1.msra.mxu0 0.0
        %2240 = vmatprep.subr.mxu0 0.0
        %2241 = vmatpush1.msra.mxu0 0.0
        %2242 = vmatprep.subr.mxu0 0.0
        %2243 = vmatpush1.msra.mxu0 0.0
        %2244 = vmatprep.subr.mxu0 0.0
        %2245 = vmatpush1.msra.mxu0 0.0
        %2246 = vmatprep.subr.mxu0 0.0
        %2247 = vmatpush1.msra.mxu0 0.0
        %2248 = vmatprep.subr.mxu0 0.0
        %2249 = vmatpush1.msra.mxu0 0.0
        %2250 = vmatprep.subr.mxu0 0.0
        %2251 = vmatpush1.msra.mxu0 0.0
        %2252 = vmatprep.subr.mxu0 0.0
        %2253 = vmatpush1.msra.mxu0 0.0
        %2254 = vmatprep.subr.mxu0 0.0
        %2255 = vmatpush1.msra.mxu0 0.0
        %2256 = vmatprep.subr.mxu0 0.0
        %2257 = vmatpush1.msra.mxu0 0.0
        %2258 = vmatprep.subr.mxu0 0.0
        %2259 = vmatpush1.msra.mxu0 0.0
        %2260 = vmatprep.subr.mxu0 0.0
        %2261 = vmatpush1.msra.mxu0 0.0
        %2262 = vmatprep.subr.mxu0 0.0
        %2263 = vmatpush1.msra.mxu0 0.0
        %2264 = vmatprep.subr.mxu0 0.0
        %2265 = vmatpush1.msra.mxu0 0.0
        %2266 = vmatprep.subr.mxu0 0.0
        %2267 = vmatpush1.msra.mxu0 0.0
        %2268 = vmatprep.subr.mxu0 0.0
        %2269 = vmatpush1.msra.mxu0 0.0
        %2270 = vmatprep.subr.mxu0 0.0
        %2271 = vmatpush1.msra.mxu0 0.0
        %2272 = vmatprep.subr.mxu0 0.0
        %2273 = vmatpush1.msra.mxu0 0.0
        %2274 = vmatprep.subr.mxu0 0.0
        %2275 = vmatpush1.msra.mxu0 0.0
        %2276 = vmatprep.mubr.f32.mxu0 0.0
        %2277 = vmatmul.mubr.f32.gmra.mrb[0].mxu0 %v2206
        %v2278 = vpop.f32.mrb[0].mxu0
        %v2279 = vadd.f32 0.0, %v2278
        %v2280 = vpop.f32.mrb[0].mxu0
        %v2281 = vadd.f32 0.0, %v2280
        %2282 = vdwg.mxu0
        %v2283 = vadd.f32 %v2187, %v2279
        %v2284 = vadd.f32 %v2188, %v2281
        %s2285 = scalar_lea.vmem %s2, 160
        %v2286 = vld [vmem:[%s2285] sm:$0xff]
        %v2287 = vld [vmem:[#allocation2] sm:$0xff]
        %v2288 = vld [vmem:[#allocation2 + $0x8] sm:$0xf]
        %v2291 = vcombine.high %v2287, %v2287
        %2292 = vrot.lane.b32.xlu0 %v2287, 48
        %v2293 = vpop.permute.xlu0 %2292
        %2294 = vrot.lane.b32.xlu0 %v2291, 48
        %v2295 = vpop.permute.xlu0 %2294
        %2296 = vrot.lane.b32.xlu0 %v2288, 48
        %v2297 = vpop.permute.xlu0 %2296
        %vm2298 = vcmask 392192
        %v2299 = vsel %vm2298, %v2293, %v2295
        %v2300 = vsel %vm2298, %v2295, %v2297
        %v2302 = vsel %vm399, %v2286, 0
        %v2304 = vsel %vm403, %v2299, 0
        %v2306 = vsel %vm403, %v2300, 0
        %2308 = vmatprep.subr.mxu0 %v2306
        %2309 = vmatpush1.msra.mxu0 %v2304
        %2310 = vmatprep.subr.mxu0 0.0
        %2311 = vmatpush1.msra.mxu0 0.0
        %2312 = vmatprep.subr.mxu0 0.0
        %2313 = vmatpush1.msra.mxu0 0.0
        %2314 = vmatprep.subr.mxu0 0.0
        %2315 = vmatpush1.msra.mxu0 0.0
        %2316 = vmatprep.subr.mxu0 0.0
        %2317 = vmatpush1.msra.mxu0 0.0
        %2318 = vmatprep.subr.mxu0 0.0
        %2319 = vmatpush1.msra.mxu0 0.0
        %2320 = vmatprep.subr.mxu0 0.0
        %2321 = vmatpush1.msra.mxu0 0.0
        %2322 = vmatprep.subr.mxu0 0.0
        %2323 = vmatpush1.msra.mxu0 0.0
        %2324 = vmatprep.subr.mxu0 0.0
        %2325 = vmatpush1.msra.mxu0 0.0
        %2326 = vmatprep.subr.mxu0 0.0
        %2327 = vmatpush1.msra.mxu0 0.0
        %2328 = vmatprep.subr.mxu0 0.0
        %2329 = vmatpush1.msra.mxu0 0.0
        %2330 = vmatprep.subr.mxu0 0.0
        %2331 = vmatpush1.msra.mxu0 0.0
        %2332 = vmatprep.subr.mxu0 0.0
        %2333 = vmatpush1.msra.mxu0 0.0
        %2334 = vmatprep.subr.mxu0 0.0
        %2335 = vmatpush1.msra.mxu0 0.0
        %2336 = vmatprep.subr.mxu0 0.0
        %2337 = vmatpush1.msra.mxu0 0.0
        %2338 = vmatprep.subr.mxu0 0.0
        %2339 = vmatpush1.msra.mxu0 0.0
        %2340 = vmatprep.subr.mxu0 0.0
        %2341 = vmatpush1.msra.mxu0 0.0
        %2342 = vmatprep.subr.mxu0 0.0
        %2343 = vmatpush1.msra.mxu0 0.0
        %2344 = vmatprep.subr.mxu0 0.0
        %2345 = vmatpush1.msra.mxu0 0.0
        %2346 = vmatprep.subr.mxu0 0.0
        %2347 = vmatpush1.msra.mxu0 0.0
        %2348 = vmatprep.subr.mxu0 0.0
        %2349 = vmatpush1.msra.mxu0 0.0
        %2350 = vmatprep.subr.mxu0 0.0
        %2351 = vmatpush1.msra.mxu0 0.0
        %2352 = vmatprep.subr.mxu0 0.0
        %2353 = vmatpush1.msra.mxu0 0.0
        %2354 = vmatprep.subr.mxu0 0.0
        %2355 = vmatpush1.msra.mxu0 0.0
        %2356 = vmatprep.subr.mxu0 0.0
        %2357 = vmatpush1.msra.mxu0 0.0
        %2358 = vmatprep.subr.mxu0 0.0
        %2359 = vmatpush1.msra.mxu0 0.0
        %2360 = vmatprep.subr.mxu0 0.0
        %2361 = vmatpush1.msra.mxu0 0.0
        %2362 = vmatprep.subr.mxu0 0.0
        %2363 = vmatpush1.msra.mxu0 0.0
        %2364 = vmatprep.subr.mxu0 0.0
        %2365 = vmatpush1.msra.mxu0 0.0
        %2366 = vmatprep.subr.mxu0 0.0
        %2367 = vmatpush1.msra.mxu0 0.0
        %2368 = vmatprep.subr.mxu0 0.0
        %2369 = vmatpush1.msra.mxu0 0.0
        %2370 = vmatprep.subr.mxu0 0.0
        %2371 = vmatpush1.msra.mxu0 0.0
        %2372 = vmatprep.mubr.f32.mxu0 0.0
        %2373 = vmatmul.mubr.f32.gmra.mrb[0].mxu0 %v2302
        %v2374 = vpop.f32.mrb[0].mxu0
        %v2375 = vadd.f32 0.0, %v2374
        %v2376 = vpop.f32.mrb[0].mxu0
        %v2377 = vadd.f32 0.0, %v2376
        %2378 = vdwg.mxu0
        %v2379 = vadd.f32 %v2283, %v2375
        %v2380 = vadd.f32 %v2284, %v2377
        %s2381 = scalar_lea.vmem %s2, 168
        %v2382 = vld [vmem:[%s2381] sm:$0xff]
        %v2383 = vld [vmem:[#allocation2] sm:$0xff]
        %v2384 = vld [vmem:[#allocation2 + $0x8] sm:$0xf]
        %v2387 = vcombine.high %v2383, %v2383
        %2388 = vrot.lane.b32.xlu0 %v2383, 47
        %v2389 = vpop.permute.xlu0 %2388
        %2390 = vrot.lane.b32.xlu0 %v2387, 47
        %v2391 = vpop.permute.xlu0 %2390
        %2392 = vrot.lane.b32.xlu0 %v2384, 47
        %v2393 = vpop.permute.xlu0 %2392
        %vm2394 = vcmask 384000
        %v2395 = vsel %vm2394, %v2389, %v2391
        %v2396 = vsel %vm2394, %v2391, %v2393
        %v2398 = vsel %vm399, %v2382, 0
        %v2400 = vsel %vm403, %v2395, 0
        %v2402 = vsel %vm403, %v2396, 0
        %2404 = vmatprep.subr.mxu0 %v2402
        %2405 = vmatpush1.msra.mxu0 %v2400
        %2406 = vmatprep.subr.mxu0 0.0
        %2407 = vmatpush1.msra.mxu0 0.0
        %2408 = vmatprep.subr.mxu0 0.0
        %2409 = vmatpush1.msra.mxu0 0.0
        %2410 = vmatprep.subr.mxu0 0.0
        %2411 = vmatpush1.msra.mxu0 0.0
        %2412 = vmatprep.subr.mxu0 0.0
        %2413 = vmatpush1.msra.mxu0 0.0
        %2414 = vmatprep.subr.mxu0 0.0
        %2415 = vmatpush1.msra.mxu0 0.0
        %2416 = vmatprep.subr.mxu0 0.0
        %2417 = vmatpush1.msra.mxu0 0.0
        %2418 = vmatprep.subr.mxu0 0.0
        %2419 = vmatpush1.msra.mxu0 0.0
        %2420 = vmatprep.subr.mxu0 0.0
        %2421 = vmatpush1.msra.mxu0 0.0
        %2422 = vmatprep.subr.mxu0 0.0
        %2423 = vmatpush1.msra.mxu0 0.0
        %2424 = vmatprep.subr.mxu0 0.0
        %2425 = vmatpush1.msra.mxu0 0.0
        %2426 = vmatprep.subr.mxu0 0.0
        %2427 = vmatpush1.msra.mxu0 0.0
        %2428 = vmatprep.subr.mxu0 0.0
        %2429 = vmatpush1.msra.mxu0 0.0
        %2430 = vmatprep.subr.mxu0 0.0
        %2431 = vmatpush1.msra.mxu0 0.0
        %2432 = vmatprep.subr.mxu0 0.0
        %2433 = vmatpush1.msra.mxu0 0.0
        %2434 = vmatprep.subr.mxu0 0.0
        %2435 = vmatpush1.msra.mxu0 0.0
        %2436 = vmatprep.subr.mxu0 0.0
        %2437 = vmatpush1.msra.mxu0 0.0
        %2438 = vmatprep.subr.mxu0 0.0
        %2439 = vmatpush1.msra.mxu0 0.0
        %2440 = vmatprep.subr.mxu0 0.0
        %2441 = vmatpush1.msra.mxu0 0.0
        %2442 = vmatprep.subr.mxu0 0.0
        %2443 = vmatpush1.msra.mxu0 0.0
        %2444 = vmatprep.subr.mxu0 0.0
        %2445 = vmatpush1.msra.mxu0 0.0
        %2446 = vmatprep.subr.mxu0 0.0
        %2447 = vmatpush1.msra.mxu0 0.0
        %2448 = vmatprep.subr.mxu0 0.0
        %2449 = vmatpush1.msra.mxu0 0.0
        %2450 = vmatprep.subr.mxu0 0.0
        %2451 = vmatpush1.msra.mxu0 0.0
        %2452 = vmatprep.subr.mxu0 0.0
        %2453 = vmatpush1.msra.mxu0 0.0
        %2454 = vmatprep.subr.mxu0 0.0
        %2455 = vmatpush1.msra.mxu0 0.0
        %2456 = vmatprep.subr.mxu0 0.0
        %2457 = vmatpush1.msra.mxu0 0.0
        %2458 = vmatprep.subr.mxu0 0.0
        %2459 = vmatpush1.msra.mxu0 0.0
        %2460 = vmatprep.subr.mxu0 0.0
        %2461 = vmatpush1.msra.mxu0 0.0
        %2462 = vmatprep.subr.mxu0 0.0
        %2463 = vmatpush1.msra.mxu0 0.0
        %2464 = vmatprep.subr.mxu0 0.0
        %2465 = vmatpush1.msra.mxu0 0.0
        %2466 = vmatprep.subr.mxu0 0.0
        %2467 = vmatpush1.msra.mxu0 0.0
        %2468 = vmatprep.mubr.f32.mxu0 0.0
        %2469 = vmatmul.mubr.f32.gmra.mrb[0].mxu0 %v2398
        %v2470 = vpop.f32.mrb[0].mxu0
        %v2471 = vadd.f32 0.0, %v2470
        %v2472 = vpop.f32.mrb[0].mxu0
        %v2473 = vadd.f32 0.0, %v2472
        %2474 = vdwg.mxu0
        %v2475 = vadd.f32 %v2379, %v2471
        %v2476 = vadd.f32 %v2380, %v2473
        %s2477 = scalar_lea.vmem %s2, 176
        %v2478 = vld [vmem:[%s2477] sm:$0xff]
        %v2479 = vld [vmem:[#allocation2] sm:$0xff]
        %v2480 = vld [vmem:[#allocation2 + $0x8] sm:$0xf]
        %v2483 = vcombine.high %v2479, %v2479
        %2484 = vrot.lane.b32.xlu0 %v2479, 46
        %v2485 = vpop.permute.xlu0 %2484
        %2486 = vrot.lane.b32.xlu0 %v2483, 46
        %v2487 = vpop.permute.xlu0 %2486
        %2488 = vrot.lane.b32.xlu0 %v2480, 46
        %v2489 = vpop.permute.xlu0 %2488
        %vm2490 = vcmask 375808
        %v2491 = vsel %vm2490, %v2485, %v2487
        %v2492 = vsel %vm2490, %v2487, %v2489
        %v2494 = vsel %vm399, %v2478, 0
        %v2496 = vsel %vm403, %v2491, 0
        %v2498 = vsel %vm403, %v2492, 0
        %2500 = vmatprep.subr.mxu0 %v2498
        %2501 = vmatpush1.msra.mxu0 %v2496
        %2502 = vmatprep.subr.mxu0 0.0
        %2503 = vmatpush1.msra.mxu0 0.0
        %2504 = vmatprep.subr.mxu0 0.0
        %2505 = vmatpush1.msra.mxu0 0.0
        %2506 = vmatprep.subr.mxu0 0.0
        %2507 = vmatpush1.msra.mxu0 0.0
        %2508 = vmatprep.subr.mxu0 0.0
        %2509 = vmatpush1.msra.mxu0 0.0
        %2510 = vmatprep.subr.mxu0 0.0
        %2511 = vmatpush1.msra.mxu0 0.0
        %2512 = vmatprep.subr.mxu0 0.0
        %2513 = vmatpush1.msra.mxu0 0.0
        %2514 = vmatprep.subr.mxu0 0.0
        %2515 = vmatpush1.msra.mxu0 0.0
        %2516 = vmatprep.subr.mxu0 0.0
        %2517 = vmatpush1.msra.mxu0 0.0
        %2518 = vmatprep.subr.mxu0 0.0
        %2519 = vmatpush1.msra.mxu0 0.0
        %2520 = vmatprep.subr.mxu0 0.0
        %2521 = vmatpush1.msra.mxu0 0.0
        %2522 = vmatprep.subr.mxu0 0.0
        %2523 = vmatpush1.msra.mxu0 0.0
        %2524 = vmatprep.subr.mxu0 0.0
        %2525 = vmatpush1.msra.mxu0 0.0
        %2526 = vmatprep.subr.mxu0 0.0
        %2527 = vmatpush1.msra.mxu0 0.0
        %2528 = vmatprep.subr.mxu0 0.0
        %2529 = vmatpush1.msra.mxu0 0.0
        %2530 = vmatprep.subr.mxu0 0.0
        %2531 = vmatpush1.msra.mxu0 0.0
        %2532 = vmatprep.subr.mxu0 0.0
        %2533 = vmatpush1.msra.mxu0 0.0
        %2534 = vmatprep.subr.mxu0 0.0
        %2535 = vmatpush1.msra.mxu0 0.0
        %2536 = vmatprep.subr.mxu0 0.0
        %2537 = vmatpush1.msra.mxu0 0.0
        %2538 = vmatprep.subr.mxu0 0.0
        %2539 = vmatpush1.msra.mxu0 0.0
        %2540 = vmatprep.subr.mxu0 0.0
        %2541 = vmatpush1.msra.mxu0 0.0
        %2542 = vmatprep.subr.mxu0 0.0
        %2543 = vmatpush1.msra.mxu0 0.0
        %2544 = vmatprep.subr.mxu0 0.0
        %2545 = vmatpush1.msra.mxu0 0.0
        %2546 = vmatprep.subr.mxu0 0.0
        %2547 = vmatpush1.msra.mxu0 0.0
        %2548 = vmatprep.subr.mxu0 0.0
        %2549 = vmatpush1.msra.mxu0 0.0
        %2550 = vmatprep.subr.mxu0 0.0
        %2551 = vmatpush1.msra.mxu0 0.0
        %2552 = vmatprep.subr.mxu0 0.0
        %2553 = vmatpush1.msra.mxu0 0.0
        %2554 = vmatprep.subr.mxu0 0.0
        %2555 = vmatpush1.msra.mxu0 0.0
        %2556 = vmatprep.subr.mxu0 0.0
        %2557 = vmatpush1.msra.mxu0 0.0
        %2558 = vmatprep.subr.mxu0 0.0
        %2559 = vmatpush1.msra.mxu0 0.0
        %2560 = vmatprep.subr.mxu0 0.0
        %2561 = vmatpush1.msra.mxu0 0.0
        %2562 = vmatprep.subr.mxu0 0.0
        %2563 = vmatpush1.msra.mxu0 0.0
        %2564 = vmatprep.mubr.f32.mxu0 0.0
        %2565 = vmatmul.mubr.f32.gmra.mrb[0].mxu0 %v2494
        %v2566 = vpop.f32.mrb[0].mxu0
        %v2567 = vadd.f32 0.0, %v2566
        %v2568 = vpop.f32.mrb[0].mxu0
        %v2569 = vadd.f32 0.0, %v2568
        %2570 = vdwg.mxu0
        %v2571 = vadd.f32 %v2475, %v2567
        %v2572 = vadd.f32 %v2476, %v2569
        %s2573 = scalar_lea.vmem %s2, 184
        %v2574 = vld [vmem:[%s2573] sm:$0xff]
        %v2575 = vld [vmem:[#allocation2] sm:$0xff]
        %v2576 = vld [vmem:[#allocation2 + $0x8] sm:$0xf]
        %v2579 = vcombine.high %v2575, %v2575
        %2580 = vrot.lane.b32.xlu0 %v2575, 45
        %v2581 = vpop.permute.xlu0 %2580
        %2582 = vrot.lane.b32.xlu0 %v2579, 45
        %v2583 = vpop.permute.xlu0 %2582
        %2584 = vrot.lane.b32.xlu0 %v2576, 45
        %v2585 = vpop.permute.xlu0 %2584
        %vm2586 = vcmask 367616
        %v2587 = vsel %vm2586, %v2581, %v2583
        %v2588 = vsel %vm2586, %v2583, %v2585
        %v2590 = vsel %vm399, %v2574, 0
        %v2592 = vsel %vm403, %v2587, 0
        %v2594 = vsel %vm403, %v2588, 0
        %2596 = vmatprep.subr.mxu0 %v2594
        %2597 = vmatpush1.msra.mxu0 %v2592
        %2598 = vmatprep.subr.mxu0 0.0
        %2599 = vmatpush1.msra.mxu0 0.0
        %2600 = vmatprep.subr.mxu0 0.0
        %2601 = vmatpush1.msra.mxu0 0.0
        %2602 = vmatprep.subr.mxu0 0.0
        %2603 = vmatpush1.msra.mxu0 0.0
        %2604 = vmatprep.subr.mxu0 0.0
        %2605 = vmatpush1.msra.mxu0 0.0
        %2606 = vmatprep.subr.mxu0 0.0
        %2607 = vmatpush1.msra.mxu0 0.0
        %2608 = vmatprep.subr.mxu0 0.0
        %2609 = vmatpush1.msra.mxu0 0.0
        %2610 = vmatprep.subr.mxu0 0.0
        %2611 = vmatpush1.msra.mxu0 0.0
        %2612 = vmatprep.subr.mxu0 0.0
        %2613 = vmatpush1.msra.mxu0 0.0
        %2614 = vmatprep.subr.mxu0 0.0
        %2615 = vmatpush1.msra.mxu0 0.0
        %2616 = vmatprep.subr.mxu0 0.0
        %2617 = vmatpush1.msra.mxu0 0.0
        %2618 = vmatprep.subr.mxu0 0.0
        %2619 = vmatpush1.msra.mxu0 0.0
        %2620 = vmatprep.subr.mxu0 0.0
        %2621 = vmatpush1.msra.mxu0 0.0
        %2622 = vmatprep.subr.mxu0 0.0
        %2623 = vmatpush1.msra.mxu0 0.0
        %2624 = vmatprep.subr.mxu0 0.0
        %2625 = vmatpush1.msra.mxu0 0.0
        %2626 = vmatprep.subr.mxu0 0.0
        %2627 = vmatpush1.msra.mxu0 0.0
        %2628 = vmatprep.subr.mxu0 0.0
        %2629 = vmatpush1.msra.mxu0 0.0
        %2630 = vmatprep.subr.mxu0 0.0
        %2631 = vmatpush1.msra.mxu0 0.0
        %2632 = vmatprep.subr.mxu0 0.0
        %2633 = vmatpush1.msra.mxu0 0.0
        %2634 = vmatprep.subr.mxu0 0.0
        %2635 = vmatpush1.msra.mxu0 0.0
        %2636 = vmatprep.subr.mxu0 0.0
        %2637 = vmatpush1.msra.mxu0 0.0
        %2638 = vmatprep.subr.mxu0 0.0
        %2639 = vmatpush1.msra.mxu0 0.0
        %2640 = vmatprep.subr.mxu0 0.0
        %2641 = vmatpush1.msra.mxu0 0.0
        %2642 = vmatprep.subr.mxu0 0.0
        %2643 = vmatpush1.msra.mxu0 0.0
        %2644 = vmatprep.subr.mxu0 0.0
        %2645 = vmatpush1.msra.mxu0 0.0
        %2646 = vmatprep.subr.mxu0 0.0
        %2647 = vmatpush1.msra.mxu0 0.0
        %2648 = vmatprep.subr.mxu0 0.0
        %2649 = vmatpush1.msra.mxu0 0.0
        %2650 = vmatprep.subr.mxu0 0.0
        %2651 = vmatpush1.msra.mxu0 0.0
        %2652 = vmatprep.subr.mxu0 0.0
        %2653 = vmatpush1.msra.mxu0 0.0
        %2654 = vmatprep.subr.mxu0 0.0
        %2655 = vmatpush1.msra.mxu0 0.0
        %2656 = vmatprep.subr.mxu0 0.0
        %2657 = vmatpush1.msra.mxu0 0.0
        %2658 = vmatprep.subr.mxu0 0.0
        %2659 = vmatpush1.msra.mxu0 0.0
        %2660 = vmatprep.mubr.f32.mxu0 0.0
        %2661 = vmatmul.mubr.f32.gmra.mrb[0].mxu0 %v2590
        %v2662 = vpop.f32.mrb[0].mxu0
        %v2663 = vadd.f32 0.0, %v2662
        %v2664 = vpop.f32.mrb[0].mxu0
        %v2665 = vadd.f32 0.0, %v2664
        %2666 = vdwg.mxu0
        %v2667 = vadd.f32 %v2571, %v2663
        %v2668 = vadd.f32 %v2572, %v2665
        %s2669 = scalar_lea.vmem %s2, 192
        %v2670 = vld [vmem:[%s2669] sm:$0xff]
        %v2671 = vld [vmem:[#allocation2] sm:$0xff]
        %v2672 = vld [vmem:[#allocation2 + $0x8] sm:$0xf]
        %v2675 = vcombine.high %v2671, %v2671
        %2676 = vrot.lane.b32.xlu0 %v2671, 44
        %v2677 = vpop.permute.xlu0 %2676
        %2678 = vrot.lane.b32.xlu0 %v2675, 44
        %v2679 = vpop.permute.xlu0 %2678
        %2680 = vrot.lane.b32.xlu0 %v2672, 44
        %v2681 = vpop.permute.xlu0 %2680
        %vm2682 = vcmask 359424
        %v2683 = vsel %vm2682, %v2677, %v2679
        %v2684 = vsel %vm2682, %v2679, %v2681
        %v2686 = vsel %vm399, %v2670, 0
        %v2688 = vsel %vm403, %v2683, 0
        %v2690 = vsel %vm403, %v2684, 0
        %2692 = vmatprep.subr.mxu0 %v2690
        %2693 = vmatpush1.msra.mxu0 %v2688
        %2694 = vmatprep.subr.mxu0 0.0
        %2695 = vmatpush1.msra.mxu0 0.0
        %2696 = vmatprep.subr.mxu0 0.0
        %2697 = vmatpush1.msra.mxu0 0.0
        %2698 = vmatprep.subr.mxu0 0.0
        %2699 = vmatpush1.msra.mxu0 0.0
        %2700 = vmatprep.subr.mxu0 0.0
        %2701 = vmatpush1.msra.mxu0 0.0
        %2702 = vmatprep.subr.mxu0 0.0
        %2703 = vmatpush1.msra.mxu0 0.0
        %2704 = vmatprep.subr.mxu0 0.0
        %2705 = vmatpush1.msra.mxu0 0.0
        %2706 = vmatprep.subr.mxu0 0.0
        %2707 = vmatpush1.msra.mxu0 0.0
        %2708 = vmatprep.subr.mxu0 0.0
        %2709 = vmatpush1.msra.mxu0 0.0
        %2710 = vmatprep.subr.mxu0 0.0
        %2711 = vmatpush1.msra.mxu0 0.0
        %2712 = vmatprep.subr.mxu0 0.0
        %2713 = vmatpush1.msra.mxu0 0.0
        %2714 = vmatprep.subr.mxu0 0.0
        %2715 = vmatpush1.msra.mxu0 0.0
        %2716 = vmatprep.subr.mxu0 0.0
        %2717 = vmatpush1.msra.mxu0 0.0
        %2718 = vmatprep.subr.mxu0 0.0
        %2719 = vmatpush1.msra.mxu0 0.0
        %2720 = vmatprep.subr.mxu0 0.0
        %2721 = vmatpush1.msra.mxu0 0.0
        %2722 = vmatprep.subr.mxu0 0.0
        %2723 = vmatpush1.msra.mxu0 0.0
        %2724 = vmatprep.subr.mxu0 0.0
        %2725 = vmatpush1.msra.mxu0 0.0
        %2726 = vmatprep.subr.mxu0 0.0
        %2727 = vmatpush1.msra.mxu0 0.0
        %2728 = vmatprep.subr.mxu0 0.0
        %2729 = vmatpush1.msra.mxu0 0.0
        %2730 = vmatprep.subr.mxu0 0.0
        %2731 = vmatpush1.msra.mxu0 0.0
        %2732 = vmatprep.subr.mxu0 0.0
        %2733 = vmatpush1.msra.mxu0 0.0
        %2734 = vmatprep.subr.mxu0 0.0
        %2735 = vmatpush1.msra.mxu0 0.0
        %2736 = vmatprep.subr.mxu0 0.0
        %2737 = vmatpush1.msra.mxu0 0.0
        %2738 = vmatprep.subr.mxu0 0.0
        %2739 = vmatpush1.msra.mxu0 0.0
        %2740 = vmatprep.subr.mxu0 0.0
        %2741 = vmatpush1.msra.mxu0 0.0
        %2742 = vmatprep.subr.mxu0 0.0
        %2743 = vmatpush1.msra.mxu0 0.0
        %2744 = vmatprep.subr.mxu0 0.0
        %2745 = vmatpush1.msra.mxu0 0.0
        %2746 = vmatprep.subr.mxu0 0.0
        %2747 = vmatpush1.msra.mxu0 0.0
        %2748 = vmatprep.subr.mxu0 0.0
        %2749 = vmatpush1.msra.mxu0 0.0
        %2750 = vmatprep.subr.mxu0 0.0
        %2751 = vmatpush1.msra.mxu0 0.0
        %2752 = vmatprep.subr.mxu0 0.0
        %2753 = vmatpush1.msra.mxu0 0.0
        %2754 = vmatprep.subr.mxu0 0.0
        %2755 = vmatpush1.msra.mxu0 0.0
        %2756 = vmatprep.mubr.f32.mxu0 0.0
        %2757 = vmatmul.mubr.f32.gmra.mrb[0].mxu0 %v2686
        %v2758 = vpop.f32.mrb[0].mxu0
        %v2759 = vadd.f32 0.0, %v2758
        %v2760 = vpop.f32.mrb[0].mxu0
        %v2761 = vadd.f32 0.0, %v2760
        %2762 = vdwg.mxu0
        %v2763 = vadd.f32 %v2667, %v2759
        %v2764 = vadd.f32 %v2668, %v2761
        %v2765 = vstv %s379
        %v2766 = vmul.f32 %v2763, %v2765
        %v2767 = vmul.f32 %v2764, %v2765
        %v2768 = vstv %s380
        %v2769 = vmax.f32 %v2768, %v2766
        %v2770 = vmax.f32 %v2768, %v2767
        %v2771 = vstv %s381
        %v2772 = vmin.f32 %v2771, %v2769
        %v2773 = vmin.f32 %v2771, %v2770
        %s2774 = sld [smem:[#allocation6]]
        %v2775 = vstv %s2774
        %v2776 = vsub.f32 %v2772, %v2775
        %v2777 = vsub.f32 %v2773, %v2775
        %v2778 = vld [vmem:[%s3] sm:$0xff]
        %v2779 = vmul.f32 %v2776, %v2776
        %v2780 = vmul.f32 %v2777, %v2777
        %v2781 = vsub.f32 0.0, %v2779
        %v2782 = vsub.f32 0.0, %v2780
        %v2783 = vmul.f32 %v2781, 1.442695
        %v2784 = vpow.pop %v2783
        %v2785 = vmul.f32 %v2782, 1.442695
        %v2786 = vpow.pop %v2785
        %2788 = vset.pattern.permute.xlu0 0
        %2789 = vperm.xlu0 %2788, %v2778
        %v2790 = vpop.permute.xlu0 %2789
        %v2792 = vmul.f32 %v2790, %v2784
        %v2793 = vmul.f32 %v2790, %v2786
        %v2794 = vadd.f32 %v2792, 0.0
        %v2795 = vadd.f32 %v2793, 0.0
        %s2796 = sld [smem:[#allocation6 + $0x1]]
        %v2797 = vstv %s2796
        %v2798 = vsub.f32 %v2772, %v2797
        %v2799 = vsub.f32 %v2773, %v2797
        %v2800 = vmul.f32 %v2798, %v2798
        %v2801 = vmul.f32 %v2799, %v2799
        %v2802 = vsub.f32 0.0, %v2800
        %v2803 = vsub.f32 0.0, %v2801
        %v2804 = vmul.f32 %v2802, 1.442695
        %v2805 = vpow.pop %v2804
        %v2806 = vmul.f32 %v2803, 1.442695
        %v2807 = vpow.pop %v2806
        %2808 = vset.pattern.permute.xlu0 1
        %2809 = vperm.xlu0 %2808, %v2778
        %v2810 = vpop.permute.xlu0 %2809
        %v2812 = vmul.f32 %v2810, %v2805
        %v2813 = vmul.f32 %v2810, %v2807
        %v2814 = vadd.f32 %v2794, %v2812
        %v2815 = vadd.f32 %v2795, %v2813
        %s2816 = sld [smem:[#allocation6 + $0x2]]
        %v2817 = vstv %s2816
        %v2818 = vsub.f32 %v2772, %v2817
        %v2819 = vsub.f32 %v2773, %v2817
        %v2820 = vmul.f32 %v2818, %v2818
        %v2821 = vmul.f32 %v2819, %v2819
        %v2822 = vsub.f32 0.0, %v2820
        %v2823 = vsub.f32 0.0, %v2821
        %v2824 = vmul.f32 %v2822, 1.442695
        %v2825 = vpow.pop %v2824
        %v2826 = vmul.f32 %v2823, 1.442695
        %v2827 = vpow.pop %v2826
        %2828 = vset.pattern.permute.xlu0 2
        %2829 = vperm.xlu0 %2828, %v2778
        %v2830 = vpop.permute.xlu0 %2829
        %v2832 = vmul.f32 %v2830, %v2825
        %v2833 = vmul.f32 %v2830, %v2827
        %v2834 = vadd.f32 %v2814, %v2832
        %v2835 = vadd.f32 %v2815, %v2833
        %s2836 = sld [smem:[#allocation6 + $0x3]]
        %v2837 = vstv %s2836
        %v2838 = vsub.f32 %v2772, %v2837
        %v2839 = vsub.f32 %v2773, %v2837
        %v2840 = vmul.f32 %v2838, %v2838
        %v2841 = vmul.f32 %v2839, %v2839
        %v2842 = vsub.f32 0.0, %v2840
        %v2843 = vsub.f32 0.0, %v2841
        %v2844 = vmul.f32 %v2842, 1.442695
        %v2845 = vpow.pop %v2844
        %v2846 = vmul.f32 %v2843, 1.442695
        %v2847 = vpow.pop %v2846
        %2848 = vset.pattern.permute.xlu0 3
        %2849 = vperm.xlu0 %2848, %v2778
        %v2850 = vpop.permute.xlu0 %2849
        %v2852 = vmul.f32 %v2850, %v2845
        %v2853 = vmul.f32 %v2850, %v2847
        %v2854 = vadd.f32 %v2834, %v2852
        %v2855 = vadd.f32 %v2835, %v2853
        %s2856 = sld [smem:[#allocation6 + $0x4]]
        %v2857 = vstv %s2856
        %v2858 = vsub.f32 %v2772, %v2857
        %v2859 = vsub.f32 %v2773, %v2857
        %v2860 = vmul.f32 %v2858, %v2858
        %v2861 = vmul.f32 %v2859, %v2859
        %v2862 = vsub.f32 0.0, %v2860
        %v2863 = vsub.f32 0.0, %v2861
        %v2864 = vmul.f32 %v2862, 1.442695
        %v2865 = vpow.pop %v2864
        %v2866 = vmul.f32 %v2863, 1.442695
        %v2867 = vpow.pop %v2866
        %2868 = vset.pattern.permute.xlu0 4
        %2869 = vperm.xlu0 %2868, %v2778
        %v2870 = vpop.permute.xlu0 %2869
        %v2872 = vmul.f32 %v2870, %v2865
        %v2873 = vmul.f32 %v2870, %v2867
        %v2874 = vadd.f32 %v2854, %v2872
        %v2875 = vadd.f32 %v2855, %v2873
        %s2876 = sld [smem:[#allocation6 + $0x5]]
        %v2877 = vstv %s2876
        %v2878 = vsub.f32 %v2772, %v2877
        %v2879 = vsub.f32 %v2773, %v2877
        %v2880 = vmul.f32 %v2878, %v2878
        %v2881 = vmul.f32 %v2879, %v2879
        %v2882 = vsub.f32 0.0, %v2880
        %v2883 = vsub.f32 0.0, %v2881
        %v2884 = vmul.f32 %v2882, 1.442695
        %v2885 = vpow.pop %v2884
        %v2886 = vmul.f32 %v2883, 1.442695
        %v2887 = vpow.pop %v2886
        %2888 = vset.pattern.permute.xlu0 5
        %2889 = vperm.xlu0 %2888, %v2778
        %v2890 = vpop.permute.xlu0 %2889
        %v2892 = vmul.f32 %v2890, %v2885
        %v2893 = vmul.f32 %v2890, %v2887
        %v2894 = vadd.f32 %v2874, %v2892
        %v2895 = vadd.f32 %v2875, %v2893
        %s2896 = sld [smem:[#allocation6 + $0x6]]
        %v2897 = vstv %s2896
        %v2898 = vsub.f32 %v2772, %v2897
        %v2899 = vsub.f32 %v2773, %v2897
        %v2900 = vmul.f32 %v2898, %v2898
        %v2901 = vmul.f32 %v2899, %v2899
        %v2902 = vsub.f32 0.0, %v2900
        %v2903 = vsub.f32 0.0, %v2901
        %v2904 = vmul.f32 %v2902, 1.442695
        %v2905 = vpow.pop %v2904
        %v2906 = vmul.f32 %v2903, 1.442695
        %v2907 = vpow.pop %v2906
        %2908 = vset.pattern.permute.xlu0 6
        %2909 = vperm.xlu0 %2908, %v2778
        %v2910 = vpop.permute.xlu0 %2909
        %v2912 = vmul.f32 %v2910, %v2905
        %v2913 = vmul.f32 %v2910, %v2907
        %v2914 = vadd.f32 %v2894, %v2912
        %v2915 = vadd.f32 %v2895, %v2913
        %s2916 = sld [smem:[#allocation6 + $0x7]]
        %v2917 = vstv %s2916
        %v2918 = vsub.f32 %v2772, %v2917
        %v2919 = vsub.f32 %v2773, %v2917
        %v2920 = vmul.f32 %v2918, %v2918
        %v2921 = vmul.f32 %v2919, %v2919
        %v2922 = vsub.f32 0.0, %v2920
        %v2923 = vsub.f32 0.0, %v2921
        %v2924 = vmul.f32 %v2922, 1.442695
        %v2925 = vpow.pop %v2924
        %v2926 = vmul.f32 %v2923, 1.442695
        %v2927 = vpow.pop %v2926
        %2928 = vset.pattern.permute.xlu0 7
        %2929 = vperm.xlu0 %2928, %v2778
        %v2930 = vpop.permute.xlu0 %2929
        %v2932 = vmul.f32 %v2930, %v2925
        %v2933 = vmul.f32 %v2930, %v2927
        %v2934 = vadd.f32 %v2914, %v2932
        %v2935 = vadd.f32 %v2915, %v2933
        %s2936 = sld [smem:[#allocation6 + $0x8]]
        %v2937 = vstv %s2936
        %v2938 = vsub.f32 %v2772, %v2937
        %v2939 = vsub.f32 %v2773, %v2937
        %v2940 = vmul.f32 %v2938, %v2938
        %v2941 = vmul.f32 %v2939, %v2939
        %v2942 = vsub.f32 0.0, %v2940
        %v2943 = vsub.f32 0.0, %v2941
        %v2944 = vmul.f32 %v2942, 1.442695
        %v2945 = vpow.pop %v2944
        %v2946 = vmul.f32 %v2943, 1.442695
        %v2947 = vpow.pop %v2946
        %2948 = vset.pattern.permute.xlu0 8
        %2949 = vperm.xlu0 %2948, %v2778
        %v2950 = vpop.permute.xlu0 %2949
        %v2952 = vmul.f32 %v2950, %v2945
        %v2953 = vmul.f32 %v2950, %v2947
        %v2954 = vadd.f32 %v2934, %v2952
        %v2955 = vadd.f32 %v2935, %v2953
        %s2956 = sld [smem:[#allocation6 + $0x9]]
        %v2957 = vstv %s2956
        %v2958 = vsub.f32 %v2772, %v2957
        %v2959 = vsub.f32 %v2773, %v2957
        %v2960 = vmul.f32 %v2958, %v2958
        %v2961 = vmul.f32 %v2959, %v2959
        %v2962 = vsub.f32 0.0, %v2960
        %v2963 = vsub.f32 0.0, %v2961
        %v2964 = vmul.f32 %v2962, 1.442695
        %v2965 = vpow.pop %v2964
        %v2966 = vmul.f32 %v2963, 1.442695
        %v2967 = vpow.pop %v2966
        %2968 = vset.pattern.permute.xlu0 9
        %2969 = vperm.xlu0 %2968, %v2778
        %v2970 = vpop.permute.xlu0 %2969
        %v2972 = vmul.f32 %v2970, %v2965
        %v2973 = vmul.f32 %v2970, %v2967
        %v2974 = vadd.f32 %v2954, %v2972
        %v2975 = vadd.f32 %v2955, %v2973
        %s2976 = sld [smem:[#allocation6 + $0xa]]
        %v2977 = vstv %s2976
        %v2978 = vsub.f32 %v2772, %v2977
        %v2979 = vsub.f32 %v2773, %v2977
        %v2980 = vmul.f32 %v2978, %v2978
        %v2981 = vmul.f32 %v2979, %v2979
        %v2982 = vsub.f32 0.0, %v2980
        %v2983 = vsub.f32 0.0, %v2981
        %v2984 = vmul.f32 %v2982, 1.442695
        %v2985 = vpow.pop %v2984
        %v2986 = vmul.f32 %v2983, 1.442695
        %v2987 = vpow.pop %v2986
        %2988 = vset.pattern.permute.xlu0 10
        %2989 = vperm.xlu0 %2988, %v2778
        %v2990 = vpop.permute.xlu0 %2989
        %v2992 = vmul.f32 %v2990, %v2985
        %v2993 = vmul.f32 %v2990, %v2987
        %v2994 = vadd.f32 %v2974, %v2992
        %v2995 = vadd.f32 %v2975, %v2993
        %s2996 = sld [smem:[#allocation6 + $0xb]]
        %v2997 = vstv %s2996
        %v2998 = vsub.f32 %v2772, %v2997
        %v2999 = vsub.f32 %v2773, %v2997
        %v3000 = vmul.f32 %v2998, %v2998
        %v3001 = vmul.f32 %v2999, %v2999
        %v3002 = vsub.f32 0.0, %v3000
        %v3003 = vsub.f32 0.0, %v3001
        %v3004 = vmul.f32 %v3002, 1.442695
        %v3005 = vpow.pop %v3004
        %v3006 = vmul.f32 %v3003, 1.442695
        %v3007 = vpow.pop %v3006
        %3008 = vset.pattern.permute.xlu0 11
        %3009 = vperm.xlu0 %3008, %v2778
        %v3010 = vpop.permute.xlu0 %3009
        %v3012 = vmul.f32 %v3010, %v3005
        %v3013 = vmul.f32 %v3010, %v3007
        %v3014 = vadd.f32 %v2994, %v3012
        %v3015 = vadd.f32 %v2995, %v3013
        %s3016 = sld [smem:[#allocation6 + $0xc]]
        %v3017 = vstv %s3016
        %v3018 = vsub.f32 %v2772, %v3017
        %v3019 = vsub.f32 %v2773, %v3017
        %v3020 = vmul.f32 %v3018, %v3018
        %v3021 = vmul.f32 %v3019, %v3019
        %v3022 = vsub.f32 0.0, %v3020
        %v3023 = vsub.f32 0.0, %v3021
        %v3024 = vmul.f32 %v3022, 1.442695
        %v3025 = vpow.pop %v3024
        %v3026 = vmul.f32 %v3023, 1.442695
        %v3027 = vpow.pop %v3026
        %3028 = vset.pattern.permute.xlu0 12
        %3029 = vperm.xlu0 %3028, %v2778
        %v3030 = vpop.permute.xlu0 %3029
        %v3032 = vmul.f32 %v3030, %v3025
        %v3033 = vmul.f32 %v3030, %v3027
        %v3034 = vadd.f32 %v3014, %v3032
        %v3035 = vadd.f32 %v3015, %v3033
        %s3036 = sld [smem:[#allocation6 + $0xd]]
        %v3037 = vstv %s3036
        %v3038 = vsub.f32 %v2772, %v3037
        %v3039 = vsub.f32 %v2773, %v3037
        %v3040 = vmul.f32 %v3038, %v3038
        %v3041 = vmul.f32 %v3039, %v3039
        %v3042 = vsub.f32 0.0, %v3040
        %v3043 = vsub.f32 0.0, %v3041
        %v3044 = vmul.f32 %v3042, 1.442695
        %v3045 = vpow.pop %v3044
        %v3046 = vmul.f32 %v3043, 1.442695
        %v3047 = vpow.pop %v3046
        %3048 = vset.pattern.permute.xlu0 13
        %3049 = vperm.xlu0 %3048, %v2778
        %v3050 = vpop.permute.xlu0 %3049
        %v3052 = vmul.f32 %v3050, %v3045
        %v3053 = vmul.f32 %v3050, %v3047
        %v3054 = vadd.f32 %v3034, %v3052
        %v3055 = vadd.f32 %v3035, %v3053
        %s3056 = sld [smem:[#allocation6 + $0xe]]
        %v3057 = vstv %s3056
        %v3058 = vsub.f32 %v2772, %v3057
        %v3059 = vsub.f32 %v2773, %v3057
        %v3060 = vmul.f32 %v3058, %v3058
        %v3061 = vmul.f32 %v3059, %v3059
        %v3062 = vsub.f32 0.0, %v3060
        %v3063 = vsub.f32 0.0, %v3061
        %v3064 = vmul.f32 %v3062, 1.442695
        %v3065 = vpow.pop %v3064
        %v3066 = vmul.f32 %v3063, 1.442695
        %v3067 = vpow.pop %v3066
        %3068 = vset.pattern.permute.xlu0 14
        %3069 = vperm.xlu0 %3068, %v2778
        %v3070 = vpop.permute.xlu0 %3069
        %v3072 = vmul.f32 %v3070, %v3065
        %v3073 = vmul.f32 %v3070, %v3067
        %v3074 = vadd.f32 %v3054, %v3072
        %v3075 = vadd.f32 %v3055, %v3073
        %s3076 = sld [smem:[#allocation6 + $0xf]]
        %v3077 = vstv %s3076
        %v3078 = vsub.f32 %v2772, %v3077
        %v3079 = vsub.f32 %v2773, %v3077
        %v3080 = vmul.f32 %v3078, %v3078
        %v3081 = vmul.f32 %v3079, %v3079
        %v3082 = vsub.f32 0.0, %v3080
        %v3083 = vsub.f32 0.0, %v3081
        %v3084 = vmul.f32 %v3082, 1.442695
        %v3085 = vpow.pop %v3084
        %v3086 = vmul.f32 %v3083, 1.442695
        %v3087 = vpow.pop %v3086
        %3088 = vset.pattern.permute.xlu0 15
        %3089 = vperm.xlu0 %3088, %v2778
        %v3090 = vpop.permute.xlu0 %3089
        %v3092 = vmul.f32 %v3090, %v3085
        %v3093 = vmul.f32 %v3090, %v3087
        %v3094 = vadd.f32 %v3074, %v3092
        %v3095 = vadd.f32 %v3075, %v3093
        %3096 = vst [vmem:[%s341] sm:$0xff] %v3094
        %3097 = vst [vmem:[%s341 + $0x8] sm:$0xff] %v3095
        %v3098 = vld [vmem:[%s2] sm:$0xff]
        %v3099 = vld [vmem:[#allocation2 + $0x8] sm:$0xf]
        %v3100 = vld [vmem:[%s384] sm:$0xff]
        %v3101 = vld [vmem:[#allocation2 + $0x8] sm:$0xff]
        %v3103 = vcombine.high %v3101, %v3101
        %3104 = vrot.lane.b32.xlu0 %v3101, 127
        %v3105 = vpop.permute.xlu0 %3104
        %3106 = vrot.lane.b32.xlu0 %v3103, 127
        %v3107 = vpop.permute.xlu0 %3106
        %v3108 = vsel %vm396, %v3105, %v3107
        %v3110 = vsel %vm399, %v3100, 0
        %v3112 = vsel %vm403, %v3108, 0
        %3114 = vmatprep.subr.mxu0 0.0
        %3115 = vmatpush1.msra.mxu0 %v3112
        %3116 = vmatprep.subr.mxu0 0.0
        %3117 = vmatpush1.msra.mxu0 0.0
        %3118 = vmatprep.subr.mxu0 0.0
        %3119 = vmatpush1.msra.mxu0 0.0
        %3120 = vmatprep.subr.mxu0 0.0
        %3121 = vmatpush1.msra.mxu0 0.0
        %3122 = vmatprep.subr.mxu0 0.0
        %3123 = vmatpush1.msra.mxu0 0.0
        %3124 = vmatprep.subr.mxu0 0.0
        %3125 = vmatpush1.msra.mxu0 0.0
        %3126 = vmatprep.subr.mxu0 0.0
        %3127 = vmatpush1.msra.mxu0 0.0
        %3128 = vmatprep.subr.mxu0 0.0
        %3129 = vmatpush1.msra.mxu0 0.0
        %3130 = vmatprep.subr.mxu0 0.0
        %3131 = vmatpush1.msra.mxu0 0.0
        %3132 = vmatprep.subr.mxu0 0.0
        %3133 = vmatpush1.msra.mxu0 0.0
        %3134 = vmatprep.subr.mxu0 0.0
        %3135 = vmatpush1.msra.mxu0 0.0
        %3136 = vmatprep.subr.mxu0 0.0
        %3137 = vmatpush1.msra.mxu0 0.0
        %3138 = vmatprep.subr.mxu0 0.0
        %3139 = vmatpush1.msra.mxu0 0.0
        %3140 = vmatprep.subr.mxu0 0.0
        %3141 = vmatpush1.msra.mxu0 0.0
        %3142 = vmatprep.subr.mxu0 0.0
        %3143 = vmatpush1.msra.mxu0 0.0
        %3144 = vmatprep.subr.mxu0 0.0
        %3145 = vmatpush1.msra.mxu0 0.0
        %3146 = vmatprep.subr.mxu0 0.0
        %3147 = vmatpush1.msra.mxu0 0.0
        %3148 = vmatprep.subr.mxu0 0.0
        %3149 = vmatpush1.msra.mxu0 0.0
        %3150 = vmatprep.subr.mxu0 0.0
        %3151 = vmatpush1.msra.mxu0 0.0
        %3152 = vmatprep.subr.mxu0 0.0
        %3153 = vmatpush1.msra.mxu0 0.0
        %3154 = vmatprep.subr.mxu0 0.0
        %3155 = vmatpush1.msra.mxu0 0.0
        %3156 = vmatprep.subr.mxu0 0.0
        %3157 = vmatpush1.msra.mxu0 0.0
        %3158 = vmatprep.subr.mxu0 0.0
        %3159 = vmatpush1.msra.mxu0 0.0
        %3160 = vmatprep.subr.mxu0 0.0
        %3161 = vmatpush1.msra.mxu0 0.0
        %3162 = vmatprep.subr.mxu0 0.0
        %3163 = vmatpush1.msra.mxu0 0.0
        %3164 = vmatprep.subr.mxu0 0.0
        %3165 = vmatpush1.msra.mxu0 0.0
        %3166 = vmatprep.subr.mxu0 0.0
        %3167 = vmatpush1.msra.mxu0 0.0
        %3168 = vmatprep.subr.mxu0 0.0
        %3169 = vmatpush1.msra.mxu0 0.0
        %3170 = vmatprep.subr.mxu0 0.0
        %3171 = vmatpush1.msra.mxu0 0.0
        %3172 = vmatprep.subr.mxu0 0.0
        %3173 = vmatpush1.msra.mxu0 0.0
        %3174 = vmatprep.subr.mxu0 0.0
        %3175 = vmatpush1.msra.mxu0 0.0
        %3176 = vmatprep.subr.mxu0 0.0
        %3177 = vmatpush1.msra.mxu0 0.0
        %3178 = vmatprep.mubr.f32.mxu0 0.0
        %3179 = vmatmul.mubr.f32.gmra.mrb[0].mxu0 %v3110
        %v3180 = vpop.f32.mrb[0].mxu0
        %v3181 = vadd.f32 0.0, %v3180
        %v3182 = vpop.f32.mrb[0].mxu0
        %3183 = vdwg.mxu0
        %v3185 = vsel %vm399, %v3098, 0
        %v3188 = vsel %vm403, %v3099, 0
        %3190 = vmatprep.subr.mxu0 0.0
        %3191 = vmatpush1.msra.mxu0 %v3188
        %3192 = vmatprep.subr.mxu0 0.0
        %3193 = vmatpush1.msra.mxu0 0.0
        %3194 = vmatprep.subr.mxu0 0.0
        %3195 = vmatpush1.msra.mxu0 0.0
        %3196 = vmatprep.subr.mxu0 0.0
        %3197 = vmatpush1.msra.mxu0 0.0
        %3198 = vmatprep.subr.mxu0 0.0
        %3199 = vmatpush1.msra.mxu0 0.0
        %3200 = vmatprep.subr.mxu0 0.0
        %3201 = vmatpush1.msra.mxu0 0.0
        %3202 = vmatprep.subr.mxu0 0.0
        %3203 = vmatpush1.msra.mxu0 0.0
        %3204 = vmatprep.subr.mxu0 0.0
        %3205 = vmatpush1.msra.mxu0 0.0
        %3206 = vmatprep.subr.mxu0 0.0
        %3207 = vmatpush1.msra.mxu0 0.0
        %3208 = vmatprep.subr.mxu0 0.0
        %3209 = vmatpush1.msra.mxu0 0.0
        %3210 = vmatprep.subr.mxu0 0.0
        %3211 = vmatpush1.msra.mxu0 0.0
        %3212 = vmatprep.subr.mxu0 0.0
        %3213 = vmatpush1.msra.mxu0 0.0
        %3214 = vmatprep.subr.mxu0 0.0
        %3215 = vmatpush1.msra.mxu0 0.0
        %3216 = vmatprep.subr.mxu0 0.0
        %3217 = vmatpush1.msra.mxu0 0.0
        %3218 = vmatprep.subr.mxu0 0.0
        %3219 = vmatpush1.msra.mxu0 0.0
        %3220 = vmatprep.subr.mxu0 0.0
        %3221 = vmatpush1.msra.mxu0 0.0
        %3222 = vmatprep.subr.mxu0 0.0
        %3223 = vmatpush1.msra.mxu0 0.0
        %3224 = vmatprep.subr.mxu0 0.0
        %3225 = vmatpush1.msra.mxu0 0.0
        %3226 = vmatprep.subr.mxu0 0.0
        %3227 = vmatpush1.msra.mxu0 0.0
        %3228 = vmatprep.subr.mxu0 0.0
        %3229 = vmatpush1.msra.mxu0 0.0
        %3230 = vmatprep.subr.mxu0 0.0
        %3231 = vmatpush1.msra.mxu0 0.0
        %3232 = vmatprep.subr.mxu0 0.0
        %3233 = vmatpush1.msra.mxu0 0.0
        %3234 = vmatprep.subr.mxu0 0.0
        %3235 = vmatpush1.msra.mxu0 0.0
        %3236 = vmatprep.subr.mxu0 0.0
        %3237 = vmatpush1.msra.mxu0 0.0
        %3238 = vmatprep.subr.mxu0 0.0
        %3239 = vmatpush1.msra.mxu0 0.0
        %3240 = vmatprep.subr.mxu0 0.0
        %3241 = vmatpush1.msra.mxu0 0.0
        %3242 = vmatprep.subr.mxu0 0.0
        %3243 = vmatpush1.msra.mxu0 0.0
        %3244 = vmatprep.subr.mxu0 0.0
        %3245 = vmatpush1.msra.mxu0 0.0
        %3246 = vmatprep.subr.mxu0 0.0
        %3247 = vmatpush1.msra.mxu0 0.0
        %3248 = vmatprep.subr.mxu0 0.0
        %3249 = vmatpush1.msra.mxu0 0.0
        %3250 = vmatprep.subr.mxu0 0.0
        %3251 = vmatpush1.msra.mxu0 0.0
        %3252 = vmatprep.subr.mxu0 0.0
        %3253 = vmatpush1.msra.mxu0 0.0
        %3254 = vmatprep.mubr.f32.mxu0 0.0
        %3255 = vmatmul.mubr.f32.gmra.mrb[0].mxu0 %v3185
        %v3256 = vpop.f32.mrb[0].mxu0
        %v3257 = vadd.f32 %v3181, %v3256
        %v3258 = vpop.f32.mrb[0].mxu0
        %3259 = vdwg.mxu0
        %v3260 = vld [vmem:[%s557] sm:$0xff]
        %v3261 = vld [vmem:[#allocation2 + $0x8] sm:$0xff]
        %v3263 = vcombine.high %v3261, %v3261
        %3264 = vrot.lane.b32.xlu0 %v3261, 126
        %v3265 = vpop.permute.xlu0 %3264
        %3266 = vrot.lane.b32.xlu0 %v3263, 126
        %v3267 = vpop.permute.xlu0 %3266
        %v3268 = vsel %vm570, %v3265, %v3267
        %v3270 = vsel %vm399, %v3260, 0
        %v3272 = vsel %vm403, %v3268, 0
        %3274 = vmatprep.subr.mxu0 0.0
        %3275 = vmatpush1.msra.mxu0 %v3272
        %3276 = vmatprep.subr.mxu0 0.0
        %3277 = vmatpush1.msra.mxu0 0.0
        %3278 = vmatprep.subr.mxu0 0.0
        %3279 = vmatpush1.msra.mxu0 0.0
        %3280 = vmatprep.subr.mxu0 0.0
        %3281 = vmatpush1.msra.mxu0 0.0
        %3282 = vmatprep.subr.mxu0 0.0
        %3283 = vmatpush1.msra.mxu0 0.0
        %3284 = vmatprep.subr.mxu0 0.0
        %3285 = vmatpush1.msra.mxu0 0.0
        %3286 = vmatprep.subr.mxu0 0.0
        %3287 = vmatpush1.msra.mxu0 0.0
        %3288 = vmatprep.subr.mxu0 0.0
        %3289 = vmatpush1.msra.mxu0 0.0
        %3290 = vmatprep.subr.mxu0 0.0
        %3291 = vmatpush1.msra.mxu0 0.0
        %3292 = vmatprep.subr.mxu0 0.0
        %3293 = vmatpush1.msra.mxu0 0.0
        %3294 = vmatprep.subr.mxu0 0.0
        %3295 = vmatpush1.msra.mxu0 0.0
        %3296 = vmatprep.subr.mxu0 0.0
        %3297 = vmatpush1.msra.mxu0 0.0
        %3298 = vmatprep.subr.mxu0 0.0
        %3299 = vmatpush1.msra.mxu0 0.0
        %3300 = vmatprep.subr.mxu0 0.0
        %3301 = vmatpush1.msra.mxu0 0.0
        %3302 = vmatprep.subr.mxu0 0.0
        %3303 = vmatpush1.msra.mxu0 0.0
        %3304 = vmatprep.subr.mxu0 0.0
        %3305 = vmatpush1.msra.mxu0 0.0
        %3306 = vmatprep.subr.mxu0 0.0
        %3307 = vmatpush1.msra.mxu0 0.0
        %3308 = vmatprep.subr.mxu0 0.0
        %3309 = vmatpush1.msra.mxu0 0.0
        %3310 = vmatprep.subr.mxu0 0.0
        %3311 = vmatpush1.msra.mxu0 0.0
        %3312 = vmatprep.subr.mxu0 0.0
        %3313 = vmatpush1.msra.mxu0 0.0
        %3314 = vmatprep.subr.mxu0 0.0
        %3315 = vmatpush1.msra.mxu0 0.0
        %3316 = vmatprep.subr.mxu0 0.0
        %3317 = vmatpush1.msra.mxu0 0.0
        %3318 = vmatprep.subr.mxu0 0.0
        %3319 = vmatpush1.msra.mxu0 0.0
        %3320 = vmatprep.subr.mxu0 0.0
        %3321 = vmatpush1.msra.mxu0 0.0
        %3322 = vmatprep.subr.mxu0 0.0
        %3323 = vmatpush1.msra.mxu0 0.0
        %3324 = vmatprep.subr.mxu0 0.0
        %3325 = vmatpush1.msra.mxu0 0.0
        %3326 = vmatprep.subr.mxu0 0.0
        %3327 = vmatpush1.msra.mxu0 0.0
        %3328 = vmatprep.subr.mxu0 0.0
        %3329 = vmatpush1.msra.mxu0 0.0
        %3330 = vmatprep.subr.mxu0 0.0
        %3331 = vmatpush1.msra.mxu0 0.0
        %3332 = vmatprep.subr.mxu0 0.0
        %3333 = vmatpush1.msra.mxu0 0.0
        %3334 = vmatprep.subr.mxu0 0.0
        %3335 = vmatpush1.msra.mxu0 0.0
        %3336 = vmatprep.subr.mxu0 0.0
        %3337 = vmatpush1.msra.mxu0 0.0
        %3338 = vmatprep.mubr.f32.mxu0 0.0
        %3339 = vmatmul.mubr.f32.gmra.mrb[0].mxu0 %v3270
        %v3340 = vpop.f32.mrb[0].mxu0
        %v3341 = vadd.f32 0.0, %v3340
        %v3342 = vpop.f32.mrb[0].mxu0
        %3343 = vdwg.mxu0
        %v3344 = vadd.f32 %v3257, %v3341
        %v3345 = vld [vmem:[%s653] sm:$0xff]
        %v3346 = vld [vmem:[#allocation2 + $0x8] sm:$0xff]
        %v3348 = vcombine.high %v3346, %v3346
        %3349 = vrot.lane.b32.xlu0 %v3346, 125
        %v3350 = vpop.permute.xlu0 %3349
        %3351 = vrot.lane.b32.xlu0 %v3348, 125
        %v3352 = vpop.permute.xlu0 %3351
        %v3353 = vsel %vm666, %v3350, %v3352
        %v3355 = vsel %vm399, %v3345, 0
        %v3357 = vsel %vm403, %v3353, 0
        %3359 = vmatprep.subr.mxu0 0.0
        %3360 = vmatpush1.msra.mxu0 %v3357
        %3361 = vmatprep.subr.mxu0 0.0
        %3362 = vmatpush1.msra.mxu0 0.0
        %3363 = vmatprep.subr.mxu0 0.0
        %3364 = vmatpush1.msra.mxu0 0.0
        %3365 = vmatprep.subr.mxu0 0.0
        %3366 = vmatpush1.msra.mxu0 0.0
        %3367 = vmatprep.subr.mxu0 0.0
        %3368 = vmatpush1.msra.mxu0 0.0
        %3369 = vmatprep.subr.mxu0 0.0
        %3370 = vmatpush1.msra.mxu0 0.0
        %3371 = vmatprep.subr.mxu0 0.0
        %3372 = vmatpush1.msra.mxu0 0.0
        %3373 = vmatprep.subr.mxu0 0.0
        %3374 = vmatpush1.msra.mxu0 0.0
        %3375 = vmatprep.subr.mxu0 0.0
        %3376 = vmatpush1.msra.mxu0 0.0
        %3377 = vmatprep.subr.mxu0 0.0
        %3378 = vmatpush1.msra.mxu0 0.0
        %3379 = vmatprep.subr.mxu0 0.0
        %3380 = vmatpush1.msra.mxu0 0.0
        %3381 = vmatprep.subr.mxu0 0.0
        %3382 = vmatpush1.msra.mxu0 0.0
        %3383 = vmatprep.subr.mxu0 0.0
        %3384 = vmatpush1.msra.mxu0 0.0
        %3385 = vmatprep.subr.mxu0 0.0
        %3386 = vmatpush1.msra.mxu0 0.0
        %3387 = vmatprep.subr.mxu0 0.0
        %3388 = vmatpush1.msra.mxu0 0.0
        %3389 = vmatprep.subr.mxu0 0.0
        %3390 = vmatpush1.msra.mxu0 0.0
        %3391 = vmatprep.subr.mxu0 0.0
        %3392 = vmatpush1.msra.mxu0 0.0
        %3393 = vmatprep.subr.mxu0 0.0
        %3394 = vmatpush1.msra.mxu0 0.0
        %3395 = vmatprep.subr.mxu0 0.0
        %3396 = vmatpush1.msra.mxu0 0.0
        %3397 = vmatprep.subr.mxu0 0.0
        %3398 = vmatpush1.msra.mxu0 0.0
        %3399 = vmatprep.subr.mxu0 0.0
        %3400 = vmatpush1.msra.mxu0 0.0
        %3401 = vmatprep.subr.mxu0 0.0
        %3402 = vmatpush1.msra.mxu0 0.0
        %3403 = vmatprep.subr.mxu0 0.0
        %3404 = vmatpush1.msra.mxu0 0.0
        %3405 = vmatprep.subr.mxu0 0.0
        %3406 = vmatpush1.msra.mxu0 0.0
        %3407 = vmatprep.subr.mxu0 0.0
        %3408 = vmatpush1.msra.mxu0 0.0
        %3409 = vmatprep.subr.mxu0 0.0
        %3410 = vmatpush1.msra.mxu0 0.0
        %3411 = vmatprep.subr.mxu0 0.0
        %3412 = vmatpush1.msra.mxu0 0.0
        %3413 = vmatprep.subr.mxu0 0.0
        %3414 = vmatpush1.msra.mxu0 0.0
        %3415 = vmatprep.subr.mxu0 0.0
        %3416 = vmatpush1.msra.mxu0 0.0
        %3417 = vmatprep.subr.mxu0 0.0
        %3418 = vmatpush1.msra.mxu0 0.0
        %3419 = vmatprep.subr.mxu0 0.0
        %3420 = vmatpush1.msra.mxu0 0.0
        %3421 = vmatprep.subr.mxu0 0.0
        %3422 = vmatpush1.msra.mxu0 0.0
        %3423 = vmatprep.mubr.f32.mxu0 0.0
        %3424 = vmatmul.mubr.f32.gmra.mrb[0].mxu0 %v3355
        %v3425 = vpop.f32.mrb[0].mxu0
        %v3426 = vadd.f32 0.0, %v3425
        %v3427 = vpop.f32.mrb[0].mxu0
        %3428 = vdwg.mxu0
        %v3429 = vadd.f32 %v3344, %v3426
        %v3430 = vld [vmem:[%s749] sm:$0xff]
        %v3431 = vld [vmem:[#allocation2 + $0x8] sm:$0xff]
        %v3433 = vcombine.high %v3431, %v3431
        %3434 = vrot.lane.b32.xlu0 %v3431, 124
        %v3435 = vpop.permute.xlu0 %3434
        %3436 = vrot.lane.b32.xlu0 %v3433, 124
        %v3437 = vpop.permute.xlu0 %3436
        %v3438 = vsel %vm762, %v3435, %v3437
        %v3440 = vsel %vm399, %v3430, 0
        %v3442 = vsel %vm403, %v3438, 0
        %3444 = vmatprep.subr.mxu0 0.0
        %3445 = vmatpush1.msra.mxu0 %v3442
        %3446 = vmatprep.subr.mxu0 0.0
        %3447 = vmatpush1.msra.mxu0 0.0
        %3448 = vmatprep.subr.mxu0 0.0
        %3449 = vmatpush1.msra.mxu0 0.0
        %3450 = vmatprep.subr.mxu0 0.0
        %3451 = vmatpush1.msra.mxu0 0.0
        %3452 = vmatprep.subr.mxu0 0.0
        %3453 = vmatpush1.msra.mxu0 0.0
        %3454 = vmatprep.subr.mxu0 0.0
        %3455 = vmatpush1.msra.mxu0 0.0
        %3456 = vmatprep.subr.mxu0 0.0
        %3457 = vmatpush1.msra.mxu0 0.0
        %3458 = vmatprep.subr.mxu0 0.0
        %3459 = vmatpush1.msra.mxu0 0.0
        %3460 = vmatprep.subr.mxu0 0.0
        %3461 = vmatpush1.msra.mxu0 0.0
        %3462 = vmatprep.subr.mxu0 0.0
        %3463 = vmatpush1.msra.mxu0 0.0
        %3464 = vmatprep.subr.mxu0 0.0
        %3465 = vmatpush1.msra.mxu0 0.0
        %3466 = vmatprep.subr.mxu0 0.0
        %3467 = vmatpush1.msra.mxu0 0.0
        %3468 = vmatprep.subr.mxu0 0.0
        %3469 = vmatpush1.msra.mxu0 0.0
        %3470 = vmatprep.subr.mxu0 0.0
        %3471 = vmatpush1.msra.mxu0 0.0
        %3472 = vmatprep.subr.mxu0 0.0
        %3473 = vmatpush1.msra.mxu0 0.0
        %3474 = vmatprep.subr.mxu0 0.0
        %3475 = vmatpush1.msra.mxu0 0.0
        %3476 = vmatprep.subr.mxu0 0.0
        %3477 = vmatpush1.msra.mxu0 0.0
        %3478 = vmatprep.subr.mxu0 0.0
        %3479 = vmatpush1.msra.mxu0 0.0
        %3480 = vmatprep.subr.mxu0 0.0
        %3481 = vmatpush1.msra.mxu0 0.0
        %3482 = vmatprep.subr.mxu0 0.0
        %3483 = vmatpush1.msra.mxu0 0.0
        %3484 = vmatprep.subr.mxu0 0.0
        %3485 = vmatpush1.msra.mxu0 0.0
        %3486 = vmatprep.subr.mxu0 0.0
        %3487 = vmatpush1.msra.mxu0 0.0
        %3488 = vmatprep.subr.mxu0 0.0
        %3489 = vmatpush1.msra.mxu0 0.0
        %3490 = vmatprep.subr.mxu0 0.0
        %3491 = vmatpush1.msra.mxu0 0.0
        %3492 = vmatprep.subr.mxu0 0.0
        %3493 = vmatpush1.msra.mxu0 0.0
        %3494 = vmatprep.subr.mxu0 0.0
        %3495 = vmatpush1.msra.mxu0 0.0
        %3496 = vmatprep.subr.mxu0 0.0
        %3497 = vmatpush1.msra.mxu0 0.0
        %3498 = vmatprep.subr.mxu0 0.0
        %3499 = vmatpush1.msra.mxu0 0.0
        %3500 = vmatprep.subr.mxu0 0.0
        %3501 = vmatpush1.msra.mxu0 0.0
        %3502 = vmatprep.subr.mxu0 0.0
        %3503 = vmatpush1.msra.mxu0 0.0
        %3504 = vmatprep.subr.mxu0 0.0
        %3505 = vmatpush1.msra.mxu0 0.0
        %3506 = vmatprep.subr.mxu0 0.0
        %3507 = vmatpush1.msra.mxu0 0.0
        %3508 = vmatprep.mubr.f32.mxu0 0.0
        %3509 = vmatmul.mubr.f32.gmra.mrb[0].mxu0 %v3440
        %v3510 = vpop.f32.mrb[0].mxu0
        %v3511 = vadd.f32 0.0, %v3510
        %v3512 = vpop.f32.mrb[0].mxu0
        %3513 = vdwg.mxu0
        %v3514 = vadd.f32 %v3429, %v3511
        %v3515 = vld [vmem:[%s845] sm:$0xff]
        %v3516 = vld [vmem:[#allocation2 + $0x8] sm:$0xff]
        %v3518 = vcombine.high %v3516, %v3516
        %3519 = vrot.lane.b32.xlu0 %v3516, 108
        %v3520 = vpop.permute.xlu0 %3519
        %3521 = vrot.lane.b32.xlu0 %v3518, 108
        %v3522 = vpop.permute.xlu0 %3521
        %v3523 = vsel %vm858, %v3520, %v3522
        %v3525 = vsel %vm399, %v3515, 0
        %v3527 = vsel %vm403, %v3523, 0
        %3529 = vmatprep.subr.mxu0 0.0
        %3530 = vmatpush1.msra.mxu0 %v3527
        %3531 = vmatprep.subr.mxu0 0.0
        %3532 = vmatpush1.msra.mxu0 0.0
        %3533 = vmatprep.subr.mxu0 0.0
        %3534 = vmatpush1.msra.mxu0 0.0
        %3535 = vmatprep.subr.mxu0 0.0
        %3536 = vmatpush1.msra.mxu0 0.0
        %3537 = vmatprep.subr.mxu0 0.0
        %3538 = vmatpush1.msra.mxu0 0.0
        %3539 = vmatprep.subr.mxu0 0.0
        %3540 = vmatpush1.msra.mxu0 0.0
        %3541 = vmatprep.subr.mxu0 0.0
        %3542 = vmatpush1.msra.mxu0 0.0
        %3543 = vmatprep.subr.mxu0 0.0
        %3544 = vmatpush1.msra.mxu0 0.0
        %3545 = vmatprep.subr.mxu0 0.0
        %3546 = vmatpush1.msra.mxu0 0.0
        %3547 = vmatprep.subr.mxu0 0.0
        %3548 = vmatpush1.msra.mxu0 0.0
        %3549 = vmatprep.subr.mxu0 0.0
        %3550 = vmatpush1.msra.mxu0 0.0
        %3551 = vmatprep.subr.mxu0 0.0
        %3552 = vmatpush1.msra.mxu0 0.0
        %3553 = vmatprep.subr.mxu0 0.0
        %3554 = vmatpush1.msra.mxu0 0.0
        %3555 = vmatprep.subr.mxu0 0.0
        %3556 = vmatpush1.msra.mxu0 0.0
        %3557 = vmatprep.subr.mxu0 0.0
        %3558 = vmatpush1.msra.mxu0 0.0
        %3559 = vmatprep.subr.mxu0 0.0
        %3560 = vmatpush1.msra.mxu0 0.0
        %3561 = vmatprep.subr.mxu0 0.0
        %3562 = vmatpush1.msra.mxu0 0.0
        %3563 = vmatprep.subr.mxu0 0.0
        %3564 = vmatpush1.msra.mxu0 0.0
        %3565 = vmatprep.subr.mxu0 0.0
        %3566 = vmatpush1.msra.mxu0 0.0
        %3567 = vmatprep.subr.mxu0 0.0
        %3568 = vmatpush1.msra.mxu0 0.0
        %3569 = vmatprep.subr.mxu0 0.0
        %3570 = vmatpush1.msra.mxu0 0.0
        %3571 = vmatprep.subr.mxu0 0.0
        %3572 = vmatpush1.msra.mxu0 0.0
        %3573 = vmatprep.subr.mxu0 0.0
        %3574 = vmatpush1.msra.mxu0 0.0
        %3575 = vmatprep.subr.mxu0 0.0
        %3576 = vmatpush1.msra.mxu0 0.0
        %3577 = vmatprep.subr.mxu0 0.0
        %3578 = vmatpush1.msra.mxu0 0.0
        %3579 = vmatprep.subr.mxu0 0.0
        %3580 = vmatpush1.msra.mxu0 0.0
        %3581 = vmatprep.subr.mxu0 0.0
        %3582 = vmatpush1.msra.mxu0 0.0
        %3583 = vmatprep.subr.mxu0 0.0
        %3584 = vmatpush1.msra.mxu0 0.0
        %3585 = vmatprep.subr.mxu0 0.0
        %3586 = vmatpush1.msra.mxu0 0.0
        %3587 = vmatprep.subr.mxu0 0.0
        %3588 = vmatpush1.msra.mxu0 0.0
        %3589 = vmatprep.subr.mxu0 0.0
        %3590 = vmatpush1.msra.mxu0 0.0
        %3591 = vmatprep.subr.mxu0 0.0
        %3592 = vmatpush1.msra.mxu0 0.0
        %3593 = vmatprep.mubr.f32.mxu0 0.0
        %3594 = vmatmul.mubr.f32.gmra.mrb[0].mxu0 %v3525
        %v3595 = vpop.f32.mrb[0].mxu0
        %v3596 = vadd.f32 0.0, %v3595
        %v3597 = vpop.f32.mrb[0].mxu0
        %3598 = vdwg.mxu0
        %v3599 = vadd.f32 %v3514, %v3596
        %v3600 = vld [vmem:[%s941] sm:$0xff]
        %v3601 = vld [vmem:[#allocation2 + $0x8] sm:$0xff]
        %v3603 = vcombine.high %v3601, %v3601
        %3604 = vrot.lane.b32.xlu0 %v3601, 107
        %v3605 = vpop.permute.xlu0 %3604
        %3606 = vrot.lane.b32.xlu0 %v3603, 107
        %v3607 = vpop.permute.xlu0 %3606
        %v3608 = vsel %vm954, %v3605, %v3607
        %v3610 = vsel %vm399, %v3600, 0
        %v3612 = vsel %vm403, %v3608, 0
        %3614 = vmatprep.subr.mxu0 0.0
        %3615 = vmatpush1.msra.mxu0 %v3612
        %3616 = vmatprep.subr.mxu0 0.0
        %3617 = vmatpush1.msra.mxu0 0.0
        %3618 = vmatprep.subr.mxu0 0.0
        %3619 = vmatpush1.msra.mxu0 0.0
        %3620 = vmatprep.subr.mxu0 0.0
        %3621 = vmatpush1.msra.mxu0 0.0
        %3622 = vmatprep.subr.mxu0 0.0
        %3623 = vmatpush1.msra.mxu0 0.0
        %3624 = vmatprep.subr.mxu0 0.0
        %3625 = vmatpush1.msra.mxu0 0.0
        %3626 = vmatprep.subr.mxu0 0.0
        %3627 = vmatpush1.msra.mxu0 0.0
        %3628 = vmatprep.subr.mxu0 0.0
        %3629 = vmatpush1.msra.mxu0 0.0
        %3630 = vmatprep.subr.mxu0 0.0
        %3631 = vmatpush1.msra.mxu0 0.0
        %3632 = vmatprep.subr.mxu0 0.0
        %3633 = vmatpush1.msra.mxu0 0.0
        %3634 = vmatprep.subr.mxu0 0.0
        %3635 = vmatpush1.msra.mxu0 0.0
        %3636 = vmatprep.subr.mxu0 0.0
        %3637 = vmatpush1.msra.mxu0 0.0
        %3638 = vmatprep.subr.mxu0 0.0
        %3639 = vmatpush1.msra.mxu0 0.0
        %3640 = vmatprep.subr.mxu0 0.0
        %3641 = vmatpush1.msra.mxu0 0.0
        %3642 = vmatprep.subr.mxu0 0.0
        %3643 = vmatpush1.msra.mxu0 0.0
        %3644 = vmatprep.subr.mxu0 0.0
        %3645 = vmatpush1.msra.mxu0 0.0
        %3646 = vmatprep.subr.mxu0 0.0
        %3647 = vmatpush1.msra.mxu0 0.0
        %3648 = vmatprep.subr.mxu0 0.0
        %3649 = vmatpush1.msra.mxu0 0.0
        %3650 = vmatprep.subr.mxu0 0.0
        %3651 = vmatpush1.msra.mxu0 0.0
        %3652 = vmatprep.subr.mxu0 0.0
        %3653 = vmatpush1.msra.mxu0 0.0
        %3654 = vmatprep.subr.mxu0 0.0
        %3655 = vmatpush1.msra.mxu0 0.0
        %3656 = vmatprep.subr.mxu0 0.0
        %3657 = vmatpush1.msra.mxu0 0.0
        %3658 = vmatprep.subr.mxu0 0.0
        %3659 = vmatpush1.msra.mxu0 0.0
        %3660 = vmatprep.subr.mxu0 0.0
        %3661 = vmatpush1.msra.mxu0 0.0
        %3662 = vmatprep.subr.mxu0 0.0
        %3663 = vmatpush1.msra.mxu0 0.0
        %3664 = vmatprep.subr.mxu0 0.0
        %3665 = vmatpush1.msra.mxu0 0.0
        %3666 = vmatprep.subr.mxu0 0.0
        %3667 = vmatpush1.msra.mxu0 0.0
        %3668 = vmatprep.subr.mxu0 0.0
        %3669 = vmatpush1.msra.mxu0 0.0
        %3670 = vmatprep.subr.mxu0 0.0
        %3671 = vmatpush1.msra.mxu0 0.0
        %3672 = vmatprep.subr.mxu0 0.0
        %3673 = vmatpush1.msra.mxu0 0.0
        %3674 = vmatprep.subr.mxu0 0.0
        %3675 = vmatpush1.msra.mxu0 0.0
        %3676 = vmatprep.subr.mxu0 0.0
        %3677 = vmatpush1.msra.mxu0 0.0
        %3678 = vmatprep.mubr.f32.mxu0 0.0
        %3679 = vmatmul.mubr.f32.gmra.mrb[0].mxu0 %v3610
        %v3680 = vpop.f32.mrb[0].mxu0
        %v3681 = vadd.f32 0.0, %v3680
        %v3682 = vpop.f32.mrb[0].mxu0
        %3683 = vdwg.mxu0
        %v3684 = vadd.f32 %v3599, %v3681
        %v3685 = vld [vmem:[%s1037] sm:$0xff]
        %v3686 = vld [vmem:[#allocation2 + $0x8] sm:$0xff]
        %v3688 = vcombine.high %v3686, %v3686
        %3689 = vrot.lane.b32.xlu0 %v3686, 106
        %v3690 = vpop.permute.xlu0 %3689
        %3691 = vrot.lane.b32.xlu0 %v3688, 106
        %v3692 = vpop.permute.xlu0 %3691
        %v3693 = vsel %vm1050, %v3690, %v3692
        %v3695 = vsel %vm399, %v3685, 0
        %v3697 = vsel %vm403, %v3693, 0
        %3699 = vmatprep.subr.mxu0 0.0
        %3700 = vmatpush1.msra.mxu0 %v3697
        %3701 = vmatprep.subr.mxu0 0.0
        %3702 = vmatpush1.msra.mxu0 0.0
        %3703 = vmatprep.subr.mxu0 0.0
        %3704 = vmatpush1.msra.mxu0 0.0
        %3705 = vmatprep.subr.mxu0 0.0
        %3706 = vmatpush1.msra.mxu0 0.0
        %3707 = vmatprep.subr.mxu0 0.0
        %3708 = vmatpush1.msra.mxu0 0.0
        %3709 = vmatprep.subr.mxu0 0.0
        %3710 = vmatpush1.msra.mxu0 0.0
        %3711 = vmatprep.subr.mxu0 0.0
        %3712 = vmatpush1.msra.mxu0 0.0
        %3713 = vmatprep.subr.mxu0 0.0
        %3714 = vmatpush1.msra.mxu0 0.0
        %3715 = vmatprep.subr.mxu0 0.0
        %3716 = vmatpush1.msra.mxu0 0.0
        %3717 = vmatprep.subr.mxu0 0.0
        %3718 = vmatpush1.msra.mxu0 0.0
        %3719 = vmatprep.subr.mxu0 0.0
        %3720 = vmatpush1.msra.mxu0 0.0
        %3721 = vmatprep.subr.mxu0 0.0
        %3722 = vmatpush1.msra.mxu0 0.0
        %3723 = vmatprep.subr.mxu0 0.0
        %3724 = vmatpush1.msra.mxu0 0.0
        %3725 = vmatprep.subr.mxu0 0.0
        %3726 = vmatpush1.msra.mxu0 0.0
        %3727 = vmatprep.subr.mxu0 0.0
        %3728 = vmatpush1.msra.mxu0 0.0
        %3729 = vmatprep.subr.mxu0 0.0
        %3730 = vmatpush1.msra.mxu0 0.0
        %3731 = vmatprep.subr.mxu0 0.0
        %3732 = vmatpush1.msra.mxu0 0.0
        %3733 = vmatprep.subr.mxu0 0.0
        %3734 = vmatpush1.msra.mxu0 0.0
        %3735 = vmatprep.subr.mxu0 0.0
        %3736 = vmatpush1.msra.mxu0 0.0
        %3737 = vmatprep.subr.mxu0 0.0
        %3738 = vmatpush1.msra.mxu0 0.0
        %3739 = vmatprep.subr.mxu0 0.0
        %3740 = vmatpush1.msra.mxu0 0.0
        %3741 = vmatprep.subr.mxu0 0.0
        %3742 = vmatpush1.msra.mxu0 0.0
        %3743 = vmatprep.subr.mxu0 0.0
        %3744 = vmatpush1.msra.mxu0 0.0
        %3745 = vmatprep.subr.mxu0 0.0
        %3746 = vmatpush1.msra.mxu0 0.0
        %3747 = vmatprep.subr.mxu0 0.0
        %3748 = vmatpush1.msra.mxu0 0.0
        %3749 = vmatprep.subr.mxu0 0.0
        %3750 = vmatpush1.msra.mxu0 0.0
        %3751 = vmatprep.subr.mxu0 0.0
        %3752 = vmatpush1.msra.mxu0 0.0
        %3753 = vmatprep.subr.mxu0 0.0
        %3754 = vmatpush1.msra.mxu0 0.0
        %3755 = vmatprep.subr.mxu0 0.0
        %3756 = vmatpush1.msra.mxu0 0.0
        %3757 = vmatprep.subr.mxu0 0.0
        %3758 = vmatpush1.msra.mxu0 0.0
        %3759 = vmatprep.subr.mxu0 0.0
        %3760 = vmatpush1.msra.mxu0 0.0
        %3761 = vmatprep.subr.mxu0 0.0
        %3762 = vmatpush1.msra.mxu0 0.0
        %3763 = vmatprep.mubr.f32.mxu0 0.0
        %3764 = vmatmul.mubr.f32.gmra.mrb[0].mxu0 %v3695
        %v3765 = vpop.f32.mrb[0].mxu0
        %v3766 = vadd.f32 0.0, %v3765
        %v3767 = vpop.f32.mrb[0].mxu0
        %3768 = vdwg.mxu0
        %v3769 = vadd.f32 %v3684, %v3766
        %v3770 = vld [vmem:[%s1133] sm:$0xff]
        %v3771 = vld [vmem:[#allocation2 + $0x8] sm:$0xff]
        %v3773 = vcombine.high %v3771, %v3771
        %3774 = vrot.lane.b32.xlu0 %v3771, 105
        %v3775 = vpop.permute.xlu0 %3774
        %3776 = vrot.lane.b32.xlu0 %v3773, 105
        %v3777 = vpop.permute.xlu0 %3776
        %v3778 = vsel %vm1146, %v3775, %v3777
        %v3780 = vsel %vm399, %v3770, 0
        %v3782 = vsel %vm403, %v3778, 0
        %3784 = vmatprep.subr.mxu0 0.0
        %3785 = vmatpush1.msra.mxu0 %v3782
        %3786 = vmatprep.subr.mxu0 0.0
        %3787 = vmatpush1.msra.mxu0 0.0
        %3788 = vmatprep.subr.mxu0 0.0
        %3789 = vmatpush1.msra.mxu0 0.0
        %3790 = vmatprep.subr.mxu0 0.0
        %3791 = vmatpush1.msra.mxu0 0.0
        %3792 = vmatprep.subr.mxu0 0.0
        %3793 = vmatpush1.msra.mxu0 0.0
        %3794 = vmatprep.subr.mxu0 0.0
        %3795 = vmatpush1.msra.mxu0 0.0
        %3796 = vmatprep.subr.mxu0 0.0
        %3797 = vmatpush1.msra.mxu0 0.0
        %3798 = vmatprep.subr.mxu0 0.0
        %3799 = vmatpush1.msra.mxu0 0.0
        %3800 = vmatprep.subr.mxu0 0.0
        %3801 = vmatpush1.msra.mxu0 0.0
        %3802 = vmatprep.subr.mxu0 0.0
        %3803 = vmatpush1.msra.mxu0 0.0
        %3804 = vmatprep.subr.mxu0 0.0
        %3805 = vmatpush1.msra.mxu0 0.0
        %3806 = vmatprep.subr.mxu0 0.0
        %3807 = vmatpush1.msra.mxu0 0.0
        %3808 = vmatprep.subr.mxu0 0.0
        %3809 = vmatpush1.msra.mxu0 0.0
        %3810 = vmatprep.subr.mxu0 0.0
        %3811 = vmatpush1.msra.mxu0 0.0
        %3812 = vmatprep.subr.mxu0 0.0
        %3813 = vmatpush1.msra.mxu0 0.0
        %3814 = vmatprep.subr.mxu0 0.0
        %3815 = vmatpush1.msra.mxu0 0.0
        %3816 = vmatprep.subr.mxu0 0.0
        %3817 = vmatpush1.msra.mxu0 0.0
        %3818 = vmatprep.subr.mxu0 0.0
        %3819 = vmatpush1.msra.mxu0 0.0
        %3820 = vmatprep.subr.mxu0 0.0
        %3821 = vmatpush1.msra.mxu0 0.0
        %3822 = vmatprep.subr.mxu0 0.0
        %3823 = vmatpush1.msra.mxu0 0.0
        %3824 = vmatprep.subr.mxu0 0.0
        %3825 = vmatpush1.msra.mxu0 0.0
        %3826 = vmatprep.subr.mxu0 0.0
        %3827 = vmatpush1.msra.mxu0 0.0
        %3828 = vmatprep.subr.mxu0 0.0
        %3829 = vmatpush1.msra.mxu0 0.0
        %3830 = vmatprep.subr.mxu0 0.0
        %3831 = vmatpush1.msra.mxu0 0.0
        %3832 = vmatprep.subr.mxu0 0.0
        %3833 = vmatpush1.msra.mxu0 0.0
        %3834 = vmatprep.subr.mxu0 0.0
        %3835 = vmatpush1.msra.mxu0 0.0
        %3836 = vmatprep.subr.mxu0 0.0
        %3837 = vmatpush1.msra.mxu0 0.0
        %3838 = vmatprep.subr.mxu0 0.0
        %3839 = vmatpush1.msra.mxu0 0.0
        %3840 = vmatprep.subr.mxu0 0.0
        %3841 = vmatpush1.msra.mxu0 0.0
        %3842 = vmatprep.subr.mxu0 0.0
        %3843 = vmatpush1.msra.mxu0 0.0
        %3844 = vmatprep.subr.mxu0 0.0
        %3845 = vmatpush1.msra.mxu0 0.0
        %3846 = vmatprep.subr.mxu0 0.0
        %3847 = vmatpush1.msra.mxu0 0.0
        %3848 = vmatprep.mubr.f32.mxu0 0.0
        %3849 = vmatmul.mubr.f32.gmra.mrb[0].mxu0 %v3780
        %v3850 = vpop.f32.mrb[0].mxu0
        %v3851 = vadd.f32 0.0, %v3850
        %v3852 = vpop.f32.mrb[0].mxu0
        %3853 = vdwg.mxu0
        %v3854 = vadd.f32 %v3769, %v3851
        %v3855 = vld [vmem:[%s1229] sm:$0xff]
        %v3856 = vld [vmem:[#allocation2 + $0x8] sm:$0xff]
        %v3858 = vcombine.high %v3856, %v3856
        %3859 = vrot.lane.b32.xlu0 %v3856, 104
        %v3860 = vpop.permute.xlu0 %3859
        %3861 = vrot.lane.b32.xlu0 %v3858, 104
        %v3862 = vpop.permute.xlu0 %3861
        %v3863 = vsel %vm1242, %v3860, %v3862
        %v3865 = vsel %vm399, %v3855, 0
        %v3867 = vsel %vm403, %v3863, 0
        %3869 = vmatprep.subr.mxu0 0.0
        %3870 = vmatpush1.msra.mxu0 %v3867
        %3871 = vmatprep.subr.mxu0 0.0
        %3872 = vmatpush1.msra.mxu0 0.0
        %3873 = vmatprep.subr.mxu0 0.0
        %3874 = vmatpush1.msra.mxu0 0.0
        %3875 = vmatprep.subr.mxu0 0.0
        %3876 = vmatpush1.msra.mxu0 0.0
        %3877 = vmatprep.subr.mxu0 0.0
        %3878 = vmatpush1.msra.mxu0 0.0
        %3879 = vmatprep.subr.mxu0 0.0
        %3880 = vmatpush1.msra.mxu0 0.0
        %3881 = vmatprep.subr.mxu0 0.0
        %3882 = vmatpush1.msra.mxu0 0.0
        %3883 = vmatprep.subr.mxu0 0.0
        %3884 = vmatpush1.msra.mxu0 0.0
        %3885 = vmatprep.subr.mxu0 0.0
        %3886 = vmatpush1.msra.mxu0 0.0
        %3887 = vmatprep.subr.mxu0 0.0
        %3888 = vmatpush1.msra.mxu0 0.0
        %3889 = vmatprep.subr.mxu0 0.0
        %3890 = vmatpush1.msra.mxu0 0.0
        %3891 = vmatprep.subr.mxu0 0.0
        %3892 = vmatpush1.msra.mxu0 0.0
        %3893 = vmatprep.subr.mxu0 0.0
        %3894 = vmatpush1.msra.mxu0 0.0
        %3895 = vmatprep.subr.mxu0 0.0
        %3896 = vmatpush1.msra.mxu0 0.0
        %3897 = vmatprep.subr.mxu0 0.0
        %3898 = vmatpush1.msra.mxu0 0.0
        %3899 = vmatprep.subr.mxu0 0.0
        %3900 = vmatpush1.msra.mxu0 0.0
        %3901 = vmatprep.subr.mxu0 0.0
        %3902 = vmatpush1.msra.mxu0 0.0
        %3903 = vmatprep.subr.mxu0 0.0
        %3904 = vmatpush1.msra.mxu0 0.0
        %3905 = vmatprep.subr.mxu0 0.0
        %3906 = vmatpush1.msra.mxu0 0.0
        %3907 = vmatprep.subr.mxu0 0.0
        %3908 = vmatpush1.msra.mxu0 0.0
        %3909 = vmatprep.subr.mxu0 0.0
        %3910 = vmatpush1.msra.mxu0 0.0
        %3911 = vmatprep.subr.mxu0 0.0
        %3912 = vmatpush1.msra.mxu0 0.0
        %3913 = vmatprep.subr.mxu0 0.0
        %3914 = vmatpush1.msra.mxu0 0.0
        %3915 = vmatprep.subr.mxu0 0.0
        %3916 = vmatpush1.msra.mxu0 0.0
        %3917 = vmatprep.subr.mxu0 0.0
        %3918 = vmatpush1.msra.mxu0 0.0
        %3919 = vmatprep.subr.mxu0 0.0
        %3920 = vmatpush1.msra.mxu0 0.0
        %3921 = vmatprep.subr.mxu0 0.0
        %3922 = vmatpush1.msra.mxu0 0.0
        %3923 = vmatprep.subr.mxu0 0.0
        %3924 = vmatpush1.msra.mxu0 0.0
        %3925 = vmatprep.subr.mxu0 0.0
        %3926 = vmatpush1.msra.mxu0 0.0
        %3927 = vmatprep.subr.mxu0 0.0
        %3928 = vmatpush1.msra.mxu0 0.0
        %3929 = vmatprep.subr.mxu0 0.0
        %3930 = vmatpush1.msra.mxu0 0.0
        %3931 = vmatprep.subr.mxu0 0.0
        %3932 = vmatpush1.msra.mxu0 0.0
        %3933 = vmatprep.mubr.f32.mxu0 0.0
        %3934 = vmatmul.mubr.f32.gmra.mrb[0].mxu0 %v3865
        %v3935 = vpop.f32.mrb[0].mxu0
        %v3936 = vadd.f32 0.0, %v3935
        %v3937 = vpop.f32.mrb[0].mxu0
        %3938 = vdwg.mxu0
        %v3939 = vadd.f32 %v3854, %v3936
        %v3940 = vld [vmem:[%s1325] sm:$0xff]
        %v3941 = vld [vmem:[#allocation2 + $0x8] sm:$0xff]
        %v3943 = vcombine.high %v3941, %v3941
        %3944 = vrot.lane.b32.xlu0 %v3941, 88
        %v3945 = vpop.permute.xlu0 %3944
        %3946 = vrot.lane.b32.xlu0 %v3943, 88
        %v3947 = vpop.permute.xlu0 %3946
        %v3948 = vsel %vm1338, %v3945, %v3947
        %v3950 = vsel %vm399, %v3940, 0
        %v3952 = vsel %vm403, %v3948, 0
        %3954 = vmatprep.subr.mxu0 0.0
        %3955 = vmatpush1.msra.mxu0 %v3952
        %3956 = vmatprep.subr.mxu0 0.0
        %3957 = vmatpush1.msra.mxu0 0.0
        %3958 = vmatprep.subr.mxu0 0.0
        %3959 = vmatpush1.msra.mxu0 0.0
        %3960 = vmatprep.subr.mxu0 0.0
        %3961 = vmatpush1.msra.mxu0 0.0
        %3962 = vmatprep.subr.mxu0 0.0
        %3963 = vmatpush1.msra.mxu0 0.0
        %3964 = vmatprep.subr.mxu0 0.0
        %3965 = vmatpush1.msra.mxu0 0.0
        %3966 = vmatprep.subr.mxu0 0.0
        %3967 = vmatpush1.msra.mxu0 0.0
        %3968 = vmatprep.subr.mxu0 0.0
        %3969 = vmatpush1.msra.mxu0 0.0
        %3970 = vmatprep.subr.mxu0 0.0
        %3971 = vmatpush1.msra.mxu0 0.0
        %3972 = vmatprep.subr.mxu0 0.0
        %3973 = vmatpush1.msra.mxu0 0.0
        %3974 = vmatprep.subr.mxu0 0.0
        %3975 = vmatpush1.msra.mxu0 0.0
        %3976 = vmatprep.subr.mxu0 0.0
        %3977 = vmatpush1.msra.mxu0 0.0
        %3978 = vmatprep.subr.mxu0 0.0
        %3979 = vmatpush1.msra.mxu0 0.0
        %3980 = vmatprep.subr.mxu0 0.0
        %3981 = vmatpush1.msra.mxu0 0.0
        %3982 = vmatprep.subr.mxu0 0.0
        %3983 = vmatpush1.msra.mxu0 0.0
        %3984 = vmatprep.subr.mxu0 0.0
        %3985 = vmatpush1.msra.mxu0 0.0
        %3986 = vmatprep.subr.mxu0 0.0
        %3987 = vmatpush1.msra.mxu0 0.0
        %3988 = vmatprep.subr.mxu0 0.0
        %3989 = vmatpush1.msra.mxu0 0.0
        %3990 = vmatprep.subr.mxu0 0.0
        %3991 = vmatpush1.msra.mxu0 0.0
        %3992 = vmatprep.subr.mxu0 0.0
        %3993 = vmatpush1.msra.mxu0 0.0
        %3994 = vmatprep.subr.mxu0 0.0
        %3995 = vmatpush1.msra.mxu0 0.0
        %3996 = vmatprep.subr.mxu0 0.0
        %3997 = vmatpush1.msra.mxu0 0.0
        %3998 = vmatprep.subr.mxu0 0.0
        %3999 = vmatpush1.msra.mxu0 0.0
        %4000 = vmatprep.subr.mxu0 0.0
        %4001 = vmatpush1.msra.mxu0 0.0
        %4002 = vmatprep.subr.mxu0 0.0
        %4003 = vmatpush1.msra.mxu0 0.0
        %4004 = vmatprep.subr.mxu0 0.0
        %4005 = vmatpush1.msra.mxu0 0.0
        %4006 = vmatprep.subr.mxu0 0.0
        %4007 = vmatpush1.msra.mxu0 0.0
        %4008 = vmatprep.subr.mxu0 0.0
        %4009 = vmatpush1.msra.mxu0 0.0
        %4010 = vmatprep.subr.mxu0 0.0
        %4011 = vmatpush1.msra.mxu0 0.0
        %4012 = vmatprep.subr.mxu0 0.0
        %4013 = vmatpush1.msra.mxu0 0.0
        %4014 = vmatprep.subr.mxu0 0.0
        %4015 = vmatpush1.msra.mxu0 0.0
        %4016 = vmatprep.subr.mxu0 0.0
        %4017 = vmatpush1.msra.mxu0 0.0
        %4018 = vmatprep.mubr.f32.mxu0 0.0
        %4019 = vmatmul.mubr.f32.gmra.mrb[0].mxu0 %v3950
        %v4020 = vpop.f32.mrb[0].mxu0
        %v4021 = vadd.f32 0.0, %v4020
        %v4022 = vpop.f32.mrb[0].mxu0
        %4023 = vdwg.mxu0
        %v4024 = vadd.f32 %v3939, %v4021
        %v4025 = vld [vmem:[%s1421] sm:$0xff]
        %v4026 = vld [vmem:[#allocation2 + $0x8] sm:$0xff]
        %v4028 = vcombine.high %v4026, %v4026
        %4029 = vrot.lane.b32.xlu0 %v4026, 87
        %v4030 = vpop.permute.xlu0 %4029
        %4031 = vrot.lane.b32.xlu0 %v4028, 87
        %v4032 = vpop.permute.xlu0 %4031
        %v4033 = vsel %vm1434, %v4030, %v4032
        %v4035 = vsel %vm399, %v4025, 0
        %v4037 = vsel %vm403, %v4033, 0
        %4039 = vmatprep.subr.mxu0 0.0
        %4040 = vmatpush1.msra.mxu0 %v4037
        %4041 = vmatprep.subr.mxu0 0.0
        %4042 = vmatpush1.msra.mxu0 0.0
        %4043 = vmatprep.subr.mxu0 0.0
        %4044 = vmatpush1.msra.mxu0 0.0
        %4045 = vmatprep.subr.mxu0 0.0
        %4046 = vmatpush1.msra.mxu0 0.0
        %4047 = vmatprep.subr.mxu0 0.0
        %4048 = vmatpush1.msra.mxu0 0.0
        %4049 = vmatprep.subr.mxu0 0.0
        %4050 = vmatpush1.msra.mxu0 0.0
        %4051 = vmatprep.subr.mxu0 0.0
        %4052 = vmatpush1.msra.mxu0 0.0
        %4053 = vmatprep.subr.mxu0 0.0
        %4054 = vmatpush1.msra.mxu0 0.0
        %4055 = vmatprep.subr.mxu0 0.0
        %4056 = vmatpush1.msra.mxu0 0.0
        %4057 = vmatprep.subr.mxu0 0.0
        %4058 = vmatpush1.msra.mxu0 0.0
        %4059 = vmatprep.subr.mxu0 0.0
        %4060 = vmatpush1.msra.mxu0 0.0
        %4061 = vmatprep.subr.mxu0 0.0
        %4062 = vmatpush1.msra.mxu0 0.0
        %4063 = vmatprep.subr.mxu0 0.0
        %4064 = vmatpush1.msra.mxu0 0.0
        %4065 = vmatprep.subr.mxu0 0.0
        %4066 = vmatpush1.msra.mxu0 0.0
        %4067 = vmatprep.subr.mxu0 0.0
        %4068 = vmatpush1.msra.mxu0 0.0
        %4069 = vmatprep.subr.mxu0 0.0
        %4070 = vmatpush1.msra.mxu0 0.0
        %4071 = vmatprep.subr.mxu0 0.0
        %4072 = vmatpush1.msra.mxu0 0.0
        %4073 = vmatprep.subr.mxu0 0.0
        %4074 = vmatpush1.msra.mxu0 0.0
        %4075 = vmatprep.subr.mxu0 0.0
        %4076 = vmatpush1.msra.mxu0 0.0
        %4077 = vmatprep.subr.mxu0 0.0
        %4078 = vmatpush1.msra.mxu0 0.0
        %4079 = vmatprep.subr.mxu0 0.0
        %4080 = vmatpush1.msra.mxu0 0.0
        %4081 = vmatprep.subr.mxu0 0.0
        %4082 = vmatpush1.msra.mxu0 0.0
        %4083 = vmatprep.subr.mxu0 0.0
        %4084 = vmatpush1.msra.mxu0 0.0
        %4085 = vmatprep.subr.mxu0 0.0
        %4086 = vmatpush1.msra.mxu0 0.0
        %4087 = vmatprep.subr.mxu0 0.0
        %4088 = vmatpush1.msra.mxu0 0.0
        %4089 = vmatprep.subr.mxu0 0.0
        %4090 = vmatpush1.msra.mxu0 0.0
        %4091 = vmatprep.subr.mxu0 0.0
        %4092 = vmatpush1.msra.mxu0 0.0
        %4093 = vmatprep.subr.mxu0 0.0
        %4094 = vmatpush1.msra.mxu0 0.0
        %4095 = vmatprep.subr.mxu0 0.0
        %4096 = vmatpush1.msra.mxu0 0.0
        %4097 = vmatprep.subr.mxu0 0.0
        %4098 = vmatpush1.msra.mxu0 0.0
        %4099 = vmatprep.subr.mxu0 0.0
        %4100 = vmatpush1.msra.mxu0 0.0
        %4101 = vmatprep.subr.mxu0 0.0
        %4102 = vmatpush1.msra.mxu0 0.0
        %4103 = vmatprep.mubr.f32.mxu0 0.0
        %4104 = vmatmul.mubr.f32.gmra.mrb[0].mxu0 %v4035
        %v4105 = vpop.f32.mrb[0].mxu0
        %v4106 = vadd.f32 0.0, %v4105
        %v4107 = vpop.f32.mrb[0].mxu0
        %4108 = vdwg.mxu0
        %v4109 = vadd.f32 %v4024, %v4106
        %v4110 = vld [vmem:[%s1517] sm:$0xff]
        %v4111 = vld [vmem:[#allocation2 + $0x8] sm:$0xff]
        %v4113 = vcombine.high %v4111, %v4111
        %4114 = vrot.lane.b32.xlu0 %v4111, 86
        %v4115 = vpop.permute.xlu0 %4114
        %4116 = vrot.lane.b32.xlu0 %v4113, 86
        %v4117 = vpop.permute.xlu0 %4116
        %v4118 = vsel %vm1530, %v4115, %v4117
        %v4120 = vsel %vm399, %v4110, 0
        %v4122 = vsel %vm403, %v4118, 0
        %4124 = vmatprep.subr.mxu0 0.0
        %4125 = vmatpush1.msra.mxu0 %v4122
        %4126 = vmatprep.subr.mxu0 0.0
        %4127 = vmatpush1.msra.mxu0 0.0
        %4128 = vmatprep.subr.mxu0 0.0
        %4129 = vmatpush1.msra.mxu0 0.0
        %4130 = vmatprep.subr.mxu0 0.0
        %4131 = vmatpush1.msra.mxu0 0.0
        %4132 = vmatprep.subr.mxu0 0.0
        %4133 = vmatpush1.msra.mxu0 0.0
        %4134 = vmatprep.subr.mxu0 0.0
        %4135 = vmatpush1.msra.mxu0 0.0
        %4136 = vmatprep.subr.mxu0 0.0
        %4137 = vmatpush1.msra.mxu0 0.0
        %4138 = vmatprep.subr.mxu0 0.0
        %4139 = vmatpush1.msra.mxu0 0.0
        %4140 = vmatprep.subr.mxu0 0.0
        %4141 = vmatpush1.msra.mxu0 0.0
        %4142 = vmatprep.subr.mxu0 0.0
        %4143 = vmatpush1.msra.mxu0 0.0
        %4144 = vmatprep.subr.mxu0 0.0
        %4145 = vmatpush1.msra.mxu0 0.0
        %4146 = vmatprep.subr.mxu0 0.0
        %4147 = vmatpush1.msra.mxu0 0.0
        %4148 = vmatprep.subr.mxu0 0.0
        %4149 = vmatpush1.msra.mxu0 0.0
        %4150 = vmatprep.subr.mxu0 0.0
        %4151 = vmatpush1.msra.mxu0 0.0
        %4152 = vmatprep.subr.mxu0 0.0
        %4153 = vmatpush1.msra.mxu0 0.0
        %4154 = vmatprep.subr.mxu0 0.0
        %4155 = vmatpush1.msra.mxu0 0.0
        %4156 = vmatprep.subr.mxu0 0.0
        %4157 = vmatpush1.msra.mxu0 0.0
        %4158 = vmatprep.subr.mxu0 0.0
        %4159 = vmatpush1.msra.mxu0 0.0
        %4160 = vmatprep.subr.mxu0 0.0
        %4161 = vmatpush1.msra.mxu0 0.0
        %4162 = vmatprep.subr.mxu0 0.0
        %4163 = vmatpush1.msra.mxu0 0.0
        %4164 = vmatprep.subr.mxu0 0.0
        %4165 = vmatpush1.msra.mxu0 0.0
        %4166 = vmatprep.subr.mxu0 0.0
        %4167 = vmatpush1.msra.mxu0 0.0
        %4168 = vmatprep.subr.mxu0 0.0
        %4169 = vmatpush1.msra.mxu0 0.0
        %4170 = vmatprep.subr.mxu0 0.0
        %4171 = vmatpush1.msra.mxu0 0.0
        %4172 = vmatprep.subr.mxu0 0.0
        %4173 = vmatpush1.msra.mxu0 0.0
        %4174 = vmatprep.subr.mxu0 0.0
        %4175 = vmatpush1.msra.mxu0 0.0
        %4176 = vmatprep.subr.mxu0 0.0
        %4177 = vmatpush1.msra.mxu0 0.0
        %4178 = vmatprep.subr.mxu0 0.0
        %4179 = vmatpush1.msra.mxu0 0.0
        %4180 = vmatprep.subr.mxu0 0.0
        %4181 = vmatpush1.msra.mxu0 0.0
        %4182 = vmatprep.subr.mxu0 0.0
        %4183 = vmatpush1.msra.mxu0 0.0
        %4184 = vmatprep.subr.mxu0 0.0
        %4185 = vmatpush1.msra.mxu0 0.0
        %4186 = vmatprep.subr.mxu0 0.0
        %4187 = vmatpush1.msra.mxu0 0.0
        %4188 = vmatprep.mubr.f32.mxu0 0.0
        %4189 = vmatmul.mubr.f32.gmra.mrb[0].mxu0 %v4120
        %v4190 = vpop.f32.mrb[0].mxu0
        %v4191 = vadd.f32 0.0, %v4190
        %v4192 = vpop.f32.mrb[0].mxu0
        %4193 = vdwg.mxu0
        %v4194 = vadd.f32 %v4109, %v4191
        %v4195 = vld [vmem:[%s1613] sm:$0xff]
        %v4196 = vld [vmem:[#allocation2 + $0x8] sm:$0xff]
        %v4198 = vcombine.high %v4196, %v4196
        %4199 = vrot.lane.b32.xlu0 %v4196, 85
        %v4200 = vpop.permute.xlu0 %4199
        %4201 = vrot.lane.b32.xlu0 %v4198, 85
        %v4202 = vpop.permute.xlu0 %4201
        %v4203 = vsel %vm1626, %v4200, %v4202
        %v4205 = vsel %vm399, %v4195, 0
        %v4207 = vsel %vm403, %v4203, 0
        %4209 = vmatprep.subr.mxu0 0.0
        %4210 = vmatpush1.msra.mxu0 %v4207
        %4211 = vmatprep.subr.mxu0 0.0
        %4212 = vmatpush1.msra.mxu0 0.0
        %4213 = vmatprep.subr.mxu0 0.0
        %4214 = vmatpush1.msra.mxu0 0.0
        %4215 = vmatprep.subr.mxu0 0.0
        %4216 = vmatpush1.msra.mxu0 0.0
        %4217 = vmatprep.subr.mxu0 0.0
        %4218 = vmatpush1.msra.mxu0 0.0
        %4219 = vmatprep.subr.mxu0 0.0
        %4220 = vmatpush1.msra.mxu0 0.0
        %4221 = vmatprep.subr.mxu0 0.0
        %4222 = vmatpush1.msra.mxu0 0.0
        %4223 = vmatprep.subr.mxu0 0.0
        %4224 = vmatpush1.msra.mxu0 0.0
        %4225 = vmatprep.subr.mxu0 0.0
        %4226 = vmatpush1.msra.mxu0 0.0
        %4227 = vmatprep.subr.mxu0 0.0
        %4228 = vmatpush1.msra.mxu0 0.0
        %4229 = vmatprep.subr.mxu0 0.0
        %4230 = vmatpush1.msra.mxu0 0.0
        %4231 = vmatprep.subr.mxu0 0.0
        %4232 = vmatpush1.msra.mxu0 0.0
        %4233 = vmatprep.subr.mxu0 0.0
        %4234 = vmatpush1.msra.mxu0 0.0
        %4235 = vmatprep.subr.mxu0 0.0
        %4236 = vmatpush1.msra.mxu0 0.0
        %4237 = vmatprep.subr.mxu0 0.0
        %4238 = vmatpush1.msra.mxu0 0.0
        %4239 = vmatprep.subr.mxu0 0.0
        %4240 = vmatpush1.msra.mxu0 0.0
        %4241 = vmatprep.subr.mxu0 0.0
        %4242 = vmatpush1.msra.mxu0 0.0
        %4243 = vmatprep.subr.mxu0 0.0
        %4244 = vmatpush1.msra.mxu0 0.0
        %4245 = vmatprep.subr.mxu0 0.0
        %4246 = vmatpush1.msra.mxu0 0.0
        %4247 = vmatprep.subr.mxu0 0.0
        %4248 = vmatpush1.msra.mxu0 0.0
        %4249 = vmatprep.subr.mxu0 0.0
        %4250 = vmatpush1.msra.mxu0 0.0
        %4251 = vmatprep.subr.mxu0 0.0
        %4252 = vmatpush1.msra.mxu0 0.0
        %4253 = vmatprep.subr.mxu0 0.0
        %4254 = vmatpush1.msra.mxu0 0.0
        %4255 = vmatprep.subr.mxu0 0.0
        %4256 = vmatpush1.msra.mxu0 0.0
        %4257 = vmatprep.subr.mxu0 0.0
        %4258 = vmatpush1.msra.mxu0 0.0
        %4259 = vmatprep.subr.mxu0 0.0
        %4260 = vmatpush1.msra.mxu0 0.0
        %4261 = vmatprep.subr.mxu0 0.0
        %4262 = vmatpush1.msra.mxu0 0.0
        %4263 = vmatprep.subr.mxu0 0.0
        %4264 = vmatpush1.msra.mxu0 0.0
        %4265 = vmatprep.subr.mxu0 0.0
        %4266 = vmatpush1.msra.mxu0 0.0
        %4267 = vmatprep.subr.mxu0 0.0
        %4268 = vmatpush1.msra.mxu0 0.0
        %4269 = vmatprep.subr.mxu0 0.0
        %4270 = vmatpush1.msra.mxu0 0.0
        %4271 = vmatprep.subr.mxu0 0.0
        %4272 = vmatpush1.msra.mxu0 0.0
        %4273 = vmatprep.mubr.f32.mxu0 0.0
        %4274 = vmatmul.mubr.f32.gmra.mrb[0].mxu0 %v4205
        %v4275 = vpop.f32.mrb[0].mxu0
        %v4276 = vadd.f32 0.0, %v4275
        %v4277 = vpop.f32.mrb[0].mxu0
        %4278 = vdwg.mxu0
        %v4279 = vadd.f32 %v4194, %v4276
        %v4280 = vld [vmem:[%s1709] sm:$0xff]
        %v4281 = vld [vmem:[#allocation2 + $0x8] sm:$0xff]
        %v4283 = vcombine.high %v4281, %v4281
        %4284 = vrot.lane.b32.xlu0 %v4281, 84
        %v4285 = vpop.permute.xlu0 %4284
        %4286 = vrot.lane.b32.xlu0 %v4283, 84
        %v4287 = vpop.permute.xlu0 %4286
        %v4288 = vsel %vm1722, %v4285, %v4287
        %v4290 = vsel %vm399, %v4280, 0
        %v4292 = vsel %vm403, %v4288, 0
        %4294 = vmatprep.subr.mxu0 0.0
        %4295 = vmatpush1.msra.mxu0 %v4292
        %4296 = vmatprep.subr.mxu0 0.0
        %4297 = vmatpush1.msra.mxu0 0.0
        %4298 = vmatprep.subr.mxu0 0.0
        %4299 = vmatpush1.msra.mxu0 0.0
        %4300 = vmatprep.subr.mxu0 0.0
        %4301 = vmatpush1.msra.mxu0 0.0
        %4302 = vmatprep.subr.mxu0 0.0
        %4303 = vmatpush1.msra.mxu0 0.0
        %4304 = vmatprep.subr.mxu0 0.0
        %4305 = vmatpush1.msra.mxu0 0.0
        %4306 = vmatprep.subr.mxu0 0.0
        %4307 = vmatpush1.msra.mxu0 0.0
        %4308 = vmatprep.subr.mxu0 0.0
        %4309 = vmatpush1.msra.mxu0 0.0
        %4310 = vmatprep.subr.mxu0 0.0
        %4311 = vmatpush1.msra.mxu0 0.0
        %4312 = vmatprep.subr.mxu0 0.0
        %4313 = vmatpush1.msra.mxu0 0.0
        %4314 = vmatprep.subr.mxu0 0.0
        %4315 = vmatpush1.msra.mxu0 0.0
        %4316 = vmatprep.subr.mxu0 0.0
        %4317 = vmatpush1.msra.mxu0 0.0
        %4318 = vmatprep.subr.mxu0 0.0
        %4319 = vmatpush1.msra.mxu0 0.0
        %4320 = vmatprep.subr.mxu0 0.0
        %4321 = vmatpush1.msra.mxu0 0.0
        %4322 = vmatprep.subr.mxu0 0.0
        %4323 = vmatpush1.msra.mxu0 0.0
        %4324 = vmatprep.subr.mxu0 0.0
        %4325 = vmatpush1.msra.mxu0 0.0
        %4326 = vmatprep.subr.mxu0 0.0
        %4327 = vmatpush1.msra.mxu0 0.0
        %4328 = vmatprep.subr.mxu0 0.0
        %4329 = vmatpush1.msra.mxu0 0.0
        %4330 = vmatprep.subr.mxu0 0.0
        %4331 = vmatpush1.msra.mxu0 0.0
        %4332 = vmatprep.subr.mxu0 0.0
        %4333 = vmatpush1.msra.mxu0 0.0
        %4334 = vmatprep.subr.mxu0 0.0
        %4335 = vmatpush1.msra.mxu0 0.0
        %4336 = vmatprep.subr.mxu0 0.0
        %4337 = vmatpush1.msra.mxu0 0.0
        %4338 = vmatprep.subr.mxu0 0.0
        %4339 = vmatpush1.msra.mxu0 0.0
        %4340 = vmatprep.subr.mxu0 0.0
        %4341 = vmatpush1.msra.mxu0 0.0
        %4342 = vmatprep.subr.mxu0 0.0
        %4343 = vmatpush1.msra.mxu0 0.0
        %4344 = vmatprep.subr.mxu0 0.0
        %4345 = vmatpush1.msra.mxu0 0.0
        %4346 = vmatprep.subr.mxu0 0.0
        %4347 = vmatpush1.msra.mxu0 0.0
        %4348 = vmatprep.subr.mxu0 0.0
        %4349 = vmatpush1.msra.mxu0 0.0
        %4350 = vmatprep.subr.mxu0 0.0
        %4351 = vmatpush1.msra.mxu0 0.0
        %4352 = vmatprep.subr.mxu0 0.0
        %4353 = vmatpush1.msra.mxu0 0.0
        %4354 = vmatprep.subr.mxu0 0.0
        %4355 = vmatpush1.msra.mxu0 0.0
        %4356 = vmatprep.subr.mxu0 0.0
        %4357 = vmatpush1.msra.mxu0 0.0
        %4358 = vmatprep.mubr.f32.mxu0 0.0
        %4359 = vmatmul.mubr.f32.gmra.mrb[0].mxu0 %v4290
        %v4360 = vpop.f32.mrb[0].mxu0
        %v4361 = vadd.f32 0.0, %v4360
        %v4362 = vpop.f32.mrb[0].mxu0
        %4363 = vdwg.mxu0
        %v4364 = vadd.f32 %v4279, %v4361
        %v4365 = vld [vmem:[%s1805] sm:$0xff]
        %v4366 = vld [vmem:[#allocation2 + $0x8] sm:$0xff]
        %v4368 = vcombine.high %v4366, %v4366
        %4369 = vrot.lane.b32.xlu0 %v4366, 68
        %v4370 = vpop.permute.xlu0 %4369
        %4371 = vrot.lane.b32.xlu0 %v4368, 68
        %v4372 = vpop.permute.xlu0 %4371
        %v4373 = vsel %vm1818, %v4370, %v4372
        %v4375 = vsel %vm399, %v4365, 0
        %v4377 = vsel %vm403, %v4373, 0
        %4379 = vmatprep.subr.mxu0 0.0
        %4380 = vmatpush1.msra.mxu0 %v4377
        %4381 = vmatprep.subr.mxu0 0.0
        %4382 = vmatpush1.msra.mxu0 0.0
        %4383 = vmatprep.subr.mxu0 0.0
        %4384 = vmatpush1.msra.mxu0 0.0
        %4385 = vmatprep.subr.mxu0 0.0
        %4386 = vmatpush1.msra.mxu0 0.0
        %4387 = vmatprep.subr.mxu0 0.0
        %4388 = vmatpush1.msra.mxu0 0.0
        %4389 = vmatprep.subr.mxu0 0.0
        %4390 = vmatpush1.msra.mxu0 0.0
        %4391 = vmatprep.subr.mxu0 0.0
        %4392 = vmatpush1.msra.mxu0 0.0
        %4393 = vmatprep.subr.mxu0 0.0
        %4394 = vmatpush1.msra.mxu0 0.0
        %4395 = vmatprep.subr.mxu0 0.0
        %4396 = vmatpush1.msra.mxu0 0.0
        %4397 = vmatprep.subr.mxu0 0.0
        %4398 = vmatpush1.msra.mxu0 0.0
        %4399 = vmatprep.subr.mxu0 0.0
        %4400 = vmatpush1.msra.mxu0 0.0
        %4401 = vmatprep.subr.mxu0 0.0
        %4402 = vmatpush1.msra.mxu0 0.0
        %4403 = vmatprep.subr.mxu0 0.0
        %4404 = vmatpush1.msra.mxu0 0.0
        %4405 = vmatprep.subr.mxu0 0.0
        %4406 = vmatpush1.msra.mxu0 0.0
        %4407 = vmatprep.subr.mxu0 0.0
        %4408 = vmatpush1.msra.mxu0 0.0
        %4409 = vmatprep.subr.mxu0 0.0
        %4410 = vmatpush1.msra.mxu0 0.0
        %4411 = vmatprep.subr.mxu0 0.0
        %4412 = vmatpush1.msra.mxu0 0.0
        %4413 = vmatprep.subr.mxu0 0.0
        %4414 = vmatpush1.msra.mxu0 0.0
        %4415 = vmatprep.subr.mxu0 0.0
        %4416 = vmatpush1.msra.mxu0 0.0
        %4417 = vmatprep.subr.mxu0 0.0
        %4418 = vmatpush1.msra.mxu0 0.0
        %4419 = vmatprep.subr.mxu0 0.0
        %4420 = vmatpush1.msra.mxu0 0.0
        %4421 = vmatprep.subr.mxu0 0.0
        %4422 = vmatpush1.msra.mxu0 0.0
        %4423 = vmatprep.subr.mxu0 0.0
        %4424 = vmatpush1.msra.mxu0 0.0
        %4425 = vmatprep.subr.mxu0 0.0
        %4426 = vmatpush1.msra.mxu0 0.0
        %4427 = vmatprep.subr.mxu0 0.0
        %4428 = vmatpush1.msra.mxu0 0.0
        %4429 = vmatprep.subr.mxu0 0.0
        %4430 = vmatpush1.msra.mxu0 0.0
        %4431 = vmatprep.subr.mxu0 0.0
        %4432 = vmatpush1.msra.mxu0 0.0
        %4433 = vmatprep.subr.mxu0 0.0
        %4434 = vmatpush1.msra.mxu0 0.0
        %4435 = vmatprep.subr.mxu0 0.0
        %4436 = vmatpush1.msra.mxu0 0.0
        %4437 = vmatprep.subr.mxu0 0.0
        %4438 = vmatpush1.msra.mxu0 0.0
        %4439 = vmatprep.subr.mxu0 0.0
        %4440 = vmatpush1.msra.mxu0 0.0
        %4441 = vmatprep.subr.mxu0 0.0
        %4442 = vmatpush1.msra.mxu0 0.0
        %4443 = vmatprep.mubr.f32.mxu0 0.0
        %4444 = vmatmul.mubr.f32.gmra.mrb[0].mxu0 %v4375
        %v4445 = vpop.f32.mrb[0].mxu0
        %v4446 = vadd.f32 0.0, %v4445
        %v4447 = vpop.f32.mrb[0].mxu0
        %4448 = vdwg.mxu0
        %v4449 = vadd.f32 %v4364, %v4446
        %v4450 = vld [vmem:[%s1901] sm:$0xff]
        %v4451 = vld [vmem:[#allocation2 + $0x8] sm:$0xff]
        %v4453 = vcombine.high %v4451, %v4451
        %4454 = vrot.lane.b32.xlu0 %v4451, 67
        %v4455 = vpop.permute.xlu0 %4454
        %4456 = vrot.lane.b32.xlu0 %v4453, 67
        %v4457 = vpop.permute.xlu0 %4456
        %v4458 = vsel %vm1914, %v4455, %v4457
        %v4460 = vsel %vm399, %v4450, 0
        %v4462 = vsel %vm403, %v4458, 0
        %4464 = vmatprep.subr.mxu0 0.0
        %4465 = vmatpush1.msra.mxu0 %v4462
        %4466 = vmatprep.subr.mxu0 0.0
        %4467 = vmatpush1.msra.mxu0 0.0
        %4468 = vmatprep.subr.mxu0 0.0
        %4469 = vmatpush1.msra.mxu0 0.0
        %4470 = vmatprep.subr.mxu0 0.0
        %4471 = vmatpush1.msra.mxu0 0.0
        %4472 = vmatprep.subr.mxu0 0.0
        %4473 = vmatpush1.msra.mxu0 0.0
        %4474 = vmatprep.subr.mxu0 0.0
        %4475 = vmatpush1.msra.mxu0 0.0
        %4476 = vmatprep.subr.mxu0 0.0
        %4477 = vmatpush1.msra.mxu0 0.0
        %4478 = vmatprep.subr.mxu0 0.0
        %4479 = vmatpush1.msra.mxu0 0.0
        %4480 = vmatprep.subr.mxu0 0.0
        %4481 = vmatpush1.msra.mxu0 0.0
        %4482 = vmatprep.subr.mxu0 0.0
        %4483 = vmatpush1.msra.mxu0 0.0
        %4484 = vmatprep.subr.mxu0 0.0
        %4485 = vmatpush1.msra.mxu0 0.0
        %4486 = vmatprep.subr.mxu0 0.0
        %4487 = vmatpush1.msra.mxu0 0.0
        %4488 = vmatprep.subr.mxu0 0.0
        %4489 = vmatpush1.msra.mxu0 0.0
        %4490 = vmatprep.subr.mxu0 0.0
        %4491 = vmatpush1.msra.mxu0 0.0
        %4492 = vmatprep.subr.mxu0 0.0
        %4493 = vmatpush1.msra.mxu0 0.0
        %4494 = vmatprep.subr.mxu0 0.0
        %4495 = vmatpush1.msra.mxu0 0.0
        %4496 = vmatprep.subr.mxu0 0.0
        %4497 = vmatpush1.msra.mxu0 0.0
        %4498 = vmatprep.subr.mxu0 0.0
        %4499 = vmatpush1.msra.mxu0 0.0
        %4500 = vmatprep.subr.mxu0 0.0
        %4501 = vmatpush1.msra.mxu0 0.0
        %4502 = vmatprep.subr.mxu0 0.0
        %4503 = vmatpush1.msra.mxu0 0.0
        %4504 = vmatprep.subr.mxu0 0.0
        %4505 = vmatpush1.msra.mxu0 0.0
        %4506 = vmatprep.subr.mxu0 0.0
        %4507 = vmatpush1.msra.mxu0 0.0
        %4508 = vmatprep.subr.mxu0 0.0
        %4509 = vmatpush1.msra.mxu0 0.0
        %4510 = vmatprep.subr.mxu0 0.0
        %4511 = vmatpush1.msra.mxu0 0.0
        %4512 = vmatprep.subr.mxu0 0.0
        %4513 = vmatpush1.msra.mxu0 0.0
        %4514 = vmatprep.subr.mxu0 0.0
        %4515 = vmatpush1.msra.mxu0 0.0
        %4516 = vmatprep.subr.mxu0 0.0
        %4517 = vmatpush1.msra.mxu0 0.0
        %4518 = vmatprep.subr.mxu0 0.0
        %4519 = vmatpush1.msra.mxu0 0.0
        %4520 = vmatprep.subr.mxu0 0.0
        %4521 = vmatpush1.msra.mxu0 0.0
        %4522 = vmatprep.subr.mxu0 0.0
        %4523 = vmatpush1.msra.mxu0 0.0
        %4524 = vmatprep.subr.mxu0 0.0
        %4525 = vmatpush1.msra.mxu0 0.0
        %4526 = vmatprep.subr.mxu0 0.0
        %4527 = vmatpush1.msra.mxu0 0.0
        %4528 = vmatprep.mubr.f32.mxu0 0.0
        %4529 = vmatmul.mubr.f32.gmra.mrb[0].mxu0 %v4460
        %v4530 = vpop.f32.mrb[0].mxu0
        %v4531 = vadd.f32 0.0, %v4530
        %v4532 = vpop.f32.mrb[0].mxu0
        %4533 = vdwg.mxu0
        %v4534 = vadd.f32 %v4449, %v4531
        %v4535 = vld [vmem:[%s1997] sm:$0xff]
        %v4536 = vld [vmem:[#allocation2 + $0x8] sm:$0xff]
        %v4538 = vcombine.high %v4536, %v4536
        %4539 = vrot.lane.b32.xlu0 %v4536, 66
        %v4540 = vpop.permute.xlu0 %4539
        %4541 = vrot.lane.b32.xlu0 %v4538, 66
        %v4542 = vpop.permute.xlu0 %4541
        %v4543 = vsel %vm2010, %v4540, %v4542
        %v4545 = vsel %vm399, %v4535, 0
        %v4547 = vsel %vm403, %v4543, 0
        %4549 = vmatprep.subr.mxu0 0.0
        %4550 = vmatpush1.msra.mxu0 %v4547
        %4551 = vmatprep.subr.mxu0 0.0
        %4552 = vmatpush1.msra.mxu0 0.0
        %4553 = vmatprep.subr.mxu0 0.0
        %4554 = vmatpush1.msra.mxu0 0.0
        %4555 = vmatprep.subr.mxu0 0.0
        %4556 = vmatpush1.msra.mxu0 0.0
        %4557 = vmatprep.subr.mxu0 0.0
        %4558 = vmatpush1.msra.mxu0 0.0
        %4559 = vmatprep.subr.mxu0 0.0
        %4560 = vmatpush1.msra.mxu0 0.0
        %4561 = vmatprep.subr.mxu0 0.0
        %4562 = vmatpush1.msra.mxu0 0.0
        %4563 = vmatprep.subr.mxu0 0.0
        %4564 = vmatpush1.msra.mxu0 0.0
        %4565 = vmatprep.subr.mxu0 0.0
        %4566 = vmatpush1.msra.mxu0 0.0
        %4567 = vmatprep.subr.mxu0 0.0
        %4568 = vmatpush1.msra.mxu0 0.0
        %4569 = vmatprep.subr.mxu0 0.0
        %4570 = vmatpush1.msra.mxu0 0.0
        %4571 = vmatprep.subr.mxu0 0.0
        %4572 = vmatpush1.msra.mxu0 0.0
        %4573 = vmatprep.subr.mxu0 0.0
        %4574 = vmatpush1.msra.mxu0 0.0
        %4575 = vmatprep.subr.mxu0 0.0
        %4576 = vmatpush1.msra.mxu0 0.0
        %4577 = vmatprep.subr.mxu0 0.0
        %4578 = vmatpush1.msra.mxu0 0.0
        %4579 = vmatprep.subr.mxu0 0.0
        %4580 = vmatpush1.msra.mxu0 0.0
        %4581 = vmatprep.subr.mxu0 0.0
        %4582 = vmatpush1.msra.mxu0 0.0
        %4583 = vmatprep.subr.mxu0 0.0
        %4584 = vmatpush1.msra.mxu0 0.0
        %4585 = vmatprep.subr.mxu0 0.0
        %4586 = vmatpush1.msra.mxu0 0.0
        %4587 = vmatprep.subr.mxu0 0.0
        %4588 = vmatpush1.msra.mxu0 0.0
        %4589 = vmatprep.subr.mxu0 0.0
        %4590 = vmatpush1.msra.mxu0 0.0
        %4591 = vmatprep.subr.mxu0 0.0
        %4592 = vmatpush1.msra.mxu0 0.0
        %4593 = vmatprep.subr.mxu0 0.0
        %4594 = vmatpush1.msra.mxu0 0.0
        %4595 = vmatprep.subr.mxu0 0.0
        %4596 = vmatpush1.msra.mxu0 0.0
        %4597 = vmatprep.subr.mxu0 0.0
        %4598 = vmatpush1.msra.mxu0 0.0
        %4599 = vmatprep.subr.mxu0 0.0
        %4600 = vmatpush1.msra.mxu0 0.0
        %4601 = vmatprep.subr.mxu0 0.0
        %4602 = vmatpush1.msra.mxu0 0.0
        %4603 = vmatprep.subr.mxu0 0.0
        %4604 = vmatpush1.msra.mxu0 0.0
        %4605 = vmatprep.subr.mxu0 0.0
        %4606 = vmatpush1.msra.mxu0 0.0
        %4607 = vmatprep.subr.mxu0 0.0
        %4608 = vmatpush1.msra.mxu0 0.0
        %4609 = vmatprep.subr.mxu0 0.0
        %4610 = vmatpush1.msra.mxu0 0.0
        %4611 = vmatprep.subr.mxu0 0.0
        %4612 = vmatpush1.msra.mxu0 0.0
        %4613 = vmatprep.mubr.f32.mxu0 0.0
        %4614 = vmatmul.mubr.f32.gmra.mrb[0].mxu0 %v4545
        %v4615 = vpop.f32.mrb[0].mxu0
        %v4616 = vadd.f32 0.0, %v4615
        %v4617 = vpop.f32.mrb[0].mxu0
        %4618 = vdwg.mxu0
        %v4619 = vadd.f32 %v4534, %v4616
        %v4620 = vld [vmem:[%s2093] sm:$0xff]
        %v4621 = vld [vmem:[#allocation2 + $0x8] sm:$0xff]
        %v4623 = vcombine.high %v4621, %v4621
        %4624 = vrot.lane.b32.xlu0 %v4621, 65
        %v4625 = vpop.permute.xlu0 %4624
        %4626 = vrot.lane.b32.xlu0 %v4623, 65
        %v4627 = vpop.permute.xlu0 %4626
        %v4628 = vsel %vm2106, %v4625, %v4627
        %v4630 = vsel %vm399, %v4620, 0
        %v4632 = vsel %vm403, %v4628, 0
        %4634 = vmatprep.subr.mxu0 0.0
        %4635 = vmatpush1.msra.mxu0 %v4632
        %4636 = vmatprep.subr.mxu0 0.0
        %4637 = vmatpush1.msra.mxu0 0.0
        %4638 = vmatprep.subr.mxu0 0.0
        %4639 = vmatpush1.msra.mxu0 0.0
        %4640 = vmatprep.subr.mxu0 0.0
        %4641 = vmatpush1.msra.mxu0 0.0
        %4642 = vmatprep.subr.mxu0 0.0
        %4643 = vmatpush1.msra.mxu0 0.0
        %4644 = vmatprep.subr.mxu0 0.0
        %4645 = vmatpush1.msra.mxu0 0.0
        %4646 = vmatprep.subr.mxu0 0.0
        %4647 = vmatpush1.msra.mxu0 0.0
        %4648 = vmatprep.subr.mxu0 0.0
        %4649 = vmatpush1.msra.mxu0 0.0
        %4650 = vmatprep.subr.mxu0 0.0
        %4651 = vmatpush1.msra.mxu0 0.0
        %4652 = vmatprep.subr.mxu0 0.0
        %4653 = vmatpush1.msra.mxu0 0.0
        %4654 = vmatprep.subr.mxu0 0.0
        %4655 = vmatpush1.msra.mxu0 0.0
        %4656 = vmatprep.subr.mxu0 0.0
        %4657 = vmatpush1.msra.mxu0 0.0
        %4658 = vmatprep.subr.mxu0 0.0
        %4659 = vmatpush1.msra.mxu0 0.0
        %4660 = vmatprep.subr.mxu0 0.0
        %4661 = vmatpush1.msra.mxu0 0.0
        %4662 = vmatprep.subr.mxu0 0.0
        %4663 = vmatpush1.msra.mxu0 0.0
        %4664 = vmatprep.subr.mxu0 0.0
        %4665 = vmatpush1.msra.mxu0 0.0
        %4666 = vmatprep.subr.mxu0 0.0
        %4667 = vmatpush1.msra.mxu0 0.0
        %4668 = vmatprep.subr.mxu0 0.0
        %4669 = vmatpush1.msra.mxu0 0.0
        %4670 = vmatprep.subr.mxu0 0.0
        %4671 = vmatpush1.msra.mxu0 0.0
        %4672 = vmatprep.subr.mxu0 0.0
        %4673 = vmatpush1.msra.mxu0 0.0
        %4674 = vmatprep.subr.mxu0 0.0
        %4675 = vmatpush1.msra.mxu0 0.0
        %4676 = vmatprep.subr.mxu0 0.0
        %4677 = vmatpush1.msra.mxu0 0.0
        %4678 = vmatprep.subr.mxu0 0.0
        %4679 = vmatpush1.msra.mxu0 0.0
        %4680 = vmatprep.subr.mxu0 0.0
        %4681 = vmatpush1.msra.mxu0 0.0
        %4682 = vmatprep.subr.mxu0 0.0
        %4683 = vmatpush1.msra.mxu0 0.0
        %4684 = vmatprep.subr.mxu0 0.0
        %4685 = vmatpush1.msra.mxu0 0.0
        %4686 = vmatprep.subr.mxu0 0.0
        %4687 = vmatpush1.msra.mxu0 0.0
        %4688 = vmatprep.subr.mxu0 0.0
        %4689 = vmatpush1.msra.mxu0 0.0
        %4690 = vmatprep.subr.mxu0 0.0
        %4691 = vmatpush1.msra.mxu0 0.0
        %4692 = vmatprep.subr.mxu0 0.0
        %4693 = vmatpush1.msra.mxu0 0.0
        %4694 = vmatprep.subr.mxu0 0.0
        %4695 = vmatpush1.msra.mxu0 0.0
        %4696 = vmatprep.subr.mxu0 0.0
        %4697 = vmatpush1.msra.mxu0 0.0
        %4698 = vmatprep.mubr.f32.mxu0 0.0
        %4699 = vmatmul.mubr.f32.gmra.mrb[0].mxu0 %v4630
        %v4700 = vpop.f32.mrb[0].mxu0
        %v4701 = vadd.f32 0.0, %v4700
        %v4702 = vpop.f32.mrb[0].mxu0
        %4703 = vdwg.mxu0
        %v4704 = vadd.f32 %v4619, %v4701
        %v4705 = vld [vmem:[%s2189] sm:$0xff]
        %v4706 = vld [vmem:[#allocation2 + $0x8] sm:$0xff]
        %v4708 = vcombine.high %v4706, %v4706
        %4709 = vrot.lane.b32.xlu0 %v4706, 64
        %v4710 = vpop.permute.xlu0 %4709
        %4711 = vrot.lane.b32.xlu0 %v4708, 64
        %v4712 = vpop.permute.xlu0 %4711
        %v4713 = vsel %vm2202, %v4710, %v4712
        %v4715 = vsel %vm399, %v4705, 0
        %v4717 = vsel %vm403, %v4713, 0
        %4719 = vmatprep.subr.mxu0 0.0
        %4720 = vmatpush1.msra.mxu0 %v4717
        %4721 = vmatprep.subr.mxu0 0.0
        %4722 = vmatpush1.msra.mxu0 0.0
        %4723 = vmatprep.subr.mxu0 0.0
        %4724 = vmatpush1.msra.mxu0 0.0
        %4725 = vmatprep.subr.mxu0 0.0
        %4726 = vmatpush1.msra.mxu0 0.0
        %4727 = vmatprep.subr.mxu0 0.0
        %4728 = vmatpush1.msra.mxu0 0.0
        %4729 = vmatprep.subr.mxu0 0.0
        %4730 = vmatpush1.msra.mxu0 0.0
        %4731 = vmatprep.subr.mxu0 0.0
        %4732 = vmatpush1.msra.mxu0 0.0
        %4733 = vmatprep.subr.mxu0 0.0
        %4734 = vmatpush1.msra.mxu0 0.0
        %4735 = vmatprep.subr.mxu0 0.0
        %4736 = vmatpush1.msra.mxu0 0.0
        %4737 = vmatprep.subr.mxu0 0.0
        %4738 = vmatpush1.msra.mxu0 0.0
        %4739 = vmatprep.subr.mxu0 0.0
        %4740 = vmatpush1.msra.mxu0 0.0
        %4741 = vmatprep.subr.mxu0 0.0
        %4742 = vmatpush1.msra.mxu0 0.0
        %4743 = vmatprep.subr.mxu0 0.0
        %4744 = vmatpush1.msra.mxu0 0.0
        %4745 = vmatprep.subr.mxu0 0.0
        %4746 = vmatpush1.msra.mxu0 0.0
        %4747 = vmatprep.subr.mxu0 0.0
        %4748 = vmatpush1.msra.mxu0 0.0
        %4749 = vmatprep.subr.mxu0 0.0
        %4750 = vmatpush1.msra.mxu0 0.0
        %4751 = vmatprep.subr.mxu0 0.0
        %4752 = vmatpush1.msra.mxu0 0.0
        %4753 = vmatprep.subr.mxu0 0.0
        %4754 = vmatpush1.msra.mxu0 0.0
        %4755 = vmatprep.subr.mxu0 0.0
        %4756 = vmatpush1.msra.mxu0 0.0
        %4757 = vmatprep.subr.mxu0 0.0
        %4758 = vmatpush1.msra.mxu0 0.0
        %4759 = vmatprep.subr.mxu0 0.0
        %4760 = vmatpush1.msra.mxu0 0.0
        %4761 = vmatprep.subr.mxu0 0.0
        %4762 = vmatpush1.msra.mxu0 0.0
        %4763 = vmatprep.subr.mxu0 0.0
        %4764 = vmatpush1.msra.mxu0 0.0
        %4765 = vmatprep.subr.mxu0 0.0
        %4766 = vmatpush1.msra.mxu0 0.0
        %4767 = vmatprep.subr.mxu0 0.0
        %4768 = vmatpush1.msra.mxu0 0.0
        %4769 = vmatprep.subr.mxu0 0.0
        %4770 = vmatpush1.msra.mxu0 0.0
        %4771 = vmatprep.subr.mxu0 0.0
        %4772 = vmatpush1.msra.mxu0 0.0
        %4773 = vmatprep.subr.mxu0 0.0
        %4774 = vmatpush1.msra.mxu0 0.0
        %4775 = vmatprep.subr.mxu0 0.0
        %4776 = vmatpush1.msra.mxu0 0.0
        %4777 = vmatprep.subr.mxu0 0.0
        %4778 = vmatpush1.msra.mxu0 0.0
        %4779 = vmatprep.subr.mxu0 0.0
        %4780 = vmatpush1.msra.mxu0 0.0
        %4781 = vmatprep.subr.mxu0 0.0
        %4782 = vmatpush1.msra.mxu0 0.0
        %4783 = vmatprep.mubr.f32.mxu0 0.0
        %4784 = vmatmul.mubr.f32.gmra.mrb[0].mxu0 %v4715
        %v4785 = vpop.f32.mrb[0].mxu0
        %v4786 = vadd.f32 0.0, %v4785
        %v4787 = vpop.f32.mrb[0].mxu0
        %4788 = vdwg.mxu0
        %v4789 = vadd.f32 %v4704, %v4786
        %v4790 = vld [vmem:[%s2285] sm:$0xff]
        %v4791 = vld [vmem:[#allocation2 + $0x8] sm:$0xff]
        %v4793 = vcombine.high %v4791, %v4791
        %4794 = vrot.lane.b32.xlu0 %v4791, 48
        %v4795 = vpop.permute.xlu0 %4794
        %4796 = vrot.lane.b32.xlu0 %v4793, 48
        %v4797 = vpop.permute.xlu0 %4796
        %v4798 = vsel %vm2298, %v4795, %v4797
        %v4800 = vsel %vm399, %v4790, 0
        %v4802 = vsel %vm403, %v4798, 0
        %4804 = vmatprep.subr.mxu0 0.0
        %4805 = vmatpush1.msra.mxu0 %v4802
        %4806 = vmatprep.subr.mxu0 0.0
        %4807 = vmatpush1.msra.mxu0 0.0
        %4808 = vmatprep.subr.mxu0 0.0
        %4809 = vmatpush1.msra.mxu0 0.0
        %4810 = vmatprep.subr.mxu0 0.0
        %4811 = vmatpush1.msra.mxu0 0.0
        %4812 = vmatprep.subr.mxu0 0.0
        %4813 = vmatpush1.msra.mxu0 0.0
        %4814 = vmatprep.subr.mxu0 0.0
        %4815 = vmatpush1.msra.mxu0 0.0
        %4816 = vmatprep.subr.mxu0 0.0
        %4817 = vmatpush1.msra.mxu0 0.0
        %4818 = vmatprep.subr.mxu0 0.0
        %4819 = vmatpush1.msra.mxu0 0.0
        %4820 = vmatprep.subr.mxu0 0.0
        %4821 = vmatpush1.msra.mxu0 0.0
        %4822 = vmatprep.subr.mxu0 0.0
        %4823 = vmatpush1.msra.mxu0 0.0
        %4824 = vmatprep.subr.mxu0 0.0
        %4825 = vmatpush1.msra.mxu0 0.0
        %4826 = vmatprep.subr.mxu0 0.0
        %4827 = vmatpush1.msra.mxu0 0.0
        %4828 = vmatprep.subr.mxu0 0.0
        %4829 = vmatpush1.msra.mxu0 0.0
        %4830 = vmatprep.subr.mxu0 0.0
        %4831 = vmatpush1.msra.mxu0 0.0
        %4832 = vmatprep.subr.mxu0 0.0
        %4833 = vmatpush1.msra.mxu0 0.0
        %4834 = vmatprep.subr.mxu0 0.0
        %4835 = vmatpush1.msra.mxu0 0.0
        %4836 = vmatprep.subr.mxu0 0.0
        %4837 = vmatpush1.msra.mxu0 0.0
        %4838 = vmatprep.subr.mxu0 0.0
        %4839 = vmatpush1.msra.mxu0 0.0
        %4840 = vmatprep.subr.mxu0 0.0
        %4841 = vmatpush1.msra.mxu0 0.0
        %4842 = vmatprep.subr.mxu0 0.0
        %4843 = vmatpush1.msra.mxu0 0.0
        %4844 = vmatprep.subr.mxu0 0.0
        %4845 = vmatpush1.msra.mxu0 0.0
        %4846 = vmatprep.subr.mxu0 0.0
        %4847 = vmatpush1.msra.mxu0 0.0
        %4848 = vmatprep.subr.mxu0 0.0
        %4849 = vmatpush1.msra.mxu0 0.0
        %4850 = vmatprep.subr.mxu0 0.0
        %4851 = vmatpush1.msra.mxu0 0.0
        %4852 = vmatprep.subr.mxu0 0.0
        %4853 = vmatpush1.msra.mxu0 0.0
        %4854 = vmatprep.subr.mxu0 0.0
        %4855 = vmatpush1.msra.mxu0 0.0
        %4856 = vmatprep.subr.mxu0 0.0
        %4857 = vmatpush1.msra.mxu0 0.0
        %4858 = vmatprep.subr.mxu0 0.0
        %4859 = vmatpush1.msra.mxu0 0.0
        %4860 = vmatprep.subr.mxu0 0.0
        %4861 = vmatpush1.msra.mxu0 0.0
        %4862 = vmatprep.subr.mxu0 0.0
        %4863 = vmatpush1.msra.mxu0 0.0
        %4864 = vmatprep.subr.mxu0 0.0
        %4865 = vmatpush1.msra.mxu0 0.0
        %4866 = vmatprep.subr.mxu0 0.0
        %4867 = vmatpush1.msra.mxu0 0.0
        %4868 = vmatprep.mubr.f32.mxu0 0.0
        %4869 = vmatmul.mubr.f32.gmra.mrb[0].mxu0 %v4800
        %v4870 = vpop.f32.mrb[0].mxu0
        %v4871 = vadd.f32 0.0, %v4870
        %v4872 = vpop.f32.mrb[0].mxu0
        %4873 = vdwg.mxu0
        %v4874 = vadd.f32 %v4789, %v4871
        %v4875 = vld [vmem:[%s2381] sm:$0xff]
        %v4876 = vld [vmem:[#allocation2 + $0x8] sm:$0xff]
        %v4878 = vcombine.high %v4876, %v4876
        %4879 = vrot.lane.b32.xlu0 %v4876, 47
        %v4880 = vpop.permute.xlu0 %4879
        %4881 = vrot.lane.b32.xlu0 %v4878, 47
        %v4882 = vpop.permute.xlu0 %4881
        %v4883 = vsel %vm2394, %v4880, %v4882
        %v4885 = vsel %vm399, %v4875, 0
        %v4887 = vsel %vm403, %v4883, 0
        %4889 = vmatprep.subr.mxu0 0.0
        %4890 = vmatpush1.msra.mxu0 %v4887
        %4891 = vmatprep.subr.mxu0 0.0
        %4892 = vmatpush1.msra.mxu0 0.0
        %4893 = vmatprep.subr.mxu0 0.0
        %4894 = vmatpush1.msra.mxu0 0.0
        %4895 = vmatprep.subr.mxu0 0.0
        %4896 = vmatpush1.msra.mxu0 0.0
        %4897 = vmatprep.subr.mxu0 0.0
        %4898 = vmatpush1.msra.mxu0 0.0
        %4899 = vmatprep.subr.mxu0 0.0
        %4900 = vmatpush1.msra.mxu0 0.0
        %4901 = vmatprep.subr.mxu0 0.0
        %4902 = vmatpush1.msra.mxu0 0.0
        %4903 = vmatprep.subr.mxu0 0.0
        %4904 = vmatpush1.msra.mxu0 0.0
        %4905 = vmatprep.subr.mxu0 0.0
        %4906 = vmatpush1.msra.mxu0 0.0
        %4907 = vmatprep.subr.mxu0 0.0
        %4908 = vmatpush1.msra.mxu0 0.0
        %4909 = vmatprep.subr.mxu0 0.0
        %4910 = vmatpush1.msra.mxu0 0.0
        %4911 = vmatprep.subr.mxu0 0.0
        %4912 = vmatpush1.msra.mxu0 0.0
        %4913 = vmatprep.subr.mxu0 0.0
        %4914 = vmatpush1.msra.mxu0 0.0
        %4915 = vmatprep.subr.mxu0 0.0
        %4916 = vmatpush1.msra.mxu0 0.0
        %4917 = vmatprep.subr.mxu0 0.0
        %4918 = vmatpush1.msra.mxu0 0.0
        %4919 = vmatprep.subr.mxu0 0.0
        %4920 = vmatpush1.msra.mxu0 0.0
        %4921 = vmatprep.subr.mxu0 0.0
        %4922 = vmatpush1.msra.mxu0 0.0
        %4923 = vmatprep.subr.mxu0 0.0
        %4924 = vmatpush1.msra.mxu0 0.0
        %4925 = vmatprep.subr.mxu0 0.0
        %4926 = vmatpush1.msra.mxu0 0.0
        %4927 = vmatprep.subr.mxu0 0.0
        %4928 = vmatpush1.msra.mxu0 0.0
        %4929 = vmatprep.subr.mxu0 0.0
        %4930 = vmatpush1.msra.mxu0 0.0
        %4931 = vmatprep.subr.mxu0 0.0
        %4932 = vmatpush1.msra.mxu0 0.0
        %4933 = vmatprep.subr.mxu0 0.0
        %4934 = vmatpush1.msra.mxu0 0.0
        %4935 = vmatprep.subr.mxu0 0.0
        %4936 = vmatpush1.msra.mxu0 0.0
        %4937 = vmatprep.subr.mxu0 0.0
        %4938 = vmatpush1.msra.mxu0 0.0
        %4939 = vmatprep.subr.mxu0 0.0
        %4940 = vmatpush1.msra.mxu0 0.0
        %4941 = vmatprep.subr.mxu0 0.0
        %4942 = vmatpush1.msra.mxu0 0.0
        %4943 = vmatprep.subr.mxu0 0.0
        %4944 = vmatpush1.msra.mxu0 0.0
        %4945 = vmatprep.subr.mxu0 0.0
        %4946 = vmatpush1.msra.mxu0 0.0
        %4947 = vmatprep.subr.mxu0 0.0
        %4948 = vmatpush1.msra.mxu0 0.0
        %4949 = vmatprep.subr.mxu0 0.0
        %4950 = vmatpush1.msra.mxu0 0.0
        %4951 = vmatprep.subr.mxu0 0.0
        %4952 = vmatpush1.msra.mxu0 0.0
        %4953 = vmatprep.mubr.f32.mxu0 0.0
        %4954 = vmatmul.mubr.f32.gmra.mrb[0].mxu0 %v4885
        %v4955 = vpop.f32.mrb[0].mxu0
        %v4956 = vadd.f32 0.0, %v4955
        %v4957 = vpop.f32.mrb[0].mxu0
        %4958 = vdwg.mxu0
        %v4959 = vadd.f32 %v4874, %v4956
        %v4960 = vld [vmem:[%s2477] sm:$0xff]
        %v4961 = vld [vmem:[#allocation2 + $0x8] sm:$0xff]
        %v4963 = vcombine.high %v4961, %v4961
        %4964 = vrot.lane.b32.xlu0 %v4961, 46
        %v4965 = vpop.permute.xlu0 %4964
        %4966 = vrot.lane.b32.xlu0 %v4963, 46
        %v4967 = vpop.permute.xlu0 %4966
        %v4968 = vsel %vm2490, %v4965, %v4967
        %v4970 = vsel %vm399, %v4960, 0
        %v4972 = vsel %vm403, %v4968, 0
        %4974 = vmatprep.subr.mxu0 0.0
        %4975 = vmatpush1.msra.mxu0 %v4972
        %4976 = vmatprep.subr.mxu0 0.0
        %4977 = vmatpush1.msra.mxu0 0.0
        %4978 = vmatprep.subr.mxu0 0.0
        %4979 = vmatpush1.msra.mxu0 0.0
        %4980 = vmatprep.subr.mxu0 0.0
        %4981 = vmatpush1.msra.mxu0 0.0
        %4982 = vmatprep.subr.mxu0 0.0
        %4983 = vmatpush1.msra.mxu0 0.0
        %4984 = vmatprep.subr.mxu0 0.0
        %4985 = vmatpush1.msra.mxu0 0.0
        %4986 = vmatprep.subr.mxu0 0.0
        %4987 = vmatpush1.msra.mxu0 0.0
        %4988 = vmatprep.subr.mxu0 0.0
        %4989 = vmatpush1.msra.mxu0 0.0
        %4990 = vmatprep.subr.mxu0 0.0
        %4991 = vmatpush1.msra.mxu0 0.0
        %4992 = vmatprep.subr.mxu0 0.0
        %4993 = vmatpush1.msra.mxu0 0.0
        %4994 = vmatprep.subr.mxu0 0.0
        %4995 = vmatpush1.msra.mxu0 0.0
        %4996 = vmatprep.subr.mxu0 0.0
        %4997 = vmatpush1.msra.mxu0 0.0
        %4998 = vmatprep.subr.mxu0 0.0
        %4999 = vmatpush1.msra.mxu0 0.0
        %5000 = vmatprep.subr.mxu0 0.0
        %5001 = vmatpush1.msra.mxu0 0.0
        %5002 = vmatprep.subr.mxu0 0.0
        %5003 = vmatpush1.msra.mxu0 0.0
        %5004 = vmatprep.subr.mxu0 0.0
        %5005 = vmatpush1.msra.mxu0 0.0
        %5006 = vmatprep.subr.mxu0 0.0
        %5007 = vmatpush1.msra.mxu0 0.0
        %5008 = vmatprep.subr.mxu0 0.0
        %5009 = vmatpush1.msra.mxu0 0.0
        %5010 = vmatprep.subr.mxu0 0.0
        %5011 = vmatpush1.msra.mxu0 0.0
        %5012 = vmatprep.subr.mxu0 0.0
        %5013 = vmatpush1.msra.mxu0 0.0
        %5014 = vmatprep.subr.mxu0 0.0
        %5015 = vmatpush1.msra.mxu0 0.0
        %5016 = vmatprep.subr.mxu0 0.0
        %5017 = vmatpush1.msra.mxu0 0.0
        %5018 = vmatprep.subr.mxu0 0.0
        %5019 = vmatpush1.msra.mxu0 0.0
        %5020 = vmatprep.subr.mxu0 0.0
        %5021 = vmatpush1.msra.mxu0 0.0
        %5022 = vmatprep.subr.mxu0 0.0
        %5023 = vmatpush1.msra.mxu0 0.0
        %5024 = vmatprep.subr.mxu0 0.0
        %5025 = vmatpush1.msra.mxu0 0.0
        %5026 = vmatprep.subr.mxu0 0.0
        %5027 = vmatpush1.msra.mxu0 0.0
        %5028 = vmatprep.subr.mxu0 0.0
        %5029 = vmatpush1.msra.mxu0 0.0
        %5030 = vmatprep.subr.mxu0 0.0
        %5031 = vmatpush1.msra.mxu0 0.0
        %5032 = vmatprep.subr.mxu0 0.0
        %5033 = vmatpush1.msra.mxu0 0.0
        %5034 = vmatprep.subr.mxu0 0.0
        %5035 = vmatpush1.msra.mxu0 0.0
        %5036 = vmatprep.subr.mxu0 0.0
        %5037 = vmatpush1.msra.mxu0 0.0
        %5038 = vmatprep.mubr.f32.mxu0 0.0
        %5039 = vmatmul.mubr.f32.gmra.mrb[0].mxu0 %v4970
        %v5040 = vpop.f32.mrb[0].mxu0
        %v5041 = vadd.f32 0.0, %v5040
        %v5042 = vpop.f32.mrb[0].mxu0
        %5043 = vdwg.mxu0
        %v5044 = vadd.f32 %v4959, %v5041
        %v5045 = vld [vmem:[%s2573] sm:$0xff]
        %v5046 = vld [vmem:[#allocation2 + $0x8] sm:$0xff]
        %v5048 = vcombine.high %v5046, %v5046
        %5049 = vrot.lane.b32.xlu0 %v5046, 45
        %v5050 = vpop.permute.xlu0 %5049
        %5051 = vrot.lane.b32.xlu0 %v5048, 45
        %v5052 = vpop.permute.xlu0 %5051
        %v5053 = vsel %vm2586, %v5050, %v5052
        %v5055 = vsel %vm399, %v5045, 0
        %v5057 = vsel %vm403, %v5053, 0
        %5059 = vmatprep.subr.mxu0 0.0
        %5060 = vmatpush1.msra.mxu0 %v5057
        %5061 = vmatprep.subr.mxu0 0.0
        %5062 = vmatpush1.msra.mxu0 0.0
        %5063 = vmatprep.subr.mxu0 0.0
        %5064 = vmatpush1.msra.mxu0 0.0
        %5065 = vmatprep.subr.mxu0 0.0
        %5066 = vmatpush1.msra.mxu0 0.0
        %5067 = vmatprep.subr.mxu0 0.0
        %5068 = vmatpush1.msra.mxu0 0.0
        %5069 = vmatprep.subr.mxu0 0.0
        %5070 = vmatpush1.msra.mxu0 0.0
        %5071 = vmatprep.subr.mxu0 0.0
        %5072 = vmatpush1.msra.mxu0 0.0
        %5073 = vmatprep.subr.mxu0 0.0
        %5074 = vmatpush1.msra.mxu0 0.0
        %5075 = vmatprep.subr.mxu0 0.0
        %5076 = vmatpush1.msra.mxu0 0.0
        %5077 = vmatprep.subr.mxu0 0.0
        %5078 = vmatpush1.msra.mxu0 0.0
        %5079 = vmatprep.subr.mxu0 0.0
        %5080 = vmatpush1.msra.mxu0 0.0
        %5081 = vmatprep.subr.mxu0 0.0
        %5082 = vmatpush1.msra.mxu0 0.0
        %5083 = vmatprep.subr.mxu0 0.0
        %5084 = vmatpush1.msra.mxu0 0.0
        %5085 = vmatprep.subr.mxu0 0.0
        %5086 = vmatpush1.msra.mxu0 0.0
        %5087 = vmatprep.subr.mxu0 0.0
        %5088 = vmatpush1.msra.mxu0 0.0
        %5089 = vmatprep.subr.mxu0 0.0
        %5090 = vmatpush1.msra.mxu0 0.0
        %5091 = vmatprep.subr.mxu0 0.0
        %5092 = vmatpush1.msra.mxu0 0.0
        %5093 = vmatprep.subr.mxu0 0.0
        %5094 = vmatpush1.msra.mxu0 0.0
        %5095 = vmatprep.subr.mxu0 0.0
        %5096 = vmatpush1.msra.mxu0 0.0
        %5097 = vmatprep.subr.mxu0 0.0
        %5098 = vmatpush1.msra.mxu0 0.0
        %5099 = vmatprep.subr.mxu0 0.0
        %5100 = vmatpush1.msra.mxu0 0.0
        %5101 = vmatprep.subr.mxu0 0.0
        %5102 = vmatpush1.msra.mxu0 0.0
        %5103 = vmatprep.subr.mxu0 0.0
        %5104 = vmatpush1.msra.mxu0 0.0
        %5105 = vmatprep.subr.mxu0 0.0
        %5106 = vmatpush1.msra.mxu0 0.0
        %5107 = vmatprep.subr.mxu0 0.0
        %5108 = vmatpush1.msra.mxu0 0.0
        %5109 = vmatprep.subr.mxu0 0.0
        %5110 = vmatpush1.msra.mxu0 0.0
        %5111 = vmatprep.subr.mxu0 0.0
        %5112 = vmatpush1.msra.mxu0 0.0
        %5113 = vmatprep.subr.mxu0 0.0
        %5114 = vmatpush1.msra.mxu0 0.0
        %5115 = vmatprep.subr.mxu0 0.0
        %5116 = vmatpush1.msra.mxu0 0.0
        %5117 = vmatprep.subr.mxu0 0.0
        %5118 = vmatpush1.msra.mxu0 0.0
        %5119 = vmatprep.subr.mxu0 0.0
        %5120 = vmatpush1.msra.mxu0 0.0
        %5121 = vmatprep.subr.mxu0 0.0
        %5122 = vmatpush1.msra.mxu0 0.0
        %5123 = vmatprep.mubr.f32.mxu0 0.0
        %5124 = vmatmul.mubr.f32.gmra.mrb[0].mxu0 %v5055
        %v5125 = vpop.f32.mrb[0].mxu0
        %v5126 = vadd.f32 0.0, %v5125
        %v5127 = vpop.f32.mrb[0].mxu0
        %5128 = vdwg.mxu0
        %v5129 = vadd.f32 %v5044, %v5126
        %v5130 = vld [vmem:[%s2669] sm:$0xff]
        %v5131 = vld [vmem:[#allocation2 + $0x8] sm:$0xff]
        %v5133 = vcombine.high %v5131, %v5131
        %5134 = vrot.lane.b32.xlu0 %v5131, 44
        %v5135 = vpop.permute.xlu0 %5134
        %5136 = vrot.lane.b32.xlu0 %v5133, 44
        %v5137 = vpop.permute.xlu0 %5136
        %v5138 = vsel %vm2682, %v5135, %v5137
        %v5140 = vsel %vm399, %v5130, 0
        %v5142 = vsel %vm403, %v5138, 0
        %5144 = vmatprep.subr.mxu0 0.0
        %5145 = vmatpush1.msra.mxu0 %v5142
        %5146 = vmatprep.subr.mxu0 0.0
        %5147 = vmatpush1.msra.mxu0 0.0
        %5148 = vmatprep.subr.mxu0 0.0
        %5149 = vmatpush1.msra.mxu0 0.0
        %5150 = vmatprep.subr.mxu0 0.0
        %5151 = vmatpush1.msra.mxu0 0.0
        %5152 = vmatprep.subr.mxu0 0.0
        %5153 = vmatpush1.msra.mxu0 0.0
        %5154 = vmatprep.subr.mxu0 0.0
        %5155 = vmatpush1.msra.mxu0 0.0
        %5156 = vmatprep.subr.mxu0 0.0
        %5157 = vmatpush1.msra.mxu0 0.0
        %5158 = vmatprep.subr.mxu0 0.0
        %5159 = vmatpush1.msra.mxu0 0.0
        %5160 = vmatprep.subr.mxu0 0.0
        %5161 = vmatpush1.msra.mxu0 0.0
        %5162 = vmatprep.subr.mxu0 0.0
        %5163 = vmatpush1.msra.mxu0 0.0
        %5164 = vmatprep.subr.mxu0 0.0
        %5165 = vmatpush1.msra.mxu0 0.0
        %5166 = vmatprep.subr.mxu0 0.0
        %5167 = vmatpush1.msra.mxu0 0.0
        %5168 = vmatprep.subr.mxu0 0.0
        %5169 = vmatpush1.msra.mxu0 0.0
        %5170 = vmatprep.subr.mxu0 0.0
        %5171 = vmatpush1.msra.mxu0 0.0
        %5172 = vmatprep.subr.mxu0 0.0
        %5173 = vmatpush1.msra.mxu0 0.0
        %5174 = vmatprep.subr.mxu0 0.0
        %5175 = vmatpush1.msra.mxu0 0.0
        %5176 = vmatprep.subr.mxu0 0.0
        %5177 = vmatpush1.msra.mxu0 0.0
        %5178 = vmatprep.subr.mxu0 0.0
        %5179 = vmatpush1.msra.mxu0 0.0
        %5180 = vmatprep.subr.mxu0 0.0
        %5181 = vmatpush1.msra.mxu0 0.0
        %5182 = vmatprep.subr.mxu0 0.0
        %5183 = vmatpush1.msra.mxu0 0.0
        %5184 = vmatprep.subr.mxu0 0.0
        %5185 = vmatpush1.msra.mxu0 0.0
        %5186 = vmatprep.subr.mxu0 0.0
        %5187 = vmatpush1.msra.mxu0 0.0
        %5188 = vmatprep.subr.mxu0 0.0
        %5189 = vmatpush1.msra.mxu0 0.0
        %5190 = vmatprep.subr.mxu0 0.0
        %5191 = vmatpush1.msra.mxu0 0.0
        %5192 = vmatprep.subr.mxu0 0.0
        %5193 = vmatpush1.msra.mxu0 0.0
        %5194 = vmatprep.subr.mxu0 0.0
        %5195 = vmatpush1.msra.mxu0 0.0
        %5196 = vmatprep.subr.mxu0 0.0
        %5197 = vmatpush1.msra.mxu0 0.0
        %5198 = vmatprep.subr.mxu0 0.0
        %5199 = vmatpush1.msra.mxu0 0.0
        %5200 = vmatprep.subr.mxu0 0.0
        %5201 = vmatpush1.msra.mxu0 0.0
        %5202 = vmatprep.subr.mxu0 0.0
        %5203 = vmatpush1.msra.mxu0 0.0
        %5204 = vmatprep.subr.mxu0 0.0
        %5205 = vmatpush1.msra.mxu0 0.0
        %5206 = vmatprep.subr.mxu0 0.0
        %5207 = vmatpush1.msra.mxu0 0.0
        %5208 = vmatprep.mubr.f32.mxu0 0.0
        %5209 = vmatmul.mubr.f32.gmra.mrb[0].mxu0 %v5140
        %v5210 = vpop.f32.mrb[0].mxu0
        %v5211 = vadd.f32 0.0, %v5210
        %v5212 = vpop.f32.mrb[0].mxu0
        %5213 = vdwg.mxu0
        %v5214 = vadd.f32 %v5129, %v5211
        %v5215 = vmul.f32 %v5214, %v2765
        %v5216 = vmax.f32 %v2768, %v5215
        %v5217 = vmin.f32 %v2771, %v5216
        %s5218 = sld [smem:[#allocation6]]
        %v5219 = vstv %s5218
        %v5220 = vsub.f32 %v5217, %v5219
        %v5221 = vld [vmem:[%s3] sm:$0xff]
        %v5222 = vmul.f32 %v5220, %v5220
        %v5223 = vsub.f32 0.0, %v5222
        %v5224 = vmul.f32 %v5223, 1.442695
        %v5225 = vpow.pop %v5224
        %5227 = vset.pattern.permute.xlu0 0
        %5228 = vperm.xlu0 %5227, %v5221
        %v5229 = vpop.permute.xlu0 %5228
        %v5231 = vmul.f32 %v5229, %v5225
        %v5232 = vadd.f32 %v5231, 0.0
        %s5233 = sld [smem:[#allocation6 + $0x1]]
        %v5234 = vstv %s5233
        %v5235 = vsub.f32 %v5217, %v5234
        %v5236 = vmul.f32 %v5235, %v5235
        %v5237 = vsub.f32 0.0, %v5236
        %v5238 = vmul.f32 %v5237, 1.442695
        %v5239 = vpow.pop %v5238
        %5240 = vset.pattern.permute.xlu0 1
        %5241 = vperm.xlu0 %5240, %v5221
        %v5242 = vpop.permute.xlu0 %5241
        %v5244 = vmul.f32 %v5242, %v5239
        %v5245 = vadd.f32 %v5232, %v5244
        %s5246 = sld [smem:[#allocation6 + $0x2]]
        %v5247 = vstv %s5246
        %v5248 = vsub.f32 %v5217, %v5247
        %v5249 = vmul.f32 %v5248, %v5248
        %v5250 = vsub.f32 0.0, %v5249
        %v5251 = vmul.f32 %v5250, 1.442695
        %v5252 = vpow.pop %v5251
        %5253 = vset.pattern.permute.xlu0 2
        %5254 = vperm.xlu0 %5253, %v5221
        %v5255 = vpop.permute.xlu0 %5254
        %v5257 = vmul.f32 %v5255, %v5252
        %v5258 = vadd.f32 %v5245, %v5257
        %s5259 = sld [smem:[#allocation6 + $0x3]]
        %v5260 = vstv %s5259
        %v5261 = vsub.f32 %v5217, %v5260
        %v5262 = vmul.f32 %v5261, %v5261
        %v5263 = vsub.f32 0.0, %v5262
        %v5264 = vmul.f32 %v5263, 1.442695
        %v5265 = vpow.pop %v5264
        %5266 = vset.pattern.permute.xlu0 3
        %5267 = vperm.xlu0 %5266, %v5221
        %v5268 = vpop.permute.xlu0 %5267
        %v5270 = vmul.f32 %v5268, %v5265
        %v5271 = vadd.f32 %v5258, %v5270
        %s5272 = sld [smem:[#allocation6 + $0x4]]
        %v5273 = vstv %s5272
        %v5274 = vsub.f32 %v5217, %v5273
        %v5275 = vmul.f32 %v5274, %v5274
        %v5276 = vsub.f32 0.0, %v5275
        %v5277 = vmul.f32 %v5276, 1.442695
        %v5278 = vpow.pop %v5277
        %5279 = vset.pattern.permute.xlu0 4
        %5280 = vperm.xlu0 %5279, %v5221
        %v5281 = vpop.permute.xlu0 %5280
        %v5283 = vmul.f32 %v5281, %v5278
        %v5284 = vadd.f32 %v5271, %v5283
        %s5285 = sld [smem:[#allocation6 + $0x5]]
        %v5286 = vstv %s5285
        %v5287 = vsub.f32 %v5217, %v5286
        %v5288 = vmul.f32 %v5287, %v5287
        %v5289 = vsub.f32 0.0, %v5288
        %v5290 = vmul.f32 %v5289, 1.442695
        %v5291 = vpow.pop %v5290
        %5292 = vset.pattern.permute.xlu0 5
        %5293 = vperm.xlu0 %5292, %v5221
        %v5294 = vpop.permute.xlu0 %5293
        %v5296 = vmul.f32 %v5294, %v5291
        %v5297 = vadd.f32 %v5284, %v5296
        %s5298 = sld [smem:[#allocation6 + $0x6]]
        %v5299 = vstv %s5298
        %v5300 = vsub.f32 %v5217, %v5299
        %v5301 = vmul.f32 %v5300, %v5300
        %v5302 = vsub.f32 0.0, %v5301
        %v5303 = vmul.f32 %v5302, 1.442695
        %v5304 = vpow.pop %v5303
        %5305 = vset.pattern.permute.xlu0 6
        %5306 = vperm.xlu0 %5305, %v5221
        %v5307 = vpop.permute.xlu0 %5306
        %v5309 = vmul.f32 %v5307, %v5304
        %v5310 = vadd.f32 %v5297, %v5309
        %s5311 = sld [smem:[#allocation6 + $0x7]]
        %v5312 = vstv %s5311
        %v5313 = vsub.f32 %v5217, %v5312
        %v5314 = vmul.f32 %v5313, %v5313
        %v5315 = vsub.f32 0.0, %v5314
        %v5316 = vmul.f32 %v5315, 1.442695
        %v5317 = vpow.pop %v5316
        %5318 = vset.pattern.permute.xlu0 7
        %5319 = vperm.xlu0 %5318, %v5221
        %v5320 = vpop.permute.xlu0 %5319
        %v5322 = vmul.f32 %v5320, %v5317
        %v5323 = vadd.f32 %v5310, %v5322
        %s5324 = sld [smem:[#allocation6 + $0x8]]
        %v5325 = vstv %s5324
        %v5326 = vsub.f32 %v5217, %v5325
        %v5327 = vmul.f32 %v5326, %v5326
        %v5328 = vsub.f32 0.0, %v5327
        %v5329 = vmul.f32 %v5328, 1.442695
        %v5330 = vpow.pop %v5329
        %5331 = vset.pattern.permute.xlu0 8
        %5332 = vperm.xlu0 %5331, %v5221
        %v5333 = vpop.permute.xlu0 %5332
        %v5335 = vmul.f32 %v5333, %v5330
        %v5336 = vadd.f32 %v5323, %v5335
        %s5337 = sld [smem:[#allocation6 + $0x9]]
        %v5338 = vstv %s5337
        %v5339 = vsub.f32 %v5217, %v5338
        %v5340 = vmul.f32 %v5339, %v5339
        %v5341 = vsub.f32 0.0, %v5340
        %v5342 = vmul.f32 %v5341, 1.442695
        %v5343 = vpow.pop %v5342
        %5344 = vset.pattern.permute.xlu0 9
        %5345 = vperm.xlu0 %5344, %v5221
        %v5346 = vpop.permute.xlu0 %5345
        %v5348 = vmul.f32 %v5346, %v5343
        %v5349 = vadd.f32 %v5336, %v5348
        %s5350 = sld [smem:[#allocation6 + $0xa]]
        %v5351 = vstv %s5350
        %v5352 = vsub.f32 %v5217, %v5351
        %v5353 = vmul.f32 %v5352, %v5352
        %v5354 = vsub.f32 0.0, %v5353
        %v5355 = vmul.f32 %v5354, 1.442695
        %v5356 = vpow.pop %v5355
        %5357 = vset.pattern.permute.xlu0 10
        %5358 = vperm.xlu0 %5357, %v5221
        %v5359 = vpop.permute.xlu0 %5358
        %v5361 = vmul.f32 %v5359, %v5356
        %v5362 = vadd.f32 %v5349, %v5361
        %s5363 = sld [smem:[#allocation6 + $0xb]]
        %v5364 = vstv %s5363
        %v5365 = vsub.f32 %v5217, %v5364
        %v5366 = vmul.f32 %v5365, %v5365
        %v5367 = vsub.f32 0.0, %v5366
        %v5368 = vmul.f32 %v5367, 1.442695
        %v5369 = vpow.pop %v5368
        %5370 = vset.pattern.permute.xlu0 11
        %5371 = vperm.xlu0 %5370, %v5221
        %v5372 = vpop.permute.xlu0 %5371
        %v5374 = vmul.f32 %v5372, %v5369
        %v5375 = vadd.f32 %v5362, %v5374
        %s5376 = sld [smem:[#allocation6 + $0xc]]
        %v5377 = vstv %s5376
        %v5378 = vsub.f32 %v5217, %v5377
        %v5379 = vmul.f32 %v5378, %v5378
        %v5380 = vsub.f32 0.0, %v5379
        %v5381 = vmul.f32 %v5380, 1.442695
        %v5382 = vpow.pop %v5381
        %5383 = vset.pattern.permute.xlu0 12
        %5384 = vperm.xlu0 %5383, %v5221
        %v5385 = vpop.permute.xlu0 %5384
        %v5387 = vmul.f32 %v5385, %v5382
        %v5388 = vadd.f32 %v5375, %v5387
        %s5389 = sld [smem:[#allocation6 + $0xd]]
        %v5390 = vstv %s5389
        %v5391 = vsub.f32 %v5217, %v5390
        %v5392 = vmul.f32 %v5391, %v5391
        %v5393 = vsub.f32 0.0, %v5392
        %v5394 = vmul.f32 %v5393, 1.442695
        %v5395 = vpow.pop %v5394
        %5396 = vset.pattern.permute.xlu0 13
        %5397 = vperm.xlu0 %5396, %v5221
        %v5398 = vpop.permute.xlu0 %5397
        %v5400 = vmul.f32 %v5398, %v5395
        %v5401 = vadd.f32 %v5388, %v5400
        %s5402 = sld [smem:[#allocation6 + $0xe]]
        %v5403 = vstv %s5402
        %v5404 = vsub.f32 %v5217, %v5403
        %v5405 = vmul.f32 %v5404, %v5404
        %v5406 = vsub.f32 0.0, %v5405
        %v5407 = vmul.f32 %v5406, 1.442695
        %v5408 = vpow.pop %v5407
        %5409 = vset.pattern.permute.xlu0 14
        %5410 = vperm.xlu0 %5409, %v5221
        %v5411 = vpop.permute.xlu0 %5410
        %v5413 = vmul.f32 %v5411, %v5408
        %v5414 = vadd.f32 %v5401, %v5413
        %s5415 = sld [smem:[#allocation6 + $0xf]]
        %v5416 = vstv %s5415
        %v5417 = vsub.f32 %v5217, %v5416
        %v5418 = vmul.f32 %v5417, %v5417
        %v5419 = vsub.f32 0.0, %v5418
        %v5420 = vmul.f32 %v5419, 1.442695
        %v5421 = vpow.pop %v5420
        %5422 = vset.pattern.permute.xlu0 15
        %5423 = vperm.xlu0 %5422, %v5221
        %v5424 = vpop.permute.xlu0 %5423
        %v5426 = vmul.f32 %v5424, %v5421
        %v5427 = vadd.f32 %v5414, %v5426
        %5428 = vst [vmem:[%s341 + $0x10] sm:$0xff] %v5427
        %s5429 = sand.u32 %s188, 1
        %s5430 = scalar_lea.sflag [#allocation4], %s5429
        %s5431 = sand.u32 %s188, 1
        %s5432 = smul.addr %s5431, 24
        %s5433 = scalar_lea.vmem [#allocation8], %s5432
        // Predicated region
        $region53: #{tpu_custom_call.1} parent=43 // pred_check
          %p5434 = pneg %p198
        $region54: #{tpu_custom_call.1} parent=43 // pred_check_branch
          %5436 = sbr.rel (%p5434) target = $region56
        $region55: #{tpu_custom_call.1} parent=43 // pred_region
          %s5437 = smul.u32 3, %s27
          %s5439 = ssub.s32 384, 384
          %5440 = vsyncadd %s5430, %s5439
          %s5441 = smul.addr %s26, 3
          %s5442 = sadd.s32 %s5437, %s5441
          %s5443 = smul.addr %s5442, 128
          %s5444 = scalar_lea.hbm %s6, %s5443
          %s5446 = sshll.u32 %s5433, 4
          %s5447 = int_to_ptr.vmem [resolvable:$true] %s5446
          %5449 = dma.vmem_to_hbm [thread:$0]  %s5447, 384, %s5444, %s5430
        $region56: #{tpu_custom_call.1} parent=43 // pred_fallthru
          _
      $region44: #{tpu_custom_call.1} parent=5 // pred_fallthru
        _
      %p5450 = scmp.le.s32.totalorder 2, %s17
      // Predicated region
      $region57: #{tpu_custom_call.1} parent=5 // pred_check
        %p5451 = pneg %p5450
      $region58: #{tpu_custom_call.1} parent=5 // pred_check_branch
        %5453 = sbr.rel (%p5451) target = $region60
      $region59: #{tpu_custom_call.1} parent=5 // pred_region
        %s5454 = ssub.s32 %s17, 2
        // Predicated region
        $region61: #{tpu_custom_call.1} parent=59 // pred_check
          %p5455 = pneg %p204
        $region62: #{tpu_custom_call.1} parent=59 // pred_check_branch
          %5457 = sbr.rel (%p5455) target = $region64
        $region63: #{tpu_custom_call.1} parent=59 // pred_region
          %s5458 = sand.u32 %s189, 1
          %s5459 = scalar_lea.sflag [#allocation4], %s5458
          %s5460 = sand.u32 %s189, 1
          %s5461 = smul.addr %s5460, 24
          %s5462 = scalar_lea.vmem [#allocation8], %s5461
          %5463 = dma.done %s5459, 384
        $region64: #{tpu_custom_call.1} parent=59 // pred_fallthru
          _
      $region60: #{tpu_custom_call.1} parent=5 // pred_fallthru
        _
    $region6: #{tpu_custom_call.1} parent=1 // loop_footer
      %s21 = sadd.s32 1, %s17
    $region7: #{tpu_custom_call.1} parent=1 // loop_footer_branch
      %16 = sbr.rel target = $region3
    $region8: #{tpu_custom_call.1} parent=1 // loop_exit
      _
    %5464 = vsyncpa [#allocation4], 1
    %s5465 = scalar_lea.sflag [#allocation4], 1
    %5466 = vsyncpa %s5465, 1
    %5467 = vsyncpa [#allocation5], 1
    %s5468 = scalar_lea.sflag [#allocation5], 1
    %5469 = vsyncpa %s5468, 1
    %5470 = vsyncpa [#allocation7], 1

</llo_original>
